<compile_context>
chip_gen: v5e
topology: v5e:2x2
jax: 0.10.0
libtpu: 0.0.40
codegen_flags: <defaults>
</compile_context>

<pallas_src>
import math
import functools

import jax
import jax.numpy as jnp
from jax.experimental import pallas as pl
from jax.experimental.pallas import tpu as pltpu

LN_EPS = 1e-5
_MIB = 1024 * 1024


# ----------------------------------------------------------------------------
# Per-generation VMEM / core defaults and tile choosers
# ----------------------------------------------------------------------------
def _tpu_defaults():
    """Best-effort (physical VMEM bytes, TensorCores per chip) from device_kind."""
    phys_vmem = 128 * _MIB          # v4 / v5e / v6e
    cores = 1
    try:
        kind = jax.devices()[0].device_kind.lower()
    except Exception:
        kind = ""
    if "v7" in kind or "7x" in kind:
        phys_vmem = 64 * _MIB       # v7x: 64 MiB per TensorCore, 2 cores per chip
        cores = 2
    elif "v2" in kind or "v3" in kind:
        phys_vmem = 16 * _MIB
    return phys_vmem, cores


def _tile_candidates(n):
    """Divisors of n that satisfy the Pallas (8,128) sublane rule (multiple of 8, or n itself)."""
    cands = {n}
    for t in range(8, n, 8):
        if n % t == 0:
            cands.add(t)
    return sorted(cands, reverse=True)


def _choose_edge_tile(n, dx, de, dff_e, *, vmem_budget, bs, cores):
    """Query tile for kernel C from an explicit VMEM formula.

    Per-step VMEM ~= double-buffered I/O (E row + E col in, E out)
                   + live (tq, n, *) temporaries (proj_s/t, e1/e2/gate x2, y_st/y_ts,
                     p_st/p_ts, mod, FFN hidden) + resident Q/K/V slabs.
    Weights are small and covered by the 25% headroom left in vmem_budget.
    """
    def vmem_bytes(tq):
        io = 2 * 3 * tq * n * de * 4
        live = (16 * dx + 2 * 3 * dx + dff_e + 2 * de) * tq * n * 4
        qkv = 2 * (4 * n * dx + 4 * tq * dx) * 4
        return io + live + qkv

    cands = _tile_candidates(n)
    # v7x has 2 TensorCores per chip: ensure the grid has at least `cores` steps if possible.
    core_ok = [t for t in cands if bs * (n // t) >= cores]
    if core_ok:
        cands = core_ok
    for t in cands:                 # largest tile first (fewer grid steps, longer DMA bursts)
        if vmem_bytes(t) <= vmem_budget:
            return t
    return cands[-1]


def _choose_node_tile(n, dx, dff_x, *, vmem_budget, bs, cores):
    def vmem_bytes(tm):
        io = 2 * 3 * tm * dx * 4
        live = (8 * dx + dff_x) * tm * 4
        w = (3 * dx * dx + 2 * dx * dff_x) * 4
        return io + live + w

    cands = _tile_candidates(n)
    core_ok = [t for t in cands if bs * (n // t) >= cores]
    if core_ok:
        cands = core_ok
    for t in cands:
        if vmem_bytes(t) <= vmem_budget:
            return t
    return cands[-1]


# ----------------------------------------------------------------------------
# A/B: small fused linear kernels
# ----------------------------------------------------------------------------
def _linear_kernel(x_ref, w_ref, b_ref, o_ref):
    o_ref[...] = (jnp.dot(x_ref[...], w_ref[...],
                          preferred_element_type=jnp.float32) + b_ref[...])


def linear_full(x2, W, b):
    """Single-block y = x @ W + b (tiny row counts, e.g. per-graph y)."""
    return pl.pallas_call(
        _linear_kernel,
        out_shape=jax.ShapeDtypeStruct((x2.shape[0], W.shape[1]), jnp.float32),
    )(x2, W, b.reshape(1, -1))


def _masked_linear_kernel(x_ref, m_ref, w_ref, b_ref, o_ref):
    o_ref[...] = (jnp.dot(x_ref[...], w_ref[...],
                          preferred_element_type=jnp.float32) + b_ref[...]) * m_ref[...]


def masked_linear_rows(x2, mask2, W, b, *, vmem_limit_bytes, tm=None):
    """Row-tiled (x @ W + b) * mask.  Used once with the concatenated (dx, 6*dx)
    weight so X is read from HBM a single time for all six node projections."""
    rows, din = x2.shape
    dout = W.shape[1]
    if tm is None:
        tm = 1024
        while tm > 8 and (2 * tm * (din + dout + 1) + din * dout + dout) * 4 > vmem_limit_bytes:
            tm //= 2
    tm = min(tm, rows)
    grid = (pl.cdiv(rows, tm),)
    return pl.pallas_call(
        _masked_linear_kernel,
        grid=grid,
        in_specs=[pl.BlockSpec((tm, din), lambda i: (i, 0)),
                  pl.BlockSpec((tm, 1), lambda i: (i, 0)),
                  pl.BlockSpec((din, dout), lambda i: (0, 0)),
                  pl.BlockSpec((1, dout), lambda i: (0, 0))],
        out_specs=pl.BlockSpec((tm, dout), lambda i: (i, 0)),
        out_shape=jax.ShapeDtypeStruct((rows, dout), jnp.float32),
        compiler_params=pltpu.CompilerParams(
            dimension_semantics=("parallel",),
            vmem_limit_bytes=vmem_limit_bytes),
    )(x2, mask2, W, b.reshape(1, -1))


# ----------------------------------------------------------------------------
# C: fused dual attention + e_out head + E residual/LN/FFN/LN + Etoy stats, query-tiled grid
# ----------------------------------------------------------------------------
def _dual_attn_edge_kernel(e_row_ref, e_col_ref, qs_ref, qt_ref, ks_ref, kt_ref,
                           vs_ref, vt_ref, mq_ref, mf_ref, ye_ref,
                           wsc_ref, bsc_ref, wtc_ref, btc_ref,
                           weo_ref, beo_ref, eln_ref,
                           wf1_ref, bf1_ref, wf2_ref, bf2_ref,
                           eout_ref, wv_ref, stats_ref, *, dx, de, inv_sqrt_df, eps):
    tq = qs_ref.shape[1]
    n = ks_ref.shape[1]

    mq = mq_ref[0]                                   # (tq, 1)  query-row node mask
    mf = mf_ref[0]                                   # (n, 1)   full node mask (keys)
    em_row = mq[:, None, :] * mf[None, :, :]         # (tq, n, 1)
    em_col = mf[:, None, :] * mq[None, :, :]         # (n, tq, 1)

    e_row = e_row_ref[0]                             # (tq, n, de)   E[b, qtile, :, :]
    e_col = e_col_ref[0]                             # (n, tq, de)   E[b, :, qtile, :]
    er2 = e_row.reshape(tq * n, de)

    # Pooled Etoy statistics folded here (raw E): saves a second full HBM pass over E.
    stats_ref[0, 0] = jnp.concatenate(
        [jnp.sum(er2, axis=0, keepdims=True),
         jnp.sum(er2 * er2, axis=0, keepdims=True),
         jnp.min(er2, axis=0, keepdims=True),
         jnp.max(er2, axis=0, keepdims=True)], axis=0)          # (4, de)

    # Fused edge projections: [e_mul | e_add | head-expanded gate] in one MXU pass
    # per orientation (the E^T side is consumed key-major, never transposed).
    proj_s = (jnp.dot(er2, wsc_ref[...],
                      preferred_element_type=jnp.float32)
              + bsc_ref[...]).reshape(tq, n, 3 * dx)
    proj_t = (jnp.dot(e_col.reshape(n * tq, de), wtc_ref[...],
                      preferred_element_type=jnp.float32)
              + btc_ref[...]).reshape(n, tq, 3 * dx)

    # TODO(synk): the em_row/em_col masking of e1/e2 could be elided (keys are re-masked before
    # the softmax and new_e is re-masked after e_out) saving 4 big VPU multiplies, but it is kept
    # for bit-parity with the torch reference on padded E entries.
    e1s = proj_s[:, :, 0 * dx:1 * dx] * em_row
    e2s = proj_s[:, :, 1 * dx:2 * dx] * em_row
    gs = jax.nn.sigmoid(proj_s[:, :, 2 * dx:3 * dx])             # per-head gate repeated over df
    e1t = proj_t[:, :, 0 * dx:1 * dx] * em_col                   # key-major: [key j, query i]
    e2t = proj_t[:, :, 1 * dx:2 * dx] * em_col
    gt = jax.nn.sigmoid(proj_t[:, :, 2 * dx:3 * dx])

    # 1/sqrt(df) hoisted onto the (tq, dx) queries instead of the (tq, n, dx) products.
    qs = qs_ref[0] * inv_sqrt_df
    qt = qt_ref[0] * inv_sqrt_df
    ks = ks_ref[0]; kt = kt_ref[0]                   # (n, dx)
    vs = vs_ref[0]; vt = vt_ref[0]

    # Source-to-target branch, query-major (tq, n, dx)
    e1sp = e1s + 1.0
    y_st = qs[:, None, :] * kt[None, :, :]
    y_st = y_st * e1sp + e2s
    y_st = y_st * (gs * e1sp) + e2s

    # Target-to-source branch kept key-major (n, tq, dx): E^T consumed without transpose.
    e1tp = e1t + 1.0
    y_ts = ks[:, None, :] * qt[None, :, :]
    y_ts = y_ts * e1tp + e2t
    y_ts = y_ts * (gt * e1tp) + e2t

    # Masked softmax over the concatenated 2n-key axis; normalisation deferred to (tq, dx).
    neg = jnp.float32(-1e30)
    a_st = jnp.where(mf[None, :, :] > 0.0, y_st, neg)
    a_ts = jnp.where(mf[:, None, :] > 0.0, y_ts, neg)
    m = jnp.maximum(jnp.max(a_st, axis=1), jnp.max(a_ts, axis=0))      # (tq, dx)
    p_st = jnp.exp(a_st - m[:, None, :])
    p_ts = jnp.exp(a_ts - m[None, :, :])
    denom = jnp.sum(p_st, axis=1) + jnp.sum(p_ts, axis=0)              # (tq, dx)
    num = (jnp.sum(p_st * vt[None, :, :], axis=1)
           + jnp.sum(p_ts * vs[:, None, :], axis=0))                   # (tq, dx)
    # With the finite -1e30 sentinel denom >= 1 even for fully-masked graphs (V rows are zero
    # there, so wV -> 0 where torch's masked_softmax would produce NaN); guard regardless.
    wv_ref[0] = jnp.where(denom > 0.0, num / denom, 0.0)

    # Edge head: y-modulation -> e_out -> mask -> residual -> mask, then the
    # transformer E epilogue (LN -> FFN -> LN).  Y_st / newE never hit HBM.
    ye = ye_ref[0]                                   # (1, 2*dx): [y_e_add | y_e_mul]
    ye1 = ye[:, 0:dx][None, :, :]
    ye2 = ye[:, dx:2 * dx][None, :, :]
    mod = ye1 + (ye2 + 1.0) * y_st
    new_e = (jnp.dot(mod.reshape(tq * n, dx), weo_ref[...],
                     preferred_element_type=jnp.float32)
             + beo_ref[...]).reshape(tq, n, de)
    new_e = new_e * em_row
    block_e = (e_row + new_e) * em_row               # DualNodeEdgeBlock output newE

    g1 = eln_ref[0:1, :]; b1 = eln_ref[1:2, :]
    g2 = eln_ref[2:3, :]; b2 = eln_ref[3:4, :]
    v = (e_row + block_e).reshape(tq * n, de)        # normE1(E + newE)
    mu = jnp.mean(v, axis=-1, keepdims=True)
    d = v - mu
    var = jnp.mean(d * d, axis=-1, keepdims=True)
    e_ln1 = d * jax.lax.rsqrt(var + eps) * g1 + b1
    h = jnp.maximum(jnp.dot(e_ln1, wf1_ref[...], preferred_element_type=jnp.float32)
                    + bf1_ref[...], 0.0)
    ff = jnp.dot(h, wf2_ref[...], preferred_element_type=jnp.float32) + bf2_ref[...]
    v2 = e_ln1 + ff
    mu2 = jnp.mean(v2, axis=-1, keepdims=True)
    d2 = v2 - mu2
    var2 = jnp.mean(d2 * d2, axis=-1, keepdims=True)
    # TODO(synk): a lane-dense (bs, n, n*de) layout for this store (de < 128 => masked vst.msk)
    # would need an in-kernel (tq*n, de)->(tq, n*de) relayout; skipped to keep lowering safe.
    eout_ref[0] = (d2 * jax.lax.rsqrt(var2 + eps) * g2 + b2).reshape(tq, n, de)


def dual_attention_edge(E, Qs, Qt, Ks, Kt, Vs, Vt, node_mask3, ye_cat,
                        Ws_cat, bs_cat, Wt_cat, bt_cat, W_eout, b_eout,
                        eln, WfE1, bfE1, WfE2, bfE2,
                        *, n_head, tq, eps=LN_EPS, vmem_limit_bytes):
    bs, n, _, de = E.shape
    dx = Qs.shape[-1]
    df = dx // n_head
    assert n % tq == 0 and (tq == n or tq % 8 == 0), "tq must divide n and be a multiple of 8"
    dffE = WfE1.shape[1]
    nq = n // tq
    grid = (bs, nq)

    kernel = functools.partial(_dual_attn_edge_kernel, dx=dx, de=de,
                               inv_sqrt_df=1.0 / math.sqrt(df), eps=eps)
    in_specs = [
        pl.BlockSpec((1, tq, n, de), lambda b, q: (b, q, 0, 0)),   # E row slice
        pl.BlockSpec((1, n, tq, de), lambda b, q: (b, 0, q, 0)),   # E column slice (E^T side)
        pl.BlockSpec((1, tq, dx), lambda b, q: (b, q, 0)),         # Q_s
        pl.BlockSpec((1, tq, dx), lambda b, q: (b, q, 0)),         # Q_t
        pl.BlockSpec((1, n, dx), lambda b, q: (b, 0, 0)),          # K_s
        pl.BlockSpec((1, n, dx), lambda b, q: (b, 0, 0)),          # K_t
        pl.BlockSpec((1, n, dx), lambda b, q: (b, 0, 0)),          # V_s
        pl.BlockSpec((1, n, dx), lambda b, q: (b, 0, 0)),          # V_t
        pl.BlockSpec((1, tq, 1), lambda b, q: (b, q, 0)),          # node mask (query rows)
        pl.BlockSpec((1, n, 1), lambda b, q: (b, 0, 0)),           # node mask (all keys)
        pl.BlockSpec((1, 1, 2 * dx), lambda b, q: (b, 0, 0)),      # [y_e_add | y_e_mul]
        pl.BlockSpec((de, 3 * dx), lambda b, q: (0, 0)),           # fused s-side edge weight
        pl.BlockSpec((1, 3 * dx), lambda b, q: (0, 0)),
        pl.BlockSpec((de, 3 * dx), lambda b, q: (0, 0)),           # fused t-side edge weight
        pl.BlockSpec((1, 3 * dx), lambda b, q: (0, 0)),
        pl.BlockSpec((dx, de), lambda b, q: (0, 0)),               # e_out
        pl.BlockSpec((1, de), lambda b, q: (0, 0)),
        pl.BlockSpec((4, de), lambda b, q: (0, 0)),                # [gE1; bE1; gE2; bE2]
        pl.BlockSpec((de, dffE), lambda b, q: (0, 0)),             # linE1
        pl.BlockSpec((1, dffE), lambda b, q: (0, 0)),
        pl.BlockSpec((dffE, de), lambda b, q: (0, 0)),             # linE2
        pl.BlockSpec((1, de), lambda b, q: (0, 0)),
    ]
    out_specs = (pl.BlockSpec((1, tq, n, de), lambda b, q: (b, q, 0, 0)),
                 pl.BlockSpec((1, tq, dx), lambda b, q: (b, q, 0)),
                 pl.BlockSpec((1, 1, 4, de), lambda b, q: (b, q, 0, 0)))
    out_shape = (jax.ShapeDtypeStruct((bs, n, n, de), jnp.float32),
                 jax.ShapeDtypeStruct((bs, n, dx), jnp.float32),
                 jax.ShapeDtypeStruct((bs, nq, 4, de), jnp.float32))

    n2 = bs * n * n
    cost = pl.CostEstimate(
        flops=2 * n2 * (2 * de * 3 * dx + dx * de + 2 * de * dffE),
        transcendentals=4 * n2 * dx,                               # 2x exp + 2x sigmoid
        bytes_accessed=4 * (3 * n2 * de + 8 * bs * n * dx + 2 * bs * n + 2 * bs * dx))

    return pl.pallas_call(
        kernel, grid=grid, in_specs=in_specs, out_specs=out_specs, out_shape=out_shape,
        cost_estimate=cost,
        compiler_params=pltpu.CompilerParams(
            dimension_semantics=("parallel", "parallel"),
            vmem_limit_bytes=vmem_limit_bytes),
    )(E, E, Qs, Qt, Ks, Kt, Vs, Vt, node_mask3, node_mask3, ye_cat,
      Ws_cat, bs_cat.reshape(1, -1), Wt_cat, bt_cat.reshape(1, -1),
      W_eout, b_eout.reshape(1, -1), eln,
      WfE1, bfE1.reshape(1, -1), WfE2, bfE2.reshape(1, -1))


# ----------------------------------------------------------------------------
# D: fused X postprocess (gate_x / x_out / mask) + X residual/LN/FFN/LN, node-tiled
# ----------------------------------------------------------------------------
def _x_post_kernel(x_ref, wv_ref, yx_ref, mask_ref,
                   wgx_ref, wgv_ref, bg_ref, wxo_ref, bxo_ref,
                   xln_ref, wf1_ref, bf1_ref, wf2_ref, bf2_ref,
                   o_ref, *, dx, eps):
    x = x_ref[0]; wv = wv_ref[0]; mask = mask_ref[0]
    yx = yx_ref[0]                                   # (1, 2*dx): [y_x_add | y_x_mul]
    yx1 = yx[:, 0:dx]
    yx2 = yx[:, dx:2 * dx]
    mod = yx1 + (yx2 + 1.0) * wv
    # gate_x(cat([X, wV])) without materialising the concat: two matmuls, one accumulator.
    gate = jax.nn.sigmoid(
        jnp.dot(x, wgx_ref[...], preferred_element_type=jnp.float32)
        + jnp.dot(wv, wgv_ref[...], preferred_element_type=jnp.float32)
        + bg_ref[...])
    new_x = gate * x + (1.0 - gate) * mod
    new_x = (jnp.dot(new_x, wxo_ref[...], preferred_element_type=jnp.float32)
             + bxo_ref[...]) * mask                  # DualNodeEdgeBlock output newX

    g1 = xln_ref[0:1, :]; b1 = xln_ref[1:2, :]
    g2 = xln_ref[2:3, :]; b2 = xln_ref[3:4, :]
    v = x + new_x                                    # normX1(X + newX)
    mu = jnp.mean(v, axis=-1, keepdims=True)
    d = v - mu
    var = jnp.mean(d * d, axis=-1, keepdims=True)
    x1 = d * jax.lax.rsqrt(var + eps) * g1 + b1
    h = jnp.maximum(jnp.dot(x1, wf1_ref[...], preferred_element_type=jnp.float32)
                    + bf1_ref[...], 0.0)
    ff = jnp.dot(h, wf2_ref[...], preferred_element_type=jnp.float32) + bf2_ref[...]
    v2 = x1 + ff
    mu2 = jnp.mean(v2, axis=-1, keepdims=True)
    d2 = v2 - mu2
    var2 = jnp.mean(d2 * d2, axis=-1, keepdims=True)
    o_ref[0] = d2 * jax.lax.rsqrt(var2 + eps) * g2 + b2


def x_postprocess(X, wV, yx_cat, node_mask3, Wg_x, Wg_v, bg, Wxo, bxo,
                  xln, WfX1, bfX1, WfX2, bfX2, *, tm, eps=LN_EPS, vmem_limit_bytes):
    bs, n, dx = X.shape
    assert n % tm == 0 and (tm == n or tm % 8 == 0)
    dffX = WfX1.shape[1]
    grid = (bs, n // tm)
    in_specs = [
        pl.BlockSpec((1, tm, dx), lambda b, i: (b, i, 0)),
        pl.BlockSpec((1, tm, dx), lambda b, i: (b, i, 0)),
        pl.BlockSpec((1, 1, 2 * dx), lambda b, i: (b, 0, 0)),
        pl.BlockSpec((1, tm, 1), lambda b, i: (b, i, 0)),
        pl.BlockSpec((dx, dx), lambda b, i: (0, 0)),
        pl.BlockSpec((dx, dx), lambda b, i: (0, 0)),
        pl.BlockSpec((1, dx), lambda b, i: (0, 0)),
        pl.BlockSpec((dx, dx), lambda b, i: (0, 0)),
        pl.BlockSpec((1, dx), lambda b, i: (0, 0)),
        pl.BlockSpec((4, dx), lambda b, i: (0, 0)),
        pl.BlockSpec((dx, dffX), lambda b, i: (0, 0)),
        pl.BlockSpec((1, dffX), lambda b, i: (0, 0)),
        pl.BlockSpec((dffX, dx), lambda b, i: (0, 0)),
        pl.BlockSpec((1, dx), lambda b, i: (0, 0)),
    ]
    return pl.pallas_call(
        functools.partial(_x_post_kernel, dx=dx, eps=eps),
        grid=grid, in_specs=in_specs,
        out_specs=pl.BlockSpec((1, tm, dx), lambda b, i: (b, i, 0)),
        out_shape=jax.ShapeDtypeStruct((bs, n, dx), jnp.float32),
        compiler_params=pltpu.CompilerParams(
            dimension_semantics=("parallel", "parallel"),
            vmem_limit_bytes=vmem_limit_bytes),
    )(X, wV, yx_cat, node_mask3, Wg_x, Wg_v, bg.reshape(1, -1),
      Wxo, bxo.reshape(1, -1), xln, WfX1, bfX1.reshape(1, -1),
      WfX2, bfX2.reshape(1, -1))


# ----------------------------------------------------------------------------
# E: fused y path: y_y + Xtoy + Etoy linears -> y_out MLP -> residuals -> LN/FFN/LN
# ----------------------------------------------------------------------------
def _y_block_kernel(y_ref, zx_ref, ze_ref,
                    wyy_ref, byy_ref, wxy_ref, bxy_ref, wey_ref, bey_ref,
                    w1_ref, b1_ref, w2_ref, b2_ref,
                    yln_ref, wfy1_ref, bfy1_ref, wfy2_ref, bfy2_ref,
                    o_ref, *, eps):
    y = y_ref[...]
    t = (jnp.dot(y, wyy_ref[...], preferred_element_type=jnp.float32) + byy_ref[...]
         + jnp.dot(zx_ref[...], wxy_ref[...], preferred_element_type=jnp.float32) + bxy_ref[...]
         + jnp.dot(ze_ref[...], wey_ref[...], preferred_element_type=jnp.float32) + bey_ref[...])
    h = jnp.maximum(jnp.dot(t, w1_ref[...], preferred_element_type=jnp.float32)
                    + b1_ref[...], 0.0)
    block_y = y + jnp.dot(h, w2_ref[...], preferred_element_type=jnp.float32) + b2_ref[...]

    g1 = yln_ref[0:1, :]; be1 = yln_ref[1:2, :]
    g2 = yln_ref[2:3, :]; be2 = yln_ref[3:4, :]
    v = y + block_y                                  # norm_y1(y + new_y)
    mu = jnp.mean(v, axis=-1, keepdims=True)
    d = v - mu
    var = jnp.mean(d * d, axis=-1, keepdims=True)
    y1 = d * jax.lax.rsqrt(var + eps) * g1 + be1
    hh = jnp.maximum(jnp.dot(y1, wfy1_ref[...], preferred_element_type=jnp.float32)
                     + bfy1_ref[...], 0.0)
    ff = jnp.dot(hh, wfy2_ref[...], preferred_element_type=jnp.float32) + bfy2_ref[...]
    v2 = y1 + ff
    mu2 = jnp.mean(v2, axis=-1, keepdims=True)
    d2 = v2 - mu2
    var2 = jnp.mean(d2 * d2, axis=-1, keepdims=True)
    o_ref[...] = d2 * jax.lax.rsqrt(var2 + eps) * g2 + be2


def y_block(y, zx, ze, params, *, eps=LN_EPS):
    yln = jnp.stack([params["norm_y1"][0], params["norm_y1"][1],
                     params["norm_y2"][0], params["norm_y2"][1]], axis=0)
    return pl.pallas_call(
        functools.partial(_y_block_kernel, eps=eps),
        out_shape=jax.ShapeDtypeStruct(y.shape, jnp.float32),
    )(y, zx, ze,
      params["y_y"][0], params["y_y"][1].reshape(1, -1),
      params["x_y"][0], params["x_y"][1].reshape(1, -1),
      params["e_y"][0], params["e_y"][1].reshape(1, -1),
      params["y_out1"][0], params["y_out1"][1].reshape(1, -1),
      params["y_out2"][0], params["y_out2"][1].reshape(1, -1),
      yln,
      params["lin_y1"][0], params["lin_y1"][1].reshape(1, -1),
      params["lin_y2"][0], params["lin_y2"][1].reshape(1, -1))


# ----------------------------------------------------------------------------
# Parameters (deterministic init, PyTorch Linear-style uniform; LayerNorm = ones/zeros)
# ----------------------------------------------------------------------------
def init_params(key, dx, de, dy, n_head, dim_ffX, dim_ffE, dim_ffy):
    keys = iter(jax.random.split(key, 64))

    def lin(d_in, d_out):
        k1, k2 = jax.random.split(next(keys))
        lim = 1.0 / math.sqrt(d_in)
        W = jax.random.uniform(k1, (d_in, d_out), jnp.float32, -lim, lim)
        b = jax.random.uniform(k2, (d_out,), jnp.float32, -lim, lim)
        return W, b

    spec = [
        ("q_s", dx, dx), ("k_s", dx, dx), ("v_s", dx, dx),
        ("q_t", dx, dx), ("k_t", dx, dx), ("v_t", dx, dx),
        ("y_e_mul", dy, dx), ("y_e_add", dy, dx),
        ("y_x_mul", dy, dx), ("y_x_add", dy, dx),
        ("e_mul_s", de, dx), ("e_add_s", de, dx),
        ("e_mul_t", de, dx), ("e_add_t", de, dx),
        ("y_y", dy, dy), ("x_y", 4 * dx, dy), ("e_y", 4 * de, dy),
        ("x_out", dx, dx), ("e_out", dx, de),
        ("y_out1", dy, dy), ("y_out2", dy, dy),
        ("gate_x", 2 * dx, dx),
        ("edge_gate", de, n_head), ("edge_gate_t", de, n_head),
        ("linX1", dx, dim_ffX), ("linX2", dim_ffX, dx),
        ("linE1", de, dim_ffE), ("linE2", dim_ffE, de),
        ("lin_y1", dy, dim_ffy), ("lin_y2", dim_ffy, dy),
    ]
    p = {name: lin(din, dout) for name, din, dout in spec}
    for name, d in [("normX1", dx), ("normX2", dx), ("normE1", de),
                    ("normE2", de), ("norm_y1", dy), ("norm_y2", dy)]:
        p[name] = (jnp.ones((d,), jnp.float32), jnp.zeros((d,), jnp.float32))
    return p


# ----------------------------------------------------------------------------
# Full forward pass
# ----------------------------------------------------------------------------
def xey_transformer_layer(params, X, E, y, node_mask, *, n_head, tq=None, tm_x=None,
                          vmem_limit_bytes=None):
    bs, n, dx = X.shape
    de = E.shape[-1]
    df = dx // n_head
    dffE = params["linE1"][0].shape[1]
    dffX = params["linX1"][0].shape[1]
    mask3 = node_mask.reshape(bs, n, 1)

    # ---- per-generation VMEM budget and tile sizes ----
    phys_vmem, cores = _tpu_defaults()
    if vmem_limit_bytes is None:
        # ~75% of physical VMEM: ~96 MiB on v5e/v6e (vs. 16/32 MiB scoped defaults),
        # ~48 MiB on v7x (64 MiB physical per TensorCore).
        vmem_limit_bytes = int(phys_vmem) * 3 // 4
    if tq is None:
        tq = _choose_edge_tile(n, dx, de, dffE, vmem_budget=vmem_limit_bytes,
                               bs=bs, cores=cores)
    if tm_x is None:
        tm_x = _choose_node_tile(n, dx, dffX, vmem_budget=vmem_limit_bytes,
                                 bs=bs, cores=cores)

    # ---- A: fused node projections (one (dx, 6*dx) masked matmul) ----
    proj_names = ("q_s", "k_s", "v_s", "q_t", "k_t", "v_t")
    W_qkv = jnp.concatenate([params[k][0] for k in proj_names], axis=1)
    b_qkv = jnp.concatenate([params[k][1] for k in proj_names], axis=0)
    qkv = masked_linear_rows(X.reshape(bs * n, dx), node_mask.reshape(bs * n, 1),
                             W_qkv, b_qkv,
                             vmem_limit_bytes=vmem_limit_bytes).reshape(bs, n, 6 * dx)
    Qs = qkv[..., 0 * dx:1 * dx]; Ks = qkv[..., 1 * dx:2 * dx]; Vs = qkv[..., 2 * dx:3 * dx]
    Qt = qkv[..., 3 * dx:4 * dx]; Kt = qkv[..., 4 * dx:5 * dx]; Vt = qkv[..., 5 * dx:6 * dx]

    # ---- B: fused y -> dx conditioning projections (one (dy, 4*dx) matmul) ----
    ymod_names = ("y_e_add", "y_e_mul", "y_x_add", "y_x_mul")
    W_ymod = jnp.concatenate([params[k][0] for k in ymod_names], axis=1)
    b_ymod = jnp.concatenate([params[k][1] for k in ymod_names], axis=0)
    ymod = linear_full(y, W_ymod, b_ymod)                       # (bs, 4*dx)
    ye_cat = ymod[:, 0:2 * dx].reshape(bs, 1, 2 * dx)           # [y_e_add | y_e_mul]
    yx_cat = ymod[:, 2 * dx:4 * dx].reshape(bs, 1, 2 * dx)      # [y_x_add | y_x_mul]

    # ---- fused edge-projection weights; gate expanded across heads on the (tiny) weight ----
    Ws_cat = jnp.concatenate(
        [params["e_mul_s"][0], params["e_add_s"][0],
         jnp.repeat(params["edge_gate"][0], df, axis=1)], axis=1)
    bs_cat = jnp.concatenate(
        [params["e_mul_s"][1], params["e_add_s"][1],
         jnp.repeat(params["edge_gate"][1], df, axis=0)], axis=0)
    Wt_cat = jnp.concatenate(
        [params["e_mul_t"][0], params["e_add_t"][0],
         jnp.repeat(params["edge_gate_t"][0], df, axis=1)], axis=1)
    bt_cat = jnp.concatenate(
        [params["e_mul_t"][1], params["e_add_t"][1],
         jnp.repeat(params["edge_gate_t"][1], df, axis=0)], axis=0)

    eln = jnp.stack([params["normE1"][0], params["normE1"][1],
                     params["normE2"][0], params["normE2"][1]], axis=0)
    xln = jnp.stack([params["normX1"][0], params["normX1"][1],
                     params["normX2"][0], params["normX2"][1]], axis=0)

    # ---- C: fused dual attention + edge output + E residual/LN/FFN/LN + Etoy stats ----
    E_out, wV, e_stats = dual_attention_edge(
        E, Qs, Qt, Ks, Kt, Vs, Vt, mask3, ye_cat,
        Ws_cat, bs_cat, Wt_cat, bt_cat,
        params["e_out"][0], params["e_out"][1],
        eln, params["linE1"][0], params["linE1"][1],
        params["linE2"][0], params["linE2"][1],
        n_head=n_head, tq=tq, vmem_limit_bytes=vmem_limit_bytes)

    # ---- D: fused X postprocess + X residual/LN/FFN/LN (node-tiled for megacore/VMEM) ----
    Wg = params["gate_x"][0]
    X_out = x_postprocess(X, wV, yx_cat, mask3,
                          Wg[:dx, :], Wg[dx:, :], params["gate_x"][1],
                          params["x_out"][0], params["x_out"][1],
                          xln, params["linX1"][0], params["linX1"][1],
                          params["linX2"][0], params["linX2"][1],
                          tm=tm_x, vmem_limit_bytes=vmem_limit_bytes)

    # ---- E: y path.  Etoy pooling comes from kernel C partials (no extra HBM pass over E). ----
    tot = float(n * n)
    esum = e_stats[:, :, 0, :].sum(axis=1)
    esq = e_stats[:, :, 1, :].sum(axis=1)
    emin = e_stats[:, :, 2, :].min(axis=1)
    emax = e_stats[:, :, 3, :].max(axis=1)
    emean = esum / tot
    evar = jnp.maximum(esq - tot * emean * emean, 0.0) / (tot - 1.0)   # torch.std (ddof=1)
    ze = jnp.concatenate([emean, emin, emax, jnp.sqrt(evar)], axis=-1)

    # TODO(synk): Xtoy pooling could also be folded into kernel D; X traffic is n-times smaller
    # than E so it is kept as plain-JAX glue.
    zx = jnp.concatenate([X.mean(axis=1), X.min(axis=1), X.max(axis=1),
                          jnp.std(X, axis=1, ddof=1)], axis=-1)
    y_out = y_block(y, zx, ze, params)

    return X_out, E_out, y_out


if __name__ == "__main__":
    bs, n = 2, 8
    dx, de, dy, n_head = 32, 16, 16, 4
    dim_ffX, dim_ffE, dim_ffy = 64, 32, 64

    key = jax.random.PRNGKey(0)
    kp, kx, ke, ky = jax.random.split(key, 4)
    params = init_params(kp, dx, de, dy, n_head, dim_ffX, dim_ffE, dim_ffy)

    X = jax.random.normal(kx, (bs, n, dx), jnp.float32)
    E = jax.random.normal(ke, (bs, n, n, de), jnp.float32)
    y = jax.random.normal(ky, (bs, dy), jnp.float32)
    node_mask = jnp.array([[1.0] * n, [1.0] * 6 + [0.0] * 2], jnp.float32)

    fwd = jax.jit(functools.partial(xey_transformer_layer, n_head=n_head))
    Xo, Eo, yo = fwd(params, X, E, y, node_mask)
    jax.block_until_ready((Xo, Eo, yo))

    assert Xo.shape == X.shape and Eo.shape == E.shape and yo.shape == y.shape
    assert bool(jnp.all(jnp.isfinite(Xo))) and bool(jnp.all(jnp.isfinite(Eo))) \
        and bool(jnp.all(jnp.isfinite(yo)))
    print("KERNEL_OK")
</pallas_src>

<mosaic_0001>
module attributes {stable_mosaic.version = 11 : i64} {
  func.func @_masked_linear_kernel(%arg0: i32, %arg1: memref<16x32xf32, #tpu.memory_space<vmem>>, %arg2: memref<16x1xf32, #tpu.memory_space<vmem>>, %arg3: memref<32x192xf32, #tpu.memory_space<vmem>>, %arg4: memref<1x192xf32, #tpu.memory_space<vmem>>, %arg5: memref<16x192xf32, #tpu.memory_space<vmem>>) attributes {dimension_semantics = [#tpu.dimension_semantics<parallel>], iteration_bounds = array<i64: 1>, scalar_prefetch = 0 : i64, scratch_operands = 0 : i64, tpu.core_type = #tpu.core_type<tc>, window_params = [{transform_indices = @transform_0, window_bounds = array<i64: 16, 32>}, {transform_indices = @transform_1, window_bounds = array<i64: 16, 1>}, {pipeline_mode = #tpu.pipeline_mode<synchronous>, transform_indices = @transform_2, window_bounds = array<i64: 32, 192>}, {pipeline_mode = #tpu.pipeline_mode<synchronous>, transform_indices = @transform_3, window_bounds = array<i64: 1, 192>}, {transform_indices = @transform_4, window_bounds = array<i64: 16, 192>}]} {
    %c0 = arith.constant 0 : index
    %c0_0 = arith.constant 0 : index
    %0 = vector.load %arg1[%c0, %c0_0] : memref<16x32xf32, #tpu.memory_space<vmem>>, vector<16x32xf32>
    %c0_1 = arith.constant 0 : index
    %c0_2 = arith.constant 0 : index
    %1 = vector.load %arg3[%c0_1, %c0_2] : memref<32x192xf32, #tpu.memory_space<vmem>>, vector<32x192xf32>
    %cst = arith.constant dense<0.000000e+00> : vector<16x192xf32>
    %2 = tpu.matmul %0, %1, %cst {dimension_numbers = #tpu.dot_dimension_numbers<[1], [0], [0], [1], [0, 0, 1, 1], [], []>} : vector<16x32xf32>, vector<32x192xf32>, vector<16x192xf32> -> vector<16x192xf32>
    %c0_3 = arith.constant 0 : index
    %c0_4 = arith.constant 0 : index
    %3 = vector.load %arg4[%c0_3, %c0_4] : memref<1x192xf32, #tpu.memory_space<vmem>>, vector<1x192xf32>
    %4 = vector.broadcast %3 : vector<1x192xf32> to vector<16x192xf32>
    %5 = arith.addf %2, %4 : vector<16x192xf32>
    %c0_5 = arith.constant 0 : index
    %c0_6 = arith.constant 0 : index
    %6 = vector.load %arg2[%c0_5, %c0_6] : memref<16x1xf32, #tpu.memory_space<vmem>>, vector<16x1xf32>
    %7 = vector.broadcast %6 : vector<16x1xf32> to vector<16x192xf32>
    %8 = arith.mulf %5, %7 : vector<16x192xf32>
    %c0_7 = arith.constant 0 : index
    %c0_8 = arith.constant 0 : index
    %9 = vector.load %arg5[%c0_7, %c0_8] : memref<16x192xf32, #tpu.memory_space<vmem>>, vector<16x192xf32>
    tpu.vector_store %arg5[%c0_7, %c0_8], %8 {strides = array<i32>} : memref<16x192xf32, #tpu.memory_space<vmem>>, vector<16x192xf32>,
    return
  }
  func.func @transform_0(%arg0: i32) -> (i32, i32) {
    %c0_i32 = arith.constant 0 : i32
    %c0_i32_0 = arith.constant 0 : i32
    return %arg0, %c0_i32 : i32, i32
  }
  func.func @transform_1(%arg0: i32) -> (i32, i32) {
    %c0_i32 = arith.constant 0 : i32
    %c0_i32_0 = arith.constant 0 : i32
    return %arg0, %c0_i32 : i32, i32
  }
  func.func @transform_2(%arg0: i32) -> (i32, i32) {
    %c0_i32 = arith.constant 0 : i32
    %c0_i32_0 = arith.constant 0 : i32
    %c0_i32_1 = arith.constant 0 : i32
    return %c0_i32, %c0_i32_0 : i32, i32
  }
  func.func @transform_3(%arg0: i32) -> (i32, i32) {
    %c0_i32 = arith.constant 0 : i32
    %c0_i32_0 = arith.constant 0 : i32
    %c0_i32_1 = arith.constant 0 : i32
    return %c0_i32, %c0_i32_0 : i32, i32
  }
  func.func @transform_4(%arg0: i32) -> (i32, i32) {
    %c0_i32 = arith.constant 0 : i32
    %c0_i32_0 = arith.constant 0 : i32
    return %arg0, %c0_i32 : i32, i32
  }
}

module attributes {stable_mosaic.version = 11 : i64} {
  func.func @_linear_kernel(%arg0: memref<2x16xf32, #tpu.memory_space<vmem>>, %arg1: memref<16x128xf32, #tpu.memory_space<vmem>>, %arg2: memref<1x128xf32, #tpu.memory_space<vmem>>, %arg3: memref<2x128xf32, #tpu.memory_space<vmem>>) attributes {dimension_semantics = [], scalar_prefetch = 0 : i64, scratch_operands = 0 : i64, tpu.core_type = #tpu.core_type<tc>} {
    %c0 = arith.constant 0 : index
    %c0_0 = arith.constant 0 : index
    %0 = vector.load %arg0[%c0, %c0_0] : memref<2x16xf32, #tpu.memory_space<vmem>>, vector<2x16xf32>
    %c0_1 = arith.constant 0 : index
    %c0_2 = arith.constant 0 : index
    %1 = vector.load %arg1[%c0_1, %c0_2] : memref<16x128xf32, #tpu.memory_space<vmem>>, vector<16x128xf32>
    %cst = arith.constant dense<0.000000e+00> : vector<2x128xf32>
    %2 = tpu.matmul %0, %1, %cst {dimension_numbers = #tpu.dot_dimension_numbers<[1], [0], [0], [1], [0, 0, 1, 1], [], []>} : vector<2x16xf32>, vector<16x128xf32>, vector<2x128xf32> -> vector<2x128xf32>
    %c0_3 = arith.constant 0 : index
    %c0_4 = arith.constant 0 : index
    %3 = vector.load %arg2[%c0_3, %c0_4] : memref<1x128xf32, #tpu.memory_space<vmem>>, vector<1x128xf32>
    %4 = vector.broadcast %3 : vector<1x128xf32> to vector<2x128xf32>
    %5 = arith.addf %2, %4 : vector<2x128xf32>
    %c0_5 = arith.constant 0 : index
    %c0_6 = arith.constant 0 : index
    %6 = vector.load %arg3[%c0_5, %c0_6] : memref<2x128xf32, #tpu.memory_space<vmem>>, vector<2x128xf32>
    tpu.vector_store %arg3[%c0_5, %c0_6], %5 {strides = array<i32>} : memref<2x128xf32, #tpu.memory_space<vmem>>, vector<2x128xf32>,
    return
  }
}

module attributes {stable_mosaic.version = 11 : i64} {
  func.func @_dual_attn_edge_kernel(%arg0: i32, %arg1: i32, %arg2: memref<1x8x8x16xf32, #tpu.memory_space<vmem>>, %arg3: memref<1x8x8x16xf32, #tpu.memory_space<vmem>>, %arg4: memref<1x8x32xf32, #tpu.memory_space<vmem>>, %arg5: memref<1x8x32xf32, #tpu.memory_space<vmem>>, %arg6: memref<1x8x32xf32, #tpu.memory_space<vmem>>, %arg7: memref<1x8x32xf32, #tpu.memory_space<vmem>>, %arg8: memref<1x8x32xf32, #tpu.memory_space<vmem>>, %arg9: memref<1x8x32xf32, #tpu.memory_space<vmem>>, %arg10: memref<1x8x1xf32, #tpu.memory_space<vmem>>, %arg11: memref<1x8x1xf32, #tpu.memory_space<vmem>>, %arg12: memref<1x1x64xf32, #tpu.memory_space<vmem>>, %arg13: memref<16x96xf32, #tpu.memory_space<vmem>>, %arg14: memref<1x96xf32, #tpu.memory_space<vmem>>, %arg15: memref<16x96xf32, #tpu.memory_space<vmem>>, %arg16: memref<1x96xf32, #tpu.memory_space<vmem>>, %arg17: memref<32x16xf32, #tpu.memory_space<vmem>>, %arg18: memref<1x16xf32, #tpu.memory_space<vmem>>, %arg19: memref<4x16xf32, #tpu.memory_space<vmem>>, %arg20: memref<16x32xf32, #tpu.memory_space<vmem>>, %arg21: memref<1x32xf32, #tpu.memory_space<vmem>>, %arg22: memref<32x16xf32, #tpu.memory_space<vmem>>, %arg23: memref<1x16xf32, #tpu.memory_space<vmem>>, %arg24: memref<1x8x8x16xf32, #tpu.memory_space<vmem>>, %arg25: memref<1x8x32xf32, #tpu.memory_space<vmem>>, %arg26: memref<1x1x4x16xf32, #tpu.memory_space<vmem>>) attributes {dimension_semantics = [#tpu.dimension_semantics<parallel>, #tpu.dimension_semantics<parallel>], iteration_bounds = array<i64: 2, 1>, scalar_prefetch = 0 : i64, scratch_operands = 0 : i64, tpu.core_type = #tpu.core_type<tc>, window_params = [{transform_indices = @transform_0, window_bounds = array<i64: 1, 8, 8, 16>}, {transform_indices = @transform_1, window_bounds = array<i64: 1, 8, 8, 16>}, {transform_indices = @transform_2, window_bounds = array<i64: 1, 8, 32>}, {transform_indices = @transform_3, window_bounds = array<i64: 1, 8, 32>}, {transform_indices = @transform_4, window_bounds = array<i64: 1, 8, 32>}, {transform_indices = @transform_5, window_bounds = array<i64: 1, 8, 32>}, {transform_indices = @transform_6, window_bounds = array<i64: 1, 8, 32>}, {transform_indices = @transform_7, window_bounds = array<i64: 1, 8, 32>}, {transform_indices = @transform_8, window_bounds = array<i64: 1, 8, 1>}, {transform_indices = @transform_9, window_bounds = array<i64: 1, 8, 1>}, {transform_indices = @transform_10, window_bounds = array<i64: 1, 1, 64>}, {pipeline_mode = #tpu.pipeline_mode<synchronous>, transform_indices = @transform_11, window_bounds = array<i64: 16, 96>}, {pipeline_mode = #tpu.pipeline_mode<synchronous>, transform_indices = @transform_12, window_bounds = array<i64: 1, 96>}, {pipeline_mode = #tpu.pipeline_mode<synchronous>, transform_indices = @transform_13, window_bounds = array<i64: 16, 96>}, {pipeline_mode = #tpu.pipeline_mode<synchronous>, transform_indices = @transform_14, window_bounds = array<i64: 1, 96>}, {pipeline_mode = #tpu.pipeline_mode<synchronous>, transform_indices = @transform_15, window_bounds = array<i64: 32, 16>}, {pipeline_mode = #tpu.pipeline_mode<synchronous>, transform_indices = @transform_16, window_bounds = array<i64: 1, 16>}, {pipeline_mode = #tpu.pipeline_mode<synchronous>, transform_indices = @transform_17, window_bounds = array<i64: 4, 16>}, {pipeline_mode = #tpu.pipeline_mode<synchronous>, transform_indices = @transform_18, window_bounds = array<i64: 16, 32>}, {pipeline_mode = #tpu.pipeline_mode<synchronous>, transform_indices = @transform_19, window_bounds = array<i64: 1, 32>}, {pipeline_mode = #tpu.pipeline_mode<synchronous>, transform_indices = @transform_20, window_bounds = array<i64: 32, 16>}, {pipeline_mode = #tpu.pipeline_mode<synchronous>, transform_indices = @transform_21, window_bounds = array<i64: 1, 16>}, {transform_indices = @transform_22, window_bounds = array<i64: 1, 8, 8, 16>}, {transform_indices = @transform_23, window_bounds = array<i64: 1, 8, 32>}, {transform_indices = @transform_24, window_bounds = array<i64: 1, 1, 4, 16>}]} {
    %c0 = arith.constant 0 : index
    %c0_0 = arith.constant 0 : index
    %c0_1 = arith.constant 0 : index
    %0 = vector.load %arg10[%c0, %c0_0, %c0_1] : memref<1x8x1xf32, #tpu.memory_space<vmem>>, vector<1x8x1xf32>
    %1 = vector.shape_cast %0 : vector<1x8x1xf32> to vector<8x1xf32>
    %c0_2 = arith.constant 0 : index
    %c0_3 = arith.constant 0 : index
    %c0_4 = arith.constant 0 : index
    %2 = vector.load %arg11[%c0_2, %c0_3, %c0_4] : memref<1x8x1xf32, #tpu.memory_space<vmem>>, vector<1x8x1xf32>
    %3 = vector.shape_cast %2 : vector<1x8x1xf32> to vector<8x1xf32>
    %4 = vector.shape_cast %1 : vector<8x1xf32> to vector<8x1x1xf32>
    %5 = vector.shape_cast %3 : vector<8x1xf32> to vector<1x8x1xf32>
    %6 = vector.broadcast %4 : vector<8x1x1xf32> to vector<8x8x1xf32>
    %7 = vector.broadcast %5 : vector<1x8x1xf32> to vector<8x8x1xf32>
    %8 = arith.mulf %6, %7 : vector<8x8x1xf32>
    %9 = vector.shape_cast %3 : vector<8x1xf32> to vector<8x1x1xf32>
    %10 = vector.shape_cast %1 : vector<8x1xf32> to vector<1x8x1xf32>
    %11 = vector.broadcast %9 : vector<8x1x1xf32> to vector<8x8x1xf32>
    %12 = vector.broadcast %10 : vector<1x8x1xf32> to vector<8x8x1xf32>
    %13 = arith.mulf %11, %12 : vector<8x8x1xf32>
    %c0_5 = arith.constant 0 : index
    %c0_6 = arith.constant 0 : index
    %c0_7 = arith.constant 0 : index
    %c0_8 = arith.constant 0 : index
    %14 = vector.load %arg2[%c0_5, %c0_6, %c0_7, %c0_8] : memref<1x8x8x16xf32, #tpu.memory_space<vmem>>, vector<1x8x8x16xf32>
    %15 = vector.shape_cast %14 : vector<1x8x8x16xf32> to vector<8x8x16xf32>
    %c0_9 = arith.constant 0 : index
    %c0_10 = arith.constant 0 : index
    %c0_11 = arith.constant 0 : index
    %c0_12 = arith.constant 0 : index
    %16 = vector.load %arg3[%c0_9, %c0_10, %c0_11, %c0_12] : memref<1x8x8x16xf32, #tpu.memory_space<vmem>>, vector<1x8x8x16xf32>
    %17 = vector.shape_cast %16 : vector<1x8x8x16xf32> to vector<8x8x16xf32>
    %18 = vector.shape_cast %15 : vector<8x8x16xf32> to vector<64x16xf32>
    %cst = arith.constant dense<0.000000e+00> : vector<16xf32>
    %19 = vector.multi_reduction <add>, %18, %cst [0] : vector<64x16xf32> to vector<16xf32>
    %20 = vector.shape_cast %19 : vector<16xf32> to vector<1x16xf32>
    %21 = arith.mulf %18, %18 : vector<64x16xf32>
    %cst_13 = arith.constant dense<0.000000e+00> : vector<16xf32>
    %22 = vector.multi_reduction <add>, %21, %cst_13 [0] : vector<64x16xf32> to vector<16xf32>
    %23 = vector.shape_cast %22 : vector<16xf32> to vector<1x16xf32>
    %cst_14 = arith.constant dense<0x7F800000> : vector<16xf32>
    %24 = vector.multi_reduction <minimumf>, %18, %cst_14 [0] : vector<64x16xf32> to vector<16xf32>
    %25 = vector.shape_cast %24 : vector<16xf32> to vector<1x16xf32>
    %cst_15 = arith.constant dense<0xFF800000> : vector<16xf32>
    %26 = vector.multi_reduction <maximumf>, %18, %cst_15 [0] : vector<64x16xf32> to vector<16xf32>
    %27 = vector.shape_cast %26 : vector<16xf32> to vector<1x16xf32>
    %28 = tpu.concatenate %20, %23, %25, %27 in 0 : vector<1x16xf32>, vector<1x16xf32>, vector<1x16xf32>, vector<1x16xf32> -> vector<4x16xf32>
    %c0_16 = arith.constant 0 : index
    %c0_17 = arith.constant 0 : index
    %c0_18 = arith.constant 0 : index
    %c0_19 = arith.constant 0 : index
    %29 = vector.load %arg26[%c0_16, %c0_17, %c0_18, %c0_19] : memref<1x1x4x16xf32, #tpu.memory_space<vmem>>, vector<1x1x4x16xf32>
    %30 = vector.shape_cast %29 : vector<1x1x4x16xf32> to vector<4x16xf32>
    %31 = vector.shape_cast %28 : vector<4x16xf32> to vector<1x1x4x16xf32>
    tpu.vector_store %arg26[%c0_16, %c0_17, %c0_18, %c0_19], %31 {strides = array<i32>} : memref<1x1x4x16xf32, #tpu.memory_space<vmem>>, vector<1x1x4x16xf32>,
    %c0_20 = arith.constant 0 : index
    %c0_21 = arith.constant 0 : index
    %32 = vector.load %arg13[%c0_20, %c0_21] : memref<16x96xf32, #tpu.memory_space<vmem>>, vector<16x96xf32>
    %cst_22 = arith.constant dense<0.000000e+00> : vector<64x96xf32>
    %33 = tpu.matmul %18, %32, %cst_22 {dimension_numbers = #tpu.dot_dimension_numbers<[1], [0], [0], [1], [0, 0, 1, 1], [], []>} : vector<64x16xf32>, vector<16x96xf32>, vector<64x96xf32> -> vector<64x96xf32>
    %c0_23 = arith.constant 0 : index
    %c0_24 = arith.constant 0 : index
    %34 = vector.load %arg14[%c0_23, %c0_24] : memref<1x96xf32, #tpu.memory_space<vmem>>, vector<1x96xf32>
    %35 = vector.broadcast %34 : vector<1x96xf32> to vector<64x96xf32>
    %36 = arith.addf %33, %35 : vector<64x96xf32>
    %37 = vector.shape_cast %36 : vector<64x96xf32> to vector<8x8x96xf32>
    %38 = vector.shape_cast %17 : vector<8x8x16xf32> to vector<64x16xf32>
    %c0_25 = arith.constant 0 : index
    %c0_26 = arith.constant 0 : index
    %39 = vector.load %arg15[%c0_25, %c0_26] : memref<16x96xf32, #tpu.memory_space<vmem>>, vector<16x96xf32>
    %cst_27 = arith.constant dense<0.000000e+00> : vector<64x96xf32>
    %40 = tpu.matmul %38, %39, %cst_27 {dimension_numbers = #tpu.dot_dimension_numbers<[1], [0], [0], [1], [0, 0, 1, 1], [], []>} : vector<64x16xf32>, vector<16x96xf32>, vector<64x96xf32> -> vector<64x96xf32>
    %c0_28 = arith.constant 0 : index
    %c0_29 = arith.constant 0 : index
    %41 = vector.load %arg16[%c0_28, %c0_29] : memref<1x96xf32, #tpu.memory_space<vmem>>, vector<1x96xf32>
    %42 = vector.broadcast %41 : vector<1x96xf32> to vector<64x96xf32>
    %43 = arith.addf %40, %42 : vector<64x96xf32>
    %44 = vector.shape_cast %43 : vector<64x96xf32> to vector<8x8x96xf32>
    %45 = vector.extract_strided_slice %37 {offsets = [0, 0, 0], sizes = [8, 8, 32], strides = [1, 1, 1]} : vector<8x8x96xf32> to vector<8x8x32xf32>
    %46 = vector.broadcast %8 : vector<8x8x1xf32> to vector<8x8x32xf32>
    %47 = arith.mulf %45, %46 : vector<8x8x32xf32>
    %48 = vector.extract_strided_slice %37 {offsets = [0, 0, 32], sizes = [8, 8, 32], strides = [1, 1, 1]} : vector<8x8x96xf32> to vector<8x8x32xf32>
    %49 = vector.broadcast %8 : vector<8x8x1xf32> to vector<8x8x32xf32>
    %50 = arith.mulf %48, %49 : vector<8x8x32xf32>
    %51 = vector.extract_strided_slice %37 {offsets = [0, 0, 64], sizes = [8, 8, 32], strides = [1, 1, 1]} : vector<8x8x96xf32> to vector<8x8x32xf32>
    %52 = arith.negf %51 : vector<8x8x32xf32>
    %53 = math.exp %52 : vector<8x8x32xf32>
    %cst_30 = arith.constant 1.000000e+00 : f32
    %54 = vector.broadcast %cst_30 : f32 to vector<8x8x32xf32>
    %55 = arith.addf %54, %53 : vector<8x8x32xf32>
    %56 = arith.divf %54, %55 : vector<8x8x32xf32>
    %57 = vector.extract_strided_slice %44 {offsets = [0, 0, 0], sizes = [8, 8, 32], strides = [1, 1, 1]} : vector<8x8x96xf32> to vector<8x8x32xf32>
    %58 = vector.broadcast %13 : vector<8x8x1xf32> to vector<8x8x32xf32>
    %59 = arith.mulf %57, %58 : vector<8x8x32xf32>
    %60 = vector.extract_strided_slice %44 {offsets = [0, 0, 32], sizes = [8, 8, 32], strides = [1, 1, 1]} : vector<8x8x96xf32> to vector<8x8x32xf32>
    %61 = vector.broadcast %13 : vector<8x8x1xf32> to vector<8x8x32xf32>
    %62 = arith.mulf %60, %61 : vector<8x8x32xf32>
    %63 = vector.extract_strided_slice %44 {offsets = [0, 0, 64], sizes = [8, 8, 32], strides = [1, 1, 1]} : vector<8x8x96xf32> to vector<8x8x32xf32>
    %64 = arith.negf %63 : vector<8x8x32xf32>
    %65 = math.exp %64 : vector<8x8x32xf32>
    %cst_31 = arith.constant 1.000000e+00 : f32
    %66 = vector.broadcast %cst_31 : f32 to vector<8x8x32xf32>
    %67 = arith.addf %66, %65 : vector<8x8x32xf32>
    %68 = arith.divf %66, %67 : vector<8x8x32xf32>
    %c0_32 = arith.constant 0 : index
    %c0_33 = arith.constant 0 : index
    %c0_34 = arith.constant 0 : index
    %69 = vector.load %arg4[%c0_32, %c0_33, %c0_34] : memref<1x8x32xf32, #tpu.memory_space<vmem>>, vector<1x8x32xf32>
    %70 = vector.shape_cast %69 : vector<1x8x32xf32> to vector<8x32xf32>
    %cst_35 = arith.constant 0.353553385 : f32
    %71 = vector.broadcast %cst_35 : f32 to vector<8x32xf32>
    %72 = arith.mulf %70, %71 : vector<8x32xf32>
    %c0_36 = arith.constant 0 : index
    %c0_37 = arith.constant 0 : index
    %c0_38 = arith.constant 0 : index
    %73 = vector.load %arg5[%c0_36, %c0_37, %c0_38] : memref<1x8x32xf32, #tpu.memory_space<vmem>>, vector<1x8x32xf32>
    %74 = vector.shape_cast %73 : vector<1x8x32xf32> to vector<8x32xf32>
    %cst_39 = arith.constant 0.353553385 : f32
    %75 = vector.broadcast %cst_39 : f32 to vector<8x32xf32>
    %76 = arith.mulf %74, %75 : vector<8x32xf32>
    %c0_40 = arith.constant 0 : index
    %c0_41 = arith.constant 0 : index
    %c0_42 = arith.constant 0 : index
    %77 = vector.load %arg6[%c0_40, %c0_41, %c0_42] : memref<1x8x32xf32, #tpu.memory_space<vmem>>, vector<1x8x32xf32>
    %78 = vector.shape_cast %77 : vector<1x8x32xf32> to vector<8x32xf32>
    %c0_43 = arith.constant 0 : index
    %c0_44 = arith.constant 0 : index
    %c0_45 = arith.constant 0 : index
    %79 = vector.load %arg7[%c0_43, %c0_44, %c0_45] : memref<1x8x32xf32, #tpu.memory_space<vmem>>, vector<1x8x32xf32>
    %80 = vector.shape_cast %79 : vector<1x8x32xf32> to vector<8x32xf32>
    %c0_46 = arith.constant 0 : index
    %c0_47 = arith.constant 0 : index
    %c0_48 = arith.constant 0 : index
    %81 = vector.load %arg8[%c0_46, %c0_47, %c0_48] : memref<1x8x32xf32, #tpu.memory_space<vmem>>, vector<1x8x32xf32>
    %82 = vector.shape_cast %81 : vector<1x8x32xf32> to vector<8x32xf32>
    %c0_49 = arith.constant 0 : index
    %c0_50 = arith.constant 0 : index
    %c0_51 = arith.constant 0 : index
    %83 = vector.load %arg9[%c0_49, %c0_50, %c0_51] : memref<1x8x32xf32, #tpu.memory_space<vmem>>, vector<1x8x32xf32>
    %84 = vector.shape_cast %83 : vector<1x8x32xf32> to vector<8x32xf32>
    %cst_52 = arith.constant 1.000000e+00 : f32
    %85 = vector.broadcast %cst_52 : f32 to vector<8x8x32xf32>
    %86 = arith.addf %47, %85 : vector<8x8x32xf32>
    %87 = vector.shape_cast %72 : vector<8x32xf32> to vector<8x1x32xf32>
    %88 = vector.shape_cast %80 : vector<8x32xf32> to vector<1x8x32xf32>
    %89 = vector.broadcast %87 : vector<8x1x32xf32> to vector<8x8x32xf32>
    %90 = vector.broadcast %88 : vector<1x8x32xf32> to vector<8x8x32xf32>
    %91 = arith.mulf %89, %90 : vector<8x8x32xf32>
    %92 = arith.mulf %91, %86 : vector<8x8x32xf32>
    %93 = arith.addf %92, %50 : vector<8x8x32xf32>
    %94 = arith.mulf %56, %86 : vector<8x8x32xf32>
    %95 = arith.mulf %93, %94 : vector<8x8x32xf32>
    %96 = arith.addf %95, %50 : vector<8x8x32xf32>
    %cst_53 = arith.constant 1.000000e+00 : f32
    %97 = vector.broadcast %cst_53 : f32 to vector<8x8x32xf32>
    %98 = arith.addf %59, %97 : vector<8x8x32xf32>
    %99 = vector.shape_cast %78 : vector<8x32xf32> to vector<8x1x32xf32>
    %100 = vector.shape_cast %76 : vector<8x32xf32> to vector<1x8x32xf32>
    %101 = vector.broadcast %99 : vector<8x1x32xf32> to vector<8x8x32xf32>
    %102 = vector.broadcast %100 : vector<1x8x32xf32> to vector<8x8x32xf32>
    %103 = arith.mulf %101, %102 : vector<8x8x32xf32>
    %104 = arith.mulf %103, %98 : vector<8x8x32xf32>
    %105 = arith.addf %104, %62 : vector<8x8x32xf32>
    %106 = arith.mulf %68, %98 : vector<8x8x32xf32>
    %107 = arith.mulf %105, %106 : vector<8x8x32xf32>
    %108 = arith.addf %107, %62 : vector<8x8x32xf32>
    %109 = vector.shape_cast %3 : vector<8x1xf32> to vector<1x8x1xf32>
    %cst_54 = arith.constant 0.000000e+00 : f32
    %110 = vector.broadcast %cst_54 : f32 to vector<1x8x1xf32>
    %111 = arith.cmpf ogt, %109, %110 : vector<1x8x1xf32>
    %cst_55 = arith.constant -1.000000e+30 : f32
    %112 = vector.shape_cast %111 : vector<1x8x1xi1> to vector<1x8x1xi1>
    %113 = vector.broadcast %112 : vector<1x8x1xi1> to vector<8x8x32xi1>
    %114 = vector.broadcast %cst_55 : f32 to vector<8x8x32xf32>
    %115 = arith.select %113, %96, %114 : vector<8x8x32xi1>, vector<8x8x32xf32>
    %116 = vector.shape_cast %3 : vector<8x1xf32> to vector<8x1x1xf32>
    %cst_56 = arith.constant 0.000000e+00 : f32
    %117 = vector.broadcast %cst_56 : f32 to vector<8x1x1xf32>
    %118 = arith.cmpf ogt, %116, %117 : vector<8x1x1xf32>
    %cst_57 = arith.constant -1.000000e+30 : f32
    %119 = vector.shape_cast %118 : vector<8x1x1xi1> to vector<8x1x1xi1>
    %120 = vector.broadcast %119 : vector<8x1x1xi1> to vector<8x8x32xi1>
    %121 = vector.broadcast %cst_57 : f32 to vector<8x8x32xf32>
    %122 = arith.select %120, %108, %121 : vector<8x8x32xi1>, vector<8x8x32xf32>
    %cst_58 = arith.constant dense<0xFF800000> : vector<8x32xf32>
    %123 = vector.multi_reduction <maximumf>, %115, %cst_58 [1] : vector<8x8x32xf32> to vector<8x32xf32>
    %cst_59 = arith.constant dense<0xFF800000> : vector<8x32xf32>
    %124 = vector.multi_reduction <maximumf>, %122, %cst_59 [0] : vector<8x8x32xf32> to vector<8x32xf32>
    %125 = arith.maximumf %123, %124 : vector<8x32xf32>
    %126 = vector.shape_cast %125 : vector<8x32xf32> to vector<8x1x32xf32>
    %127 = vector.broadcast %126 : vector<8x1x32xf32> to vector<8x8x32xf32>
    %128 = arith.subf %115, %127 : vector<8x8x32xf32>
    %129 = math.exp %128 : vector<8x8x32xf32>
    %130 = vector.shape_cast %125 : vector<8x32xf32> to vector<1x8x32xf32>
    %131 = vector.broadcast %130 : vector<1x8x32xf32> to vector<8x8x32xf32>
    %132 = arith.subf %122, %131 : vector<8x8x32xf32>
    %133 = math.exp %132 : vector<8x8x32xf32>
    %cst_60 = arith.constant dense<0.000000e+00> : vector<8x32xf32>
    %134 = vector.multi_reduction <add>, %129, %cst_60 [1] : vector<8x8x32xf32> to vector<8x32xf32>
    %cst_61 = arith.constant dense<0.000000e+00> : vector<8x32xf32>
    %135 = vector.multi_reduction <add>, %133, %cst_61 [0] : vector<8x8x32xf32> to vector<8x32xf32>
    %136 = arith.addf %134, %135 : vector<8x32xf32>
    %137 = vector.shape_cast %84 : vector<8x32xf32> to vector<1x8x32xf32>
    %138 = vector.broadcast %137 : vector<1x8x32xf32> to vector<8x8x32xf32>
    %139 = arith.mulf %129, %138 : vector<8x8x32xf32>
    %cst_62 = arith.constant dense<0.000000e+00> : vector<8x32xf32>
    %140 = vector.multi_reduction <add>, %139, %cst_62 [1] : vector<8x8x32xf32> to vector<8x32xf32>
    %141 = vector.shape_cast %82 : vector<8x32xf32> to vector<8x1x32xf32>
    %142 = vector.broadcast %141 : vector<8x1x32xf32> to vector<8x8x32xf32>
    %143 = arith.mulf %133, %142 : vector<8x8x32xf32>
    %cst_63 = arith.constant dense<0.000000e+00> : vector<8x32xf32>
    %144 = vector.multi_reduction <add>, %143, %cst_63 [0] : vector<8x8x32xf32> to vector<8x32xf32>
    %145 = arith.addf %140, %144 : vector<8x32xf32>
    %cst_64 = arith.constant 0.000000e+00 : f32
    %146 = vector.broadcast %cst_64 : f32 to vector<8x32xf32>
    %147 = arith.cmpf ogt, %136, %146 : vector<8x32xf32>
    %148 = arith.divf %145, %136 : vector<8x32xf32>
    %cst_65 = arith.constant 0.000000e+00 : f32
    %149 = vector.broadcast %cst_65 : f32 to vector<8x32xf32>
    %150 = arith.select %147, %148, %149 : vector<8x32xi1>, vector<8x32xf32>
    %c0_66 = arith.constant 0 : index
    %c0_67 = arith.constant 0 : index
    %c0_68 = arith.constant 0 : index
    %151 = vector.load %arg25[%c0_66, %c0_67, %c0_68] : memref<1x8x32xf32, #tpu.memory_space<vmem>>, vector<1x8x32xf32>
    %152 = vector.shape_cast %151 : vector<1x8x32xf32> to vector<8x32xf32>
    %153 = vector.shape_cast %150 : vector<8x32xf32> to vector<1x8x32xf32>
    tpu.vector_store %arg25[%c0_66, %c0_67, %c0_68], %153 {strides = array<i32>} : memref<1x8x32xf32, #tpu.memory_space<vmem>>, vector<1x8x32xf32>,
    %c0_69 = arith.constant 0 : index
    %c0_70 = arith.constant 0 : index
    %c0_71 = arith.constant 0 : index
    %154 = vector.load %arg12[%c0_69, %c0_70, %c0_71] : memref<1x1x64xf32, #tpu.memory_space<vmem>>, vector<1x1x64xf32>
    %155 = vector.shape_cast %154 : vector<1x1x64xf32> to vector<1x64xf32>
    %156 = vector.extract_strided_slice %155 {offsets = [0, 0], sizes = [1, 32], strides = [1, 1]} : vector<1x64xf32> to vector<1x32xf32>
    %157 = vector.shape_cast %156 : vector<1x32xf32> to vector<1x1x32xf32>
    %158 = vector.extract_strided_slice %155 {offsets = [0, 32], sizes = [1, 32], strides = [1, 1]} : vector<1x64xf32> to vector<1x32xf32>
    %159 = vector.shape_cast %158 : vector<1x32xf32> to vector<1x1x32xf32>
    %cst_72 = arith.constant 1.000000e+00 : f32
    %160 = vector.broadcast %cst_72 : f32 to vector<1x1x32xf32>
    %161 = arith.addf %159, %160 : vector<1x1x32xf32>
    %162 = vector.broadcast %161 : vector<1x1x32xf32> to vector<8x8x32xf32>
    %163 = arith.mulf %162, %96 : vector<8x8x32xf32>
    %164 = vector.broadcast %157 : vector<1x1x32xf32> to vector<8x8x32xf32>
    %165 = arith.addf %164, %163 : vector<8x8x32xf32>
    %166 = vector.shape_cast %165 : vector<8x8x32xf32> to vector<64x32xf32>
    %c0_73 = arith.constant 0 : index
    %c0_74 = arith.constant 0 : index
    %167 = vector.load %arg17[%c0_73, %c0_74] : memref<32x16xf32, #tpu.memory_space<vmem>>, vector<32x16xf32>
    %cst_75 = arith.constant dense<0.000000e+00> : vector<64x16xf32>
    %168 = tpu.matmul %166, %167, %cst_75 {dimension_numbers = #tpu.dot_dimension_numbers<[1], [0], [0], [1], [0, 0, 1, 1], [], []>} : vector<64x32xf32>, vector<32x16xf32>, vector<64x16xf32> -> vector<64x16xf32>
    %c0_76 = arith.constant 0 : index
    %c0_77 = arith.constant 0 : index
    %169 = vector.load %arg18[%c0_76, %c0_77] : memref<1x16xf32, #tpu.memory_space<vmem>>, vector<1x16xf32>
    %170 = vector.broadcast %169 : vector<1x16xf32> to vector<64x16xf32>
    %171 = arith.addf %168, %170 : vector<64x16xf32>
    %172 = vector.shape_cast %171 : vector<64x16xf32> to vector<8x8x16xf32>
    %173 = vector.broadcast %8 : vector<8x8x1xf32> to vector<8x8x16xf32>
    %174 = arith.mulf %172, %173 : vector<8x8x16xf32>
    %175 = arith.addf %15, %174 : vector<8x8x16xf32>
    %176 = vector.broadcast %8 : vector<8x8x1xf32> to vector<8x8x16xf32>
    %177 = arith.mulf %175, %176 : vector<8x8x16xf32>
    %c0_78 = arith.constant 0 : index
    %c0_79 = arith.constant 0 : index
    %178 = vector.load %arg19[%c0_78, %c0_79] : memref<4x16xf32, #tpu.memory_space<vmem>>, vector<1x16xf32>
    %c1 = arith.constant 1 : index
    %c0_80 = arith.constant 0 : index
    %179 = vector.load %arg19[%c1, %c0_80] : memref<4x16xf32, #tpu.memory_space<vmem>>, vector<1x16xf32>
    %c2 = arith.constant 2 : index
    %c0_81 = arith.constant 0 : index
    %180 = vector.load %arg19[%c2, %c0_81] : memref<4x16xf32, #tpu.memory_space<vmem>>, vector<1x16xf32>
    %c3 = arith.constant 3 : index
    %c0_82 = arith.constant 0 : index
    %181 = vector.load %arg19[%c3, %c0_82] : memref<4x16xf32, #tpu.memory_space<vmem>>, vector<1x16xf32>
    %182 = arith.addf %15, %177 : vector<8x8x16xf32>
    %183 = vector.shape_cast %182 : vector<8x8x16xf32> to vector<64x16xf32>
    %cst_83 = arith.constant dense<0.000000e+00> : vector<64xf32>
    %184 = vector.multi_reduction <add>, %183, %cst_83 [1] : vector<64x16xf32> to vector<64xf32>
    %185 = vector.shape_cast %184 : vector<64xf32> to vector<64x1xf32>
    %cst_84 = arith.constant 1.600000e+01 : f32
    %186 = vector.broadcast %cst_84 : f32 to vector<64x1xf32>
    %187 = arith.divf %185, %186 : vector<64x1xf32>
    %188 = vector.broadcast %187 : vector<64x1xf32> to vector<64x16xf32>
    %189 = arith.subf %183, %188 : vector<64x16xf32>
    %190 = arith.mulf %189, %189 : vector<64x16xf32>
    %cst_85 = arith.constant dense<0.000000e+00> : vector<64xf32>
    %191 = vector.multi_reduction <add>, %190, %cst_85 [1] : vector<64x16xf32> to vector<64xf32>
    %192 = vector.shape_cast %191 : vector<64xf32> to vector<64x1xf32>
    %cst_86 = arith.constant 1.600000e+01 : f32
    %193 = vector.broadcast %cst_86 : f32 to vector<64x1xf32>
    %194 = arith.divf %192, %193 : vector<64x1xf32>
    %cst_87 = arith.constant 9.99999974E-6 : f32
    %195 = vector.broadcast %cst_87 : f32 to vector<64x1xf32>
    %196 = arith.addf %194, %195 : vector<64x1xf32>
    %197 = math.rsqrt %196 : vector<64x1xf32>
    %198 = vector.broadcast %197 : vector<64x1xf32> to vector<64x16xf32>
    %199 = arith.mulf %189, %198 : vector<64x16xf32>
    %200 = vector.broadcast %178 : vector<1x16xf32> to vector<64x16xf32>
    %201 = arith.mulf %199, %200 : vector<64x16xf32>
    %202 = vector.broadcast %179 : vector<1x16xf32> to vector<64x16xf32>
    %203 = arith.addf %201, %202 : vector<64x16xf32>
    %c0_88 = arith.constant 0 : index
    %c0_89 = arith.constant 0 : index
    %204 = vector.load %arg20[%c0_88, %c0_89] : memref<16x32xf32, #tpu.memory_space<vmem>>, vector<16x32xf32>
    %cst_90 = arith.constant dense<0.000000e+00> : vector<64x32xf32>
    %205 = tpu.matmul %203, %204, %cst_90 {dimension_numbers = #tpu.dot_dimension_numbers<[1], [0], [0], [1], [0, 0, 1, 1], [], []>} : vector<64x16xf32>, vector<16x32xf32>, vector<64x32xf32> -> vector<64x32xf32>
    %c0_91 = arith.constant 0 : index
    %c0_92 = arith.constant 0 : index
    %206 = vector.load %arg21[%c0_91, %c0_92] : memref<1x32xf32, #tpu.memory_space<vmem>>, vector<1x32xf32>
    %207 = vector.broadcast %206 : vector<1x32xf32> to vector<64x32xf32>
    %208 = arith.addf %205, %207 : vector<64x32xf32>
    %cst_93 = arith.constant 0.000000e+00 : f32
    %209 = vector.broadcast %cst_93 : f32 to vector<64x32xf32>
    %210 = arith.maximumf %208, %209 : vector<64x32xf32>
    %c0_94 = arith.constant 0 : index
    %c0_95 = arith.constant 0 : index
    %211 = vector.load %arg22[%c0_94, %c0_95] : memref<32x16xf32, #tpu.memory_space<vmem>>, vector<32x16xf32>
    %cst_96 = arith.constant dense<0.000000e+00> : vector<64x16xf32>
    %212 = tpu.matmul %210, %211, %cst_96 {dimension_numbers = #tpu.dot_dimension_numbers<[1], [0], [0], [1], [0, 0, 1, 1], [], []>} : vector<64x32xf32>, vector<32x16xf32>, vector<64x16xf32> -> vector<64x16xf32>
    %c0_97 = arith.constant 0 : index
    %c0_98 = arith.constant 0 : index
    %213 = vector.load %arg23[%c0_97, %c0_98] : memref<1x16xf32, #tpu.memory_space<vmem>>, vector<1x16xf32>
    %214 = vector.broadcast %213 : vector<1x16xf32> to vector<64x16xf32>
    %215 = arith.addf %212, %214 : vector<64x16xf32>
    %216 = arith.addf %203, %215 : vector<64x16xf32>
    %cst_99 = arith.constant dense<0.000000e+00> : vector<64xf32>
    %217 = vector.multi_reduction <add>, %216, %cst_99 [1] : vector<64x16xf32> to vector<64xf32>
    %218 = vector.shape_cast %217 : vector<64xf32> to vector<64x1xf32>
    %cst_100 = arith.constant 1.600000e+01 : f32
    %219 = vector.broadcast %cst_100 : f32 to vector<64x1xf32>
    %220 = arith.divf %218, %219 : vector<64x1xf32>
    %221 = vector.broadcast %220 : vector<64x1xf32> to vector<64x16xf32>
    %222 = arith.subf %216, %221 : vector<64x16xf32>
    %223 = arith.mulf %222, %222 : vector<64x16xf32>
    %cst_101 = arith.constant dense<0.000000e+00> : vector<64xf32>
    %224 = vector.multi_reduction <add>, %223, %cst_101 [1] : vector<64x16xf32> to vector<64xf32>
    %225 = vector.shape_cast %224 : vector<64xf32> to vector<64x1xf32>
    %cst_102 = arith.constant 1.600000e+01 : f32
    %226 = vector.broadcast %cst_102 : f32 to vector<64x1xf32>
    %227 = arith.divf %225, %226 : vector<64x1xf32>
    %cst_103 = arith.constant 9.99999974E-6 : f32
    %228 = vector.broadcast %cst_103 : f32 to vector<64x1xf32>
    %229 = arith.addf %227, %228 : vector<64x1xf32>
    %230 = math.rsqrt %229 : vector<64x1xf32>
    %231 = vector.broadcast %230 : vector<64x1xf32> to vector<64x16xf32>
    %232 = arith.mulf %222, %231 : vector<64x16xf32>
    %233 = vector.broadcast %180 : vector<1x16xf32> to vector<64x16xf32>
    %234 = arith.mulf %232, %233 : vector<64x16xf32>
    %235 = vector.broadcast %181 : vector<1x16xf32> to vector<64x16xf32>
    %236 = arith.addf %234, %235 : vector<64x16xf32>
    %237 = vector.shape_cast %236 : vector<64x16xf32> to vector<8x8x16xf32>
    %c0_104 = arith.constant 0 : index
    %c0_105 = arith.constant 0 : index
    %c0_106 = arith.constant 0 : index
    %c0_107 = arith.constant 0 : index
    %238 = vector.load %arg24[%c0_104, %c0_105, %c0_106, %c0_107] : memref<1x8x8x16xf32, #tpu.memory_space<vmem>>, vector<1x8x8x16xf32>
    %239 = vector.shape_cast %238 : vector<1x8x8x16xf32> to vector<8x8x16xf32>
    %240 = vector.shape_cast %237 : vector<8x8x16xf32> to vector<1x8x8x16xf32>
    tpu.vector_store %arg24[%c0_104, %c0_105, %c0_106, %c0_107], %240 {strides = array<i32>} : memref<1x8x8x16xf32, #tpu.memory_space<vmem>>, vector<1x8x8x16xf32>,
    return
  }
  func.func @transform_0(%arg0: i32, %arg1: i32) -> (i32, i32, i32, i32) {
    %c0_i32 = arith.constant 0 : i32
    %c0_i32_0 = arith.constant 0 : i32
    %c0_i32_1 = arith.constant 0 : i32
    return %arg0, %arg1, %c0_i32, %c0_i32_0 : i32, i32, i32, i32
  }
  func.func @transform_1(%arg0: i32, %arg1: i32) -> (i32, i32, i32, i32) {
    %c0_i32 = arith.constant 0 : i32
    %c0_i32_0 = arith.constant 0 : i32
    %c0_i32_1 = arith.constant 0 : i32
    return %arg0, %c0_i32, %arg1, %c0_i32_0 : i32, i32, i32, i32
  }
  func.func @transform_2(%arg0: i32, %arg1: i32) -> (i32, i32, i32) {
    %c0_i32 = arith.constant 0 : i32
    %c0_i32_0 = arith.constant 0 : i32
    return %arg0, %arg1, %c0_i32 : i32, i32, i32
  }
  func.func @transform_3(%arg0: i32, %arg1: i32) -> (i32, i32, i32) {
    %c0_i32 = arith.constant 0 : i32
    %c0_i32_0 = arith.constant 0 : i32
    return %arg0, %arg1, %c0_i32 : i32, i32, i32
  }
  func.func @transform_4(%arg0: i32, %arg1: i32) -> (i32, i32, i32) {
    %c0_i32 = arith.constant 0 : i32
    %c0_i32_0 = arith.constant 0 : i32
    %c0_i32_1 = arith.constant 0 : i32
    return %arg0, %c0_i32, %c0_i32_0 : i32, i32, i32
  }
  func.func @transform_5(%arg0: i32, %arg1: i32) -> (i32, i32, i32) {
    %c0_i32 = arith.constant 0 : i32
    %c0_i32_0 = arith.constant 0 : i32
    %c0_i32_1 = arith.constant 0 : i32
    return %arg0, %c0_i32, %c0_i32_0 : i32, i32, i32
  }
  func.func @transform_6(%arg0: i32, %arg1: i32) -> (i32, i32, i32) {
    %c0_i32 = arith.constant 0 : i32
    %c0_i32_0 = arith.constant 0 : i32
    %c0_i32_1 = arith.constant 0 : i32
    return %arg0, %c0_i32, %c0_i32_0 : i32, i32, i32
  }
  func.func @transform_7(%arg0: i32, %arg1: i32) -> (i32, i32, i32) {
    %c0_i32 = arith.constant 0 : i32
    %c0_i32_0 = arith.constant 0 : i32
    %c0_i32_1 = arith.constant 0 : i32
    return %arg0, %c0_i32, %c0_i32_0 : i32, i32, i32
  }
  func.func @transform_8(%arg0: i32, %arg1: i32) -> (i32, i32, i32) {
    %c0_i32 = arith.constant 0 : i32
    %c0_i32_0 = arith.constant 0 : i32
    return %arg0, %arg1, %c0_i32 : i32, i32, i32
  }
  func.func @transform_9(%arg0: i32, %arg1: i32) -> (i32, i32, i32) {
    %c0_i32 = arith.constant 0 : i32
    %c0_i32_0 = arith.constant 0 : i32
    %c0_i32_1 = arith.constant 0 : i32
    return %arg0, %c0_i32, %c0_i32_0 : i32, i32, i32
  }
  func.func @transform_10(%arg0: i32, %arg1: i32) -> (i32, i32, i32) {
    %c0_i32 = arith.constant 0 : i32
    %c0_i32_0 = arith.constant 0 : i32
    %c0_i32_1 = arith.constant 0 : i32
    return %arg0, %c0_i32, %c0_i32_0 : i32, i32, i32
  }
  func.func @transform_11(%arg0: i32, %arg1: i32) -> (i32, i32) {
    %c0_i32 = arith.constant 0 : i32
    %c0_i32_0 = arith.constant 0 : i32
    %c0_i32_1 = arith.constant 0 : i32
    return %c0_i32, %c0_i32_0 : i32, i32
  }
  func.func @transform_12(%arg0: i32, %arg1: i32) -> (i32, i32) {
    %c0_i32 = arith.constant 0 : i32
    %c0_i32_0 = arith.constant 0 : i32
    %c0_i32_1 = arith.constant 0 : i32
    return %c0_i32, %c0_i32_0 : i32, i32
  }
  func.func @transform_13(%arg0: i32, %arg1: i32) -> (i32, i32) {
    %c0_i32 = arith.constant 0 : i32
    %c0_i32_0 = arith.constant 0 : i32
    %c0_i32_1 = arith.constant 0 : i32
    return %c0_i32, %c0_i32_0 : i32, i32
  }
  func.func @transform_14(%arg0: i32, %arg1: i32) -> (i32, i32) {
    %c0_i32 = arith.constant 0 : i32
    %c0_i32_0 = arith.constant 0 : i32
    %c0_i32_1 = arith.constant 0 : i32
    return %c0_i32, %c0_i32_0 : i32, i32
  }
  func.func @transform_15(%arg0: i32, %arg1: i32) -> (i32, i32) {
    %c0_i32 = arith.constant 0 : i32
    %c0_i32_0 = arith.constant 0 : i32
    %c0_i32_1 = arith.constant 0 : i32
    return %c0_i32, %c0_i32_0 : i32, i32
  }
  func.func @transform_16(%arg0: i32, %arg1: i32) -> (i32, i32) {
    %c0_i32 = arith.constant 0 : i32
    %c0_i32_0 = arith.constant 0 : i32
    %c0_i32_1 = arith.constant 0 : i32
    return %c0_i32, %c0_i32_0 : i32, i32
  }
  func.func @transform_17(%arg0: i32, %arg1: i32) -> (i32, i32) {
    %c0_i32 = arith.constant 0 : i32
    %c0_i32_0 = arith.constant 0 : i32
    %c0_i32_1 = arith.constant 0 : i32
    return %c0_i32, %c0_i32_0 : i32, i32
  }
  func.func @transform_18(%arg0: i32, %arg1: i32) -> (i32, i32) {
    %c0_i32 = arith.constant 0 : i32
    %c0_i32_0 = arith.constant 0 : i32
    %c0_i32_1 = arith.constant 0 : i32
    return %c0_i32, %c0_i32_0 : i32, i32
  }
  func.func @transform_19(%arg0: i32, %arg1: i32) -> (i32, i32) {
    %c0_i32 = arith.constant 0 : i32
    %c0_i32_0 = arith.constant 0 : i32
    %c0_i32_1 = arith.constant 0 : i32
    return %c0_i32, %c0_i32_0 : i32, i32
  }
  func.func @transform_20(%arg0: i32, %arg1: i32) -> (i32, i32) {
    %c0_i32 = arith.constant 0 : i32
    %c0_i32_0 = arith.constant 0 : i32
    %c0_i32_1 = arith.constant 0 : i32
    return %c0_i32, %c0_i32_0 : i32, i32
  }
  func.func @transform_21(%arg0: i32, %arg1: i32) -> (i32, i32) {
    %c0_i32 = arith.constant 0 : i32
    %c0_i32_0 = arith.constant 0 : i32
    %c0_i32_1 = arith.constant 0 : i32
    return %c0_i32, %c0_i32_0 : i32, i32
  }
  func.func @transform_22(%arg0: i32, %arg1: i32) -> (i32, i32, i32, i32) {
    %c0_i32 = arith.constant 0 : i32
    %c0_i32_0 = arith.constant 0 : i32
    %c0_i32_1 = arith.constant 0 : i32
    return %arg0, %arg1, %c0_i32, %c0_i32_0 : i32, i32, i32, i32
  }
  func.func @transform_23(%arg0: i32, %arg1: i32) -> (i32, i32, i32) {
    %c0_i32 = arith.constant 0 : i32
    %c0_i32_0 = arith.constant 0 : i32
    return %arg0, %arg1, %c0_i32 : i32, i32, i32
  }
  func.func @transform_24(%arg0: i32, %arg1: i32) -> (i32, i32, i32, i32) {
    %c0_i32 = arith.constant 0 : i32
    %c0_i32_0 = arith.constant 0 : i32
    %c0_i32_1 = arith.constant 0 : i32
    return %arg0, %arg1, %c0_i32, %c0_i32_0 : i32, i32, i32, i32
  }
}

module attributes {stable_mosaic.version = 11 : i64} {
  func.func @_x_post_kernel(%arg0: i32, %arg1: i32, %arg2: memref<1x8x32xf32, #tpu.memory_space<vmem>>, %arg3: memref<1x8x32xf32, #tpu.memory_space<vmem>>, %arg4: memref<1x1x64xf32, #tpu.memory_space<vmem>>, %arg5: memref<1x8x1xf32, #tpu.memory_space<vmem>>, %arg6: memref<32x32xf32, #tpu.memory_space<vmem>>, %arg7: memref<32x32xf32, #tpu.memory_space<vmem>>, %arg8: memref<1x32xf32, #tpu.memory_space<vmem>>, %arg9: memref<32x32xf32, #tpu.memory_space<vmem>>, %arg10: memref<1x32xf32, #tpu.memory_space<vmem>>, %arg11: memref<4x32xf32, #tpu.memory_space<vmem>>, %arg12: memref<32x64xf32, #tpu.memory_space<vmem>>, %arg13: memref<1x64xf32, #tpu.memory_space<vmem>>, %arg14: memref<64x32xf32, #tpu.memory_space<vmem>>, %arg15: memref<1x32xf32, #tpu.memory_space<vmem>>, %arg16: memref<1x8x32xf32, #tpu.memory_space<vmem>>) attributes {dimension_semantics = [#tpu.dimension_semantics<parallel>, #tpu.dimension_semantics<parallel>], iteration_bounds = array<i64: 2, 1>, scalar_prefetch = 0 : i64, scratch_operands = 0 : i64, tpu.core_type = #tpu.core_type<tc>, window_params = [{transform_indices = @transform_0, window_bounds = array<i64: 1, 8, 32>}, {transform_indices = @transform_1, window_bounds = array<i64: 1, 8, 32>}, {transform_indices = @transform_2, window_bounds = array<i64: 1, 1, 64>}, {transform_indices = @transform_3, window_bounds = array<i64: 1, 8, 1>}, {pipeline_mode = #tpu.pipeline_mode<synchronous>, transform_indices = @transform_4, window_bounds = array<i64: 32, 32>}, {pipeline_mode = #tpu.pipeline_mode<synchronous>, transform_indices = @transform_5, window_bounds = array<i64: 32, 32>}, {pipeline_mode = #tpu.pipeline_mode<synchronous>, transform_indices = @transform_6, window_bounds = array<i64: 1, 32>}, {pipeline_mode = #tpu.pipeline_mode<synchronous>, transform_indices = @transform_7, window_bounds = array<i64: 32, 32>}, {pipeline_mode = #tpu.pipeline_mode<synchronous>, transform_indices = @transform_8, window_bounds = array<i64: 1, 32>}, {pipeline_mode = #tpu.pipeline_mode<synchronous>, transform_indices = @transform_9, window_bounds = array<i64: 4, 32>}, {pipeline_mode = #tpu.pipeline_mode<synchronous>, transform_indices = @transform_10, window_bounds = array<i64: 32, 64>}, {pipeline_mode = #tpu.pipeline_mode<synchronous>, transform_indices = @transform_11, window_bounds = array<i64: 1, 64>}, {pipeline_mode = #tpu.pipeline_mode<synchronous>, transform_indices = @transform_12, window_bounds = array<i64: 64, 32>}, {pipeline_mode = #tpu.pipeline_mode<synchronous>, transform_indices = @transform_13, window_bounds = array<i64: 1, 32>}, {transform_indices = @transform_14, window_bounds = array<i64: 1, 8, 32>}]} {
    %c0 = arith.constant 0 : index
    %c0_0 = arith.constant 0 : index
    %c0_1 = arith.constant 0 : index
    %0 = vector.load %arg2[%c0, %c0_0, %c0_1] : memref<1x8x32xf32, #tpu.memory_space<vmem>>, vector<1x8x32xf32>
    %1 = vector.shape_cast %0 : vector<1x8x32xf32> to vector<8x32xf32>
    %c0_2 = arith.constant 0 : index
    %c0_3 = arith.constant 0 : index
    %c0_4 = arith.constant 0 : index
    %2 = vector.load %arg3[%c0_2, %c0_3, %c0_4] : memref<1x8x32xf32, #tpu.memory_space<vmem>>, vector<1x8x32xf32>
    %3 = vector.shape_cast %2 : vector<1x8x32xf32> to vector<8x32xf32>
    %c0_5 = arith.constant 0 : index
    %c0_6 = arith.constant 0 : index
    %c0_7 = arith.constant 0 : index
    %4 = vector.load %arg5[%c0_5, %c0_6, %c0_7] : memref<1x8x1xf32, #tpu.memory_space<vmem>>, vector<1x8x1xf32>
    %5 = vector.shape_cast %4 : vector<1x8x1xf32> to vector<8x1xf32>
    %c0_8 = arith.constant 0 : index
    %c0_9 = arith.constant 0 : index
    %c0_10 = arith.constant 0 : index
    %6 = vector.load %arg4[%c0_8, %c0_9, %c0_10] : memref<1x1x64xf32, #tpu.memory_space<vmem>>, vector<1x1x64xf32>
    %7 = vector.shape_cast %6 : vector<1x1x64xf32> to vector<1x64xf32>
    %8 = vector.extract_strided_slice %7 {offsets = [0, 0], sizes = [1, 32], strides = [1, 1]} : vector<1x64xf32> to vector<1x32xf32>
    %9 = vector.extract_strided_slice %7 {offsets = [0, 32], sizes = [1, 32], strides = [1, 1]} : vector<1x64xf32> to vector<1x32xf32>
    %cst = arith.constant 1.000000e+00 : f32
    %10 = vector.broadcast %cst : f32 to vector<1x32xf32>
    %11 = arith.addf %9, %10 : vector<1x32xf32>
    %12 = vector.broadcast %11 : vector<1x32xf32> to vector<8x32xf32>
    %13 = arith.mulf %12, %3 : vector<8x32xf32>
    %14 = vector.broadcast %8 : vector<1x32xf32> to vector<8x32xf32>
    %15 = arith.addf %14, %13 : vector<8x32xf32>
    %c0_11 = arith.constant 0 : index
    %c0_12 = arith.constant 0 : index
    %16 = vector.load %arg6[%c0_11, %c0_12] : memref<32x32xf32, #tpu.memory_space<vmem>>, vector<32x32xf32>
    %cst_13 = arith.constant dense<0.000000e+00> : vector<8x32xf32>
    %17 = tpu.matmul %1, %16, %cst_13 {dimension_numbers = #tpu.dot_dimension_numbers<[1], [0], [0], [1], [0, 0, 1, 1], [], []>} : vector<8x32xf32>, vector<32x32xf32>, vector<8x32xf32> -> vector<8x32xf32>
    %c0_14 = arith.constant 0 : index
    %c0_15 = arith.constant 0 : index
    %18 = vector.load %arg7[%c0_14, %c0_15] : memref<32x32xf32, #tpu.memory_space<vmem>>, vector<32x32xf32>
    %cst_16 = arith.constant dense<0.000000e+00> : vector<8x32xf32>
    %19 = tpu.matmul %3, %18, %cst_16 {dimension_numbers = #tpu.dot_dimension_numbers<[1], [0], [0], [1], [0, 0, 1, 1], [], []>} : vector<8x32xf32>, vector<32x32xf32>, vector<8x32xf32> -> vector<8x32xf32>
    %20 = arith.addf %17, %19 : vector<8x32xf32>
    %c0_17 = arith.constant 0 : index
    %c0_18 = arith.constant 0 : index
    %21 = vector.load %arg8[%c0_17, %c0_18] : memref<1x32xf32, #tpu.memory_space<vmem>>, vector<1x32xf32>
    %22 = vector.broadcast %21 : vector<1x32xf32> to vector<8x32xf32>
    %23 = arith.addf %20, %22 : vector<8x32xf32>
    %24 = arith.negf %23 : vector<8x32xf32>
    %25 = math.exp %24 : vector<8x32xf32>
    %cst_19 = arith.constant 1.000000e+00 : f32
    %26 = vector.broadcast %cst_19 : f32 to vector<8x32xf32>
    %27 = arith.addf %26, %25 : vector<8x32xf32>
    %28 = arith.divf %26, %27 : vector<8x32xf32>
    %29 = arith.mulf %28, %1 : vector<8x32xf32>
    %cst_20 = arith.constant 1.000000e+00 : f32
    %30 = vector.broadcast %cst_20 : f32 to vector<8x32xf32>
    %31 = arith.subf %30, %28 : vector<8x32xf32>
    %32 = arith.mulf %31, %15 : vector<8x32xf32>
    %33 = arith.addf %29, %32 : vector<8x32xf32>
    %c0_21 = arith.constant 0 : index
    %c0_22 = arith.constant 0 : index
    %34 = vector.load %arg9[%c0_21, %c0_22] : memref<32x32xf32, #tpu.memory_space<vmem>>, vector<32x32xf32>
    %cst_23 = arith.constant dense<0.000000e+00> : vector<8x32xf32>
    %35 = tpu.matmul %33, %34, %cst_23 {dimension_numbers = #tpu.dot_dimension_numbers<[1], [0], [0], [1], [0, 0, 1, 1], [], []>} : vector<8x32xf32>, vector<32x32xf32>, vector<8x32xf32> -> vector<8x32xf32>
    %c0_24 = arith.constant 0 : index
    %c0_25 = arith.constant 0 : index
    %36 = vector.load %arg10[%c0_24, %c0_25] : memref<1x32xf32, #tpu.memory_space<vmem>>, vector<1x32xf32>
    %37 = vector.broadcast %36 : vector<1x32xf32> to vector<8x32xf32>
    %38 = arith.addf %35, %37 : vector<8x32xf32>
    %39 = vector.broadcast %5 : vector<8x1xf32> to vector<8x32xf32>
    %40 = arith.mulf %38, %39 : vector<8x32xf32>
    %c0_26 = arith.constant 0 : index
    %c0_27 = arith.constant 0 : index
    %41 = vector.load %arg11[%c0_26, %c0_27] : memref<4x32xf32, #tpu.memory_space<vmem>>, vector<1x32xf32>
    %c1 = arith.constant 1 : index
    %c0_28 = arith.constant 0 : index
    %42 = vector.load %arg11[%c1, %c0_28] : memref<4x32xf32, #tpu.memory_space<vmem>>, vector<1x32xf32>
    %c2 = arith.constant 2 : index
    %c0_29 = arith.constant 0 : index
    %43 = vector.load %arg11[%c2, %c0_29] : memref<4x32xf32, #tpu.memory_space<vmem>>, vector<1x32xf32>
    %c3 = arith.constant 3 : index
    %c0_30 = arith.constant 0 : index
    %44 = vector.load %arg11[%c3, %c0_30] : memref<4x32xf32, #tpu.memory_space<vmem>>, vector<1x32xf32>
    %45 = arith.addf %1, %40 : vector<8x32xf32>
    %cst_31 = arith.constant dense<0.000000e+00> : vector<8xf32>
    %46 = vector.multi_reduction <add>, %45, %cst_31 [1] : vector<8x32xf32> to vector<8xf32>
    %47 = vector.shape_cast %46 : vector<8xf32> to vector<8x1xf32>
    %cst_32 = arith.constant 3.200000e+01 : f32
    %48 = vector.broadcast %cst_32 : f32 to vector<8x1xf32>
    %49 = arith.divf %47, %48 : vector<8x1xf32>
    %50 = vector.broadcast %49 : vector<8x1xf32> to vector<8x32xf32>
    %51 = arith.subf %45, %50 : vector<8x32xf32>
    %52 = arith.mulf %51, %51 : vector<8x32xf32>
    %cst_33 = arith.constant dense<0.000000e+00> : vector<8xf32>
    %53 = vector.multi_reduction <add>, %52, %cst_33 [1] : vector<8x32xf32> to vector<8xf32>
    %54 = vector.shape_cast %53 : vector<8xf32> to vector<8x1xf32>
    %cst_34 = arith.constant 3.200000e+01 : f32
    %55 = vector.broadcast %cst_34 : f32 to vector<8x1xf32>
    %56 = arith.divf %54, %55 : vector<8x1xf32>
    %cst_35 = arith.constant 9.99999974E-6 : f32
    %57 = vector.broadcast %cst_35 : f32 to vector<8x1xf32>
    %58 = arith.addf %56, %57 : vector<8x1xf32>
    %59 = math.rsqrt %58 : vector<8x1xf32>
    %60 = vector.broadcast %59 : vector<8x1xf32> to vector<8x32xf32>
    %61 = arith.mulf %51, %60 : vector<8x32xf32>
    %62 = vector.broadcast %41 : vector<1x32xf32> to vector<8x32xf32>
    %63 = arith.mulf %61, %62 : vector<8x32xf32>
    %64 = vector.broadcast %42 : vector<1x32xf32> to vector<8x32xf32>
    %65 = arith.addf %63, %64 : vector<8x32xf32>
    %c0_36 = arith.constant 0 : index
    %c0_37 = arith.constant 0 : index
    %66 = vector.load %arg12[%c0_36, %c0_37] : memref<32x64xf32, #tpu.memory_space<vmem>>, vector<32x64xf32>
    %cst_38 = arith.constant dense<0.000000e+00> : vector<8x64xf32>
    %67 = tpu.matmul %65, %66, %cst_38 {dimension_numbers = #tpu.dot_dimension_numbers<[1], [0], [0], [1], [0, 0, 1, 1], [], []>} : vector<8x32xf32>, vector<32x64xf32>, vector<8x64xf32> -> vector<8x64xf32>
    %c0_39 = arith.constant 0 : index
    %c0_40 = arith.constant 0 : index
    %68 = vector.load %arg13[%c0_39, %c0_40] : memref<1x64xf32, #tpu.memory_space<vmem>>, vector<1x64xf32>
    %69 = vector.broadcast %68 : vector<1x64xf32> to vector<8x64xf32>
    %70 = arith.addf %67, %69 : vector<8x64xf32>
    %cst_41 = arith.constant 0.000000e+00 : f32
    %71 = vector.broadcast %cst_41 : f32 to vector<8x64xf32>
    %72 = arith.maximumf %70, %71 : vector<8x64xf32>
    %c0_42 = arith.constant 0 : index
    %c0_43 = arith.constant 0 : index
    %73 = vector.load %arg14[%c0_42, %c0_43] : memref<64x32xf32, #tpu.memory_space<vmem>>, vector<64x32xf32>
    %cst_44 = arith.constant dense<0.000000e+00> : vector<8x32xf32>
    %74 = tpu.matmul %72, %73, %cst_44 {dimension_numbers = #tpu.dot_dimension_numbers<[1], [0], [0], [1], [0, 0, 1, 1], [], []>} : vector<8x64xf32>, vector<64x32xf32>, vector<8x32xf32> -> vector<8x32xf32>
    %c0_45 = arith.constant 0 : index
    %c0_46 = arith.constant 0 : index
    %75 = vector.load %arg15[%c0_45, %c0_46] : memref<1x32xf32, #tpu.memory_space<vmem>>, vector<1x32xf32>
    %76 = vector.broadcast %75 : vector<1x32xf32> to vector<8x32xf32>
    %77 = arith.addf %74, %76 : vector<8x32xf32>
    %78 = arith.addf %65, %77 : vector<8x32xf32>
    %cst_47 = arith.constant dense<0.000000e+00> : vector<8xf32>
    %79 = vector.multi_reduction <add>, %78, %cst_47 [1] : vector<8x32xf32> to vector<8xf32>
    %80 = vector.shape_cast %79 : vector<8xf32> to vector<8x1xf32>
    %cst_48 = arith.constant 3.200000e+01 : f32
    %81 = vector.broadcast %cst_48 : f32 to vector<8x1xf32>
    %82 = arith.divf %80, %81 : vector<8x1xf32>
    %83 = vector.broadcast %82 : vector<8x1xf32> to vector<8x32xf32>
    %84 = arith.subf %78, %83 : vector<8x32xf32>
    %85 = arith.mulf %84, %84 : vector<8x32xf32>
    %cst_49 = arith.constant dense<0.000000e+00> : vector<8xf32>
    %86 = vector.multi_reduction <add>, %85, %cst_49 [1] : vector<8x32xf32> to vector<8xf32>
    %87 = vector.shape_cast %86 : vector<8xf32> to vector<8x1xf32>
    %cst_50 = arith.constant 3.200000e+01 : f32
    %88 = vector.broadcast %cst_50 : f32 to vector<8x1xf32>
    %89 = arith.divf %87, %88 : vector<8x1xf32>
    %cst_51 = arith.constant 9.99999974E-6 : f32
    %90 = vector.broadcast %cst_51 : f32 to vector<8x1xf32>
    %91 = arith.addf %89, %90 : vector<8x1xf32>
    %92 = math.rsqrt %91 : vector<8x1xf32>
    %93 = vector.broadcast %92 : vector<8x1xf32> to vector<8x32xf32>
    %94 = arith.mulf %84, %93 : vector<8x32xf32>
    %95 = vector.broadcast %43 : vector<1x32xf32> to vector<8x32xf32>
    %96 = arith.mulf %94, %95 : vector<8x32xf32>
    %97 = vector.broadcast %44 : vector<1x32xf32> to vector<8x32xf32>
    %98 = arith.addf %96, %97 : vector<8x32xf32>
    %c0_52 = arith.constant 0 : index
    %c0_53 = arith.constant 0 : index
    %c0_54 = arith.constant 0 : index
    %99 = vector.load %arg16[%c0_52, %c0_53, %c0_54] : memref<1x8x32xf32, #tpu.memory_space<vmem>>, vector<1x8x32xf32>
    %100 = vector.shape_cast %99 : vector<1x8x32xf32> to vector<8x32xf32>
    %101 = vector.shape_cast %98 : vector<8x32xf32> to vector<1x8x32xf32>
    tpu.vector_store %arg16[%c0_52, %c0_53, %c0_54], %101 {strides = array<i32>} : memref<1x8x32xf32, #tpu.memory_space<vmem>>, vector<1x8x32xf32>,
    return
  }
  func.func @transform_0(%arg0: i32, %arg1: i32) -> (i32, i32, i32) {
    %c0_i32 = arith.constant 0 : i32
    %c0_i32_0 = arith.constant 0 : i32
    return %arg0, %arg1, %c0_i32 : i32, i32, i32
  }
  func.func @transform_1(%arg0: i32, %arg1: i32) -> (i32, i32, i32) {
    %c0_i32 = arith.constant 0 : i32
    %c0_i32_0 = arith.constant 0 : i32
    return %arg0, %arg1, %c0_i32 : i32, i32, i32
  }
  func.func @transform_2(%arg0: i32, %arg1: i32) -> (i32, i32, i32) {
    %c0_i32 = arith.constant 0 : i32
    %c0_i32_0 = arith.constant 0 : i32
    %c0_i32_1 = arith.constant 0 : i32
    return %arg0, %c0_i32, %c0_i32_0 : i32, i32, i32
  }
  func.func @transform_3(%arg0: i32, %arg1: i32) -> (i32, i32, i32) {
    %c0_i32 = arith.constant 0 : i32
    %c0_i32_0 = arith.constant 0 : i32
    return %arg0, %arg1, %c0_i32 : i32, i32, i32
  }
  func.func @transform_4(%arg0: i32, %arg1: i32) -> (i32, i32) {
    %c0_i32 = arith.constant 0 : i32
    %c0_i32_0 = arith.constant 0 : i32
    %c0_i32_1 = arith.constant 0 : i32
    return %c0_i32, %c0_i32_0 : i32, i32
  }
  func.func @transform_5(%arg0: i32, %arg1: i32) -> (i32, i32) {
    %c0_i32 = arith.constant 0 : i32
    %c0_i32_0 = arith.constant 0 : i32
    %c0_i32_1 = arith.constant 0 : i32
    return %c0_i32, %c0_i32_0 : i32, i32
  }
  func.func @transform_6(%arg0: i32, %arg1: i32) -> (i32, i32) {
    %c0_i32 = arith.constant 0 : i32
    %c0_i32_0 = arith.constant 0 : i32
    %c0_i32_1 = arith.constant 0 : i32
    return %c0_i32, %c0_i32_0 : i32, i32
  }
  func.func @transform_7(%arg0: i32, %arg1: i32) -> (i32, i32) {
    %c0_i32 = arith.constant 0 : i32
    %c0_i32_0 = arith.constant 0 : i32
    %c0_i32_1 = arith.constant 0 : i32
    return %c0_i32, %c0_i32_0 : i32, i32
  }
  func.func @transform_8(%arg0: i32, %arg1: i32) -> (i32, i32) {
    %c0_i32 = arith.constant 0 : i32
    %c0_i32_0 = arith.constant 0 : i32
    %c0_i32_1 = arith.constant 0 : i32
    return %c0_i32, %c0_i32_0 : i32, i32
  }
  func.func @transform_9(%arg0: i32, %arg1: i32) -> (i32, i32) {
    %c0_i32 = arith.constant 0 : i32
    %c0_i32_0 = arith.constant 0 : i32
    %c0_i32_1 = arith.constant 0 : i32
    return %c0_i32, %c0_i32_0 : i32, i32
  }
  func.func @transform_10(%arg0: i32, %arg1: i32) -> (i32, i32) {
    %c0_i32 = arith.constant 0 : i32
    %c0_i32_0 = arith.constant 0 : i32
    %c0_i32_1 = arith.constant 0 : i32
    return %c0_i32, %c0_i32_0 : i32, i32
  }
  func.func @transform_11(%arg0: i32, %arg1: i32) -> (i32, i32) {
    %c0_i32 = arith.constant 0 : i32
    %c0_i32_0 = arith.constant 0 : i32
    %c0_i32_1 = arith.constant 0 : i32
    return %c0_i32, %c0_i32_0 : i32, i32
  }
  func.func @transform_12(%arg0: i32, %arg1: i32) -> (i32, i32) {
    %c0_i32 = arith.constant 0 : i32
    %c0_i32_0 = arith.constant 0 : i32
    %c0_i32_1 = arith.constant 0 : i32
    return %c0_i32, %c0_i32_0 : i32, i32
  }
  func.func @transform_13(%arg0: i32, %arg1: i32) -> (i32, i32) {
    %c0_i32 = arith.constant 0 : i32
    %c0_i32_0 = arith.constant 0 : i32
    %c0_i32_1 = arith.constant 0 : i32
    return %c0_i32, %c0_i32_0 : i32, i32
  }
  func.func @transform_14(%arg0: i32, %arg1: i32) -> (i32, i32, i32) {
    %c0_i32 = arith.constant 0 : i32
    %c0_i32_0 = arith.constant 0 : i32
    return %arg0, %arg1, %c0_i32 : i32, i32, i32
  }
}

module attributes {stable_mosaic.version = 11 : i64} {
  func.func @_y_block_kernel(%arg0: memref<2x16xf32, #tpu.memory_space<vmem>>, %arg1: memref<2x128xf32, #tpu.memory_space<vmem>>, %arg2: memref<2x64xf32, #tpu.memory_space<vmem>>, %arg3: memref<16x16xf32, #tpu.memory_space<vmem>>, %arg4: memref<1x16xf32, #tpu.memory_space<vmem>>, %arg5: memref<128x16xf32, #tpu.memory_space<vmem>>, %arg6: memref<1x16xf32, #tpu.memory_space<vmem>>, %arg7: memref<64x16xf32, #tpu.memory_space<vmem>>, %arg8: memref<1x16xf32, #tpu.memory_space<vmem>>, %arg9: memref<16x16xf32, #tpu.memory_space<vmem>>, %arg10: memref<1x16xf32, #tpu.memory_space<vmem>>, %arg11: memref<16x16xf32, #tpu.memory_space<vmem>>, %arg12: memref<1x16xf32, #tpu.memory_space<vmem>>, %arg13: memref<4x16xf32, #tpu.memory_space<vmem>>, %arg14: memref<16x64xf32, #tpu.memory_space<vmem>>, %arg15: memref<1x64xf32, #tpu.memory_space<vmem>>, %arg16: memref<64x16xf32, #tpu.memory_space<vmem>>, %arg17: memref<1x16xf32, #tpu.memory_space<vmem>>, %arg18: memref<2x16xf32, #tpu.memory_space<vmem>>) attributes {dimension_semantics = [], scalar_prefetch = 0 : i64, scratch_operands = 0 : i64, tpu.core_type = #tpu.core_type<tc>} {
    %c0 = arith.constant 0 : index
    %c0_0 = arith.constant 0 : index
    %0 = vector.load %arg0[%c0, %c0_0] : memref<2x16xf32, #tpu.memory_space<vmem>>, vector<2x16xf32>
    %c0_1 = arith.constant 0 : index
    %c0_2 = arith.constant 0 : index
    %1 = vector.load %arg3[%c0_1, %c0_2] : memref<16x16xf32, #tpu.memory_space<vmem>>, vector<16x16xf32>
    %cst = arith.constant dense<0.000000e+00> : vector<2x16xf32>
    %2 = tpu.matmul %0, %1, %cst {dimension_numbers = #tpu.dot_dimension_numbers<[1], [0], [0], [1], [0, 0, 1, 1], [], []>} : vector<2x16xf32>, vector<16x16xf32>, vector<2x16xf32> -> vector<2x16xf32>
    %c0_3 = arith.constant 0 : index
    %c0_4 = arith.constant 0 : index
    %3 = vector.load %arg4[%c0_3, %c0_4] : memref<1x16xf32, #tpu.memory_space<vmem>>, vector<1x16xf32>
    %4 = vector.broadcast %3 : vector<1x16xf32> to vector<2x16xf32>
    %5 = arith.addf %2, %4 : vector<2x16xf32>
    %c0_5 = arith.constant 0 : index
    %c0_6 = arith.constant 0 : index
    %6 = vector.load %arg1[%c0_5, %c0_6] : memref<2x128xf32, #tpu.memory_space<vmem>>, vector<2x128xf32>
    %c0_7 = arith.constant 0 : index
    %c0_8 = arith.constant 0 : index
    %7 = vector.load %arg5[%c0_7, %c0_8] : memref<128x16xf32, #tpu.memory_space<vmem>>, vector<128x16xf32>
    %cst_9 = arith.constant dense<0.000000e+00> : vector<2x16xf32>
    %8 = tpu.matmul %6, %7, %cst_9 {dimension_numbers = #tpu.dot_dimension_numbers<[1], [0], [0], [1], [0, 0, 1, 1], [], []>} : vector<2x128xf32>, vector<128x16xf32>, vector<2x16xf32> -> vector<2x16xf32>
    %9 = arith.addf %5, %8 : vector<2x16xf32>
    %c0_10 = arith.constant 0 : index
    %c0_11 = arith.constant 0 : index
    %10 = vector.load %arg6[%c0_10, %c0_11] : memref<1x16xf32, #tpu.memory_space<vmem>>, vector<1x16xf32>
    %11 = vector.broadcast %10 : vector<1x16xf32> to vector<2x16xf32>
    %12 = arith.addf %9, %11 : vector<2x16xf32>
    %c0_12 = arith.constant 0 : index
    %c0_13 = arith.constant 0 : index
    %13 = vector.load %arg2[%c0_12, %c0_13] : memref<2x64xf32, #tpu.memory_space<vmem>>, vector<2x64xf32>
    %c0_14 = arith.constant 0 : index
    %c0_15 = arith.constant 0 : index
    %14 = vector.load %arg7[%c0_14, %c0_15] : memref<64x16xf32, #tpu.memory_space<vmem>>, vector<64x16xf32>
    %cst_16 = arith.constant dense<0.000000e+00> : vector<2x16xf32>
    %15 = tpu.matmul %13, %14, %cst_16 {dimension_numbers = #tpu.dot_dimension_numbers<[1], [0], [0], [1], [0, 0, 1, 1], [], []>} : vector<2x64xf32>, vector<64x16xf32>, vector<2x16xf32> -> vector<2x16xf32>
    %16 = arith.addf %12, %15 : vector<2x16xf32>
    %c0_17 = arith.constant 0 : index
    %c0_18 = arith.constant 0 : index
    %17 = vector.load %arg8[%c0_17, %c0_18] : memref<1x16xf32, #tpu.memory_space<vmem>>, vector<1x16xf32>
    %18 = vector.broadcast %17 : vector<1x16xf32> to vector<2x16xf32>
    %19 = arith.addf %16, %18 : vector<2x16xf32>
    %c0_19 = arith.constant 0 : index
    %c0_20 = arith.constant 0 : index
    %20 = vector.load %arg9[%c0_19, %c0_20] : memref<16x16xf32, #tpu.memory_space<vmem>>, vector<16x16xf32>
    %cst_21 = arith.constant dense<0.000000e+00> : vector<2x16xf32>
    %21 = tpu.matmul %19, %20, %cst_21 {dimension_numbers = #tpu.dot_dimension_numbers<[1], [0], [0], [1], [0, 0, 1, 1], [], []>} : vector<2x16xf32>, vector<16x16xf32>, vector<2x16xf32> -> vector<2x16xf32>
    %c0_22 = arith.constant 0 : index
    %c0_23 = arith.constant 0 : index
    %22 = vector.load %arg10[%c0_22, %c0_23] : memref<1x16xf32, #tpu.memory_space<vmem>>, vector<1x16xf32>
    %23 = vector.broadcast %22 : vector<1x16xf32> to vector<2x16xf32>
    %24 = arith.addf %21, %23 : vector<2x16xf32>
    %cst_24 = arith.constant 0.000000e+00 : f32
    %25 = vector.broadcast %cst_24 : f32 to vector<2x16xf32>
    %26 = arith.maximumf %24, %25 : vector<2x16xf32>
    %c0_25 = arith.constant 0 : index
    %c0_26 = arith.constant 0 : index
    %27 = vector.load %arg11[%c0_25, %c0_26] : memref<16x16xf32, #tpu.memory_space<vmem>>, vector<16x16xf32>
    %cst_27 = arith.constant dense<0.000000e+00> : vector<2x16xf32>
    %28 = tpu.matmul %26, %27, %cst_27 {dimension_numbers = #tpu.dot_dimension_numbers<[1], [0], [0], [1], [0, 0, 1, 1], [], []>} : vector<2x16xf32>, vector<16x16xf32>, vector<2x16xf32> -> vector<2x16xf32>
    %29 = arith.addf %0, %28 : vector<2x16xf32>
    %c0_28 = arith.constant 0 : index
    %c0_29 = arith.constant 0 : index
    %30 = vector.load %arg12[%c0_28, %c0_29] : memref<1x16xf32, #tpu.memory_space<vmem>>, vector<1x16xf32>
    %31 = vector.broadcast %30 : vector<1x16xf32> to vector<2x16xf32>
    %32 = arith.addf %29, %31 : vector<2x16xf32>
    %c0_30 = arith.constant 0 : index
    %c0_31 = arith.constant 0 : index
    %33 = vector.load %arg13[%c0_30, %c0_31] : memref<4x16xf32, #tpu.memory_space<vmem>>, vector<1x16xf32>
    %c1 = arith.constant 1 : index
    %c0_32 = arith.constant 0 : index
    %34 = vector.load %arg13[%c1, %c0_32] : memref<4x16xf32, #tpu.memory_space<vmem>>, vector<1x16xf32>
    %c2 = arith.constant 2 : index
    %c0_33 = arith.constant 0 : index
    %35 = vector.load %arg13[%c2, %c0_33] : memref<4x16xf32, #tpu.memory_space<vmem>>, vector<1x16xf32>
    %c3 = arith.constant 3 : index
    %c0_34 = arith.constant 0 : index
    %36 = vector.load %arg13[%c3, %c0_34] : memref<4x16xf32, #tpu.memory_space<vmem>>, vector<1x16xf32>
    %37 = arith.addf %0, %32 : vector<2x16xf32>
    %cst_35 = arith.constant dense<0.000000e+00> : vector<2xf32>
    %38 = vector.multi_reduction <add>, %37, %cst_35 [1] : vector<2x16xf32> to vector<2xf32>
    %39 = vector.shape_cast %38 : vector<2xf32> to vector<2x1xf32>
    %cst_36 = arith.constant 1.600000e+01 : f32
    %40 = vector.broadcast %cst_36 : f32 to vector<2x1xf32>
    %41 = arith.divf %39, %40 : vector<2x1xf32>
    %42 = vector.broadcast %41 : vector<2x1xf32> to vector<2x16xf32>
    %43 = arith.subf %37, %42 : vector<2x16xf32>
    %44 = arith.mulf %43, %43 : vector<2x16xf32>
    %cst_37 = arith.constant dense<0.000000e+00> : vector<2xf32>
    %45 = vector.multi_reduction <add>, %44, %cst_37 [1] : vector<2x16xf32> to vector<2xf32>
    %46 = vector.shape_cast %45 : vector<2xf32> to vector<2x1xf32>
    %cst_38 = arith.constant 1.600000e+01 : f32
    %47 = vector.broadcast %cst_38 : f32 to vector<2x1xf32>
    %48 = arith.divf %46, %47 : vector<2x1xf32>
    %cst_39 = arith.constant 9.99999974E-6 : f32
    %49 = vector.broadcast %cst_39 : f32 to vector<2x1xf32>
    %50 = arith.addf %48, %49 : vector<2x1xf32>
    %51 = math.rsqrt %50 : vector<2x1xf32>
    %52 = vector.broadcast %51 : vector<2x1xf32> to vector<2x16xf32>
    %53 = arith.mulf %43, %52 : vector<2x16xf32>
    %54 = vector.broadcast %33 : vector<1x16xf32> to vector<2x16xf32>
    %55 = arith.mulf %53, %54 : vector<2x16xf32>
    %56 = vector.broadcast %34 : vector<1x16xf32> to vector<2x16xf32>
    %57 = arith.addf %55, %56 : vector<2x16xf32>
    %c0_40 = arith.constant 0 : index
    %c0_41 = arith.constant 0 : index
    %58 = vector.load %arg14[%c0_40, %c0_41] : memref<16x64xf32, #tpu.memory_space<vmem>>, vector<16x64xf32>
    %cst_42 = arith.constant dense<0.000000e+00> : vector<2x64xf32>
    %59 = tpu.matmul %57, %58, %cst_42 {dimension_numbers = #tpu.dot_dimension_numbers<[1], [0], [0], [1], [0, 0, 1, 1], [], []>} : vector<2x16xf32>, vector<16x64xf32>, vector<2x64xf32> -> vector<2x64xf32>
    %c0_43 = arith.constant 0 : index
    %c0_44 = arith.constant 0 : index
    %60 = vector.load %arg15[%c0_43, %c0_44] : memref<1x64xf32, #tpu.memory_space<vmem>>, vector<1x64xf32>
    %61 = vector.broadcast %60 : vector<1x64xf32> to vector<2x64xf32>
    %62 = arith.addf %59, %61 : vector<2x64xf32>
    %cst_45 = arith.constant 0.000000e+00 : f32
    %63 = vector.broadcast %cst_45 : f32 to vector<2x64xf32>
    %64 = arith.maximumf %62, %63 : vector<2x64xf32>
    %c0_46 = arith.constant 0 : index
    %c0_47 = arith.constant 0 : index
    %65 = vector.load %arg16[%c0_46, %c0_47] : memref<64x16xf32, #tpu.memory_space<vmem>>, vector<64x16xf32>
    %cst_48 = arith.constant dense<0.000000e+00> : vector<2x16xf32>
    %66 = tpu.matmul %64, %65, %cst_48 {dimension_numbers = #tpu.dot_dimension_numbers<[1], [0], [0], [1], [0, 0, 1, 1], [], []>} : vector<2x64xf32>, vector<64x16xf32>, vector<2x16xf32> -> vector<2x16xf32>
    %c0_49 = arith.constant 0 : index
    %c0_50 = arith.constant 0 : index
    %67 = vector.load %arg17[%c0_49, %c0_50] : memref<1x16xf32, #tpu.memory_space<vmem>>, vector<1x16xf32>
    %68 = vector.broadcast %67 : vector<1x16xf32> to vector<2x16xf32>
    %69 = arith.addf %66, %68 : vector<2x16xf32>
    %70 = arith.addf %57, %69 : vector<2x16xf32>
    %cst_51 = arith.constant dense<0.000000e+00> : vector<2xf32>
    %71 = vector.multi_reduction <add>, %70, %cst_51 [1] : vector<2x16xf32> to vector<2xf32>
    %72 = vector.shape_cast %71 : vector<2xf32> to vector<2x1xf32>
    %cst_52 = arith.constant 1.600000e+01 : f32
    %73 = vector.broadcast %cst_52 : f32 to vector<2x1xf32>
    %74 = arith.divf %72, %73 : vector<2x1xf32>
    %75 = vector.broadcast %74 : vector<2x1xf32> to vector<2x16xf32>
    %76 = arith.subf %70, %75 : vector<2x16xf32>
    %77 = arith.mulf %76, %76 : vector<2x16xf32>
    %cst_53 = arith.constant dense<0.000000e+00> : vector<2xf32>
    %78 = vector.multi_reduction <add>, %77, %cst_53 [1] : vector<2x16xf32> to vector<2xf32>
    %79 = vector.shape_cast %78 : vector<2xf32> to vector<2x1xf32>
    %cst_54 = arith.constant 1.600000e+01 : f32
    %80 = vector.broadcast %cst_54 : f32 to vector<2x1xf32>
    %81 = arith.divf %79, %80 : vector<2x1xf32>
    %cst_55 = arith.constant 9.99999974E-6 : f32
    %82 = vector.broadcast %cst_55 : f32 to vector<2x1xf32>
    %83 = arith.addf %81, %82 : vector<2x1xf32>
    %84 = math.rsqrt %83 : vector<2x1xf32>
    %85 = vector.broadcast %84 : vector<2x1xf32> to vector<2x16xf32>
    %86 = arith.mulf %76, %85 : vector<2x16xf32>
    %87 = vector.broadcast %35 : vector<1x16xf32> to vector<2x16xf32>
    %88 = arith.mulf %86, %87 : vector<2x16xf32>
    %89 = vector.broadcast %36 : vector<1x16xf32> to vector<2x16xf32>
    %90 = arith.addf %88, %89 : vector<2x16xf32>
    %c0_56 = arith.constant 0 : index
    %c0_57 = arith.constant 0 : index
    %91 = vector.load %arg18[%c0_56, %c0_57] : memref<2x16xf32, #tpu.memory_space<vmem>>, vector<2x16xf32>
    tpu.vector_store %arg18[%c0_56, %c0_57], %90 {strides = array<i32>} : memref<2x16xf32, #tpu.memory_space<vmem>>, vector<2x16xf32>,
    return
  }
}

</mosaic_0001>

<llo_original>
// kernel: xey_transformer_layer.5
$region0: #{xey_transformer_layer.5}
  #allocation0 [shape = 'u32[]', space=smem, size = 0x4, offset = 0x4, fixed_abs, tag = 'smem constant byte address 0x4 - core index']
  #allocation1 [shape = 'u32[72,128]{1,0:T(1,128)}', space=vmem, size = 0x9000, scoped, tag = 'internal scratch']
  %s0 = inlined_call_operand.vmem [shape: f32[16,32], index: 0, kind: input, shape index: {}]
  %s1 = inlined_call_operand.vmem [shape: f32[16,1], index: 1, kind: input, shape index: {}]
  %s2 = inlined_call_operand.vmem [shape: f32[32,192], index: 2, kind: input, shape index: {}]
  %s3 = inlined_call_operand.vmem [shape: f32[1,192], index: 3, kind: input, shape index: {}]
  %s4 = inlined_call_operand.vmem [shape: f32[16,192], index: 4, kind: output, shape index: {}]
  %s5 = sld [smem:[#allocation0]]
  $region26: #{xey_transformer_layer.5} parent=0
    _
  %s7 = ssub.s32 1, %s5
  %s8 = scalar_select 0, %s7, %s5
  // Predicated region
  $region2: #{xey_transformer_layer.5} parent=0 // pred_check
    _
  $region3: #{xey_transformer_layer.5} parent=0 // pred_check_branch
    %10 = sbr.rel (0) target = $region5
  $region4: #{xey_transformer_layer.5} parent=0 // pred_region
    _
  $region5: #{xey_transformer_layer.5} parent=0 // pred_fallthru
    _
  // Predicated region
  $region6: #{xey_transformer_layer.5} parent=0 // pred_check
    _
  $region7: #{xey_transformer_layer.5} parent=0 // pred_check_branch
    %12 = sbr.rel (0) target = $region9
  $region8: #{xey_transformer_layer.5} parent=0 // pred_region
    _
  $region9: #{xey_transformer_layer.5} parent=0 // pred_fallthru
    _
  // Predicated region
  $region10: #{xey_transformer_layer.5} parent=0 // pred_check
    _
  $region11: #{xey_transformer_layer.5} parent=0 // pred_check_branch
    %14 = sbr.rel (0) target = $region13
  $region12: #{xey_transformer_layer.5} parent=0 // pred_region
    _
  $region13: #{xey_transformer_layer.5} parent=0 // pred_fallthru
    _
  // Predicated region
  $region14: #{xey_transformer_layer.5} parent=0 // pred_check
    _
  $region15: #{xey_transformer_layer.5} parent=0 // pred_check_branch
    %16 = sbr.rel (0) target = $region17
  $region16: #{xey_transformer_layer.5} parent=0 // pred_region
    _
  $region17: #{xey_transformer_layer.5} parent=0 // pred_fallthru
    _
  %v17 = vld [vmem:[%s0] sm:$0xff]
  %v18 = vld [vmem:[%s0 + $0x8] sm:$0xff]
  %v19 = vld [vmem:[%s2] sm:$0xff]
  %v20 = vld [vmem:[%s2 + $0x8] sm:$0xff]
  %v21 = vld [vmem:[%s2 + $0x10] sm:$0xff]
  %v22 = vld [vmem:[%s2 + $0x18] sm:$0xff]
  %v23 = vld [vmem:[%s2 + $0x20] sm:$0xff]
  %v24 = vld [vmem:[%s2 + $0x28] sm:$0xff]
  %v25 = vld [vmem:[%s2 + $0x30] sm:$0xff]
  %v26 = vld [vmem:[%s2 + $0x38] sm:$0xff]
  %v27 = vld [vmem:[%s3] sm:$0x3]
  %v29 = vperm.slane %v27, 0
  %v30 = vperm.slane %v27, 1
  %vm33 = vcmask 261120
  %v35 = vsel %vm33, %v17, 0
  %v38 = vsel %vm33, %v18, 0
  %40 = vmatpush.msra.mxu0 0.0
  %41 = vmatpush.msra.mxu0 0.0
  %42 = vmatpush.msra.mxu0 0.0
  %43 = vmatpush.msra.mxu0 0.0
  %44 = vmatpush.msra.mxu0 0.0
  %45 = vmatpush.msra.mxu0 0.0
  %46 = vmatpush.msra.mxu0 0.0
  %47 = vmatpush.msra.mxu0 0.0
  %48 = vmatpush.msra.mxu0 0.0
  %49 = vmatpush.msra.mxu0 0.0
  %50 = vmatpush.msra.mxu0 0.0
  %51 = vmatpush.msra.mxu0 0.0
  %52 = vmatpush.msra.mxu0 %v25
  %53 = vmatpush.msra.mxu0 %v23
  %54 = vmatpush.msra.mxu0 %v21
  %55 = vmatpush.msra.mxu0 %v19
  %56 = vmatmul.f32.gmra.mxu0 %v35
  %v57 = vpop.f32.mrf.mxu0
  %v58 = vadd.f32 %v29, %v57
  %59 = vmatmul.f32.gmra.mxu0 %v38
  %v60 = vpop.f32.mrf.mxu0
  %v61 = vadd.f32 %v29, %v60
  %62 = vdwg.mxu0
  %63 = vmatpush.msra.mxu0 0.0
  %64 = vmatpush.msra.mxu0 0.0
  %65 = vmatpush.msra.mxu0 0.0
  %66 = vmatpush.msra.mxu0 0.0
  %67 = vmatpush.msra.mxu0 0.0
  %68 = vmatpush.msra.mxu0 0.0
  %69 = vmatpush.msra.mxu0 0.0
  %70 = vmatpush.msra.mxu0 0.0
  %71 = vmatpush.msra.mxu0 0.0
  %72 = vmatpush.msra.mxu0 0.0
  %73 = vmatpush.msra.mxu0 0.0
  %74 = vmatpush.msra.mxu0 0.0
  %75 = vmatpush.msra.mxu0 %v26
  %76 = vmatpush.msra.mxu0 %v24
  %77 = vmatpush.msra.mxu0 %v22
  %78 = vmatpush.msra.mxu0 %v20
  %79 = vmatmul.f32.gmra.mxu0 %v35
  %v80 = vpop.f32.mrf.mxu0
  %v81 = vadd.f32 %v30, %v80
  %82 = vmatmul.f32.gmra.mxu0 %v38
  %v83 = vpop.f32.mrf.mxu0
  %v84 = vadd.f32 %v30, %v83
  %85 = vdwg.mxu0
  %v86 = vld [vmem:[%s1] sm:$0xff]
  %v87 = vld [vmem:[%s1 + $0x8] sm:$0xff]
  %89 = vset.pattern.permute.xlu0 0
  %90 = vperm.xlu0 %89, %v86
  %v91 = vpop.permute.xlu0 %90
  %94 = vset.pattern.permute.xlu0 0
  %95 = vperm.xlu0 %94, %v87
  %v96 = vpop.permute.xlu0 %95
  %v98 = vmul.f32 %v58, %v91
  %v99 = vmul.f32 %v81, %v91
  %v100 = vmul.f32 %v61, %v96
  %v101 = vmul.f32 %v84, %v96
  %102 = vst [vmem:[%s4] sm:$0xff] %v98
  %vm103 = vcmask 523264
  %104 = vst.msk [vmem:[%s4 + $0x8] sm:$0xff] %vm103, %v99
  %105 = vst [vmem:[%s4 + $0x10] sm:$0xff] %v100
  %106 = vst.msk [vmem:[%s4 + $0x18] sm:$0xff] %vm103, %v101
  // Predicated region
  $region18: #{xey_transformer_layer.5} parent=0 // pred_check
    _
  $region19: #{xey_transformer_layer.5} parent=0 // pred_check_branch
    %108 = sbr.rel (0) target = $region21
  $region20: #{xey_transformer_layer.5} parent=0 // pred_region
    _
  $region21: #{xey_transformer_layer.5} parent=0 // pred_fallthru
    _
  // Predicated region
  $region22: #{xey_transformer_layer.5} parent=0 // pred_check
    _
  $region23: #{xey_transformer_layer.5} parent=0 // pred_check_branch
    %110 = sbr.rel (0) target = $region25
  $region24: #{xey_transformer_layer.5} parent=0 // pred_region
    _
  $region25: #{xey_transformer_layer.5} parent=0 // pred_fallthru
    _

// kernel: xey_transformer_layer.6
$region0: #{xey_transformer_layer.6}
  #allocation0 [shape = 'u32[]', space=smem, size = 0x4, offset = 0x4, fixed_abs, tag = 'smem constant byte address 0x4 - core index']
  #allocation1 [shape = 'u32[72,128]{1,0:T(1,128)}', space=vmem, size = 0x9000, scoped, tag = 'internal scratch']
  %s0 = inlined_call_operand.vmem [shape: f32[2,16], index: 0, kind: input, shape index: {}]
  %s1 = inlined_call_operand.vmem [shape: f32[16,128], index: 1, kind: input, shape index: {}]
  %s2 = inlined_call_operand.vmem [shape: f32[1,128], index: 2, kind: input, shape index: {}]
  %s3 = inlined_call_operand.vmem [shape: f32[2,128], index: 3, kind: output, shape index: {}]
  %s4 = sld [smem:[#allocation0]]
  $region22: #{xey_transformer_layer.6} parent=0
    _
  %s6 = ssub.s32 1, %s4
  %s7 = scalar_select 0, %s6, %s4
  // Predicated region
  $region2: #{xey_transformer_layer.6} parent=0 // pred_check
    _
  $region3: #{xey_transformer_layer.6} parent=0 // pred_check_branch
    %9 = sbr.rel (0) target = $region5
  $region4: #{xey_transformer_layer.6} parent=0 // pred_region
    _
  $region5: #{xey_transformer_layer.6} parent=0 // pred_fallthru
    _
  // Predicated region
  $region6: #{xey_transformer_layer.6} parent=0 // pred_check
    _
  $region7: #{xey_transformer_layer.6} parent=0 // pred_check_branch
    %11 = sbr.rel (0) target = $region9
  $region8: #{xey_transformer_layer.6} parent=0 // pred_region
    _
  $region9: #{xey_transformer_layer.6} parent=0 // pred_fallthru
    _
  // Predicated region
  $region10: #{xey_transformer_layer.6} parent=0 // pred_check
    _
  $region11: #{xey_transformer_layer.6} parent=0 // pred_check_branch
    %13 = sbr.rel (0) target = $region13
  $region12: #{xey_transformer_layer.6} parent=0 // pred_region
    _
  $region13: #{xey_transformer_layer.6} parent=0 // pred_fallthru
    _
  %v14 = vld [vmem:[%s0] sm:$0x3]
  %v15 = vld [vmem:[%s1] sm:$0xff]
  %v16 = vld [vmem:[%s1 + $0x8] sm:$0xff]
  %v17 = vld [vmem:[%s2] sm:$0x1]
  %v19 = vperm.slane %v17, 0
  %vm21 = vcmask 130048
  %v23 = vsel %vm21, %v14, 0
  %25 = vmatpush.msra.mxu0 0.0
  %26 = vmatpush.msra.mxu0 0.0
  %27 = vmatpush.msra.mxu0 0.0
  %28 = vmatpush.msra.mxu0 0.0
  %29 = vmatpush.msra.mxu0 0.0
  %30 = vmatpush.msra.mxu0 0.0
  %31 = vmatpush.msra.mxu0 0.0
  %32 = vmatpush.msra.mxu0 0.0
  %33 = vmatpush.msra.mxu0 0.0
  %34 = vmatpush.msra.mxu0 0.0
  %35 = vmatpush.msra.mxu0 0.0
  %36 = vmatpush.msra.mxu0 0.0
  %37 = vmatpush.msra.mxu0 0.0
  %38 = vmatpush.msra.mxu0 0.0
  %39 = vmatpush.msra.mxu0 %v16
  %40 = vmatpush.msra.mxu0 %v15
  %41 = vmatmul.f32.gmra.mxu0 %v23
  %v42 = vpop.f32.mrf.mxu0
  %v43 = vadd.f32 %v19, %v42
  %44 = vdwg.mxu0
  %45 = vst [vmem:[%s3] sm:$0x3] %v43
  // Predicated region
  $region14: #{xey_transformer_layer.6} parent=0 // pred_check
    _
  $region15: #{xey_transformer_layer.6} parent=0 // pred_check_branch
    %47 = sbr.rel (0) target = $region17
  $region16: #{xey_transformer_layer.6} parent=0 // pred_region
    _
  $region17: #{xey_transformer_layer.6} parent=0 // pred_fallthru
    _
  // Predicated region
  $region18: #{xey_transformer_layer.6} parent=0 // pred_check
    _
  $region19: #{xey_transformer_layer.6} parent=0 // pred_check_branch
    %49 = sbr.rel (0) target = $region21
  $region20: #{xey_transformer_layer.6} parent=0 // pred_region
    _
  $region21: #{xey_transformer_layer.6} parent=0 // pred_fallthru
    _

// kernel: xey_transformer_layer.8
$region0: #{xey_transformer_layer.8}
  #allocation0 [shape = 'u32[]', space=smem, size = 0x4, offset = 0x4, fixed_abs, tag = 'smem constant byte address 0x4 - core index']
  #allocation1 [shape = 'u32[72,128]{1,0:T(1,128)}', space=vmem, size = 0x9000, scoped, tag = 'internal scratch']
  %s0 = inlined_call_operand.vmem [shape: f32[2,8,32], index: 0, kind: input, shape index: {}]
  %s1 = inlined_call_operand.vmem [shape: f32[2,8,32], index: 1, kind: input, shape index: {}]
  %s2 = inlined_call_operand.vmem [shape: f32[2,1,64], index: 2, kind: input, shape index: {}]
  %s3 = inlined_call_operand.vmem [shape: f32[2,8,1], index: 3, kind: input, shape index: {}]
  %s4 = inlined_call_operand.vmem [shape: f32[32,32], index: 4, kind: input, shape index: {}]
  %s5 = inlined_call_operand.vmem [shape: f32[32,32], index: 5, kind: input, shape index: {}]
  %s6 = inlined_call_operand.vmem [shape: f32[1,32], index: 6, kind: input, shape index: {}]
  %s7 = inlined_call_operand.vmem [shape: f32[32,32], index: 7, kind: input, shape index: {}]
  %s8 = inlined_call_operand.vmem [shape: f32[1,32], index: 8, kind: input, shape index: {}]
  %s9 = inlined_call_operand.vmem [shape: f32[4,32], index: 9, kind: input, shape index: {}]
  %s10 = inlined_call_operand.vmem [shape: f32[32,64], index: 10, kind: input, shape index: {}]
  %s11 = inlined_call_operand.vmem [shape: f32[1,64], index: 11, kind: input, shape index: {}]
  %s12 = inlined_call_operand.vmem [shape: f32[64,32], index: 12, kind: input, shape index: {}]
  %s13 = inlined_call_operand.vmem [shape: f32[1,32], index: 13, kind: input, shape index: {}]
  %s14 = inlined_call_operand.hbm [shape: f32[2,8,32], index: 14, kind: output, shape index: {}]
  %s15 = sld [smem:[#allocation0]]
  $region89: #{xey_transformer_layer.8} parent=0
    _
  %s17 = ssub.s32 1, %s15
  %s18 = scalar_select 0, %s17, %s15
  $region1: #{xey_transformer_layer.8} parent=0
    #allocation2 [shape = 'u8[8192]{0}', space=vmem, size = 0x2000, scoped, tag = 'output window, operand 0']
    #allocation3 [shape = 's32[2]{0}', space=sflag, size = 0x8, scoped, tag = 'scoped memory for xey_transformer_layer.8']
    %19 = vsyncpa [#allocation3], 0
    %s20 = scalar_lea.sflag [#allocation3], 1
    %21 = vsyncpa %s20, 0
    loop: start=0, step=1, limit=4
    $region2: #{xey_transformer_layer.8} parent=1 // loop_pre_header
      _
    $region3: #{xey_transformer_layer.8} parent=1 // loop_header
      %s23 = sphi 0, %s27
      %p24 = scmp.ge.s32.totalorder %s23, 4
      %s30 = sphi 0, %s42
      %s31 = sphi 0, %s38
      %s32 = sphi 0, %s30
      %s33 = sphi 0, %s31
      %s34 = sphi 0, %s32
      %s35 = sphi 0, %s33
      %s47 = sphi 0, %s49
      %s50 = sphi 0, %s47
      %s51 = sphi 0, %s50
      %s67 = sphi 0, %s51
      %s75 = sphi 0, %s77
      %s78 = sphi 0, %s75
      %s79 = sphi 0, %s78
      %s95 = sphi 0, %s79
      %s101 = sphi 0, %s103
      %s104 = sphi 0, %s101
      %s105 = sphi 0, %s104
      %s121 = sphi 0, %s105
      %s129 = sphi 0, %s131
      %s132 = sphi 0, %s129
      %s133 = sphi 0, %s132
      %s149 = sphi 0, %s133
      %s153 = sphi 0, %s153
      %s155 = sphi 0, %s153
      %s156 = sphi 0, %s155
      %s170 = sphi 0, %s156
      %s174 = sphi 0, %s174
      %s176 = sphi 0, %s174
      %s177 = sphi 0, %s176
      %s191 = sphi 0, %s177
      %s195 = sphi 0, %s195
      %s197 = sphi 0, %s195
      %s198 = sphi 0, %s197
      %s212 = sphi 0, %s198
      %s216 = sphi 0, %s216
      %s218 = sphi 0, %s216
      %s219 = sphi 0, %s218
      %s233 = sphi 0, %s219
      %s237 = sphi 0, %s237
      %s239 = sphi 0, %s237
      %s240 = sphi 0, %s239
      %s254 = sphi 0, %s240
      %s258 = sphi 0, %s258
      %s260 = sphi 0, %s258
      %s261 = sphi 0, %s260
      %s275 = sphi 0, %s261
      %s279 = sphi 0, %s279
      %s281 = sphi 0, %s279
      %s282 = sphi 0, %s281
      %s296 = sphi 0, %s282
      %s300 = sphi 0, %s300
      %s302 = sphi 0, %s300
      %s303 = sphi 0, %s302
      %s317 = sphi 0, %s303
      %s321 = sphi 0, %s321
      %s323 = sphi 0, %s321
      %s324 = sphi 0, %s323
      %s338 = sphi 0, %s324
      %s342 = sphi 0, %s342
      %s344 = sphi 0, %s342
      %s345 = sphi 0, %s344
      %s359 = sphi 0, %s345
      %s367 = sphi 0, %s369
      %s370 = sphi 0, %s367
      %s371 = sphi 0, %s370
      %s387 = sphi 0, %s371
    $region4: #{xey_transformer_layer.8} parent=1 // loop_header_branch
      %26 = sbr.rel (%p24) target = $region8
    $region5: #{xey_transformer_layer.8} parent=1 // loop_body
      %s28 = ssub.s32 %s23, 1
      %s29 = ssub.s32 %s23, 2
      %s36 = sadd.s32 1, %s31
      %p37 = scmp.ge.s32.totalorder %s36, 1
      %s38 = scalar_select %p37, 0, %s36
      %s39 = sadd.s32 1, %s30
      %s40 = scalar_select %p37, %s39, %s30
      %p41 = scmp.ge.s32.totalorder %s40, 2
      %s42 = scalar_select %p41, 0, %s40
      %s43 = ssub.s32 %s30, %s42
      %s44 = ssub.s32 %s31, %s38
      %s45 = sor.u32 %s43, %s44
      %p46 = scmp.eq.s32.totalorder %s45, 0
      %s48 = sadd.s32 %s47, 1
      %s49 = scalar_select %p46, %s47, %s48
      %p52 = pneg %p46
      %p53 = scmp.eq.s32.totalorder %s23, 1
      %p54 = por %p52, %p53
      %p55 = scmp.ne.s32.totalorder %s47, %s50
      %p56 = scmp.eq.s32.totalorder %s23, 0
      %p57 = por %p55, %p56
      %p58 = scmp.ne.s32.totalorder %s47, %s50
      %p59 = scmp.eq.s32.totalorder %s28, 1
      %p60 = por %p58, %p59
      %p61 = scmp.ne.s32.totalorder %s50, %s51
      %p62 = scmp.eq.s32.totalorder %s28, 0
      %p63 = por %p61, %p62
      %p64 = scmp.ne.s32.totalorder %s50, %s51
      %p65 = scmp.eq.s32.totalorder %s29, 1
      %p66 = por %p64, %p65
      %p68 = scmp.ne.s32.totalorder %s51, %s67
      %p69 = scmp.eq.s32.totalorder %s29, 0
      %p70 = por %p68, %p69
      %s71 = ssub.s32 %s30, %s42
      %s72 = ssub.s32 %s31, %s38
      %s73 = sor.u32 %s71, %s72
      %p74 = scmp.eq.s32.totalorder %s73, 0
      %s76 = sadd.s32 %s75, 1
      %s77 = scalar_select %p74, %s75, %s76
      %p80 = pneg %p74
      %p81 = scmp.eq.s32.totalorder %s23, 1
      %p82 = por %p80, %p81
      %p83 = scmp.ne.s32.totalorder %s75, %s78
      %p84 = scmp.eq.s32.totalorder %s23, 0
      %p85 = por %p83, %p84
      %p86 = scmp.ne.s32.totalorder %s75, %s78
      %p87 = scmp.eq.s32.totalorder %s28, 1
      %p88 = por %p86, %p87
      %p89 = scmp.ne.s32.totalorder %s78, %s79
      %p90 = scmp.eq.s32.totalorder %s28, 0
      %p91 = por %p89, %p90
      %p92 = scmp.ne.s32.totalorder %s78, %s79
      %p93 = scmp.eq.s32.totalorder %s29, 1
      %p94 = por %p92, %p93
      %p96 = scmp.ne.s32.totalorder %s79, %s95
      %p97 = scmp.eq.s32.totalorder %s29, 0
      %p98 = por %p96, %p97
      %s99 = ssub.s32 %s30, %s42
      %p100 = scmp.eq.s32.totalorder %s99, 0
      %s102 = sadd.s32 %s101, 1
      %s103 = scalar_select %p100, %s101, %s102
      %p106 = pneg %p100
      %p107 = scmp.eq.s32.totalorder %s23, 1
      %p108 = por %p106, %p107
      %p109 = scmp.ne.s32.totalorder %s101, %s104
      %p110 = scmp.eq.s32.totalorder %s23, 0
      %p111 = por %p109, %p110
      %p112 = scmp.ne.s32.totalorder %s101, %s104
      %p113 = scmp.eq.s32.totalorder %s28, 1
      %p114 = por %p112, %p113
      %p115 = scmp.ne.s32.totalorder %s104, %s105
      %p116 = scmp.eq.s32.totalorder %s28, 0
      %p117 = por %p115, %p116
      %p118 = scmp.ne.s32.totalorder %s104, %s105
      %p119 = scmp.eq.s32.totalorder %s29, 1
      %p120 = por %p118, %p119
      %p122 = scmp.ne.s32.totalorder %s105, %s121
      %p123 = scmp.eq.s32.totalorder %s29, 0
      %p124 = por %p122, %p123
      %s125 = ssub.s32 %s30, %s42
      %s126 = ssub.s32 %s31, %s38
      %s127 = sor.u32 %s125, %s126
      %p128 = scmp.eq.s32.totalorder %s127, 0
      %s130 = sadd.s32 %s129, 1
      %s131 = scalar_select %p128, %s129, %s130
      %p134 = pneg %p128
      %p135 = scmp.eq.s32.totalorder %s23, 1
      %p136 = por %p134, %p135
      %p137 = scmp.ne.s32.totalorder %s129, %s132
      %p138 = scmp.eq.s32.totalorder %s23, 0
      %p139 = por %p137, %p138
      %p140 = scmp.ne.s32.totalorder %s129, %s132
      %p141 = scmp.eq.s32.totalorder %s28, 1
      %p142 = por %p140, %p141
      %p143 = scmp.ne.s32.totalorder %s132, %s133
      %p144 = scmp.eq.s32.totalorder %s28, 0
      %p145 = por %p143, %p144
      %p146 = scmp.ne.s32.totalorder %s132, %s133
      %p147 = scmp.eq.s32.totalorder %s29, 1
      %p148 = por %p146, %p147
      %p150 = scmp.ne.s32.totalorder %s133, %s149
      %p151 = scmp.eq.s32.totalorder %s29, 0
      %p152 = por %p150, %p151
      %s154 = sadd.s32 %s153, 1
      %p157 = scmp.eq.s32.totalorder %s23, 1
      %p158 = scmp.ne.s32.totalorder %s153, %s155
      %p159 = scmp.eq.s32.totalorder %s23, 0
      %p160 = por %p158, %p159
      %p161 = scmp.ne.s32.totalorder %s153, %s155
      %p162 = scmp.eq.s32.totalorder %s28, 1
      %p163 = por %p161, %p162
      %p164 = scmp.ne.s32.totalorder %s155, %s156
      %p165 = scmp.eq.s32.totalorder %s28, 0
      %p166 = por %p164, %p165
      %p167 = scmp.ne.s32.totalorder %s155, %s156
      %p168 = scmp.eq.s32.totalorder %s29, 1
      %p169 = por %p167, %p168
      %p171 = scmp.ne.s32.totalorder %s156, %s170
      %p172 = scmp.eq.s32.totalorder %s29, 0
      %p173 = por %p171, %p172
      %s175 = sadd.s32 %s174, 1
      %p178 = scmp.eq.s32.totalorder %s23, 1
      %p179 = scmp.ne.s32.totalorder %s174, %s176
      %p180 = scmp.eq.s32.totalorder %s23, 0
      %p181 = por %p179, %p180
      %p182 = scmp.ne.s32.totalorder %s174, %s176
      %p183 = scmp.eq.s32.totalorder %s28, 1
      %p184 = por %p182, %p183
      %p185 = scmp.ne.s32.totalorder %s176, %s177
      %p186 = scmp.eq.s32.totalorder %s28, 0
      %p187 = por %p185, %p186
      %p188 = scmp.ne.s32.totalorder %s176, %s177
      %p189 = scmp.eq.s32.totalorder %s29, 1
      %p190 = por %p188, %p189
      %p192 = scmp.ne.s32.totalorder %s177, %s191
      %p193 = scmp.eq.s32.totalorder %s29, 0
      %p194 = por %p192, %p193
      %s196 = sadd.s32 %s195, 1
      %p199 = scmp.eq.s32.totalorder %s23, 1
      %p200 = scmp.ne.s32.totalorder %s195, %s197
      %p201 = scmp.eq.s32.totalorder %s23, 0
      %p202 = por %p200, %p201
      %p203 = scmp.ne.s32.totalorder %s195, %s197
      %p204 = scmp.eq.s32.totalorder %s28, 1
      %p205 = por %p203, %p204
      %p206 = scmp.ne.s32.totalorder %s197, %s198
      %p207 = scmp.eq.s32.totalorder %s28, 0
      %p208 = por %p206, %p207
      %p209 = scmp.ne.s32.totalorder %s197, %s198
      %p210 = scmp.eq.s32.totalorder %s29, 1
      %p211 = por %p209, %p210
      %p213 = scmp.ne.s32.totalorder %s198, %s212
      %p214 = scmp.eq.s32.totalorder %s29, 0
      %p215 = por %p213, %p214
      %s217 = sadd.s32 %s216, 1
      %p220 = scmp.eq.s32.totalorder %s23, 1
      %p221 = scmp.ne.s32.totalorder %s216, %s218
      %p222 = scmp.eq.s32.totalorder %s23, 0
      %p223 = por %p221, %p222
      %p224 = scmp.ne.s32.totalorder %s216, %s218
      %p225 = scmp.eq.s32.totalorder %s28, 1
      %p226 = por %p224, %p225
      %p227 = scmp.ne.s32.totalorder %s218, %s219
      %p228 = scmp.eq.s32.totalorder %s28, 0
      %p229 = por %p227, %p228
      %p230 = scmp.ne.s32.totalorder %s218, %s219
      %p231 = scmp.eq.s32.totalorder %s29, 1
      %p232 = por %p230, %p231
      %p234 = scmp.ne.s32.totalorder %s219, %s233
      %p235 = scmp.eq.s32.totalorder %s29, 0
      %p236 = por %p234, %p235
      %s238 = sadd.s32 %s237, 1
      %p241 = scmp.eq.s32.totalorder %s23, 1
      %p242 = scmp.ne.s32.totalorder %s237, %s239
      %p243 = scmp.eq.s32.totalorder %s23, 0
      %p244 = por %p242, %p243
      %p245 = scmp.ne.s32.totalorder %s237, %s239
      %p246 = scmp.eq.s32.totalorder %s28, 1
      %p247 = por %p245, %p246
      %p248 = scmp.ne.s32.totalorder %s239, %s240
      %p249 = scmp.eq.s32.totalorder %s28, 0
      %p250 = por %p248, %p249
      %p251 = scmp.ne.s32.totalorder %s239, %s240
      %p252 = scmp.eq.s32.totalorder %s29, 1
      %p253 = por %p251, %p252
      %p255 = scmp.ne.s32.totalorder %s240, %s254
      %p256 = scmp.eq.s32.totalorder %s29, 0
      %p257 = por %p255, %p256
      %s259 = sadd.s32 %s258, 1
      %p262 = scmp.eq.s32.totalorder %s23, 1
      %p263 = scmp.ne.s32.totalorder %s258, %s260
      %p264 = scmp.eq.s32.totalorder %s23, 0
      %p265 = por %p263, %p264
      %p266 = scmp.ne.s32.totalorder %s258, %s260
      %p267 = scmp.eq.s32.totalorder %s28, 1
      %p268 = por %p266, %p267
      %p269 = scmp.ne.s32.totalorder %s260, %s261
      %p270 = scmp.eq.s32.totalorder %s28, 0
      %p271 = por %p269, %p270
      %p272 = scmp.ne.s32.totalorder %s260, %s261
      %p273 = scmp.eq.s32.totalorder %s29, 1
      %p274 = por %p272, %p273
      %p276 = scmp.ne.s32.totalorder %s261, %s275
      %p277 = scmp.eq.s32.totalorder %s29, 0
      %p278 = por %p276, %p277
      %s280 = sadd.s32 %s279, 1
      %p283 = scmp.eq.s32.totalorder %s23, 1
      %p284 = scmp.ne.s32.totalorder %s279, %s281
      %p285 = scmp.eq.s32.totalorder %s23, 0
      %p286 = por %p284, %p285
      %p287 = scmp.ne.s32.totalorder %s279, %s281
      %p288 = scmp.eq.s32.totalorder %s28, 1
      %p289 = por %p287, %p288
      %p290 = scmp.ne.s32.totalorder %s281, %s282
      %p291 = scmp.eq.s32.totalorder %s28, 0
      %p292 = por %p290, %p291
      %p293 = scmp.ne.s32.totalorder %s281, %s282
      %p294 = scmp.eq.s32.totalorder %s29, 1
      %p295 = por %p293, %p294
      %p297 = scmp.ne.s32.totalorder %s282, %s296
      %p298 = scmp.eq.s32.totalorder %s29, 0
      %p299 = por %p297, %p298
      %s301 = sadd.s32 %s300, 1
      %p304 = scmp.eq.s32.totalorder %s23, 1
      %p305 = scmp.ne.s32.totalorder %s300, %s302
      %p306 = scmp.eq.s32.totalorder %s23, 0
      %p307 = por %p305, %p306
      %p308 = scmp.ne.s32.totalorder %s300, %s302
      %p309 = scmp.eq.s32.totalorder %s28, 1
      %p310 = por %p308, %p309
      %p311 = scmp.ne.s32.totalorder %s302, %s303
      %p312 = scmp.eq.s32.totalorder %s28, 0
      %p313 = por %p311, %p312
      %p314 = scmp.ne.s32.totalorder %s302, %s303
      %p315 = scmp.eq.s32.totalorder %s29, 1
      %p316 = por %p314, %p315
      %p318 = scmp.ne.s32.totalorder %s303, %s317
      %p319 = scmp.eq.s32.totalorder %s29, 0
      %p320 = por %p318, %p319
      %s322 = sadd.s32 %s321, 1
      %p325 = scmp.eq.s32.totalorder %s23, 1
      %p326 = scmp.ne.s32.totalorder %s321, %s323
      %p327 = scmp.eq.s32.totalorder %s23, 0
      %p328 = por %p326, %p327
      %p329 = scmp.ne.s32.totalorder %s321, %s323
      %p330 = scmp.eq.s32.totalorder %s28, 1
      %p331 = por %p329, %p330
      %p332 = scmp.ne.s32.totalorder %s323, %s324
      %p333 = scmp.eq.s32.totalorder %s28, 0
      %p334 = por %p332, %p333
      %p335 = scmp.ne.s32.totalorder %s323, %s324
      %p336 = scmp.eq.s32.totalorder %s29, 1
      %p337 = por %p335, %p336
      %p339 = scmp.ne.s32.totalorder %s324, %s338
      %p340 = scmp.eq.s32.totalorder %s29, 0
      %p341 = por %p339, %p340
      %s343 = sadd.s32 %s342, 1
      %p346 = scmp.eq.s32.totalorder %s23, 1
      %p347 = scmp.ne.s32.totalorder %s342, %s344
      %p348 = scmp.eq.s32.totalorder %s23, 0
      %p349 = por %p347, %p348
      %p350 = scmp.ne.s32.totalorder %s342, %s344
      %p351 = scmp.eq.s32.totalorder %s28, 1
      %p352 = por %p350, %p351
      %p353 = scmp.ne.s32.totalorder %s344, %s345
      %p354 = scmp.eq.s32.totalorder %s28, 0
      %p355 = por %p353, %p354
      %p356 = scmp.ne.s32.totalorder %s344, %s345
      %p357 = scmp.eq.s32.totalorder %s29, 1
      %p358 = por %p356, %p357
      %p360 = scmp.ne.s32.totalorder %s345, %s359
      %p361 = scmp.eq.s32.totalorder %s29, 0
      %p362 = por %p360, %p361
      %s363 = ssub.s32 %s30, %s42
      %s364 = ssub.s32 %s31, %s38
      %s365 = sor.u32 %s363, %s364
      %p366 = scmp.eq.s32.totalorder %s365, 0
      %s368 = sadd.s32 %s367, 1
      %s369 = scalar_select %p366, %s367, %s368
      %p372 = pneg %p366
      %p373 = scmp.eq.s32.totalorder %s23, 1
      %p374 = por %p372, %p373
      %p375 = scmp.ne.s32.totalorder %s367, %s370
      %p376 = scmp.eq.s32.totalorder %s23, 0
      %p377 = por %p375, %p376
      %p378 = scmp.ne.s32.totalorder %s367, %s370
      %p379 = scmp.eq.s32.totalorder %s28, 1
      %p380 = por %p378, %p379
      %p381 = scmp.ne.s32.totalorder %s370, %s371
      %p382 = scmp.eq.s32.totalorder %s28, 0
      %p383 = por %p381, %p382
      %p384 = scmp.ne.s32.totalorder %s370, %s371
      %p385 = scmp.eq.s32.totalorder %s29, 1
      %p386 = por %p384, %p385
      %p388 = scmp.ne.s32.totalorder %s371, %s387
      %p389 = scmp.eq.s32.totalorder %s29, 0
      %p390 = por %p388, %p389
      %p391 = scmp.le.s32.totalorder 1, %s23
      %p392 = scmp.lt.s32.totalorder %s23, 3
      %p393 = pnand %p391, %p392
      %p394 = pneg %p393
      // Predicated region
      $region9: #{xey_transformer_layer.8} parent=5 // pred_check
        _
      $region10: #{xey_transformer_layer.8} parent=5 // pred_check_branch
        %396 = sbr.rel (%p393) target = $region12
      $region11: #{xey_transformer_layer.8} parent=5 // pred_region
        %s397 = ssub.s32 %s23, 1
        // Predicated region
        $region13: #{xey_transformer_layer.8} parent=11 // pred_check
          %p398 = pneg %p166
        $region14: #{xey_transformer_layer.8} parent=11 // pred_check_branch
          %400 = sbr.rel (%p398) target = $region16
        $region15: #{xey_transformer_layer.8} parent=11 // pred_region
          _
        $region16: #{xey_transformer_layer.8} parent=11 // pred_fallthru
          _
        // Predicated region
        $region17: #{xey_transformer_layer.8} parent=11 // pred_check
          %p401 = pneg %p187
        $region18: #{xey_transformer_layer.8} parent=11 // pred_check_branch
          %403 = sbr.rel (%p401) target = $region20
        $region19: #{xey_transformer_layer.8} parent=11 // pred_region
          _
        $region20: #{xey_transformer_layer.8} parent=11 // pred_fallthru
          _
        // Predicated region
        $region21: #{xey_transformer_layer.8} parent=11 // pred_check
          %p404 = pneg %p208
        $region22: #{xey_transformer_layer.8} parent=11 // pred_check_branch
          %406 = sbr.rel (%p404) target = $region24
        $region23: #{xey_transformer_layer.8} parent=11 // pred_region
          _
        $region24: #{xey_transformer_layer.8} parent=11 // pred_fallthru
          _
        // Predicated region
        $region25: #{xey_transformer_layer.8} parent=11 // pred_check
          %p407 = pneg %p229
        $region26: #{xey_transformer_layer.8} parent=11 // pred_check_branch
          %409 = sbr.rel (%p407) target = $region28
        $region27: #{xey_transformer_layer.8} parent=11 // pred_region
          _
        $region28: #{xey_transformer_layer.8} parent=11 // pred_fallthru
          _
        // Predicated region
        $region29: #{xey_transformer_layer.8} parent=11 // pred_check
          %p410 = pneg %p250
        $region30: #{xey_transformer_layer.8} parent=11 // pred_check_branch
          %412 = sbr.rel (%p410) target = $region32
        $region31: #{xey_transformer_layer.8} parent=11 // pred_region
          _
        $region32: #{xey_transformer_layer.8} parent=11 // pred_fallthru
          _
        // Predicated region
        $region33: #{xey_transformer_layer.8} parent=11 // pred_check
          %p413 = pneg %p271
        $region34: #{xey_transformer_layer.8} parent=11 // pred_check_branch
          %415 = sbr.rel (%p413) target = $region36
        $region35: #{xey_transformer_layer.8} parent=11 // pred_region
          _
        $region36: #{xey_transformer_layer.8} parent=11 // pred_fallthru
          _
        // Predicated region
        $region37: #{xey_transformer_layer.8} parent=11 // pred_check
          %p416 = pneg %p292
        $region38: #{xey_transformer_layer.8} parent=11 // pred_check_branch
          %418 = sbr.rel (%p416) target = $region40
        $region39: #{xey_transformer_layer.8} parent=11 // pred_region
          _
        $region40: #{xey_transformer_layer.8} parent=11 // pred_fallthru
          _
        // Predicated region
        $region41: #{xey_transformer_layer.8} parent=11 // pred_check
          %p419 = pneg %p313
        $region42: #{xey_transformer_layer.8} parent=11 // pred_check_branch
          %421 = sbr.rel (%p419) target = $region44
        $region43: #{xey_transformer_layer.8} parent=11 // pred_region
          _
        $region44: #{xey_transformer_layer.8} parent=11 // pred_fallthru
          _
        // Predicated region
        $region45: #{xey_transformer_layer.8} parent=11 // pred_check
          %p422 = pneg %p334
        $region46: #{xey_transformer_layer.8} parent=11 // pred_check_branch
          %424 = sbr.rel (%p422) target = $region48
        $region47: #{xey_transformer_layer.8} parent=11 // pred_region
          _
        $region48: #{xey_transformer_layer.8} parent=11 // pred_fallthru
          _
        // Predicated region
        $region49: #{xey_transformer_layer.8} parent=11 // pred_check
          %p425 = pneg %p355
        $region50: #{xey_transformer_layer.8} parent=11 // pred_check_branch
          %427 = sbr.rel (%p425) target = $region52
        $region51: #{xey_transformer_layer.8} parent=11 // pred_region
          _
        $region52: #{xey_transformer_layer.8} parent=11 // pred_fallthru
          _
      $region12: #{xey_transformer_layer.8} parent=5 // pred_fallthru
        _
      %p428 = scmp.lt.s32.totalorder %s23, 2
      // Predicated region
      $region53: #{xey_transformer_layer.8} parent=5 // pred_check
        %p429 = pneg %p428
      $region54: #{xey_transformer_layer.8} parent=5 // pred_check_branch
        %431 = sbr.rel (%p429) target = $region56
      $region55: #{xey_transformer_layer.8} parent=5 // pred_region
        // Predicated region
        $region57: #{xey_transformer_layer.8} parent=55 // pred_check
          %p432 = pneg %p57
        $region58: #{xey_transformer_layer.8} parent=55 // pred_check_branch
          %434 = sbr.rel (%p432) target = $region60
        $region59: #{xey_transformer_layer.8} parent=55 // pred_region
          %p435 = scmp.lt.s32.totalorder %s30, 1
          %s436 = scalar_select %p435, %s30, 1
          %p437 = scmp.lt.s32.totalorder %s31, 0
          %s438 = scalar_select %p437, %s31, 0
          %s439 = sadd.s32 %s438, %s436
          %s440 = smul.addr %s439, 8
          %s441 = scalar_lea.vmem %s0, %s440
        $region60: #{xey_transformer_layer.8} parent=55 // pred_fallthru
          _
        // Predicated region
        $region61: #{xey_transformer_layer.8} parent=55 // pred_check
          %p442 = pneg %p85
        $region62: #{xey_transformer_layer.8} parent=55 // pred_check_branch
          %444 = sbr.rel (%p442) target = $region64
        $region63: #{xey_transformer_layer.8} parent=55 // pred_region
          %p445 = scmp.lt.s32.totalorder %s30, 1
          %s446 = scalar_select %p445, %s30, 1
          %p447 = scmp.lt.s32.totalorder %s31, 0
          %s448 = scalar_select %p447, %s31, 0
          %s449 = sadd.s32 %s448, %s446
          %s450 = smul.addr %s449, 8
          %s451 = scalar_lea.vmem %s1, %s450
        $region64: #{xey_transformer_layer.8} parent=55 // pred_fallthru
          _
        // Predicated region
        $region65: #{xey_transformer_layer.8} parent=55 // pred_check
          %p452 = pneg %p111
        $region66: #{xey_transformer_layer.8} parent=55 // pred_check_branch
          %454 = sbr.rel (%p452) target = $region68
        $region67: #{xey_transformer_layer.8} parent=55 // pred_region
          %p455 = scmp.lt.s32.totalorder %s30, 1
          %s456 = scalar_select %p455, %s30, 1
          %s457 = scalar_lea.vmem %s2, %s456
        $region68: #{xey_transformer_layer.8} parent=55 // pred_fallthru
          _
        // Predicated region
        $region69: #{xey_transformer_layer.8} parent=55 // pred_check
          %p458 = pneg %p139
        $region70: #{xey_transformer_layer.8} parent=55 // pred_check_branch
          %460 = sbr.rel (%p458) target = $region72
        $region71: #{xey_transformer_layer.8} parent=55 // pred_region
          %p461 = scmp.lt.s32.totalorder %s30, 1
          %s462 = scalar_select %p461, %s30, 1
          %p463 = scmp.lt.s32.totalorder %s31, 0
          %s464 = scalar_select %p463, %s31, 0
          %s465 = sadd.s32 %s464, %s462
          %s466 = smul.addr %s465, 8
          %s467 = scalar_lea.vmem %s3, %s466
        $region72: #{xey_transformer_layer.8} parent=55 // pred_fallthru
          _
      $region56: #{xey_transformer_layer.8} parent=5 // pred_fallthru
        _
      %p468 = scmp.le.s32.totalorder 1, %s23
      %p469 = scmp.lt.s32.totalorder %s23, 3
      %p470 = pnand %p468, %p469
      %p471 = pneg %p470
      // Predicated region
      $region73: #{xey_transformer_layer.8} parent=5 // pred_check
        _
      $region74: #{xey_transformer_layer.8} parent=5 // pred_check_branch
        %473 = sbr.rel (%p470) target = $region76
      $region75: #{xey_transformer_layer.8} parent=5 // pred_region
        %s474 = ssub.s32 %s23, 1
        %p475 = scmp.lt.s32.totalorder %s32, 1
        %s476 = scalar_select %p475, %s32, 1
        %p477 = scmp.lt.s32.totalorder %s33, 0
        %s478 = scalar_select %p477, %s33, 0
        %s479 = sadd.s32 %s478, %s476
        %s480 = smul.addr %s479, 8
        %s481 = scalar_lea.vmem %s0, %s480
        %p482 = pneg %p63
        %p483 = pneg %p60
        %p484 = scmp.lt.s32.totalorder %s32, 1
        %s485 = scalar_select %p484, %s32, 1
        %p486 = scmp.lt.s32.totalorder %s33, 0
        %s487 = scalar_select %p486, %s33, 0
        %s488 = sadd.s32 %s487, %s485
        %s489 = smul.addr %s488, 8
        %s490 = scalar_lea.vmem %s1, %s489
        %p491 = pneg %p91
        %p492 = pneg %p88
        %p493 = scmp.lt.s32.totalorder %s32, 1
        %s494 = scalar_select %p493, %s32, 1
        %s495 = scalar_lea.vmem %s2, %s494
        %p496 = pneg %p117
        %p497 = pneg %p114
        %p498 = scmp.lt.s32.totalorder %s32, 1
        %s499 = scalar_select %p498, %s32, 1
        %p500 = scmp.lt.s32.totalorder %s33, 0
        %s501 = scalar_select %p500, %s33, 0
        %s502 = sadd.s32 %s501, %s499
        %s503 = smul.addr %s502, 8
        %s504 = scalar_lea.vmem %s3, %s503
        %p505 = pneg %p145
        %p506 = pneg %p142
        %p507 = pneg %p166
        %p508 = pneg %p163
        %p509 = pneg %p187
        %p510 = pneg %p184
        %p511 = pneg %p208
        %p512 = pneg %p205
        %p513 = pneg %p229
        %p514 = pneg %p226
        %p515 = pneg %p250
        %p516 = pneg %p247
        %p517 = pneg %p271
        %p518 = pneg %p268
        %p519 = pneg %p292
        %p520 = pneg %p289
        %p521 = pneg %p313
        %p522 = pneg %p310
        %p523 = pneg %p334
        %p524 = pneg %p331
        %p525 = pneg %p355
        %p526 = pneg %p352
        %p527 = pneg %p383
        %p528 = pneg %p380
        %s529 = sand.u32 %s370, 1
        %s530 = scalar_lea.sflag [#allocation3], %s529
        %s531 = sand.u32 %s370, 1
        %s532 = smul.addr %s531, 8
        %s533 = scalar_lea.vmem [#allocation2], %s532
        %p534 = scmp.lt.s32.totalorder %s32, 1
        %s535 = scalar_select %p534, %s32, 1
        %p536 = scmp.lt.s32.totalorder %s33, 0
        %s537 = scalar_select %p536, %s33, 0
        %s538 = sadd.s32 %s537, %s535
        %s539 = smul.addr %s538, 8
        %s540 = scalar_lea.vmem %s0, %s539
        %p541 = scmp.lt.s32.totalorder %s32, 1
        %s542 = scalar_select %p541, %s32, 1
        %p543 = scmp.lt.s32.totalorder %s33, 0
        %s544 = scalar_select %p543, %s33, 0
        %s545 = sadd.s32 %s544, %s542
        %s546 = smul.addr %s545, 8
        %s547 = scalar_lea.vmem %s1, %s546
        %p548 = scmp.lt.s32.totalorder %s32, 1
        %s549 = scalar_select %p548, %s32, 1
        %s550 = scalar_lea.vmem %s2, %s549
        %p551 = scmp.lt.s32.totalorder %s32, 1
        %s552 = scalar_select %p551, %s32, 1
        %p553 = scmp.lt.s32.totalorder %s33, 0
        %s554 = scalar_select %p553, %s33, 0
        %s555 = sadd.s32 %s554, %s552
        %s556 = smul.addr %s555, 8
        %s557 = scalar_lea.vmem %s3, %s556
        %v558 = vld [vmem:[%s540] sm:$0xff]
        %v559 = vld [vmem:[%s547] sm:$0xff]
        %v560 = vld [vmem:[%s557] sm:$0xff]
        %v561 = vld [vmem:[%s550] sm:$0x1]
        %v562 = vadd.f32 %v561, 1.0
        %v564 = vperm.slane %v562, 0
        %567 = vrot.lane.b32.xlu0 %v559, 32
        %v568 = vpop.permute.xlu0 %567
        %v570 = vmul.f32 %v564, %v568
        %v572 = vperm.slane %v561, 0
        %575 = vrot.lane.b32.xlu0 %v570, 96
        %v576 = vpop.permute.xlu0 %575
        %v578 = vadd.f32 %v572, %v576
        %v579 = vld [vmem:[%s4] sm:$0xff]
        %v580 = vld [vmem:[%s4 + $0x8] sm:$0xff]
        %v581 = vld [vmem:[%s4 + $0x10] sm:$0xff]
        %v582 = vld [vmem:[%s4 + $0x18] sm:$0xff]
        %v583 = vld [vmem:[%s5] sm:$0xff]
        %v584 = vld [vmem:[%s5 + $0x8] sm:$0xff]
        %v585 = vld [vmem:[%s5 + $0x10] sm:$0xff]
        %v586 = vld [vmem:[%s5 + $0x18] sm:$0xff]
        %vm587 = vcmask 261120
        %v588 = vsel %vm587, %v559, 0
        %590 = vmatpush.msra.mxu0 0.0
        %591 = vmatpush.msra.mxu0 0.0
        %592 = vmatpush.msra.mxu0 0.0
        %593 = vmatpush.msra.mxu0 0.0
        %594 = vmatpush.msra.mxu0 0.0
        %595 = vmatpush.msra.mxu0 0.0
        %596 = vmatpush.msra.mxu0 0.0
        %597 = vmatpush.msra.mxu0 0.0
        %598 = vmatpush.msra.mxu0 0.0
        %599 = vmatpush.msra.mxu0 0.0
        %600 = vmatpush.msra.mxu0 0.0
        %601 = vmatpush.msra.mxu0 0.0
        %602 = vmatpush.msra.mxu0 %v586
        %603 = vmatpush.msra.mxu0 %v585
        %604 = vmatpush.msra.mxu0 %v584
        %605 = vmatpush.msra.mxu0 %v583
        %606 = vmatmul.f32.gmra.mxu0 %v588
        %v607 = vpop.f32.mrf.mxu0
        %v608 = vadd.f32 0.0, %v607
        %609 = vdwg.mxu0
        %v611 = vsel %vm587, %v558, 0
        %613 = vmatpush.msra.mxu0 0.0
        %614 = vmatpush.msra.mxu0 0.0
        %615 = vmatpush.msra.mxu0 0.0
        %616 = vmatpush.msra.mxu0 0.0
        %617 = vmatpush.msra.mxu0 0.0
        %618 = vmatpush.msra.mxu0 0.0
        %619 = vmatpush.msra.mxu0 0.0
        %620 = vmatpush.msra.mxu0 0.0
        %621 = vmatpush.msra.mxu0 0.0
        %622 = vmatpush.msra.mxu0 0.0
        %623 = vmatpush.msra.mxu0 0.0
        %624 = vmatpush.msra.mxu0 0.0
        %625 = vmatpush.msra.mxu0 %v582
        %626 = vmatpush.msra.mxu0 %v581
        %627 = vmatpush.msra.mxu0 %v580
        %628 = vmatpush.msra.mxu0 %v579
        %629 = vmatmul.f32.gmra.mxu0 %v611
        %v630 = vpop.f32.mrf.mxu0
        %v631 = vadd.f32 %v608, %v630
        %632 = vdwg.mxu0
        %v633 = vld [vmem:[%s6] sm:$0x1]
        %v635 = vperm.slane %v633, 0
        %v637 = vadd.f32 %v631, %v635
        %v638 = vxor.u32 %v637, 2147483648
        %v639 = vmul.f32 %v638, 1.442695
        %v640 = vpow.pop %v639
        %v641 = vadd.f32 %v640, 1.0
        %v642 = vrcp.pop %v641
        %v643 = vmul.f32 %v641, %v642
        %v644 = vsub.f32 1.0, %v643
        %v645 = vmul.f32 %v642, %v644
        %v646 = vadd.f32 %v642, %v645
        %vm647 = vweird.f32 %v641
        %vm648 = vweird.f32 %v642
        %vm649 = vmor %vm647, %vm648
        %v650 = vsel %vm649, %v642, %v646
        %v651 = vand.u32 2147483647, %v641
        %vm652 = vcmp.eq.f32.partialorder %v651, 8.507059e+37
        %v653 = vand.u32 %v641, 2147483648
        %v654 = vor.u32 1.1754944e-38, %v653
        %v655 = vsel %vm652, %v654, %v650
        %v656 = vmul.f32 1.0, %v655
        %v657 = vmul.f32 %v656, %v558
        %v658 = vsub.f32 1.0, %v656
        %v659 = vmul.f32 %v658, %v578
        %v660 = vadd.f32 %v657, %v659
        %v661 = vld [vmem:[%s7] sm:$0xff]
        %v662 = vld [vmem:[%s7 + $0x8] sm:$0xff]
        %v663 = vld [vmem:[%s7 + $0x10] sm:$0xff]
        %v664 = vld [vmem:[%s7 + $0x18] sm:$0xff]
        %v665 = vld [vmem:[%s8] sm:$0x1]
        %v667 = vperm.slane %v665, 0
        %v670 = vsel %vm587, %v660, 0
        %672 = vmatpush.msra.mxu0 0.0
        %673 = vmatpush.msra.mxu0 0.0
        %674 = vmatpush.msra.mxu0 0.0
        %675 = vmatpush.msra.mxu0 0.0
        %676 = vmatpush.msra.mxu0 0.0
        %677 = vmatpush.msra.mxu0 0.0
        %678 = vmatpush.msra.mxu0 0.0
        %679 = vmatpush.msra.mxu0 0.0
        %680 = vmatpush.msra.mxu0 0.0
        %681 = vmatpush.msra.mxu0 0.0
        %682 = vmatpush.msra.mxu0 0.0
        %683 = vmatpush.msra.mxu0 0.0
        %684 = vmatpush.msra.mxu0 %v664
        %685 = vmatpush.msra.mxu0 %v663
        %686 = vmatpush.msra.mxu0 %v662
        %687 = vmatpush.msra.mxu0 %v661
        %688 = vmatmul.f32.gmra.mxu0 %v670
        %v689 = vpop.f32.mrf.mxu0
        %v690 = vadd.f32 %v667, %v689
        %691 = vdwg.mxu0
        %693 = vset.pattern.permute.xlu0 0
        %694 = vperm.xlu0 %693, %v560
        %v695 = vpop.permute.xlu0 %694
        %v697 = vmul.f32 %v690, %v695
        %v698 = vld [vmem:[%s9] sm:$0x1]
        %v699 = vld [vmem:[%s9 + $0x1] sm:$0x1]
        %v700 = vld [vmem:[%s9 + $0x2] sm:$0x1]
        %v701 = vld [vmem:[%s9 + $0x3] sm:$0x1]
        %v702 = vadd.f32 %v558, %v697
        %v703 = vsel %vm587, %v702, 0.0
        %704 = vadd.xlane.f32.xlu0 %v703
        %v705 = vpop.xlane.xlu0 %704
        %v706 = vrcp.pop 32.0
        %v707 = vmul.f32 32.0, %v706
        %v708 = vsub.f32 1.0, %v707
        %v709 = vmul.f32 %v706, %v708
        %v710 = vadd.f32 %v706, %v709
        %vm711 = vweird.f32 %v706
        %v712 = vsel %vm711, %v706, %v710
        %v713 = vmul.f32 %v705, %v712
        %v714 = vsub.f32 %v702, %v713
        %v715 = vmul.f32 %v714, %v714
        %v716 = vsel %vm587, %v715, 0.0
        %717 = vadd.xlane.f32.xlu0 %v716
        %v718 = vpop.xlane.xlu0 %717
        %v719 = vmul.f32 %v718, %v712
        %v720 = vadd.f32 %v719, 1e-05
        %v721 = vrsqrt.pop %v720
        %v722 = vmul.f32 %v721, %v720
        %v723 = vmul.f32 %v722, %v721
        %v724 = vmul.f32 0.5, %v723
        %v725 = vsub.f32 1.5, %v724
        %v726 = vmul.f32 %v721, %v725
        %vm727 = vweird.f32 %v720
        %vm728 = vweird.f32 %v721
        %vm729 = vmor %vm727, %vm728
        %v730 = vsel %vm729, %v721, %v726
        %v731 = vmul.f32 %v714, %v730
        %v732 = vperm.slane %v698, 0
        %v733 = vmul.f32 %v731, %v732
        %v734 = vperm.slane %v699, 0
        %v735 = vadd.f32 %v733, %v734
        %v736 = vld [vmem:[%s10] sm:$0xff]
        %v737 = vld [vmem:[%s10 + $0x8] sm:$0xff]
        %v738 = vld [vmem:[%s10 + $0x10] sm:$0xff]
        %v739 = vld [vmem:[%s10 + $0x18] sm:$0xff]
        %v740 = vld [vmem:[%s11] sm:$0x1]
        %v742 = vperm.slane %v740, 0
        %v745 = vsel %vm587, %v735, 0
        %747 = vmatpush.msra.mxu0 0.0
        %748 = vmatpush.msra.mxu0 0.0
        %749 = vmatpush.msra.mxu0 0.0
        %750 = vmatpush.msra.mxu0 0.0
        %751 = vmatpush.msra.mxu0 0.0
        %752 = vmatpush.msra.mxu0 0.0
        %753 = vmatpush.msra.mxu0 0.0
        %754 = vmatpush.msra.mxu0 0.0
        %755 = vmatpush.msra.mxu0 0.0
        %756 = vmatpush.msra.mxu0 0.0
        %757 = vmatpush.msra.mxu0 0.0
        %758 = vmatpush.msra.mxu0 0.0
        %759 = vmatpush.msra.mxu0 %v739
        %760 = vmatpush.msra.mxu0 %v738
        %761 = vmatpush.msra.mxu0 %v737
        %762 = vmatpush.msra.mxu0 %v736
        %763 = vmatmul.f32.gmra.mxu0 %v745
        %v764 = vpop.f32.mrf.mxu0
        %v765 = vadd.f32 %v742, %v764
        %766 = vdwg.mxu0
        %v767 = vmax.f32 %v765, 0.0
        %v768 = vld [vmem:[%s12] sm:$0xff]
        %v769 = vld [vmem:[%s12 + $0x8] sm:$0xff]
        %v770 = vld [vmem:[%s12 + $0x10] sm:$0xff]
        %v771 = vld [vmem:[%s12 + $0x18] sm:$0xff]
        %v772 = vld [vmem:[%s12 + $0x20] sm:$0xff]
        %v773 = vld [vmem:[%s12 + $0x28] sm:$0xff]
        %v774 = vld [vmem:[%s12 + $0x30] sm:$0xff]
        %v775 = vld [vmem:[%s12 + $0x38] sm:$0xff]
        %v776 = vld [vmem:[%s13] sm:$0x1]
        %v778 = vperm.slane %v776, 0
        %vm780 = vcmask 523264
        %v782 = vsel %vm780, %v767, 0
        %784 = vmatpush.msra.mxu0 0.0
        %785 = vmatpush.msra.mxu0 0.0
        %786 = vmatpush.msra.mxu0 0.0
        %787 = vmatpush.msra.mxu0 0.0
        %788 = vmatpush.msra.mxu0 0.0
        %789 = vmatpush.msra.mxu0 0.0
        %790 = vmatpush.msra.mxu0 0.0
        %791 = vmatpush.msra.mxu0 0.0
        %792 = vmatpush.msra.mxu0 %v775
        %793 = vmatpush.msra.mxu0 %v774
        %794 = vmatpush.msra.mxu0 %v773
        %795 = vmatpush.msra.mxu0 %v772
        %796 = vmatpush.msra.mxu0 %v771
        %797 = vmatpush.msra.mxu0 %v770
        %798 = vmatpush.msra.mxu0 %v769
        %799 = vmatpush.msra.mxu0 %v768
        %800 = vmatmul.f32.gmra.mxu0 %v782
        %v801 = vpop.f32.mrf.mxu0
        %v802 = vadd.f32 %v778, %v801
        %803 = vdwg.mxu0
        %v804 = vadd.f32 %v735, %v802
        %v805 = vsel %vm587, %v804, 0.0
        %806 = vadd.xlane.f32.xlu0 %v805
        %v807 = vpop.xlane.xlu0 %806
        %v808 = vmul.f32 %v807, %v712
        %v809 = vsub.f32 %v804, %v808
        %v810 = vmul.f32 %v809, %v809
        %v811 = vsel %vm587, %v810, 0.0
        %812 = vadd.xlane.f32.xlu0 %v811
        %v813 = vpop.xlane.xlu0 %812
        %v814 = vmul.f32 %v813, %v712
        %v815 = vadd.f32 %v814, 1e-05
        %v816 = vrsqrt.pop %v815
        %v817 = vmul.f32 %v816, %v815
        %v818 = vmul.f32 %v817, %v816
        %v819 = vmul.f32 0.5, %v818
        %v820 = vsub.f32 1.5, %v819
        %v821 = vmul.f32 %v816, %v820
        %vm822 = vweird.f32 %v815
        %vm823 = vweird.f32 %v816
        %vm824 = vmor %vm822, %vm823
        %v825 = vsel %vm824, %v816, %v821
        %v826 = vmul.f32 %v809, %v825
        %v827 = vperm.slane %v700, 0
        %v828 = vmul.f32 %v826, %v827
        %v829 = vperm.slane %v701, 0
        %v830 = vadd.f32 %v828, %v829
        %831 = vst.msk [vmem:[%s533] sm:$0xff] %vm587, %v830
        %s832 = sand.u32 %s370, 1
        %s833 = scalar_lea.sflag [#allocation3], %s832
        %s834 = sand.u32 %s370, 1
        %s835 = smul.addr %s834, 8
        %s836 = scalar_lea.vmem [#allocation2], %s835
        // Predicated region
        $region77: #{xey_transformer_layer.8} parent=75 // pred_check
          %p837 = pneg %p380
        $region78: #{xey_transformer_layer.8} parent=75 // pred_check_branch
          %839 = sbr.rel (%p837) target = $region80
        $region79: #{xey_transformer_layer.8} parent=75 // pred_region
          %841 = vsyncadd %s833, 0
          %s842 = sadd.s32 %s33, %s32
          %s843 = smul.addr %s842, 8
          %s844 = scalar_lea.hbm %s14, %s843
          %s846 = sshll.u32 %s836, 4
          %s847 = int_to_ptr.vmem [resolvable:$true] %s846
          %s848 = sshll.u32 %s844, 4
          %s849 = int_to_ptr.hbm [resolvable:$true] %s848
          %851 = dma.vmem_to_hbm [thread:$0]  %s847, 128, %s849, %s833
        $region80: #{xey_transformer_layer.8} parent=75 // pred_fallthru
          _
      $region76: #{xey_transformer_layer.8} parent=5 // pred_fallthru
        _
      %p852 = scmp.le.s32.totalorder 2, %s23
      // Predicated region
      $region81: #{xey_transformer_layer.8} parent=5 // pred_check
        %p853 = pneg %p852
      $region82: #{xey_transformer_layer.8} parent=5 // pred_check_branch
        %855 = sbr.rel (%p853) target = $region84
      $region83: #{xey_transformer_layer.8} parent=5 // pred_region
        %s856 = ssub.s32 %s23, 2
        // Predicated region
        $region85: #{xey_transformer_layer.8} parent=83 // pred_check
          %p857 = pneg %p386
        $region86: #{xey_transformer_layer.8} parent=83 // pred_check_branch
          %859 = sbr.rel (%p857) target = $region88
        $region87: #{xey_transformer_layer.8} parent=83 // pred_region
          %s860 = sand.u32 %s371, 1
          %s861 = scalar_lea.sflag [#allocation3], %s860
          %s862 = sand.u32 %s371, 1
          %s863 = smul.addr %s862, 8
          %s864 = scalar_lea.vmem [#allocation2], %s863
          %866 = dma.done %s861, 128
        $region88: #{xey_transformer_layer.8} parent=83 // pred_fallthru
          _
      $region84: #{xey_transformer_layer.8} parent=5 // pred_fallthru
        _
    $region6: #{xey_transformer_layer.8} parent=1 // loop_footer
      %s27 = sadd.s32 1, %s23
    $region7: #{xey_transformer_layer.8} parent=1 // loop_footer_branch
      %22 = sbr.rel target = $region3
    $region8: #{xey_transformer_layer.8} parent=1 // loop_exit
      _
    %867 = vsyncpa [#allocation3], 1
    %s868 = scalar_lea.sflag [#allocation3], 1
    %869 = vsyncpa %s868, 1

// kernel: xey_transformer_layer.9
$region0: #{xey_transformer_layer.9}
  #allocation0 [shape = 'u32[]', space=smem, size = 0x4, offset = 0x4, fixed_abs, tag = 'smem constant byte address 0x4 - core index']
  #allocation1 [shape = 'u32[72,128]{1,0:T(1,128)}', space=vmem, size = 0x9000, scoped, tag = 'internal scratch']
  %s0 = inlined_call_operand.vmem [shape: f32[2,16], index: 0, kind: input, shape index: {}]
  %s1 = inlined_call_operand.vmem [shape: f32[2,128], index: 1, kind: input, shape index: {}]
  %s2 = inlined_call_operand.vmem [shape: f32[2,64], index: 2, kind: input, shape index: {}]
  %s3 = inlined_call_operand.vmem [shape: f32[16,16], index: 3, kind: input, shape index: {}]
  %s4 = inlined_call_operand.vmem [shape: f32[1,16], index: 4, kind: input, shape index: {}]
  %s5 = inlined_call_operand.vmem [shape: f32[128,16], index: 5, kind: input, shape index: {}]
  %s6 = inlined_call_operand.vmem [shape: f32[1,16], index: 6, kind: input, shape index: {}]
  %s7 = inlined_call_operand.vmem [shape: f32[64,16], index: 7, kind: input, shape index: {}]
  %s8 = inlined_call_operand.vmem [shape: f32[1,16], index: 8, kind: input, shape index: {}]
  %s9 = inlined_call_operand.vmem [shape: f32[16,16], index: 9, kind: input, shape index: {}]
  %s10 = inlined_call_operand.vmem [shape: f32[1,16], index: 10, kind: input, shape index: {}]
  %s11 = inlined_call_operand.vmem [shape: f32[16,16], index: 11, kind: input, shape index: {}]
  %s12 = inlined_call_operand.vmem [shape: f32[1,16], index: 12, kind: input, shape index: {}]
  %s13 = inlined_call_operand.vmem [shape: f32[4,16], index: 13, kind: input, shape index: {}]
  %s14 = inlined_call_operand.vmem [shape: f32[16,64], index: 14, kind: input, shape index: {}]
  %s15 = inlined_call_operand.vmem [shape: f32[1,64], index: 15, kind: input, shape index: {}]
  %s16 = inlined_call_operand.vmem [shape: f32[64,16], index: 16, kind: input, shape index: {}]
  %s17 = inlined_call_operand.vmem [shape: f32[1,16], index: 17, kind: input, shape index: {}]
  %s18 = inlined_call_operand.hbm [shape: f32[2,16], index: 18, kind: output, shape index: {}]
  %s19 = sld [smem:[#allocation0]]
  $region82: #{xey_transformer_layer.9} parent=0
    _
  %s21 = ssub.s32 1, %s19
  %s22 = scalar_select 0, %s21, %s19
  $region1: #{xey_transformer_layer.9} parent=0
    #allocation2 [shape = 'u8[1024]{0}', space=vmem, size = 0x400, scoped, tag = 'output window, operand 0, single buffered']
    #allocation3 [shape = 's32[1]{0}', space=sflag, size = 0x4, scoped, tag = 'scoped memory for xey_transformer_layer.9']
    %23 = vsyncpa [#allocation3], 0
    // Predicated region
    $region2: #{xey_transformer_layer.9} parent=1 // pred_check
      _
    $region3: #{xey_transformer_layer.9} parent=1 // pred_check_branch
      %25 = sbr.rel (0) target = $region5
    $region4: #{xey_transformer_layer.9} parent=1 // pred_region
      _
    $region5: #{xey_transformer_layer.9} parent=1 // pred_fallthru
      _
    // Predicated region
    $region6: #{xey_transformer_layer.9} parent=1 // pred_check
      _
    $region7: #{xey_transformer_layer.9} parent=1 // pred_check_branch
      %27 = sbr.rel (0) target = $region9
    $region8: #{xey_transformer_layer.9} parent=1 // pred_region
      _
    $region9: #{xey_transformer_layer.9} parent=1 // pred_fallthru
      _
    // Predicated region
    $region10: #{xey_transformer_layer.9} parent=1 // pred_check
      _
    $region11: #{xey_transformer_layer.9} parent=1 // pred_check_branch
      %29 = sbr.rel (0) target = $region13
    $region12: #{xey_transformer_layer.9} parent=1 // pred_region
      _
    $region13: #{xey_transformer_layer.9} parent=1 // pred_fallthru
      _
    // Predicated region
    $region14: #{xey_transformer_layer.9} parent=1 // pred_check
      _
    $region15: #{xey_transformer_layer.9} parent=1 // pred_check_branch
      %31 = sbr.rel (0) target = $region17
    $region16: #{xey_transformer_layer.9} parent=1 // pred_region
      _
    $region17: #{xey_transformer_layer.9} parent=1 // pred_fallthru
      _
    // Predicated region
    $region18: #{xey_transformer_layer.9} parent=1 // pred_check
      _
    $region19: #{xey_transformer_layer.9} parent=1 // pred_check_branch
      %33 = sbr.rel (0) target = $region21
    $region20: #{xey_transformer_layer.9} parent=1 // pred_region
      _
    $region21: #{xey_transformer_layer.9} parent=1 // pred_fallthru
      _
    // Predicated region
    $region22: #{xey_transformer_layer.9} parent=1 // pred_check
      _
    $region23: #{xey_transformer_layer.9} parent=1 // pred_check_branch
      %35 = sbr.rel (0) target = $region25
    $region24: #{xey_transformer_layer.9} parent=1 // pred_region
      _
    $region25: #{xey_transformer_layer.9} parent=1 // pred_fallthru
      _
    // Predicated region
    $region26: #{xey_transformer_layer.9} parent=1 // pred_check
      _
    $region27: #{xey_transformer_layer.9} parent=1 // pred_check_branch
      %37 = sbr.rel (0) target = $region29
    $region28: #{xey_transformer_layer.9} parent=1 // pred_region
      _
    $region29: #{xey_transformer_layer.9} parent=1 // pred_fallthru
      _
    // Predicated region
    $region30: #{xey_transformer_layer.9} parent=1 // pred_check
      _
    $region31: #{xey_transformer_layer.9} parent=1 // pred_check_branch
      %39 = sbr.rel (0) target = $region33
    $region32: #{xey_transformer_layer.9} parent=1 // pred_region
      _
    $region33: #{xey_transformer_layer.9} parent=1 // pred_fallthru
      _
    // Predicated region
    $region34: #{xey_transformer_layer.9} parent=1 // pred_check
      _
    $region35: #{xey_transformer_layer.9} parent=1 // pred_check_branch
      %41 = sbr.rel (0) target = $region37
    $region36: #{xey_transformer_layer.9} parent=1 // pred_region
      _
    $region37: #{xey_transformer_layer.9} parent=1 // pred_fallthru
      _
    // Predicated region
    $region38: #{xey_transformer_layer.9} parent=1 // pred_check
      _
    $region39: #{xey_transformer_layer.9} parent=1 // pred_check_branch
      %43 = sbr.rel (0) target = $region41
    $region40: #{xey_transformer_layer.9} parent=1 // pred_region
      _
    $region41: #{xey_transformer_layer.9} parent=1 // pred_fallthru
      _
    // Predicated region
    $region42: #{xey_transformer_layer.9} parent=1 // pred_check
      _
    $region43: #{xey_transformer_layer.9} parent=1 // pred_check_branch
      %45 = sbr.rel (0) target = $region45
    $region44: #{xey_transformer_layer.9} parent=1 // pred_region
      _
    $region45: #{xey_transformer_layer.9} parent=1 // pred_fallthru
      _
    // Predicated region
    $region46: #{xey_transformer_layer.9} parent=1 // pred_check
      _
    $region47: #{xey_transformer_layer.9} parent=1 // pred_check_branch
      %47 = sbr.rel (0) target = $region49
    $region48: #{xey_transformer_layer.9} parent=1 // pred_region
      _
    $region49: #{xey_transformer_layer.9} parent=1 // pred_fallthru
      _
    // Predicated region
    $region50: #{xey_transformer_layer.9} parent=1 // pred_check
      _
    $region51: #{xey_transformer_layer.9} parent=1 // pred_check_branch
      %49 = sbr.rel (0) target = $region53
    $region52: #{xey_transformer_layer.9} parent=1 // pred_region
      _
    $region53: #{xey_transformer_layer.9} parent=1 // pred_fallthru
      _
    // Predicated region
    $region54: #{xey_transformer_layer.9} parent=1 // pred_check
      _
    $region55: #{xey_transformer_layer.9} parent=1 // pred_check_branch
      %51 = sbr.rel (0) target = $region57
    $region56: #{xey_transformer_layer.9} parent=1 // pred_region
      _
    $region57: #{xey_transformer_layer.9} parent=1 // pred_fallthru
      _
    // Predicated region
    $region58: #{xey_transformer_layer.9} parent=1 // pred_check
      _
    $region59: #{xey_transformer_layer.9} parent=1 // pred_check_branch
      %53 = sbr.rel (0) target = $region61
    $region60: #{xey_transformer_layer.9} parent=1 // pred_region
      _
    $region61: #{xey_transformer_layer.9} parent=1 // pred_fallthru
      _
    // Predicated region
    $region62: #{xey_transformer_layer.9} parent=1 // pred_check
      _
    $region63: #{xey_transformer_layer.9} parent=1 // pred_check_branch
      %55 = sbr.rel (0) target = $region65
    $region64: #{xey_transformer_layer.9} parent=1 // pred_region
      _
    $region65: #{xey_transformer_layer.9} parent=1 // pred_fallthru
      _
    // Predicated region
    $region66: #{xey_transformer_layer.9} parent=1 // pred_check
      _
    $region67: #{xey_transformer_layer.9} parent=1 // pred_check_branch
      %57 = sbr.rel (0) target = $region69
    $region68: #{xey_transformer_layer.9} parent=1 // pred_region
      _
    $region69: #{xey_transformer_layer.9} parent=1 // pred_fallthru
      _
    // Predicated region
    $region70: #{xey_transformer_layer.9} parent=1 // pred_check
      _
    $region71: #{xey_transformer_layer.9} parent=1 // pred_check_branch
      %59 = sbr.rel (0) target = $region73
    $region72: #{xey_transformer_layer.9} parent=1 // pred_region
      _
    $region73: #{xey_transformer_layer.9} parent=1 // pred_fallthru
      _
    %v60 = vld [vmem:[%s0] sm:$0x3]
    %v61 = vld [vmem:[%s3] sm:$0xff]
    %v62 = vld [vmem:[%s3 + $0x8] sm:$0xff]
    %v63 = vld [vmem:[%s4] sm:$0x1]
    %v65 = vperm.slane %v63, 0
    %vm67 = vcmask 130048
    %v69 = vsel %vm67, %v60, 0
    %71 = vmatpush.msra.mxu0 0.0
    %72 = vmatpush.msra.mxu0 0.0
    %73 = vmatpush.msra.mxu0 0.0
    %74 = vmatpush.msra.mxu0 0.0
    %75 = vmatpush.msra.mxu0 0.0
    %76 = vmatpush.msra.mxu0 0.0
    %77 = vmatpush.msra.mxu0 0.0
    %78 = vmatpush.msra.mxu0 0.0
    %79 = vmatpush.msra.mxu0 0.0
    %80 = vmatpush.msra.mxu0 0.0
    %81 = vmatpush.msra.mxu0 0.0
    %82 = vmatpush.msra.mxu0 0.0
    %83 = vmatpush.msra.mxu0 0.0
    %84 = vmatpush.msra.mxu0 0.0
    %85 = vmatpush.msra.mxu0 %v62
    %86 = vmatpush.msra.mxu0 %v61
    %87 = vmatmul.f32.gmra.mxu0 %v69
    %v88 = vpop.f32.mrf.mxu0
    %v89 = vadd.f32 %v65, %v88
    %90 = vdwg.mxu0
    %v91 = vld [vmem:[%s1] sm:$0x3]
    %v92 = vld [vmem:[%s5] sm:$0xff]
    %v93 = vld [vmem:[%s5 + $0x8] sm:$0xff]
    %v94 = vld [vmem:[%s5 + $0x10] sm:$0xff]
    %v95 = vld [vmem:[%s5 + $0x18] sm:$0xff]
    %v96 = vld [vmem:[%s5 + $0x20] sm:$0xff]
    %v97 = vld [vmem:[%s5 + $0x28] sm:$0xff]
    %v98 = vld [vmem:[%s5 + $0x30] sm:$0xff]
    %v99 = vld [vmem:[%s5 + $0x38] sm:$0xff]
    %v100 = vld [vmem:[%s5 + $0x40] sm:$0xff]
    %v101 = vld [vmem:[%s5 + $0x48] sm:$0xff]
    %v102 = vld [vmem:[%s5 + $0x50] sm:$0xff]
    %v103 = vld [vmem:[%s5 + $0x58] sm:$0xff]
    %v104 = vld [vmem:[%s5 + $0x60] sm:$0xff]
    %v105 = vld [vmem:[%s5 + $0x68] sm:$0xff]
    %v106 = vld [vmem:[%s5 + $0x70] sm:$0xff]
    %v107 = vld [vmem:[%s5 + $0x78] sm:$0xff]
    %108 = vmatpush.msra.mxu0 %v107
    %109 = vmatpush.msra.mxu0 %v106
    %110 = vmatpush.msra.mxu0 %v105
    %111 = vmatpush.msra.mxu0 %v104
    %112 = vmatpush.msra.mxu0 %v103
    %113 = vmatpush.msra.mxu0 %v102
    %114 = vmatpush.msra.mxu0 %v101
    %115 = vmatpush.msra.mxu0 %v100
    %116 = vmatpush.msra.mxu0 %v99
    %117 = vmatpush.msra.mxu0 %v98
    %118 = vmatpush.msra.mxu0 %v97
    %119 = vmatpush.msra.mxu0 %v96
    %120 = vmatpush.msra.mxu0 %v95
    %121 = vmatpush.msra.mxu0 %v94
    %122 = vmatpush.msra.mxu0 %v93
    %123 = vmatpush.msra.mxu0 %v92
    %124 = vmatmul.f32.gmra.mxu0 %v91
    %v125 = vpop.f32.mrf.mxu0
    %v126 = vadd.f32 0.0, %v125
    %127 = vdwg.mxu0
    %v128 = vadd.f32 %v89, %v126
    %v129 = vld [vmem:[%s6] sm:$0x1]
    %v131 = vperm.slane %v129, 0
    %v133 = vadd.f32 %v128, %v131
    %v134 = vld [vmem:[%s2] sm:$0x3]
    %v135 = vld [vmem:[%s7] sm:$0xff]
    %v136 = vld [vmem:[%s7 + $0x8] sm:$0xff]
    %v137 = vld [vmem:[%s7 + $0x10] sm:$0xff]
    %v138 = vld [vmem:[%s7 + $0x18] sm:$0xff]
    %v139 = vld [vmem:[%s7 + $0x20] sm:$0xff]
    %v140 = vld [vmem:[%s7 + $0x28] sm:$0xff]
    %v141 = vld [vmem:[%s7 + $0x30] sm:$0xff]
    %v142 = vld [vmem:[%s7 + $0x38] sm:$0xff]
    %vm143 = vcmask 523264
    %v145 = vsel %vm143, %v134, 0
    %147 = vmatpush.msra.mxu0 0.0
    %148 = vmatpush.msra.mxu0 0.0
    %149 = vmatpush.msra.mxu0 0.0
    %150 = vmatpush.msra.mxu0 0.0
    %151 = vmatpush.msra.mxu0 0.0
    %152 = vmatpush.msra.mxu0 0.0
    %153 = vmatpush.msra.mxu0 0.0
    %154 = vmatpush.msra.mxu0 0.0
    %155 = vmatpush.msra.mxu0 %v142
    %156 = vmatpush.msra.mxu0 %v141
    %157 = vmatpush.msra.mxu0 %v140
    %158 = vmatpush.msra.mxu0 %v139
    %159 = vmatpush.msra.mxu0 %v138
    %160 = vmatpush.msra.mxu0 %v137
    %161 = vmatpush.msra.mxu0 %v136
    %162 = vmatpush.msra.mxu0 %v135
    %163 = vmatmul.f32.gmra.mxu0 %v145
    %v164 = vpop.f32.mrf.mxu0
    %v165 = vadd.f32 0.0, %v164
    %166 = vdwg.mxu0
    %v167 = vadd.f32 %v133, %v165
    %v168 = vld [vmem:[%s8] sm:$0x1]
    %v170 = vperm.slane %v168, 0
    %v172 = vadd.f32 %v167, %v170
    %v173 = vld [vmem:[%s9] sm:$0xff]
    %v174 = vld [vmem:[%s9 + $0x8] sm:$0xff]
    %v175 = vld [vmem:[%s10] sm:$0x1]
    %v177 = vperm.slane %v175, 0
    %v180 = vsel %vm67, %v172, 0
    %182 = vmatpush.msra.mxu0 0.0
    %183 = vmatpush.msra.mxu0 0.0
    %184 = vmatpush.msra.mxu0 0.0
    %185 = vmatpush.msra.mxu0 0.0
    %186 = vmatpush.msra.mxu0 0.0
    %187 = vmatpush.msra.mxu0 0.0
    %188 = vmatpush.msra.mxu0 0.0
    %189 = vmatpush.msra.mxu0 0.0
    %190 = vmatpush.msra.mxu0 0.0
    %191 = vmatpush.msra.mxu0 0.0
    %192 = vmatpush.msra.mxu0 0.0
    %193 = vmatpush.msra.mxu0 0.0
    %194 = vmatpush.msra.mxu0 0.0
    %195 = vmatpush.msra.mxu0 0.0
    %196 = vmatpush.msra.mxu0 %v174
    %197 = vmatpush.msra.mxu0 %v173
    %198 = vmatmul.f32.gmra.mxu0 %v180
    %v199 = vpop.f32.mrf.mxu0
    %v200 = vadd.f32 %v177, %v199
    %201 = vdwg.mxu0
    %v202 = vmax.f32 %v200, 0.0
    %v203 = vld [vmem:[%s11] sm:$0xff]
    %v204 = vld [vmem:[%s11 + $0x8] sm:$0xff]
    %v206 = vsel %vm67, %v202, 0
    %208 = vmatpush.msra.mxu0 0.0
    %209 = vmatpush.msra.mxu0 0.0
    %210 = vmatpush.msra.mxu0 0.0
    %211 = vmatpush.msra.mxu0 0.0
    %212 = vmatpush.msra.mxu0 0.0
    %213 = vmatpush.msra.mxu0 0.0
    %214 = vmatpush.msra.mxu0 0.0
    %215 = vmatpush.msra.mxu0 0.0
    %216 = vmatpush.msra.mxu0 0.0
    %217 = vmatpush.msra.mxu0 0.0
    %218 = vmatpush.msra.mxu0 0.0
    %219 = vmatpush.msra.mxu0 0.0
    %220 = vmatpush.msra.mxu0 0.0
    %221 = vmatpush.msra.mxu0 0.0
    %222 = vmatpush.msra.mxu0 %v204
    %223 = vmatpush.msra.mxu0 %v203
    %224 = vmatmul.f32.gmra.mxu0 %v206
    %v225 = vpop.f32.mrf.mxu0
    %v226 = vadd.f32 0.0, %v225
    %227 = vdwg.mxu0
    %v228 = vadd.f32 %v60, %v226
    %v229 = vld [vmem:[%s12] sm:$0x1]
    %v231 = vperm.slane %v229, 0
    %v233 = vadd.f32 %v228, %v231
    %v234 = vld [vmem:[%s13] sm:$0x1]
    %v235 = vld [vmem:[%s13 + $0x1] sm:$0x1]
    %v236 = vld [vmem:[%s13 + $0x2] sm:$0x1]
    %v237 = vld [vmem:[%s13 + $0x3] sm:$0x1]
    %v238 = vadd.f32 %v60, %v233
    %vm239 = vcmask 123904
    %v240 = vsel %vm239, %v238, 0.0
    %241 = vadd.xlane.f32.xlu0 %v240
    %v242 = vpop.xlane.xlu0 %241
    %v243 = vrcp.pop 16.0
    %v244 = vmul.f32 16.0, %v243
    %v245 = vsub.f32 1.0, %v244
    %v246 = vmul.f32 %v243, %v245
    %v247 = vadd.f32 %v243, %v246
    %vm248 = vweird.f32 %v243
    %v249 = vsel %vm248, %v243, %v247
    %v250 = vmul.f32 %v242, %v249
    %v251 = vsub.f32 %v238, %v250
    %v252 = vmul.f32 %v251, %v251
    %v253 = vsel %vm239, %v252, 0.0
    %254 = vadd.xlane.f32.xlu0 %v253
    %v255 = vpop.xlane.xlu0 %254
    %v256 = vmul.f32 %v255, %v249
    %v257 = vadd.f32 %v256, 1e-05
    %v258 = vrsqrt.pop %v257
    %v259 = vmul.f32 %v258, %v257
    %v260 = vmul.f32 %v259, %v258
    %v261 = vmul.f32 0.5, %v260
    %v262 = vsub.f32 1.5, %v261
    %v263 = vmul.f32 %v258, %v262
    %vm264 = vweird.f32 %v257
    %vm265 = vweird.f32 %v258
    %vm266 = vmor %vm264, %vm265
    %v267 = vsel %vm266, %v258, %v263
    %v268 = vmul.f32 %v251, %v267
    %v269 = vperm.slane %v234, 0
    %v270 = vmul.f32 %v268, %v269
    %v271 = vperm.slane %v235, 0
    %v272 = vadd.f32 %v270, %v271
    %v273 = vld [vmem:[%s14] sm:$0xff]
    %v274 = vld [vmem:[%s14 + $0x8] sm:$0xff]
    %v275 = vld [vmem:[%s15] sm:$0x1]
    %v277 = vperm.slane %v275, 0
    %v280 = vsel %vm67, %v272, 0
    %282 = vmatpush.msra.mxu0 0.0
    %283 = vmatpush.msra.mxu0 0.0
    %284 = vmatpush.msra.mxu0 0.0
    %285 = vmatpush.msra.mxu0 0.0
    %286 = vmatpush.msra.mxu0 0.0
    %287 = vmatpush.msra.mxu0 0.0
    %288 = vmatpush.msra.mxu0 0.0
    %289 = vmatpush.msra.mxu0 0.0
    %290 = vmatpush.msra.mxu0 0.0
    %291 = vmatpush.msra.mxu0 0.0
    %292 = vmatpush.msra.mxu0 0.0
    %293 = vmatpush.msra.mxu0 0.0
    %294 = vmatpush.msra.mxu0 0.0
    %295 = vmatpush.msra.mxu0 0.0
    %296 = vmatpush.msra.mxu0 %v274
    %297 = vmatpush.msra.mxu0 %v273
    %298 = vmatmul.f32.gmra.mxu0 %v280
    %v299 = vpop.f32.mrf.mxu0
    %v300 = vadd.f32 %v277, %v299
    %301 = vdwg.mxu0
    %v302 = vmax.f32 %v300, 0.0
    %v303 = vld [vmem:[%s16] sm:$0xff]
    %v304 = vld [vmem:[%s16 + $0x8] sm:$0xff]
    %v305 = vld [vmem:[%s16 + $0x10] sm:$0xff]
    %v306 = vld [vmem:[%s16 + $0x18] sm:$0xff]
    %v307 = vld [vmem:[%s16 + $0x20] sm:$0xff]
    %v308 = vld [vmem:[%s16 + $0x28] sm:$0xff]
    %v309 = vld [vmem:[%s16 + $0x30] sm:$0xff]
    %v310 = vld [vmem:[%s16 + $0x38] sm:$0xff]
    %v311 = vld [vmem:[%s17] sm:$0x1]
    %v313 = vperm.slane %v311, 0
    %v316 = vsel %vm143, %v302, 0
    %318 = vmatpush.msra.mxu0 0.0
    %319 = vmatpush.msra.mxu0 0.0
    %320 = vmatpush.msra.mxu0 0.0
    %321 = vmatpush.msra.mxu0 0.0
    %322 = vmatpush.msra.mxu0 0.0
    %323 = vmatpush.msra.mxu0 0.0
    %324 = vmatpush.msra.mxu0 0.0
    %325 = vmatpush.msra.mxu0 0.0
    %326 = vmatpush.msra.mxu0 %v310
    %327 = vmatpush.msra.mxu0 %v309
    %328 = vmatpush.msra.mxu0 %v308
    %329 = vmatpush.msra.mxu0 %v307
    %330 = vmatpush.msra.mxu0 %v306
    %331 = vmatpush.msra.mxu0 %v305
    %332 = vmatpush.msra.mxu0 %v304
    %333 = vmatpush.msra.mxu0 %v303
    %334 = vmatmul.f32.gmra.mxu0 %v316
    %v335 = vpop.f32.mrf.mxu0
    %v336 = vadd.f32 %v313, %v335
    %337 = vdwg.mxu0
    %v338 = vadd.f32 %v272, %v336
    %v339 = vsel %vm239, %v338, 0.0
    %340 = vadd.xlane.f32.xlu0 %v339
    %v341 = vpop.xlane.xlu0 %340
    %v342 = vmul.f32 %v341, %v249
    %v343 = vsub.f32 %v338, %v342
    %v344 = vmul.f32 %v343, %v343
    %v345 = vsel %vm239, %v344, 0.0
    %346 = vadd.xlane.f32.xlu0 %v345
    %v347 = vpop.xlane.xlu0 %346
    %v348 = vmul.f32 %v347, %v249
    %v349 = vadd.f32 %v348, 1e-05
    %v350 = vrsqrt.pop %v349
    %v351 = vmul.f32 %v350, %v349
    %v352 = vmul.f32 %v351, %v350
    %v353 = vmul.f32 0.5, %v352
    %v354 = vsub.f32 1.5, %v353
    %v355 = vmul.f32 %v350, %v354
    %vm356 = vweird.f32 %v349
    %vm357 = vweird.f32 %v350
    %vm358 = vmor %vm356, %vm357
    %v359 = vsel %vm358, %v350, %v355
    %v360 = vmul.f32 %v343, %v359
    %v361 = vperm.slane %v236, 0
    %v362 = vmul.f32 %v360, %v361
    %v363 = vperm.slane %v237, 0
    %v364 = vadd.f32 %v362, %v363
    %365 = vst.msk [vmem:[#allocation2] sm:$0x3] %vm239, %v364
    // Predicated region
    $region74: #{xey_transformer_layer.9} parent=1 // pred_check
      _
    $region75: #{xey_transformer_layer.9} parent=1 // pred_check_branch
      %367 = sbr.rel (0) target = $region77
    $region76: #{xey_transformer_layer.9} parent=1 // pred_region
      %369 = vsyncadd [#allocation3], 0
      %s371 = sshll.u32 [#allocation2], 4
      %s372 = int_to_ptr.vmem [resolvable:$true] %s371
      %s373 = sshll.u32 %s18, 4
      %s374 = int_to_ptr.hbm [resolvable:$true] %s373
      %376 = dma.vmem_to_hbm [thread:$0]  %s372, 32, %s374, [#allocation3]
    $region77: #{xey_transformer_layer.9} parent=1 // pred_fallthru
      _
    // Predicated region
    $region78: #{xey_transformer_layer.9} parent=1 // pred_check
      _
    $region79: #{xey_transformer_layer.9} parent=1 // pred_check_branch
      %378 = sbr.rel (0) target = $region81
    $region80: #{xey_transformer_layer.9} parent=1 // pred_region
      %380 = dma.done [#allocation3], 32
    $region81: #{xey_transformer_layer.9} parent=1 // pred_fallthru
      _
    %381 = vsyncpa [#allocation3], 1

// kernel: xey_transformer_layer.7
$region0: #{xey_transformer_layer.7}
  #allocation0 [shape = 'u32[]', space=smem, size = 0x4, offset = 0x4, fixed_abs, tag = 'smem constant byte address 0x4 - core index']
  #allocation1 [shape = 'u32[72,128]{1,0:T(1,128)}', space=vmem, size = 0x9000, scoped, tag = 'internal scratch']
  %s0 = inlined_call_operand.vmem [shape: f32[2,8,8,16], index: 0, kind: input, shape index: {}, may-alias: {0,1}]
  %s1 = inlined_call_operand.vmem [shape: f32[2,8,8,16], index: 1, kind: input, shape index: {}, may-alias: {0,1}]
  %s2 = inlined_call_operand.vmem [shape: f32[2,8,32], index: 2, kind: input, shape index: {}]
  %s3 = inlined_call_operand.vmem [shape: f32[2,8,32], index: 3, kind: input, shape index: {}]
  %s4 = inlined_call_operand.vmem [shape: f32[2,8,32], index: 4, kind: input, shape index: {}]
  %s5 = inlined_call_operand.vmem [shape: f32[2,8,32], index: 5, kind: input, shape index: {}]
  %s6 = inlined_call_operand.vmem [shape: f32[2,8,32], index: 6, kind: input, shape index: {}]
  %s7 = inlined_call_operand.vmem [shape: f32[2,8,32], index: 7, kind: input, shape index: {}]
  %s8 = inlined_call_operand.vmem [shape: f32[2,8,1], index: 8, kind: input, shape index: {}, may-alias: {8,9}]
  %s9 = inlined_call_operand.vmem [shape: f32[2,8,1], index: 9, kind: input, shape index: {}, may-alias: {8,9}]
  %s10 = inlined_call_operand.vmem [shape: f32[2,1,64], index: 10, kind: input, shape index: {}]
  %s11 = inlined_call_operand.vmem [shape: f32[16,96], index: 11, kind: input, shape index: {}]
  %s12 = inlined_call_operand.vmem [shape: f32[1,96], index: 12, kind: input, shape index: {}]
  %s13 = inlined_call_operand.vmem [shape: f32[16,96], index: 13, kind: input, shape index: {}]
  %s14 = inlined_call_operand.vmem [shape: f32[1,96], index: 14, kind: input, shape index: {}]
  %s15 = inlined_call_operand.vmem [shape: f32[32,16], index: 15, kind: input, shape index: {}]
  %s16 = inlined_call_operand.vmem [shape: f32[1,16], index: 16, kind: input, shape index: {}]
  %s17 = inlined_call_operand.vmem [shape: f32[4,16], index: 17, kind: input, shape index: {}]
  %s18 = inlined_call_operand.vmem [shape: f32[16,32], index: 18, kind: input, shape index: {}]
  %s19 = inlined_call_operand.vmem [shape: f32[1,32], index: 19, kind: input, shape index: {}]
  %s20 = inlined_call_operand.vmem [shape: f32[32,16], index: 20, kind: input, shape index: {}]
  %s21 = inlined_call_operand.vmem [shape: f32[1,16], index: 21, kind: input, shape index: {}]
  %s22 = inlined_call_operand.hbm [shape: f32[2,8,8,16], index: 22, kind: output, shape index: {0}]
  %s23 = inlined_call_operand.vmem [shape: f32[2,8,32], index: 23, kind: output, shape index: {1}]
  %s24 = inlined_call_operand.vmem [shape: f32[2,1,4,16], index: 24, kind: output, shape index: {2}]
  %25 = xla_tuple %s22, %s23, %s24
  %s26 = sld [smem:[#allocation0]]
  $region137: #{xey_transformer_layer.7} parent=0
    _
  %s28 = ssub.s32 1, %s26
  %s29 = scalar_select 0, %s28, %s26
  $region1: #{xey_transformer_layer.7} parent=0
    #allocation2 [shape = 'u8[65536]{0}', space=vmem, size = 0x10000, scoped, tag = 'output window, operand 0']
    #allocation3 [shape = 's32[2]{0}', space=sflag, size = 0x8, scoped, tag = 'scoped memory for xey_transformer_layer.7']
    %30 = vsyncpa [#allocation3], 0
    %s31 = scalar_lea.sflag [#allocation3], 1
    %32 = vsyncpa %s31, 0
    loop: start=0, step=1, limit=4
    $region2: #{xey_transformer_layer.7} parent=1 // loop_pre_header
      _
    $region3: #{xey_transformer_layer.7} parent=1 // loop_header
      %s34 = sphi 0, %s38
      %p35 = scmp.ge.s32.totalorder %s34, 4
      %s41 = sphi 0, %s53
      %s42 = sphi 0, %s49
      %s43 = sphi 0, %s41
      %s44 = sphi 0, %s42
      %s45 = sphi 0, %s43
      %s46 = sphi 0, %s44
      %s58 = sphi 0, %s60
      %s61 = sphi 0, %s58
      %s62 = sphi 0, %s61
      %s78 = sphi 0, %s62
      %s86 = sphi 0, %s88
      %s89 = sphi 0, %s86
      %s90 = sphi 0, %s89
      %s106 = sphi 0, %s90
      %s114 = sphi 0, %s116
      %s117 = sphi 0, %s114
      %s118 = sphi 0, %s117
      %s134 = sphi 0, %s118
      %s142 = sphi 0, %s144
      %s145 = sphi 0, %s142
      %s146 = sphi 0, %s145
      %s162 = sphi 0, %s146
      %s168 = sphi 0, %s170
      %s171 = sphi 0, %s168
      %s172 = sphi 0, %s171
      %s188 = sphi 0, %s172
      %s194 = sphi 0, %s196
      %s197 = sphi 0, %s194
      %s198 = sphi 0, %s197
      %s214 = sphi 0, %s198
      %s220 = sphi 0, %s222
      %s223 = sphi 0, %s220
      %s224 = sphi 0, %s223
      %s240 = sphi 0, %s224
      %s246 = sphi 0, %s248
      %s249 = sphi 0, %s246
      %s250 = sphi 0, %s249
      %s266 = sphi 0, %s250
      %s274 = sphi 0, %s276
      %s277 = sphi 0, %s274
      %s278 = sphi 0, %s277
      %s294 = sphi 0, %s278
      %s300 = sphi 0, %s302
      %s303 = sphi 0, %s300
      %s304 = sphi 0, %s303
      %s320 = sphi 0, %s304
      %s326 = sphi 0, %s328
      %s329 = sphi 0, %s326
      %s330 = sphi 0, %s329
      %s346 = sphi 0, %s330
      %s350 = sphi 0, %s350
      %s352 = sphi 0, %s350
      %s353 = sphi 0, %s352
      %s367 = sphi 0, %s353
      %s371 = sphi 0, %s371
      %s373 = sphi 0, %s371
      %s374 = sphi 0, %s373
      %s388 = sphi 0, %s374
      %s392 = sphi 0, %s392
      %s394 = sphi 0, %s392
      %s395 = sphi 0, %s394
      %s409 = sphi 0, %s395
      %s413 = sphi 0, %s413
      %s415 = sphi 0, %s413
      %s416 = sphi 0, %s415
      %s430 = sphi 0, %s416
      %s434 = sphi 0, %s434
      %s436 = sphi 0, %s434
      %s437 = sphi 0, %s436
      %s451 = sphi 0, %s437
      %s455 = sphi 0, %s455
      %s457 = sphi 0, %s455
      %s458 = sphi 0, %s457
      %s472 = sphi 0, %s458
      %s476 = sphi 0, %s476
      %s478 = sphi 0, %s476
      %s479 = sphi 0, %s478
      %s493 = sphi 0, %s479
      %s497 = sphi 0, %s497
      %s499 = sphi 0, %s497
      %s500 = sphi 0, %s499
      %s514 = sphi 0, %s500
      %s518 = sphi 0, %s518
      %s520 = sphi 0, %s518
      %s521 = sphi 0, %s520
      %s535 = sphi 0, %s521
      %s539 = sphi 0, %s539
      %s541 = sphi 0, %s539
      %s542 = sphi 0, %s541
      %s556 = sphi 0, %s542
      %s560 = sphi 0, %s560
      %s562 = sphi 0, %s560
      %s563 = sphi 0, %s562
      %s577 = sphi 0, %s563
      %s585 = sphi 0, %s587
      %s588 = sphi 0, %s585
      %s589 = sphi 0, %s588
      %s605 = sphi 0, %s589
      %s613 = sphi 0, %s615
      %s616 = sphi 0, %s613
      %s617 = sphi 0, %s616
      %s633 = sphi 0, %s617
      %s641 = sphi 0, %s643
      %s644 = sphi 0, %s641
      %s645 = sphi 0, %s644
      %s661 = sphi 0, %s645
    $region4: #{xey_transformer_layer.7} parent=1 // loop_header_branch
      %37 = sbr.rel (%p35) target = $region8
    $region5: #{xey_transformer_layer.7} parent=1 // loop_body
      %s39 = ssub.s32 %s34, 1
      %s40 = ssub.s32 %s34, 2
      %s47 = sadd.s32 1, %s42
      %p48 = scmp.ge.s32.totalorder %s47, 1
      %s49 = scalar_select %p48, 0, %s47
      %s50 = sadd.s32 1, %s41
      %s51 = scalar_select %p48, %s50, %s41
      %p52 = scmp.ge.s32.totalorder %s51, 2
      %s53 = scalar_select %p52, 0, %s51
      %s54 = ssub.s32 %s41, %s53
      %s55 = ssub.s32 %s42, %s49
      %s56 = sor.u32 %s54, %s55
      %p57 = scmp.eq.s32.totalorder %s56, 0
      %s59 = sadd.s32 %s58, 1
      %s60 = scalar_select %p57, %s58, %s59
      %p63 = pneg %p57
      %p64 = scmp.eq.s32.totalorder %s34, 1
      %p65 = por %p63, %p64
      %p66 = scmp.ne.s32.totalorder %s58, %s61
      %p67 = scmp.eq.s32.totalorder %s34, 0
      %p68 = por %p66, %p67
      %p69 = scmp.ne.s32.totalorder %s58, %s61
      %p70 = scmp.eq.s32.totalorder %s39, 1
      %p71 = por %p69, %p70
      %p72 = scmp.ne.s32.totalorder %s61, %s62
      %p73 = scmp.eq.s32.totalorder %s39, 0
      %p74 = por %p72, %p73
      %p75 = scmp.ne.s32.totalorder %s61, %s62
      %p76 = scmp.eq.s32.totalorder %s40, 1
      %p77 = por %p75, %p76
      %p79 = scmp.ne.s32.totalorder %s62, %s78
      %p80 = scmp.eq.s32.totalorder %s40, 0
      %p81 = por %p79, %p80
      %s82 = ssub.s32 %s41, %s53
      %s83 = ssub.s32 %s42, %s49
      %s84 = sor.u32 %s82, %s83
      %p85 = scmp.eq.s32.totalorder %s84, 0
      %s87 = sadd.s32 %s86, 1
      %s88 = scalar_select %p85, %s86, %s87
      %p91 = pneg %p85
      %p92 = scmp.eq.s32.totalorder %s34, 1
      %p93 = por %p91, %p92
      %p94 = scmp.ne.s32.totalorder %s86, %s89
      %p95 = scmp.eq.s32.totalorder %s34, 0
      %p96 = por %p94, %p95
      %p97 = scmp.ne.s32.totalorder %s86, %s89
      %p98 = scmp.eq.s32.totalorder %s39, 1
      %p99 = por %p97, %p98
      %p100 = scmp.ne.s32.totalorder %s89, %s90
      %p101 = scmp.eq.s32.totalorder %s39, 0
      %p102 = por %p100, %p101
      %p103 = scmp.ne.s32.totalorder %s89, %s90
      %p104 = scmp.eq.s32.totalorder %s40, 1
      %p105 = por %p103, %p104
      %p107 = scmp.ne.s32.totalorder %s90, %s106
      %p108 = scmp.eq.s32.totalorder %s40, 0
      %p109 = por %p107, %p108
      %s110 = ssub.s32 %s41, %s53
      %s111 = ssub.s32 %s42, %s49
      %s112 = sor.u32 %s110, %s111
      %p113 = scmp.eq.s32.totalorder %s112, 0
      %s115 = sadd.s32 %s114, 1
      %s116 = scalar_select %p113, %s114, %s115
      %p119 = pneg %p113
      %p120 = scmp.eq.s32.totalorder %s34, 1
      %p121 = por %p119, %p120
      %p122 = scmp.ne.s32.totalorder %s114, %s117
      %p123 = scmp.eq.s32.totalorder %s34, 0
      %p124 = por %p122, %p123
      %p125 = scmp.ne.s32.totalorder %s114, %s117
      %p126 = scmp.eq.s32.totalorder %s39, 1
      %p127 = por %p125, %p126
      %p128 = scmp.ne.s32.totalorder %s117, %s118
      %p129 = scmp.eq.s32.totalorder %s39, 0
      %p130 = por %p128, %p129
      %p131 = scmp.ne.s32.totalorder %s117, %s118
      %p132 = scmp.eq.s32.totalorder %s40, 1
      %p133 = por %p131, %p132
      %p135 = scmp.ne.s32.totalorder %s118, %s134
      %p136 = scmp.eq.s32.totalorder %s40, 0
      %p137 = por %p135, %p136
      %s138 = ssub.s32 %s41, %s53
      %s139 = ssub.s32 %s42, %s49
      %s140 = sor.u32 %s138, %s139
      %p141 = scmp.eq.s32.totalorder %s140, 0
      %s143 = sadd.s32 %s142, 1
      %s144 = scalar_select %p141, %s142, %s143
      %p147 = pneg %p141
      %p148 = scmp.eq.s32.totalorder %s34, 1
      %p149 = por %p147, %p148
      %p150 = scmp.ne.s32.totalorder %s142, %s145
      %p151 = scmp.eq.s32.totalorder %s34, 0
      %p152 = por %p150, %p151
      %p153 = scmp.ne.s32.totalorder %s142, %s145
      %p154 = scmp.eq.s32.totalorder %s39, 1
      %p155 = por %p153, %p154
      %p156 = scmp.ne.s32.totalorder %s145, %s146
      %p157 = scmp.eq.s32.totalorder %s39, 0
      %p158 = por %p156, %p157
      %p159 = scmp.ne.s32.totalorder %s145, %s146
      %p160 = scmp.eq.s32.totalorder %s40, 1
      %p161 = por %p159, %p160
      %p163 = scmp.ne.s32.totalorder %s146, %s162
      %p164 = scmp.eq.s32.totalorder %s40, 0
      %p165 = por %p163, %p164
      %s166 = ssub.s32 %s41, %s53
      %p167 = scmp.eq.s32.totalorder %s166, 0
      %s169 = sadd.s32 %s168, 1
      %s170 = scalar_select %p167, %s168, %s169
      %p173 = pneg %p167
      %p174 = scmp.eq.s32.totalorder %s34, 1
      %p175 = por %p173, %p174
      %p176 = scmp.ne.s32.totalorder %s168, %s171
      %p177 = scmp.eq.s32.totalorder %s34, 0
      %p178 = por %p176, %p177
      %p179 = scmp.ne.s32.totalorder %s168, %s171
      %p180 = scmp.eq.s32.totalorder %s39, 1
      %p181 = por %p179, %p180
      %p182 = scmp.ne.s32.totalorder %s171, %s172
      %p183 = scmp.eq.s32.totalorder %s39, 0
      %p184 = por %p182, %p183
      %p185 = scmp.ne.s32.totalorder %s171, %s172
      %p186 = scmp.eq.s32.totalorder %s40, 1
      %p187 = por %p185, %p186
      %p189 = scmp.ne.s32.totalorder %s172, %s188
      %p190 = scmp.eq.s32.totalorder %s40, 0
      %p191 = por %p189, %p190
      %s192 = ssub.s32 %s41, %s53
      %p193 = scmp.eq.s32.totalorder %s192, 0
      %s195 = sadd.s32 %s194, 1
      %s196 = scalar_select %p193, %s194, %s195
      %p199 = pneg %p193
      %p200 = scmp.eq.s32.totalorder %s34, 1
      %p201 = por %p199, %p200
      %p202 = scmp.ne.s32.totalorder %s194, %s197
      %p203 = scmp.eq.s32.totalorder %s34, 0
      %p204 = por %p202, %p203
      %p205 = scmp.ne.s32.totalorder %s194, %s197
      %p206 = scmp.eq.s32.totalorder %s39, 1
      %p207 = por %p205, %p206
      %p208 = scmp.ne.s32.totalorder %s197, %s198
      %p209 = scmp.eq.s32.totalorder %s39, 0
      %p210 = por %p208, %p209
      %p211 = scmp.ne.s32.totalorder %s197, %s198
      %p212 = scmp.eq.s32.totalorder %s40, 1
      %p213 = por %p211, %p212
      %p215 = scmp.ne.s32.totalorder %s198, %s214
      %p216 = scmp.eq.s32.totalorder %s40, 0
      %p217 = por %p215, %p216
      %s218 = ssub.s32 %s41, %s53
      %p219 = scmp.eq.s32.totalorder %s218, 0
      %s221 = sadd.s32 %s220, 1
      %s222 = scalar_select %p219, %s220, %s221
      %p225 = pneg %p219
      %p226 = scmp.eq.s32.totalorder %s34, 1
      %p227 = por %p225, %p226
      %p228 = scmp.ne.s32.totalorder %s220, %s223
      %p229 = scmp.eq.s32.totalorder %s34, 0
      %p230 = por %p228, %p229
      %p231 = scmp.ne.s32.totalorder %s220, %s223
      %p232 = scmp.eq.s32.totalorder %s39, 1
      %p233 = por %p231, %p232
      %p234 = scmp.ne.s32.totalorder %s223, %s224
      %p235 = scmp.eq.s32.totalorder %s39, 0
      %p236 = por %p234, %p235
      %p237 = scmp.ne.s32.totalorder %s223, %s224
      %p238 = scmp.eq.s32.totalorder %s40, 1
      %p239 = por %p237, %p238
      %p241 = scmp.ne.s32.totalorder %s224, %s240
      %p242 = scmp.eq.s32.totalorder %s40, 0
      %p243 = por %p241, %p242
      %s244 = ssub.s32 %s41, %s53
      %p245 = scmp.eq.s32.totalorder %s244, 0
      %s247 = sadd.s32 %s246, 1
      %s248 = scalar_select %p245, %s246, %s247
      %p251 = pneg %p245
      %p252 = scmp.eq.s32.totalorder %s34, 1
      %p253 = por %p251, %p252
      %p254 = scmp.ne.s32.totalorder %s246, %s249
      %p255 = scmp.eq.s32.totalorder %s34, 0
      %p256 = por %p254, %p255
      %p257 = scmp.ne.s32.totalorder %s246, %s249
      %p258 = scmp.eq.s32.totalorder %s39, 1
      %p259 = por %p257, %p258
      %p260 = scmp.ne.s32.totalorder %s249, %s250
      %p261 = scmp.eq.s32.totalorder %s39, 0
      %p262 = por %p260, %p261
      %p263 = scmp.ne.s32.totalorder %s249, %s250
      %p264 = scmp.eq.s32.totalorder %s40, 1
      %p265 = por %p263, %p264
      %p267 = scmp.ne.s32.totalorder %s250, %s266
      %p268 = scmp.eq.s32.totalorder %s40, 0
      %p269 = por %p267, %p268
      %s270 = ssub.s32 %s41, %s53
      %s271 = ssub.s32 %s42, %s49
      %s272 = sor.u32 %s270, %s271
      %p273 = scmp.eq.s32.totalorder %s272, 0
      %s275 = sadd.s32 %s274, 1
      %s276 = scalar_select %p273, %s274, %s275
      %p279 = pneg %p273
      %p280 = scmp.eq.s32.totalorder %s34, 1
      %p281 = por %p279, %p280
      %p282 = scmp.ne.s32.totalorder %s274, %s277
      %p283 = scmp.eq.s32.totalorder %s34, 0
      %p284 = por %p282, %p283
      %p285 = scmp.ne.s32.totalorder %s274, %s277
      %p286 = scmp.eq.s32.totalorder %s39, 1
      %p287 = por %p285, %p286
      %p288 = scmp.ne.s32.totalorder %s277, %s278
      %p289 = scmp.eq.s32.totalorder %s39, 0
      %p290 = por %p288, %p289
      %p291 = scmp.ne.s32.totalorder %s277, %s278
      %p292 = scmp.eq.s32.totalorder %s40, 1
      %p293 = por %p291, %p292
      %p295 = scmp.ne.s32.totalorder %s278, %s294
      %p296 = scmp.eq.s32.totalorder %s40, 0
      %p297 = por %p295, %p296
      %s298 = ssub.s32 %s41, %s53
      %p299 = scmp.eq.s32.totalorder %s298, 0
      %s301 = sadd.s32 %s300, 1
      %s302 = scalar_select %p299, %s300, %s301
      %p305 = pneg %p299
      %p306 = scmp.eq.s32.totalorder %s34, 1
      %p307 = por %p305, %p306
      %p308 = scmp.ne.s32.totalorder %s300, %s303
      %p309 = scmp.eq.s32.totalorder %s34, 0
      %p310 = por %p308, %p309
      %p311 = scmp.ne.s32.totalorder %s300, %s303
      %p312 = scmp.eq.s32.totalorder %s39, 1
      %p313 = por %p311, %p312
      %p314 = scmp.ne.s32.totalorder %s303, %s304
      %p315 = scmp.eq.s32.totalorder %s39, 0
      %p316 = por %p314, %p315
      %p317 = scmp.ne.s32.totalorder %s303, %s304
      %p318 = scmp.eq.s32.totalorder %s40, 1
      %p319 = por %p317, %p318
      %p321 = scmp.ne.s32.totalorder %s304, %s320
      %p322 = scmp.eq.s32.totalorder %s40, 0
      %p323 = por %p321, %p322
      %s324 = ssub.s32 %s41, %s53
      %p325 = scmp.eq.s32.totalorder %s324, 0
      %s327 = sadd.s32 %s326, 1
      %s328 = scalar_select %p325, %s326, %s327
      %p331 = pneg %p325
      %p332 = scmp.eq.s32.totalorder %s34, 1
      %p333 = por %p331, %p332
      %p334 = scmp.ne.s32.totalorder %s326, %s329
      %p335 = scmp.eq.s32.totalorder %s34, 0
      %p336 = por %p334, %p335
      %p337 = scmp.ne.s32.totalorder %s326, %s329
      %p338 = scmp.eq.s32.totalorder %s39, 1
      %p339 = por %p337, %p338
      %p340 = scmp.ne.s32.totalorder %s329, %s330
      %p341 = scmp.eq.s32.totalorder %s39, 0
      %p342 = por %p340, %p341
      %p343 = scmp.ne.s32.totalorder %s329, %s330
      %p344 = scmp.eq.s32.totalorder %s40, 1
      %p345 = por %p343, %p344
      %p347 = scmp.ne.s32.totalorder %s330, %s346
      %p348 = scmp.eq.s32.totalorder %s40, 0
      %p349 = por %p347, %p348
      %s351 = sadd.s32 %s350, 1
      %p354 = scmp.eq.s32.totalorder %s34, 1
      %p355 = scmp.ne.s32.totalorder %s350, %s352
      %p356 = scmp.eq.s32.totalorder %s34, 0
      %p357 = por %p355, %p356
      %p358 = scmp.ne.s32.totalorder %s350, %s352
      %p359 = scmp.eq.s32.totalorder %s39, 1
      %p360 = por %p358, %p359
      %p361 = scmp.ne.s32.totalorder %s352, %s353
      %p362 = scmp.eq.s32.totalorder %s39, 0
      %p363 = por %p361, %p362
      %p364 = scmp.ne.s32.totalorder %s352, %s353
      %p365 = scmp.eq.s32.totalorder %s40, 1
      %p366 = por %p364, %p365
      %p368 = scmp.ne.s32.totalorder %s353, %s367
      %p369 = scmp.eq.s32.totalorder %s40, 0
      %p370 = por %p368, %p369
      %s372 = sadd.s32 %s371, 1
      %p375 = scmp.eq.s32.totalorder %s34, 1
      %p376 = scmp.ne.s32.totalorder %s371, %s373
      %p377 = scmp.eq.s32.totalorder %s34, 0
      %p378 = por %p376, %p377
      %p379 = scmp.ne.s32.totalorder %s371, %s373
      %p380 = scmp.eq.s32.totalorder %s39, 1
      %p381 = por %p379, %p380
      %p382 = scmp.ne.s32.totalorder %s373, %s374
      %p383 = scmp.eq.s32.totalorder %s39, 0
      %p384 = por %p382, %p383
      %p385 = scmp.ne.s32.totalorder %s373, %s374
      %p386 = scmp.eq.s32.totalorder %s40, 1
      %p387 = por %p385, %p386
      %p389 = scmp.ne.s32.totalorder %s374, %s388
      %p390 = scmp.eq.s32.totalorder %s40, 0
      %p391 = por %p389, %p390
      %s393 = sadd.s32 %s392, 1
      %p396 = scmp.eq.s32.totalorder %s34, 1
      %p397 = scmp.ne.s32.totalorder %s392, %s394
      %p398 = scmp.eq.s32.totalorder %s34, 0
      %p399 = por %p397, %p398
      %p400 = scmp.ne.s32.totalorder %s392, %s394
      %p401 = scmp.eq.s32.totalorder %s39, 1
      %p402 = por %p400, %p401
      %p403 = scmp.ne.s32.totalorder %s394, %s395
      %p404 = scmp.eq.s32.totalorder %s39, 0
      %p405 = por %p403, %p404
      %p406 = scmp.ne.s32.totalorder %s394, %s395
      %p407 = scmp.eq.s32.totalorder %s40, 1
      %p408 = por %p406, %p407
      %p410 = scmp.ne.s32.totalorder %s395, %s409
      %p411 = scmp.eq.s32.totalorder %s40, 0
      %p412 = por %p410, %p411
      %s414 = sadd.s32 %s413, 1
      %p417 = scmp.eq.s32.totalorder %s34, 1
      %p418 = scmp.ne.s32.totalorder %s413, %s415
      %p419 = scmp.eq.s32.totalorder %s34, 0
      %p420 = por %p418, %p419
      %p421 = scmp.ne.s32.totalorder %s413, %s415
      %p422 = scmp.eq.s32.totalorder %s39, 1
      %p423 = por %p421, %p422
      %p424 = scmp.ne.s32.totalorder %s415, %s416
      %p425 = scmp.eq.s32.totalorder %s39, 0
      %p426 = por %p424, %p425
      %p427 = scmp.ne.s32.totalorder %s415, %s416
      %p428 = scmp.eq.s32.totalorder %s40, 1
      %p429 = por %p427, %p428
      %p431 = scmp.ne.s32.totalorder %s416, %s430
      %p432 = scmp.eq.s32.totalorder %s40, 0
      %p433 = por %p431, %p432
      %s435 = sadd.s32 %s434, 1
      %p438 = scmp.eq.s32.totalorder %s34, 1
      %p439 = scmp.ne.s32.totalorder %s434, %s436
      %p440 = scmp.eq.s32.totalorder %s34, 0
      %p441 = por %p439, %p440
      %p442 = scmp.ne.s32.totalorder %s434, %s436
      %p443 = scmp.eq.s32.totalorder %s39, 1
      %p444 = por %p442, %p443
      %p445 = scmp.ne.s32.totalorder %s436, %s437
      %p446 = scmp.eq.s32.totalorder %s39, 0
      %p447 = por %p445, %p446
      %p448 = scmp.ne.s32.totalorder %s436, %s437
      %p449 = scmp.eq.s32.totalorder %s40, 1
      %p450 = por %p448, %p449
      %p452 = scmp.ne.s32.totalorder %s437, %s451
      %p453 = scmp.eq.s32.totalorder %s40, 0
      %p454 = por %p452, %p453
      %s456 = sadd.s32 %s455, 1
      %p459 = scmp.eq.s32.totalorder %s34, 1
      %p460 = scmp.ne.s32.totalorder %s455, %s457
      %p461 = scmp.eq.s32.totalorder %s34, 0
      %p462 = por %p460, %p461
      %p463 = scmp.ne.s32.totalorder %s455, %s457
      %p464 = scmp.eq.s32.totalorder %s39, 1
      %p465 = por %p463, %p464
      %p466 = scmp.ne.s32.totalorder %s457, %s458
      %p467 = scmp.eq.s32.totalorder %s39, 0
      %p468 = por %p466, %p467
      %p469 = scmp.ne.s32.totalorder %s457, %s458
      %p470 = scmp.eq.s32.totalorder %s40, 1
      %p471 = por %p469, %p470
      %p473 = scmp.ne.s32.totalorder %s458, %s472
      %p474 = scmp.eq.s32.totalorder %s40, 0
      %p475 = por %p473, %p474
      %s477 = sadd.s32 %s476, 1
      %p480 = scmp.eq.s32.totalorder %s34, 1
      %p481 = scmp.ne.s32.totalorder %s476, %s478
      %p482 = scmp.eq.s32.totalorder %s34, 0
      %p483 = por %p481, %p482
      %p484 = scmp.ne.s32.totalorder %s476, %s478
      %p485 = scmp.eq.s32.totalorder %s39, 1
      %p486 = por %p484, %p485
      %p487 = scmp.ne.s32.totalorder %s478, %s479
      %p488 = scmp.eq.s32.totalorder %s39, 0
      %p489 = por %p487, %p488
      %p490 = scmp.ne.s32.totalorder %s478, %s479
      %p491 = scmp.eq.s32.totalorder %s40, 1
      %p492 = por %p490, %p491
      %p494 = scmp.ne.s32.totalorder %s479, %s493
      %p495 = scmp.eq.s32.totalorder %s40, 0
      %p496 = por %p494, %p495
      %s498 = sadd.s32 %s497, 1
      %p501 = scmp.eq.s32.totalorder %s34, 1
      %p502 = scmp.ne.s32.totalorder %s497, %s499
      %p503 = scmp.eq.s32.totalorder %s34, 0
      %p504 = por %p502, %p503
      %p505 = scmp.ne.s32.totalorder %s497, %s499
      %p506 = scmp.eq.s32.totalorder %s39, 1
      %p507 = por %p505, %p506
      %p508 = scmp.ne.s32.totalorder %s499, %s500
      %p509 = scmp.eq.s32.totalorder %s39, 0
      %p510 = por %p508, %p509
      %p511 = scmp.ne.s32.totalorder %s499, %s500
      %p512 = scmp.eq.s32.totalorder %s40, 1
      %p513 = por %p511, %p512
      %p515 = scmp.ne.s32.totalorder %s500, %s514
      %p516 = scmp.eq.s32.totalorder %s40, 0
      %p517 = por %p515, %p516
      %s519 = sadd.s32 %s518, 1
      %p522 = scmp.eq.s32.totalorder %s34, 1
      %p523 = scmp.ne.s32.totalorder %s518, %s520
      %p524 = scmp.eq.s32.totalorder %s34, 0
      %p525 = por %p523, %p524
      %p526 = scmp.ne.s32.totalorder %s518, %s520
      %p527 = scmp.eq.s32.totalorder %s39, 1
      %p528 = por %p526, %p527
      %p529 = scmp.ne.s32.totalorder %s520, %s521
      %p530 = scmp.eq.s32.totalorder %s39, 0
      %p531 = por %p529, %p530
      %p532 = scmp.ne.s32.totalorder %s520, %s521
      %p533 = scmp.eq.s32.totalorder %s40, 1
      %p534 = por %p532, %p533
      %p536 = scmp.ne.s32.totalorder %s521, %s535
      %p537 = scmp.eq.s32.totalorder %s40, 0
      %p538 = por %p536, %p537
      %s540 = sadd.s32 %s539, 1
      %p543 = scmp.eq.s32.totalorder %s34, 1
      %p544 = scmp.ne.s32.totalorder %s539, %s541
      %p545 = scmp.eq.s32.totalorder %s34, 0
      %p546 = por %p544, %p545
      %p547 = scmp.ne.s32.totalorder %s539, %s541
      %p548 = scmp.eq.s32.totalorder %s39, 1
      %p549 = por %p547, %p548
      %p550 = scmp.ne.s32.totalorder %s541, %s542
      %p551 = scmp.eq.s32.totalorder %s39, 0
      %p552 = por %p550, %p551
      %p553 = scmp.ne.s32.totalorder %s541, %s542
      %p554 = scmp.eq.s32.totalorder %s40, 1
      %p555 = por %p553, %p554
      %p557 = scmp.ne.s32.totalorder %s542, %s556
      %p558 = scmp.eq.s32.totalorder %s40, 0
      %p559 = por %p557, %p558
      %s561 = sadd.s32 %s560, 1
      %p564 = scmp.eq.s32.totalorder %s34, 1
      %p565 = scmp.ne.s32.totalorder %s560, %s562
      %p566 = scmp.eq.s32.totalorder %s34, 0
      %p567 = por %p565, %p566
      %p568 = scmp.ne.s32.totalorder %s560, %s562
      %p569 = scmp.eq.s32.totalorder %s39, 1
      %p570 = por %p568, %p569
      %p571 = scmp.ne.s32.totalorder %s562, %s563
      %p572 = scmp.eq.s32.totalorder %s39, 0
      %p573 = por %p571, %p572
      %p574 = scmp.ne.s32.totalorder %s562, %s563
      %p575 = scmp.eq.s32.totalorder %s40, 1
      %p576 = por %p574, %p575
      %p578 = scmp.ne.s32.totalorder %s563, %s577
      %p579 = scmp.eq.s32.totalorder %s40, 0
      %p580 = por %p578, %p579
      %s581 = ssub.s32 %s41, %s53
      %s582 = ssub.s32 %s42, %s49
      %s583 = sor.u32 %s581, %s582
      %p584 = scmp.eq.s32.totalorder %s583, 0
      %s586 = sadd.s32 %s585, 1
      %s587 = scalar_select %p584, %s585, %s586
      %p590 = pneg %p584
      %p591 = scmp.eq.s32.totalorder %s34, 1
      %p592 = por %p590, %p591
      %p593 = scmp.ne.s32.totalorder %s585, %s588
      %p594 = scmp.eq.s32.totalorder %s34, 0
      %p595 = por %p593, %p594
      %p596 = scmp.ne.s32.totalorder %s585, %s588
      %p597 = scmp.eq.s32.totalorder %s39, 1
      %p598 = por %p596, %p597
      %p599 = scmp.ne.s32.totalorder %s588, %s589
      %p600 = scmp.eq.s32.totalorder %s39, 0
      %p601 = por %p599, %p600
      %p602 = scmp.ne.s32.totalorder %s588, %s589
      %p603 = scmp.eq.s32.totalorder %s40, 1
      %p604 = por %p602, %p603
      %p606 = scmp.ne.s32.totalorder %s589, %s605
      %p607 = scmp.eq.s32.totalorder %s40, 0
      %p608 = por %p606, %p607
      %s609 = ssub.s32 %s41, %s53
      %s610 = ssub.s32 %s42, %s49
      %s611 = sor.u32 %s609, %s610
      %p612 = scmp.eq.s32.totalorder %s611, 0
      %s614 = sadd.s32 %s613, 1
      %s615 = scalar_select %p612, %s613, %s614
      %p618 = pneg %p612
      %p619 = scmp.eq.s32.totalorder %s34, 1
      %p620 = por %p618, %p619
      %p621 = scmp.ne.s32.totalorder %s613, %s616
      %p622 = scmp.eq.s32.totalorder %s34, 0
      %p623 = por %p621, %p622
      %p624 = scmp.ne.s32.totalorder %s613, %s616
      %p625 = scmp.eq.s32.totalorder %s39, 1
      %p626 = por %p624, %p625
      %p627 = scmp.ne.s32.totalorder %s616, %s617
      %p628 = scmp.eq.s32.totalorder %s39, 0
      %p629 = por %p627, %p628
      %p630 = scmp.ne.s32.totalorder %s616, %s617
      %p631 = scmp.eq.s32.totalorder %s40, 1
      %p632 = por %p630, %p631
      %p634 = scmp.ne.s32.totalorder %s617, %s633
      %p635 = scmp.eq.s32.totalorder %s40, 0
      %p636 = por %p634, %p635
      %s637 = ssub.s32 %s41, %s53
      %s638 = ssub.s32 %s42, %s49
      %s639 = sor.u32 %s637, %s638
      %p640 = scmp.eq.s32.totalorder %s639, 0
      %s642 = sadd.s32 %s641, 1
      %s643 = scalar_select %p640, %s641, %s642
      %p646 = pneg %p640
      %p647 = scmp.eq.s32.totalorder %s34, 1
      %p648 = por %p646, %p647
      %p649 = scmp.ne.s32.totalorder %s641, %s644
      %p650 = scmp.eq.s32.totalorder %s34, 0
      %p651 = por %p649, %p650
      %p652 = scmp.ne.s32.totalorder %s641, %s644
      %p653 = scmp.eq.s32.totalorder %s39, 1
      %p654 = por %p652, %p653
      %p655 = scmp.ne.s32.totalorder %s644, %s645
      %p656 = scmp.eq.s32.totalorder %s39, 0
      %p657 = por %p655, %p656
      %p658 = scmp.ne.s32.totalorder %s644, %s645
      %p659 = scmp.eq.s32.totalorder %s40, 1
      %p660 = por %p658, %p659
      %p662 = scmp.ne.s32.totalorder %s645, %s661
      %p663 = scmp.eq.s32.totalorder %s40, 0
      %p664 = por %p662, %p663
      %p665 = scmp.le.s32.totalorder 1, %s34
      %p666 = scmp.lt.s32.totalorder %s34, 3
      %p667 = pnand %p665, %p666
      %p668 = pneg %p667
      // Predicated region
      $region9: #{xey_transformer_layer.7} parent=5 // pred_check
        _
      $region10: #{xey_transformer_layer.7} parent=5 // pred_check_branch
        %670 = sbr.rel (%p667) target = $region12
      $region11: #{xey_transformer_layer.7} parent=5 // pred_region
        %s671 = ssub.s32 %s34, 1
        // Predicated region
        $region13: #{xey_transformer_layer.7} parent=11 // pred_check
          %p672 = pneg %p363
        $region14: #{xey_transformer_layer.7} parent=11 // pred_check_branch
          %674 = sbr.rel (%p672) target = $region16
        $region15: #{xey_transformer_layer.7} parent=11 // pred_region
          _
        $region16: #{xey_transformer_layer.7} parent=11 // pred_fallthru
          _
        // Predicated region
        $region17: #{xey_transformer_layer.7} parent=11 // pred_check
          %p675 = pneg %p384
        $region18: #{xey_transformer_layer.7} parent=11 // pred_check_branch
          %677 = sbr.rel (%p675) target = $region20
        $region19: #{xey_transformer_layer.7} parent=11 // pred_region
          _
        $region20: #{xey_transformer_layer.7} parent=11 // pred_fallthru
          _
        // Predicated region
        $region21: #{xey_transformer_layer.7} parent=11 // pred_check
          %p678 = pneg %p405
        $region22: #{xey_transformer_layer.7} parent=11 // pred_check_branch
          %680 = sbr.rel (%p678) target = $region24
        $region23: #{xey_transformer_layer.7} parent=11 // pred_region
          _
        $region24: #{xey_transformer_layer.7} parent=11 // pred_fallthru
          _
        // Predicated region
        $region25: #{xey_transformer_layer.7} parent=11 // pred_check
          %p681 = pneg %p426
        $region26: #{xey_transformer_layer.7} parent=11 // pred_check_branch
          %683 = sbr.rel (%p681) target = $region28
        $region27: #{xey_transformer_layer.7} parent=11 // pred_region
          _
        $region28: #{xey_transformer_layer.7} parent=11 // pred_fallthru
          _
        // Predicated region
        $region29: #{xey_transformer_layer.7} parent=11 // pred_check
          %p684 = pneg %p447
        $region30: #{xey_transformer_layer.7} parent=11 // pred_check_branch
          %686 = sbr.rel (%p684) target = $region32
        $region31: #{xey_transformer_layer.7} parent=11 // pred_region
          _
        $region32: #{xey_transformer_layer.7} parent=11 // pred_fallthru
          _
        // Predicated region
        $region33: #{xey_transformer_layer.7} parent=11 // pred_check
          %p687 = pneg %p468
        $region34: #{xey_transformer_layer.7} parent=11 // pred_check_branch
          %689 = sbr.rel (%p687) target = $region36
        $region35: #{xey_transformer_layer.7} parent=11 // pred_region
          _
        $region36: #{xey_transformer_layer.7} parent=11 // pred_fallthru
          _
        // Predicated region
        $region37: #{xey_transformer_layer.7} parent=11 // pred_check
          %p690 = pneg %p489
        $region38: #{xey_transformer_layer.7} parent=11 // pred_check_branch
          %692 = sbr.rel (%p690) target = $region40
        $region39: #{xey_transformer_layer.7} parent=11 // pred_region
          _
        $region40: #{xey_transformer_layer.7} parent=11 // pred_fallthru
          _
        // Predicated region
        $region41: #{xey_transformer_layer.7} parent=11 // pred_check
          %p693 = pneg %p510
        $region42: #{xey_transformer_layer.7} parent=11 // pred_check_branch
          %695 = sbr.rel (%p693) target = $region44
        $region43: #{xey_transformer_layer.7} parent=11 // pred_region
          _
        $region44: #{xey_transformer_layer.7} parent=11 // pred_fallthru
          _
        // Predicated region
        $region45: #{xey_transformer_layer.7} parent=11 // pred_check
          %p696 = pneg %p531
        $region46: #{xey_transformer_layer.7} parent=11 // pred_check_branch
          %698 = sbr.rel (%p696) target = $region48
        $region47: #{xey_transformer_layer.7} parent=11 // pred_region
          _
        $region48: #{xey_transformer_layer.7} parent=11 // pred_fallthru
          _
        // Predicated region
        $region49: #{xey_transformer_layer.7} parent=11 // pred_check
          %p699 = pneg %p552
        $region50: #{xey_transformer_layer.7} parent=11 // pred_check_branch
          %701 = sbr.rel (%p699) target = $region52
        $region51: #{xey_transformer_layer.7} parent=11 // pred_region
          _
        $region52: #{xey_transformer_layer.7} parent=11 // pred_fallthru
          _
        // Predicated region
        $region53: #{xey_transformer_layer.7} parent=11 // pred_check
          %p702 = pneg %p573
        $region54: #{xey_transformer_layer.7} parent=11 // pred_check_branch
          %704 = sbr.rel (%p702) target = $region56
        $region55: #{xey_transformer_layer.7} parent=11 // pred_region
          _
        $region56: #{xey_transformer_layer.7} parent=11 // pred_fallthru
          _
      $region12: #{xey_transformer_layer.7} parent=5 // pred_fallthru
        _
      %p705 = scmp.lt.s32.totalorder %s34, 2
      // Predicated region
      $region57: #{xey_transformer_layer.7} parent=5 // pred_check
        %p706 = pneg %p705
      $region58: #{xey_transformer_layer.7} parent=5 // pred_check_branch
        %708 = sbr.rel (%p706) target = $region60
      $region59: #{xey_transformer_layer.7} parent=5 // pred_region
        // Predicated region
        $region61: #{xey_transformer_layer.7} parent=59 // pred_check
          %p709 = pneg %p68
        $region62: #{xey_transformer_layer.7} parent=59 // pred_check_branch
          %711 = sbr.rel (%p709) target = $region64
        $region63: #{xey_transformer_layer.7} parent=59 // pred_region
          %s712 = smul.u32 8, %s42
          %p713 = scmp.lt.s32.totalorder %s41, 1
          %s714 = scalar_select %p713, %s41, 1
          %p715 = scmp.lt.s32.totalorder %s712, 7
          %s716 = scalar_select %p715, %s712, 7
          %s717 = smul.addr %s714, 8
          %s718 = sadd.s32 %s716, %s717
          %s719 = smul.addr %s718, 8
          %s720 = scalar_lea.vmem %s0, %s719
          %s721 = smul.u32 8, %s42
        $region64: #{xey_transformer_layer.7} parent=59 // pred_fallthru
          _
        // Predicated region
        $region65: #{xey_transformer_layer.7} parent=59 // pred_check
          %p722 = pneg %p96
        $region66: #{xey_transformer_layer.7} parent=59 // pred_check_branch
          %724 = sbr.rel (%p722) target = $region68
        $region67: #{xey_transformer_layer.7} parent=59 // pred_region
          %p725 = scmp.lt.s32.totalorder %s41, 1
          %s726 = scalar_select %p725, %s41, 1
          %p727 = scmp.lt.s32.totalorder %s42, 0
          %s728 = scalar_select %p727, %s42, 0
          %s729 = smul.addr %s726, 8
          %s730 = sadd.s32 %s728, %s729
          %s731 = smul.addr %s730, 8
          %s732 = scalar_lea.vmem %s1, %s731
        $region68: #{xey_transformer_layer.7} parent=59 // pred_fallthru
          _
        // Predicated region
        $region69: #{xey_transformer_layer.7} parent=59 // pred_check
          %p733 = pneg %p124
        $region70: #{xey_transformer_layer.7} parent=59 // pred_check_branch
          %735 = sbr.rel (%p733) target = $region72
        $region71: #{xey_transformer_layer.7} parent=59 // pred_region
          %p736 = scmp.lt.s32.totalorder %s41, 1
          %s737 = scalar_select %p736, %s41, 1
          %p738 = scmp.lt.s32.totalorder %s42, 0
          %s739 = scalar_select %p738, %s42, 0
          %s740 = sadd.s32 %s739, %s737
          %s741 = smul.addr %s740, 8
          %s742 = scalar_lea.vmem %s2, %s741
        $region72: #{xey_transformer_layer.7} parent=59 // pred_fallthru
          _
        // Predicated region
        $region73: #{xey_transformer_layer.7} parent=59 // pred_check
          %p743 = pneg %p152
        $region74: #{xey_transformer_layer.7} parent=59 // pred_check_branch
          %745 = sbr.rel (%p743) target = $region76
        $region75: #{xey_transformer_layer.7} parent=59 // pred_region
          %p746 = scmp.lt.s32.totalorder %s41, 1
          %s747 = scalar_select %p746, %s41, 1
          %p748 = scmp.lt.s32.totalorder %s42, 0
          %s749 = scalar_select %p748, %s42, 0
          %s750 = sadd.s32 %s749, %s747
          %s751 = smul.addr %s750, 8
          %s752 = scalar_lea.vmem %s3, %s751
        $region76: #{xey_transformer_layer.7} parent=59 // pred_fallthru
          _
        // Predicated region
        $region77: #{xey_transformer_layer.7} parent=59 // pred_check
          %p753 = pneg %p178
        $region78: #{xey_transformer_layer.7} parent=59 // pred_check_branch
          %755 = sbr.rel (%p753) target = $region80
        $region79: #{xey_transformer_layer.7} parent=59 // pred_region
          %p756 = scmp.lt.s32.totalorder %s41, 1
          %s757 = scalar_select %p756, %s41, 1
          %s758 = smul.addr %s757, 8
          %s759 = scalar_lea.vmem %s4, %s758
        $region80: #{xey_transformer_layer.7} parent=59 // pred_fallthru
          _
        // Predicated region
        $region81: #{xey_transformer_layer.7} parent=59 // pred_check
          %p760 = pneg %p204
        $region82: #{xey_transformer_layer.7} parent=59 // pred_check_branch
          %762 = sbr.rel (%p760) target = $region84
        $region83: #{xey_transformer_layer.7} parent=59 // pred_region
          %p763 = scmp.lt.s32.totalorder %s41, 1
          %s764 = scalar_select %p763, %s41, 1
          %s765 = smul.addr %s764, 8
          %s766 = scalar_lea.vmem %s5, %s765
        $region84: #{xey_transformer_layer.7} parent=59 // pred_fallthru
          _
        // Predicated region
        $region85: #{xey_transformer_layer.7} parent=59 // pred_check
          %p767 = pneg %p230
        $region86: #{xey_transformer_layer.7} parent=59 // pred_check_branch
          %769 = sbr.rel (%p767) target = $region88
        $region87: #{xey_transformer_layer.7} parent=59 // pred_region
          %p770 = scmp.lt.s32.totalorder %s41, 1
          %s771 = scalar_select %p770, %s41, 1
          %s772 = smul.addr %s771, 8
          %s773 = scalar_lea.vmem %s6, %s772
        $region88: #{xey_transformer_layer.7} parent=59 // pred_fallthru
          _
        // Predicated region
        $region89: #{xey_transformer_layer.7} parent=59 // pred_check
          %p774 = pneg %p256
        $region90: #{xey_transformer_layer.7} parent=59 // pred_check_branch
          %776 = sbr.rel (%p774) target = $region92
        $region91: #{xey_transformer_layer.7} parent=59 // pred_region
          %p777 = scmp.lt.s32.totalorder %s41, 1
          %s778 = scalar_select %p777, %s41, 1
          %s779 = smul.addr %s778, 8
          %s780 = scalar_lea.vmem %s7, %s779
        $region92: #{xey_transformer_layer.7} parent=59 // pred_fallthru
          _
        // Predicated region
        $region93: #{xey_transformer_layer.7} parent=59 // pred_check
          %p781 = pneg %p284
        $region94: #{xey_transformer_layer.7} parent=59 // pred_check_branch
          %783 = sbr.rel (%p781) target = $region96
        $region95: #{xey_transformer_layer.7} parent=59 // pred_region
          %p784 = scmp.lt.s32.totalorder %s41, 1
          %s785 = scalar_select %p784, %s41, 1
          %p786 = scmp.lt.s32.totalorder %s42, 0
          %s787 = scalar_select %p786, %s42, 0
          %s788 = sadd.s32 %s787, %s785
          %s789 = smul.addr %s788, 8
          %s790 = scalar_lea.vmem %s8, %s789
        $region96: #{xey_transformer_layer.7} parent=59 // pred_fallthru
          _
        // Predicated region
        $region97: #{xey_transformer_layer.7} parent=59 // pred_check
          %p791 = pneg %p310
        $region98: #{xey_transformer_layer.7} parent=59 // pred_check_branch
          %793 = sbr.rel (%p791) target = $region100
        $region99: #{xey_transformer_layer.7} parent=59 // pred_region
          %p794 = scmp.lt.s32.totalorder %s41, 1
          %s795 = scalar_select %p794, %s41, 1
          %s796 = smul.addr %s795, 8
          %s797 = scalar_lea.vmem %s9, %s796
        $region100: #{xey_transformer_layer.7} parent=59 // pred_fallthru
          _
        // Predicated region
        $region101: #{xey_transformer_layer.7} parent=59 // pred_check
          %p798 = pneg %p336
        $region102: #{xey_transformer_layer.7} parent=59 // pred_check_branch
          %800 = sbr.rel (%p798) target = $region104
        $region103: #{xey_transformer_layer.7} parent=59 // pred_region
          %p801 = scmp.lt.s32.totalorder %s41, 1
          %s802 = scalar_select %p801, %s41, 1
          %s803 = scalar_lea.vmem %s10, %s802
        $region104: #{xey_transformer_layer.7} parent=59 // pred_fallthru
          _
      $region60: #{xey_transformer_layer.7} parent=5 // pred_fallthru
        _
      %p804 = scmp.le.s32.totalorder 1, %s34
      %p805 = scmp.lt.s32.totalorder %s34, 3
      %p806 = pnand %p804, %p805
      %p807 = pneg %p806
      // Predicated region
      $region105: #{xey_transformer_layer.7} parent=5 // pred_check
        _
      $region106: #{xey_transformer_layer.7} parent=5 // pred_check_branch
        %809 = sbr.rel (%p806) target = $region108
      $region107: #{xey_transformer_layer.7} parent=5 // pred_region
        %s810 = ssub.s32 %s34, 1
        %s811 = smul.u32 8, %s44
        %p812 = scmp.lt.s32.totalorder %s43, 1
        %s813 = scalar_select %p812, %s43, 1
        %p814 = scmp.lt.s32.totalorder %s811, 7
        %s815 = scalar_select %p814, %s811, 7
        %s816 = smul.addr %s813, 8
        %s817 = sadd.s32 %s815, %s816
        %s818 = smul.addr %s817, 8
        %s819 = scalar_lea.vmem %s0, %s818
        %p820 = pneg %p74
        %p821 = pneg %p71
        %p822 = scmp.lt.s32.totalorder %s43, 1
        %s823 = scalar_select %p822, %s43, 1
        %p824 = scmp.lt.s32.totalorder %s44, 0
        %s825 = scalar_select %p824, %s44, 0
        %s826 = smul.addr %s823, 8
        %s827 = sadd.s32 %s825, %s826
        %s828 = smul.addr %s827, 8
        %s829 = scalar_lea.vmem %s1, %s828
        %p830 = pneg %p102
        %p831 = pneg %p99
        %p832 = scmp.lt.s32.totalorder %s43, 1
        %s833 = scalar_select %p832, %s43, 1
        %p834 = scmp.lt.s32.totalorder %s44, 0
        %s835 = scalar_select %p834, %s44, 0
        %s836 = sadd.s32 %s835, %s833
        %s837 = smul.addr %s836, 8
        %s838 = scalar_lea.vmem %s2, %s837
        %p839 = pneg %p130
        %p840 = pneg %p127
        %p841 = scmp.lt.s32.totalorder %s43, 1
        %s842 = scalar_select %p841, %s43, 1
        %p843 = scmp.lt.s32.totalorder %s44, 0
        %s844 = scalar_select %p843, %s44, 0
        %s845 = sadd.s32 %s844, %s842
        %s846 = smul.addr %s845, 8
        %s847 = scalar_lea.vmem %s3, %s846
        %p848 = pneg %p158
        %p849 = pneg %p155
        %p850 = scmp.lt.s32.totalorder %s43, 1
        %s851 = scalar_select %p850, %s43, 1
        %s852 = smul.addr %s851, 8
        %s853 = scalar_lea.vmem %s4, %s852
        %p854 = pneg %p184
        %p855 = pneg %p181
        %p856 = scmp.lt.s32.totalorder %s43, 1
        %s857 = scalar_select %p856, %s43, 1
        %s858 = smul.addr %s857, 8
        %s859 = scalar_lea.vmem %s5, %s858
        %p860 = pneg %p210
        %p861 = pneg %p207
        %p862 = scmp.lt.s32.totalorder %s43, 1
        %s863 = scalar_select %p862, %s43, 1
        %s864 = smul.addr %s863, 8
        %s865 = scalar_lea.vmem %s6, %s864
        %p866 = pneg %p236
        %p867 = pneg %p233
        %p868 = scmp.lt.s32.totalorder %s43, 1
        %s869 = scalar_select %p868, %s43, 1
        %s870 = smul.addr %s869, 8
        %s871 = scalar_lea.vmem %s7, %s870
        %p872 = pneg %p262
        %p873 = pneg %p259
        %p874 = scmp.lt.s32.totalorder %s43, 1
        %s875 = scalar_select %p874, %s43, 1
        %p876 = scmp.lt.s32.totalorder %s44, 0
        %s877 = scalar_select %p876, %s44, 0
        %s878 = sadd.s32 %s877, %s875
        %s879 = smul.addr %s878, 8
        %s880 = scalar_lea.vmem %s8, %s879
        %p881 = pneg %p290
        %p882 = pneg %p287
        %p883 = scmp.lt.s32.totalorder %s43, 1
        %s884 = scalar_select %p883, %s43, 1
        %s885 = smul.addr %s884, 8
        %s886 = scalar_lea.vmem %s9, %s885
        %p887 = pneg %p316
        %p888 = pneg %p313
        %p889 = scmp.lt.s32.totalorder %s43, 1
        %s890 = scalar_select %p889, %s43, 1
        %s891 = scalar_lea.vmem %s10, %s890
        %p892 = pneg %p342
        %p893 = pneg %p339
        %p894 = pneg %p363
        %p895 = pneg %p360
        %p896 = pneg %p384
        %p897 = pneg %p381
        %p898 = pneg %p405
        %p899 = pneg %p402
        %p900 = pneg %p426
        %p901 = pneg %p423
        %p902 = pneg %p447
        %p903 = pneg %p444
        %p904 = pneg %p468
        %p905 = pneg %p465
        %p906 = pneg %p489
        %p907 = pneg %p486
        %p908 = pneg %p510
        %p909 = pneg %p507
        %p910 = pneg %p531
        %p911 = pneg %p528
        %p912 = pneg %p552
        %p913 = pneg %p549
        %p914 = pneg %p573
        %p915 = pneg %p570
        %p916 = pneg %p601
        %p917 = pneg %p598
        %s918 = sand.u32 %s588, 1
        %s919 = scalar_lea.sflag [#allocation3], %s918
        %s920 = sand.u32 %s588, 1
        %s921 = smul.addr %s920, 64
        %s922 = scalar_lea.vmem [#allocation2], %s921
        %p923 = pneg %p629
        %p924 = pneg %p626
        %p925 = scmp.lt.s32.totalorder %s43, 1
        %s926 = scalar_select %p925, %s43, 1
        %p927 = scmp.lt.s32.totalorder %s44, 0
        %s928 = scalar_select %p927, %s44, 0
        %s929 = sadd.s32 %s928, %s926
        %s930 = smul.addr %s929, 8
        %s931 = scalar_lea.vmem %s23, %s930
        %p932 = pneg %p657
        %p933 = pneg %p654
        %p934 = scmp.lt.s32.totalorder %s43, 1
        %s935 = scalar_select %p934, %s43, 1
        %p936 = scmp.lt.s32.totalorder %s44, 0
        %s937 = scalar_select %p936, %s44, 0
        %s938 = sadd.s32 %s937, %s935
        %s939 = smul.addr %s938, 4
        %s940 = scalar_lea.vmem %s24, %s939
        %s941 = smul.u32 8, %s44
        %p942 = scmp.lt.s32.totalorder %s43, 1
        %s943 = scalar_select %p942, %s43, 1
        %p944 = scmp.lt.s32.totalorder %s941, 7
        %s945 = scalar_select %p944, %s941, 7
        %s946 = smul.addr %s943, 8
        %s947 = sadd.s32 %s945, %s946
        %s948 = smul.addr %s947, 8
        %s949 = scalar_lea.vmem %s0, %s948
        %s950 = smul.u32 8, %s44
        %p951 = scmp.lt.s32.totalorder %s43, 1
        %s952 = scalar_select %p951, %s43, 1
        %p953 = scmp.lt.s32.totalorder %s44, 0
        %s954 = scalar_select %p953, %s44, 0
        %s955 = smul.addr %s952, 8
        %s956 = sadd.s32 %s954, %s955
        %s957 = smul.addr %s956, 8
        %s958 = scalar_lea.vmem %s1, %s957
        %p959 = scmp.lt.s32.totalorder %s43, 1
        %s960 = scalar_select %p959, %s43, 1
        %p961 = scmp.lt.s32.totalorder %s44, 0
        %s962 = scalar_select %p961, %s44, 0
        %s963 = sadd.s32 %s962, %s960
        %s964 = smul.addr %s963, 8
        %s965 = scalar_lea.vmem %s2, %s964
        %p966 = scmp.lt.s32.totalorder %s43, 1
        %s967 = scalar_select %p966, %s43, 1
        %p968 = scmp.lt.s32.totalorder %s44, 0
        %s969 = scalar_select %p968, %s44, 0
        %s970 = sadd.s32 %s969, %s967
        %s971 = smul.addr %s970, 8
        %s972 = scalar_lea.vmem %s3, %s971
        %p973 = scmp.lt.s32.totalorder %s43, 1
        %s974 = scalar_select %p973, %s43, 1
        %s975 = smul.addr %s974, 8
        %s976 = scalar_lea.vmem %s4, %s975
        %p977 = scmp.lt.s32.totalorder %s43, 1
        %s978 = scalar_select %p977, %s43, 1
        %s979 = smul.addr %s978, 8
        %s980 = scalar_lea.vmem %s5, %s979
        %p981 = scmp.lt.s32.totalorder %s43, 1
        %s982 = scalar_select %p981, %s43, 1
        %s983 = smul.addr %s982, 8
        %s984 = scalar_lea.vmem %s6, %s983
        %p985 = scmp.lt.s32.totalorder %s43, 1
        %s986 = scalar_select %p985, %s43, 1
        %s987 = smul.addr %s986, 8
        %s988 = scalar_lea.vmem %s7, %s987
        %p989 = scmp.lt.s32.totalorder %s43, 1
        %s990 = scalar_select %p989, %s43, 1
        %p991 = scmp.lt.s32.totalorder %s44, 0
        %s992 = scalar_select %p991, %s44, 0
        %s993 = sadd.s32 %s992, %s990
        %s994 = smul.addr %s993, 8
        %s995 = scalar_lea.vmem %s8, %s994
        %p996 = scmp.lt.s32.totalorder %s43, 1
        %s997 = scalar_select %p996, %s43, 1
        %s998 = smul.addr %s997, 8
        %s999 = scalar_lea.vmem %s9, %s998
        %p1000 = scmp.lt.s32.totalorder %s43, 1
        %s1001 = scalar_select %p1000, %s43, 1
        %s1002 = scalar_lea.vmem %s10, %s1001
        %s1003 = smul.u32 8, %s44
        %p1004 = scmp.lt.s32.totalorder %s43, 1
        %s1005 = scalar_select %p1004, %s43, 1
        %p1006 = scmp.lt.s32.totalorder %s44, 0
        %s1007 = scalar_select %p1006, %s44, 0
        %s1008 = sadd.s32 %s1007, %s1005
        %s1009 = smul.addr %s1008, 8
        %s1010 = scalar_lea.vmem %s23, %s1009
        %p1011 = scmp.lt.s32.totalorder %s43, 1
        %s1012 = scalar_select %p1011, %s43, 1
        %p1013 = scmp.lt.s32.totalorder %s44, 0
        %s1014 = scalar_select %p1013, %s44, 0
        %s1015 = sadd.s32 %s1014, %s1012
        %s1016 = smul.addr %s1015, 4
        %s1017 = scalar_lea.vmem %s24, %s1016
        %v1018 = vld [vmem:[%s995] sm:$0xff]
        %v1019 = vld [vmem:[%s999] sm:$0xff]
        %v1021 = vrot.slane %v1018, 1
        %v1022 = vrot.slane %v1018, 2
        %v1023 = vrot.slane %v1018, 3
        %v1024 = vrot.slane %v1018, 4
        %v1025 = vrot.slane %v1018, 5
        %v1026 = vrot.slane %v1018, 6
        %v1027 = vrot.slane %v1018, 7
        %v1028 = vperm.slane %v1018, 0
        %v1029 = vperm.slane %v1021, 0
        %v1030 = vperm.slane %v1022, 0
        %v1031 = vperm.slane %v1023, 0
        %v1032 = vperm.slane %v1024, 0
        %v1033 = vperm.slane %v1025, 0
        %v1034 = vperm.slane %v1026, 0
        %v1035 = vperm.slane %v1027, 0
        %v1044 = vmul.f32 %v1028, %v1019
        %v1045 = vmul.f32 %v1029, %v1019
        %v1046 = vmul.f32 %v1030, %v1019
        %v1047 = vmul.f32 %v1031, %v1019
        %v1048 = vmul.f32 %v1032, %v1019
        %v1049 = vmul.f32 %v1033, %v1019
        %v1050 = vmul.f32 %v1034, %v1019
        %v1051 = vmul.f32 %v1035, %v1019
        %v1053 = vrot.slane %v1019, 1
        %v1054 = vrot.slane %v1019, 2
        %v1055 = vrot.slane %v1019, 3
        %v1056 = vrot.slane %v1019, 4
        %v1057 = vrot.slane %v1019, 5
        %v1058 = vrot.slane %v1019, 6
        %v1059 = vrot.slane %v1019, 7
        %v1067 = vperm.slane %v1019, 0
        %v1068 = vperm.slane %v1053, 0
        %v1069 = vperm.slane %v1054, 0
        %v1070 = vperm.slane %v1055, 0
        %v1071 = vperm.slane %v1056, 0
        %v1072 = vperm.slane %v1057, 0
        %v1073 = vperm.slane %v1058, 0
        %v1074 = vperm.slane %v1059, 0
        %v1083 = vmul.f32 %v1067, %v1018
        %v1084 = vmul.f32 %v1068, %v1018
        %v1085 = vmul.f32 %v1069, %v1018
        %v1086 = vmul.f32 %v1070, %v1018
        %v1087 = vmul.f32 %v1071, %v1018
        %v1088 = vmul.f32 %v1072, %v1018
        %v1089 = vmul.f32 %v1073, %v1018
        %v1090 = vmul.f32 %v1074, %v1018
        %v1091 = vld [vmem:[%s949] sm:$0xff]
        %v1092 = vld [vmem:[%s949 + $0x8] sm:$0xff]
        %v1093 = vld [vmem:[%s949 + $0x10] sm:$0xff]
        %v1094 = vld [vmem:[%s949 + $0x18] sm:$0xff]
        %v1095 = vld [vmem:[%s949 + $0x20] sm:$0xff]
        %v1096 = vld [vmem:[%s949 + $0x28] sm:$0xff]
        %v1097 = vld [vmem:[%s949 + $0x30] sm:$0xff]
        %v1098 = vld [vmem:[%s949 + $0x38] sm:$0xff]
        %v1099 = vld [vmem:[%s958] sm:$0xff]
        %v1100 = vld [vmem:[%s958 + $0x8] sm:$0xff]
        %v1101 = vld [vmem:[%s958 + $0x10] sm:$0xff]
        %v1102 = vld [vmem:[%s958 + $0x18] sm:$0xff]
        %v1103 = vld [vmem:[%s958 + $0x20] sm:$0xff]
        %v1104 = vld [vmem:[%s958 + $0x28] sm:$0xff]
        %v1105 = vld [vmem:[%s958 + $0x30] sm:$0xff]
        %v1106 = vld [vmem:[%s958 + $0x38] sm:$0xff]
        %vm1107 = vcmask 130048
        %v1108 = vsel %vm1107, %v1091, 0.0
        %v1109 = vsel %vm1107, %v1092, 0.0
        %v1110 = vadd.f32 %v1108, %v1109
        %v1111 = vsel %vm1107, %v1093, 0.0
        %v1112 = vadd.f32 %v1110, %v1111
        %v1113 = vsel %vm1107, %v1094, 0.0
        %v1114 = vadd.f32 %v1112, %v1113
        %v1115 = vsel %vm1107, %v1095, 0.0
        %v1116 = vadd.f32 %v1114, %v1115
        %v1117 = vsel %vm1107, %v1096, 0.0
        %v1118 = vadd.f32 %v1116, %v1117
        %v1119 = vsel %vm1107, %v1097, 0.0
        %v1120 = vadd.f32 %v1118, %v1119
        %v1121 = vsel %vm1107, %v1098, 0.0
        %v1122 = vadd.f32 %v1120, %v1121
        %v1123 = vrot.slane %v1122, 4
        %v1124 = vadd.f32 %v1122, %v1123
        %v1125 = vrot.slane %v1124, 2
        %v1126 = vadd.f32 %v1124, %v1125
        %v1127 = vrot.slane %v1126, 1
        %v1128 = vadd.f32 %v1126, %v1127
        %v1129 = vmul.f32 %v1091, %v1091
        %v1130 = vmul.f32 %v1092, %v1092
        %v1131 = vmul.f32 %v1093, %v1093
        %v1132 = vmul.f32 %v1094, %v1094
        %v1133 = vmul.f32 %v1095, %v1095
        %v1134 = vmul.f32 %v1096, %v1096
        %v1135 = vmul.f32 %v1097, %v1097
        %v1136 = vmul.f32 %v1098, %v1098
        %v1137 = vsel %vm1107, %v1129, 0.0
        %v1138 = vsel %vm1107, %v1130, 0.0
        %v1139 = vadd.f32 %v1137, %v1138
        %v1140 = vsel %vm1107, %v1131, 0.0
        %v1141 = vadd.f32 %v1139, %v1140
        %v1142 = vsel %vm1107, %v1132, 0.0
        %v1143 = vadd.f32 %v1141, %v1142
        %v1144 = vsel %vm1107, %v1133, 0.0
        %v1145 = vadd.f32 %v1143, %v1144
        %v1146 = vsel %vm1107, %v1134, 0.0
        %v1147 = vadd.f32 %v1145, %v1146
        %v1148 = vsel %vm1107, %v1135, 0.0
        %v1149 = vadd.f32 %v1147, %v1148
        %v1150 = vsel %vm1107, %v1136, 0.0
        %v1151 = vadd.f32 %v1149, %v1150
        %v1152 = vrot.slane %v1151, 4
        %v1153 = vadd.f32 %v1151, %v1152
        %v1154 = vrot.slane %v1153, 2
        %v1155 = vadd.f32 %v1153, %v1154
        %v1156 = vrot.slane %v1155, 1
        %v1157 = vadd.f32 %v1155, %v1156
        %v1158 = vsel %vm1107, %v1091, inf
        %v1159 = vsel %vm1107, %v1092, inf
        %v1160 = vsel %vm1107, %v1093, inf
        %v1161 = vsel %vm1107, %v1094, inf
        %v1162 = vsel %vm1107, %v1095, inf
        %v1163 = vmin.f32 %v1158, %v1162
        %v1164 = vsel %vm1107, %v1096, inf
        %v1165 = vmin.f32 %v1159, %v1164
        %v1166 = vsel %vm1107, %v1097, inf
        %v1167 = vmin.f32 %v1160, %v1166
        %v1168 = vsel %vm1107, %v1098, inf
        %v1169 = vmin.f32 %v1161, %v1168
        %v1170 = vmin.f32 %v1163, %v1165
        %v1171 = vmin.f32 %v1167, %v1169
        %v1172 = vmin.f32 %v1170, %v1171
        %v1173 = vrot.slane %v1172, 4
        %v1174 = vmin.f32 %v1172, %v1173
        %v1175 = vrot.slane %v1174, 2
        %v1176 = vmin.f32 %v1174, %v1175
        %v1177 = vrot.slane %v1176, 1
        %v1178 = vmin.f32 %v1176, %v1177
        %v1179 = vsel %vm1107, %v1091, -inf
        %v1180 = vsel %vm1107, %v1092, -inf
        %v1181 = vsel %vm1107, %v1093, -inf
        %v1182 = vsel %vm1107, %v1094, -inf
        %v1183 = vsel %vm1107, %v1095, -inf
        %v1184 = vmax.f32 %v1179, %v1183
        %v1185 = vsel %vm1107, %v1096, -inf
        %v1186 = vmax.f32 %v1180, %v1185
        %v1187 = vsel %vm1107, %v1097, -inf
        %v1188 = vmax.f32 %v1181, %v1187
        %v1189 = vsel %vm1107, %v1098, -inf
        %v1190 = vmax.f32 %v1182, %v1189
        %v1191 = vmax.f32 %v1184, %v1186
        %v1192 = vmax.f32 %v1188, %v1190
        %v1193 = vmax.f32 %v1191, %v1192
        %v1194 = vrot.slane %v1193, 4
        %v1195 = vmax.f32 %v1193, %v1194
        %v1196 = vrot.slane %v1195, 2
        %v1197 = vmax.f32 %v1195, %v1196
        %v1198 = vrot.slane %v1197, 1
        %v1199 = vmax.f32 %v1197, %v1198
        %vm1200 = vcmask 1040384
        %v1201 = vsel %vm1200, %v1128, %v1157
        %vm1202 = vcmask 1041408
        %v1203 = vsel %vm1202, %v1201, %v1178
        %vm1204 = vcmask 1042432
        %v1205 = vsel %vm1204, %v1203, %v1199
        %vm1206 = vcmask 125952
        %1207 = vst.msk [vmem:[%s1017] sm:$0xf] %vm1206, %v1205
        %v1208 = vld [vmem:[%s11] sm:$0xff]
        %v1209 = vld [vmem:[%s11 + $0x8] sm:$0xff]
        %v1210 = vld [vmem:[%s12] sm:$0x1]
        %v1212 = vperm.slane %v1210, 0
        %v1215 = vsel %vm1107, %v1091, 0
        %v1218 = vsel %vm1107, %v1092, 0
        %v1221 = vsel %vm1107, %v1093, 0
        %v1224 = vsel %vm1107, %v1094, 0
        %v1227 = vsel %vm1107, %v1095, 0
        %v1230 = vsel %vm1107, %v1096, 0
        %v1233 = vsel %vm1107, %v1097, 0
        %v1236 = vsel %vm1107, %v1098, 0
        %1238 = vmatpush.msra.mxu0 0.0
        %1239 = vmatpush.msra.mxu0 0.0
        %1240 = vmatpush.msra.mxu0 0.0
        %1241 = vmatpush.msra.mxu0 0.0
        %1242 = vmatpush.msra.mxu0 0.0
        %1243 = vmatpush.msra.mxu0 0.0
        %1244 = vmatpush.msra.mxu0 0.0
        %1245 = vmatpush.msra.mxu0 0.0
        %1246 = vmatpush.msra.mxu0 0.0
        %1247 = vmatpush.msra.mxu0 0.0
        %1248 = vmatpush.msra.mxu0 0.0
        %1249 = vmatpush.msra.mxu0 0.0
        %1250 = vmatpush.msra.mxu0 0.0
        %1251 = vmatpush.msra.mxu0 0.0
        %1252 = vmatpush.msra.mxu0 %v1209
        %1253 = vmatpush.msra.mxu0 %v1208
        %1254 = vmatmul.f32.gmra.mxu0 %v1215
        %v1255 = vpop.f32.mrf.mxu0
        %v1256 = vadd.f32 %v1212, %v1255
        %1257 = vmatmul.f32.gmra.mxu0 %v1218
        %v1258 = vpop.f32.mrf.mxu0
        %v1259 = vadd.f32 %v1212, %v1258
        %1260 = vmatmul.f32.gmra.mxu0 %v1221
        %v1261 = vpop.f32.mrf.mxu0
        %v1262 = vadd.f32 %v1212, %v1261
        %1263 = vmatmul.f32.gmra.mxu0 %v1224
        %v1264 = vpop.f32.mrf.mxu0
        %v1265 = vadd.f32 %v1212, %v1264
        %1266 = vmatmul.f32.gmra.mxu0 %v1227
        %v1267 = vpop.f32.mrf.mxu0
        %v1268 = vadd.f32 %v1212, %v1267
        %1269 = vmatmul.f32.gmra.mxu0 %v1230
        %v1270 = vpop.f32.mrf.mxu0
        %v1271 = vadd.f32 %v1212, %v1270
        %1272 = vmatmul.f32.gmra.mxu0 %v1233
        %v1273 = vpop.f32.mrf.mxu0
        %v1274 = vadd.f32 %v1212, %v1273
        %1275 = vmatmul.f32.gmra.mxu0 %v1236
        %v1276 = vpop.f32.mrf.mxu0
        %v1277 = vadd.f32 %v1212, %v1276
        %1278 = vdwg.mxu0
        %v1279 = vld [vmem:[%s13] sm:$0xff]
        %v1280 = vld [vmem:[%s13 + $0x8] sm:$0xff]
        %v1281 = vld [vmem:[%s14] sm:$0x1]
        %v1283 = vperm.slane %v1281, 0
        %v1286 = vsel %vm1107, %v1099, 0
        %v1289 = vsel %vm1107, %v1100, 0
        %v1292 = vsel %vm1107, %v1101, 0
        %v1295 = vsel %vm1107, %v1102, 0
        %v1298 = vsel %vm1107, %v1103, 0
        %v1301 = vsel %vm1107, %v1104, 0
        %v1304 = vsel %vm1107, %v1105, 0
        %v1307 = vsel %vm1107, %v1106, 0
        %1309 = vmatpush.msra.mxu0 0.0
        %1310 = vmatpush.msra.mxu0 0.0
        %1311 = vmatpush.msra.mxu0 0.0
        %1312 = vmatpush.msra.mxu0 0.0
        %1313 = vmatpush.msra.mxu0 0.0
        %1314 = vmatpush.msra.mxu0 0.0
        %1315 = vmatpush.msra.mxu0 0.0
        %1316 = vmatpush.msra.mxu0 0.0
        %1317 = vmatpush.msra.mxu0 0.0
        %1318 = vmatpush.msra.mxu0 0.0
        %1319 = vmatpush.msra.mxu0 0.0
        %1320 = vmatpush.msra.mxu0 0.0
        %1321 = vmatpush.msra.mxu0 0.0
        %1322 = vmatpush.msra.mxu0 0.0
        %1323 = vmatpush.msra.mxu0 %v1280
        %1324 = vmatpush.msra.mxu0 %v1279
        %1325 = vmatmul.f32.gmra.mxu0 %v1286
        %v1326 = vpop.f32.mrf.mxu0
        %v1327 = vadd.f32 %v1283, %v1326
        %1328 = vmatmul.f32.gmra.mxu0 %v1289
        %v1329 = vpop.f32.mrf.mxu0
        %v1330 = vadd.f32 %v1283, %v1329
        %1331 = vmatmul.f32.gmra.mxu0 %v1292
        %v1332 = vpop.f32.mrf.mxu0
        %v1333 = vadd.f32 %v1283, %v1332
        %1334 = vmatmul.f32.gmra.mxu0 %v1295
        %v1335 = vpop.f32.mrf.mxu0
        %v1336 = vadd.f32 %v1283, %v1335
        %1337 = vmatmul.f32.gmra.mxu0 %v1298
        %v1338 = vpop.f32.mrf.mxu0
        %v1339 = vadd.f32 %v1283, %v1338
        %1340 = vmatmul.f32.gmra.mxu0 %v1301
        %v1341 = vpop.f32.mrf.mxu0
        %v1342 = vadd.f32 %v1283, %v1341
        %1343 = vmatmul.f32.gmra.mxu0 %v1304
        %v1344 = vpop.f32.mrf.mxu0
        %v1345 = vadd.f32 %v1283, %v1344
        %1346 = vmatmul.f32.gmra.mxu0 %v1307
        %v1347 = vpop.f32.mrf.mxu0
        %v1348 = vadd.f32 %v1283, %v1347
        %1349 = vdwg.mxu0
        %1351 = vset.pattern.permute.xlu0 0
        %1352 = vperm.xlu0 %1351, %v1044
        %v1353 = vpop.permute.xlu0 %1352
        %1356 = vset.pattern.permute.xlu0 0
        %1357 = vperm.xlu0 %1356, %v1045
        %v1358 = vpop.permute.xlu0 %1357
        %1361 = vset.pattern.permute.xlu0 0
        %1362 = vperm.xlu0 %1361, %v1046
        %v1363 = vpop.permute.xlu0 %1362
        %1366 = vset.pattern.permute.xlu0 0
        %1367 = vperm.xlu0 %1366, %v1047
        %v1368 = vpop.permute.xlu0 %1367
        %1371 = vset.pattern.permute.xlu0 0
        %1372 = vperm.xlu0 %1371, %v1048
        %v1373 = vpop.permute.xlu0 %1372
        %1376 = vset.pattern.permute.xlu0 0
        %1377 = vperm.xlu0 %1376, %v1049
        %v1378 = vpop.permute.xlu0 %1377
        %1381 = vset.pattern.permute.xlu0 0
        %1382 = vperm.xlu0 %1381, %v1050
        %v1383 = vpop.permute.xlu0 %1382
        %1386 = vset.pattern.permute.xlu0 0
        %1387 = vperm.xlu0 %1386, %v1051
        %v1388 = vpop.permute.xlu0 %1387
        %v1390 = vmul.f32 %v1256, %v1353
        %v1391 = vmul.f32 %v1259, %v1358
        %v1392 = vmul.f32 %v1262, %v1363
        %v1393 = vmul.f32 %v1265, %v1368
        %v1394 = vmul.f32 %v1268, %v1373
        %v1395 = vmul.f32 %v1271, %v1378
        %v1396 = vmul.f32 %v1274, %v1383
        %v1397 = vmul.f32 %v1277, %v1388
        %v1398 = vxor.u32 %v1256, 2147483648
        %v1399 = vxor.u32 %v1259, 2147483648
        %v1400 = vxor.u32 %v1262, 2147483648
        %v1401 = vxor.u32 %v1265, 2147483648
        %v1402 = vxor.u32 %v1268, 2147483648
        %v1403 = vxor.u32 %v1271, 2147483648
        %v1404 = vxor.u32 %v1274, 2147483648
        %v1405 = vxor.u32 %v1277, 2147483648
        %v1406 = vmul.f32 %v1398, 1.442695
        %v1407 = vpow.pop %v1406
        %v1408 = vmul.f32 %v1399, 1.442695
        %v1409 = vpow.pop %v1408
        %v1410 = vmul.f32 %v1400, 1.442695
        %v1411 = vpow.pop %v1410
        %v1412 = vmul.f32 %v1401, 1.442695
        %v1413 = vpow.pop %v1412
        %v1414 = vmul.f32 %v1402, 1.442695
        %v1415 = vpow.pop %v1414
        %v1416 = vmul.f32 %v1403, 1.442695
        %v1417 = vpow.pop %v1416
        %v1418 = vmul.f32 %v1404, 1.442695
        %v1419 = vpow.pop %v1418
        %v1420 = vmul.f32 %v1405, 1.442695
        %v1421 = vpow.pop %v1420
        %v1422 = vadd.f32 %v1407, 1.0
        %v1423 = vadd.f32 %v1409, 1.0
        %v1424 = vadd.f32 %v1411, 1.0
        %v1425 = vadd.f32 %v1413, 1.0
        %v1426 = vadd.f32 %v1415, 1.0
        %v1427 = vadd.f32 %v1417, 1.0
        %v1428 = vadd.f32 %v1419, 1.0
        %v1429 = vadd.f32 %v1421, 1.0
        %v1430 = vrcp.pop %v1422
        %v1431 = vmul.f32 %v1422, %v1430
        %v1432 = vsub.f32 1.0, %v1431
        %v1433 = vmul.f32 %v1430, %v1432
        %v1434 = vadd.f32 %v1430, %v1433
        %vm1435 = vweird.f32 %v1422
        %vm1436 = vweird.f32 %v1430
        %vm1437 = vmor %vm1435, %vm1436
        %v1438 = vsel %vm1437, %v1430, %v1434
        %v1439 = vand.u32 2147483647, %v1422
        %vm1440 = vcmp.eq.f32.partialorder %v1439, 8.507059e+37
        %v1441 = vand.u32 %v1422, 2147483648
        %v1442 = vor.u32 1.1754944e-38, %v1441
        %v1443 = vsel %vm1440, %v1442, %v1438
        %v1444 = vmul.f32 1.0, %v1443
        %v1445 = vrcp.pop %v1423
        %v1446 = vmul.f32 %v1423, %v1445
        %v1447 = vsub.f32 1.0, %v1446
        %v1448 = vmul.f32 %v1445, %v1447
        %v1449 = vadd.f32 %v1445, %v1448
        %vm1450 = vweird.f32 %v1423
        %vm1451 = vweird.f32 %v1445
        %vm1452 = vmor %vm1450, %vm1451
        %v1453 = vsel %vm1452, %v1445, %v1449
        %v1454 = vand.u32 2147483647, %v1423
        %vm1455 = vcmp.eq.f32.partialorder %v1454, 8.507059e+37
        %v1456 = vand.u32 %v1423, 2147483648
        %v1457 = vor.u32 1.1754944e-38, %v1456
        %v1458 = vsel %vm1455, %v1457, %v1453
        %v1459 = vmul.f32 1.0, %v1458
        %v1460 = vrcp.pop %v1424
        %v1461 = vmul.f32 %v1424, %v1460
        %v1462 = vsub.f32 1.0, %v1461
        %v1463 = vmul.f32 %v1460, %v1462
        %v1464 = vadd.f32 %v1460, %v1463
        %vm1465 = vweird.f32 %v1424
        %vm1466 = vweird.f32 %v1460
        %vm1467 = vmor %vm1465, %vm1466
        %v1468 = vsel %vm1467, %v1460, %v1464
        %v1469 = vand.u32 2147483647, %v1424
        %vm1470 = vcmp.eq.f32.partialorder %v1469, 8.507059e+37
        %v1471 = vand.u32 %v1424, 2147483648
        %v1472 = vor.u32 1.1754944e-38, %v1471
        %v1473 = vsel %vm1470, %v1472, %v1468
        %v1474 = vmul.f32 1.0, %v1473
        %v1475 = vrcp.pop %v1425
        %v1476 = vmul.f32 %v1425, %v1475
        %v1477 = vsub.f32 1.0, %v1476
        %v1478 = vmul.f32 %v1475, %v1477
        %v1479 = vadd.f32 %v1475, %v1478
        %vm1480 = vweird.f32 %v1425
        %vm1481 = vweird.f32 %v1475
        %vm1482 = vmor %vm1480, %vm1481
        %v1483 = vsel %vm1482, %v1475, %v1479
        %v1484 = vand.u32 2147483647, %v1425
        %vm1485 = vcmp.eq.f32.partialorder %v1484, 8.507059e+37
        %v1486 = vand.u32 %v1425, 2147483648
        %v1487 = vor.u32 1.1754944e-38, %v1486
        %v1488 = vsel %vm1485, %v1487, %v1483
        %v1489 = vmul.f32 1.0, %v1488
        %v1490 = vrcp.pop %v1426
        %v1491 = vmul.f32 %v1426, %v1490
        %v1492 = vsub.f32 1.0, %v1491
        %v1493 = vmul.f32 %v1490, %v1492
        %v1494 = vadd.f32 %v1490, %v1493
        %vm1495 = vweird.f32 %v1426
        %vm1496 = vweird.f32 %v1490
        %vm1497 = vmor %vm1495, %vm1496
        %v1498 = vsel %vm1497, %v1490, %v1494
        %v1499 = vand.u32 2147483647, %v1426
        %vm1500 = vcmp.eq.f32.partialorder %v1499, 8.507059e+37
        %v1501 = vand.u32 %v1426, 2147483648
        %v1502 = vor.u32 1.1754944e-38, %v1501
        %v1503 = vsel %vm1500, %v1502, %v1498
        %v1504 = vmul.f32 1.0, %v1503
        %v1505 = vrcp.pop %v1427
        %v1506 = vmul.f32 %v1427, %v1505
        %v1507 = vsub.f32 1.0, %v1506
        %v1508 = vmul.f32 %v1505, %v1507
        %v1509 = vadd.f32 %v1505, %v1508
        %vm1510 = vweird.f32 %v1427
        %vm1511 = vweird.f32 %v1505
        %vm1512 = vmor %vm1510, %vm1511
        %v1513 = vsel %vm1512, %v1505, %v1509
        %v1514 = vand.u32 2147483647, %v1427
        %vm1515 = vcmp.eq.f32.partialorder %v1514, 8.507059e+37
        %v1516 = vand.u32 %v1427, 2147483648
        %v1517 = vor.u32 1.1754944e-38, %v1516
        %v1518 = vsel %vm1515, %v1517, %v1513
        %v1519 = vmul.f32 1.0, %v1518
        %v1520 = vrcp.pop %v1428
        %v1521 = vmul.f32 %v1428, %v1520
        %v1522 = vsub.f32 1.0, %v1521
        %v1523 = vmul.f32 %v1520, %v1522
        %v1524 = vadd.f32 %v1520, %v1523
        %vm1525 = vweird.f32 %v1428
        %vm1526 = vweird.f32 %v1520
        %vm1527 = vmor %vm1525, %vm1526
        %v1528 = vsel %vm1527, %v1520, %v1524
        %v1529 = vand.u32 2147483647, %v1428
        %vm1530 = vcmp.eq.f32.partialorder %v1529, 8.507059e+37
        %v1531 = vand.u32 %v1428, 2147483648
        %v1532 = vor.u32 1.1754944e-38, %v1531
        %v1533 = vsel %vm1530, %v1532, %v1528
        %v1534 = vmul.f32 1.0, %v1533
        %v1535 = vrcp.pop %v1429
        %v1536 = vmul.f32 %v1429, %v1535
        %v1537 = vsub.f32 1.0, %v1536
        %v1538 = vmul.f32 %v1535, %v1537
        %v1539 = vadd.f32 %v1535, %v1538
        %vm1540 = vweird.f32 %v1429
        %vm1541 = vweird.f32 %v1535
        %vm1542 = vmor %vm1540, %vm1541
        %v1543 = vsel %vm1542, %v1535, %v1539
        %v1544 = vand.u32 2147483647, %v1429
        %vm1545 = vcmp.eq.f32.partialorder %v1544, 8.507059e+37
        %v1546 = vand.u32 %v1429, 2147483648
        %v1547 = vor.u32 1.1754944e-38, %v1546
        %v1548 = vsel %vm1545, %v1547, %v1543
        %v1549 = vmul.f32 1.0, %v1548
        %1551 = vset.pattern.permute.xlu0 0
        %1552 = vperm.xlu0 %1551, %v1083
        %v1553 = vpop.permute.xlu0 %1552
        %1556 = vset.pattern.permute.xlu0 0
        %1557 = vperm.xlu0 %1556, %v1084
        %v1558 = vpop.permute.xlu0 %1557
        %1561 = vset.pattern.permute.xlu0 0
        %1562 = vperm.xlu0 %1561, %v1085
        %v1563 = vpop.permute.xlu0 %1562
        %1566 = vset.pattern.permute.xlu0 0
        %1567 = vperm.xlu0 %1566, %v1086
        %v1568 = vpop.permute.xlu0 %1567
        %1571 = vset.pattern.permute.xlu0 0
        %1572 = vperm.xlu0 %1571, %v1087
        %v1573 = vpop.permute.xlu0 %1572
        %1576 = vset.pattern.permute.xlu0 0
        %1577 = vperm.xlu0 %1576, %v1088
        %v1578 = vpop.permute.xlu0 %1577
        %1581 = vset.pattern.permute.xlu0 0
        %1582 = vperm.xlu0 %1581, %v1089
        %v1583 = vpop.permute.xlu0 %1582
        %1586 = vset.pattern.permute.xlu0 0
        %1587 = vperm.xlu0 %1586, %v1090
        %v1588 = vpop.permute.xlu0 %1587
        %v1590 = vmul.f32 %v1327, %v1553
        %v1591 = vmul.f32 %v1330, %v1558
        %v1592 = vmul.f32 %v1333, %v1563
        %v1593 = vmul.f32 %v1336, %v1568
        %v1594 = vmul.f32 %v1339, %v1573
        %v1595 = vmul.f32 %v1342, %v1578
        %v1596 = vmul.f32 %v1345, %v1583
        %v1597 = vmul.f32 %v1348, %v1588
        %v1598 = vxor.u32 %v1327, 2147483648
        %v1599 = vxor.u32 %v1330, 2147483648
        %v1600 = vxor.u32 %v1333, 2147483648
        %v1601 = vxor.u32 %v1336, 2147483648
        %v1602 = vxor.u32 %v1339, 2147483648
        %v1603 = vxor.u32 %v1342, 2147483648
        %v1604 = vxor.u32 %v1345, 2147483648
        %v1605 = vxor.u32 %v1348, 2147483648
        %v1606 = vmul.f32 %v1598, 1.442695
        %v1607 = vpow.pop %v1606
        %v1608 = vmul.f32 %v1599, 1.442695
        %v1609 = vpow.pop %v1608
        %v1610 = vmul.f32 %v1600, 1.442695
        %v1611 = vpow.pop %v1610
        %v1612 = vmul.f32 %v1601, 1.442695
        %v1613 = vpow.pop %v1612
        %v1614 = vmul.f32 %v1602, 1.442695
        %v1615 = vpow.pop %v1614
        %v1616 = vmul.f32 %v1603, 1.442695
        %v1617 = vpow.pop %v1616
        %v1618 = vmul.f32 %v1604, 1.442695
        %v1619 = vpow.pop %v1618
        %v1620 = vmul.f32 %v1605, 1.442695
        %v1621 = vpow.pop %v1620
        %v1622 = vadd.f32 %v1607, 1.0
        %v1623 = vadd.f32 %v1609, 1.0
        %v1624 = vadd.f32 %v1611, 1.0
        %v1625 = vadd.f32 %v1613, 1.0
        %v1626 = vadd.f32 %v1615, 1.0
        %v1627 = vadd.f32 %v1617, 1.0
        %v1628 = vadd.f32 %v1619, 1.0
        %v1629 = vadd.f32 %v1621, 1.0
        %v1630 = vrcp.pop %v1622
        %v1631 = vmul.f32 %v1622, %v1630
        %v1632 = vsub.f32 1.0, %v1631
        %v1633 = vmul.f32 %v1630, %v1632
        %v1634 = vadd.f32 %v1630, %v1633
        %vm1635 = vweird.f32 %v1622
        %vm1636 = vweird.f32 %v1630
        %vm1637 = vmor %vm1635, %vm1636
        %v1638 = vsel %vm1637, %v1630, %v1634
        %v1639 = vand.u32 2147483647, %v1622
        %vm1640 = vcmp.eq.f32.partialorder %v1639, 8.507059e+37
        %v1641 = vand.u32 %v1622, 2147483648
        %v1642 = vor.u32 1.1754944e-38, %v1641
        %v1643 = vsel %vm1640, %v1642, %v1638
        %v1644 = vmul.f32 1.0, %v1643
        %v1645 = vrcp.pop %v1623
        %v1646 = vmul.f32 %v1623, %v1645
        %v1647 = vsub.f32 1.0, %v1646
        %v1648 = vmul.f32 %v1645, %v1647
        %v1649 = vadd.f32 %v1645, %v1648
        %vm1650 = vweird.f32 %v1623
        %vm1651 = vweird.f32 %v1645
        %vm1652 = vmor %vm1650, %vm1651
        %v1653 = vsel %vm1652, %v1645, %v1649
        %v1654 = vand.u32 2147483647, %v1623
        %vm1655 = vcmp.eq.f32.partialorder %v1654, 8.507059e+37
        %v1656 = vand.u32 %v1623, 2147483648
        %v1657 = vor.u32 1.1754944e-38, %v1656
        %v1658 = vsel %vm1655, %v1657, %v1653
        %v1659 = vmul.f32 1.0, %v1658
        %v1660 = vrcp.pop %v1624
        %v1661 = vmul.f32 %v1624, %v1660
        %v1662 = vsub.f32 1.0, %v1661
        %v1663 = vmul.f32 %v1660, %v1662
        %v1664 = vadd.f32 %v1660, %v1663
        %vm1665 = vweird.f32 %v1624
        %vm1666 = vweird.f32 %v1660
        %vm1667 = vmor %vm1665, %vm1666
        %v1668 = vsel %vm1667, %v1660, %v1664
        %v1669 = vand.u32 2147483647, %v1624
        %vm1670 = vcmp.eq.f32.partialorder %v1669, 8.507059e+37
        %v1671 = vand.u32 %v1624, 2147483648
        %v1672 = vor.u32 1.1754944e-38, %v1671
        %v1673 = vsel %vm1670, %v1672, %v1668
        %v1674 = vmul.f32 1.0, %v1673
        %v1675 = vrcp.pop %v1625
        %v1676 = vmul.f32 %v1625, %v1675
        %v1677 = vsub.f32 1.0, %v1676
        %v1678 = vmul.f32 %v1675, %v1677
        %v1679 = vadd.f32 %v1675, %v1678
        %vm1680 = vweird.f32 %v1625
        %vm1681 = vweird.f32 %v1675
        %vm1682 = vmor %vm1680, %vm1681
        %v1683 = vsel %vm1682, %v1675, %v1679
        %v1684 = vand.u32 2147483647, %v1625
        %vm1685 = vcmp.eq.f32.partialorder %v1684, 8.507059e+37
        %v1686 = vand.u32 %v1625, 2147483648
        %v1687 = vor.u32 1.1754944e-38, %v1686
        %v1688 = vsel %vm1685, %v1687, %v1683
        %v1689 = vmul.f32 1.0, %v1688
        %v1690 = vrcp.pop %v1626
        %v1691 = vmul.f32 %v1626, %v1690
        %v1692 = vsub.f32 1.0, %v1691
        %v1693 = vmul.f32 %v1690, %v1692
        %v1694 = vadd.f32 %v1690, %v1693
        %vm1695 = vweird.f32 %v1626
        %vm1696 = vweird.f32 %v1690
        %vm1697 = vmor %vm1695, %vm1696
        %v1698 = vsel %vm1697, %v1690, %v1694
        %v1699 = vand.u32 2147483647, %v1626
        %vm1700 = vcmp.eq.f32.partialorder %v1699, 8.507059e+37
        %v1701 = vand.u32 %v1626, 2147483648
        %v1702 = vor.u32 1.1754944e-38, %v1701
        %v1703 = vsel %vm1700, %v1702, %v1698
        %v1704 = vmul.f32 1.0, %v1703
        %v1705 = vrcp.pop %v1627
        %v1706 = vmul.f32 %v1627, %v1705
        %v1707 = vsub.f32 1.0, %v1706
        %v1708 = vmul.f32 %v1705, %v1707
        %v1709 = vadd.f32 %v1705, %v1708
        %vm1710 = vweird.f32 %v1627
        %vm1711 = vweird.f32 %v1705
        %vm1712 = vmor %vm1710, %vm1711
        %v1713 = vsel %vm1712, %v1705, %v1709
        %v1714 = vand.u32 2147483647, %v1627
        %vm1715 = vcmp.eq.f32.partialorder %v1714, 8.507059e+37
        %v1716 = vand.u32 %v1627, 2147483648
        %v1717 = vor.u32 1.1754944e-38, %v1716
        %v1718 = vsel %vm1715, %v1717, %v1713
        %v1719 = vmul.f32 1.0, %v1718
        %v1720 = vrcp.pop %v1628
        %v1721 = vmul.f32 %v1628, %v1720
        %v1722 = vsub.f32 1.0, %v1721
        %v1723 = vmul.f32 %v1720, %v1722
        %v1724 = vadd.f32 %v1720, %v1723
        %vm1725 = vweird.f32 %v1628
        %vm1726 = vweird.f32 %v1720
        %vm1727 = vmor %vm1725, %vm1726
        %v1728 = vsel %vm1727, %v1720, %v1724
        %v1729 = vand.u32 2147483647, %v1628
        %vm1730 = vcmp.eq.f32.partialorder %v1729, 8.507059e+37
        %v1731 = vand.u32 %v1628, 2147483648
        %v1732 = vor.u32 1.1754944e-38, %v1731
        %v1733 = vsel %vm1730, %v1732, %v1728
        %v1734 = vmul.f32 1.0, %v1733
        %v1735 = vrcp.pop %v1629
        %v1736 = vmul.f32 %v1629, %v1735
        %v1737 = vsub.f32 1.0, %v1736
        %v1738 = vmul.f32 %v1735, %v1737
        %v1739 = vadd.f32 %v1735, %v1738
        %vm1740 = vweird.f32 %v1629
        %vm1741 = vweird.f32 %v1735
        %vm1742 = vmor %vm1740, %vm1741
        %v1743 = vsel %vm1742, %v1735, %v1739
        %v1744 = vand.u32 2147483647, %v1629
        %vm1745 = vcmp.eq.f32.partialorder %v1744, 8.507059e+37
        %v1746 = vand.u32 %v1629, 2147483648
        %v1747 = vor.u32 1.1754944e-38, %v1746
        %v1748 = vsel %vm1745, %v1747, %v1743
        %v1749 = vmul.f32 1.0, %v1748
        %v1750 = vld [vmem:[%s965] sm:$0xff]
        %v1751 = vmul.f32 %v1750, 0.35355338
        %v1752 = vld [vmem:[%s972] sm:$0xff]
        %v1753 = vmul.f32 %v1752, 0.35355338
        %v1754 = vld [vmem:[%s976] sm:$0xff]
        %v1755 = vld [vmem:[%s980] sm:$0xff]
        %v1756 = vld [vmem:[%s984] sm:$0xff]
        %v1757 = vld [vmem:[%s988] sm:$0xff]
        %v1758 = vadd.f32 %v1390, 1.0
        %v1759 = vadd.f32 %v1391, 1.0
        %v1760 = vadd.f32 %v1392, 1.0
        %v1761 = vadd.f32 %v1393, 1.0
        %v1762 = vadd.f32 %v1394, 1.0
        %v1763 = vadd.f32 %v1395, 1.0
        %v1764 = vadd.f32 %v1396, 1.0
        %v1765 = vadd.f32 %v1397, 1.0
        %v1767 = vrot.slane %v1751, 1
        %v1768 = vrot.slane %v1751, 2
        %v1769 = vrot.slane %v1751, 3
        %v1770 = vrot.slane %v1751, 4
        %v1771 = vrot.slane %v1751, 5
        %v1772 = vrot.slane %v1751, 6
        %v1773 = vrot.slane %v1751, 7
        %v1774 = vperm.slane %v1751, 0
        %v1775 = vperm.slane %v1767, 0
        %v1776 = vperm.slane %v1768, 0
        %v1777 = vperm.slane %v1769, 0
        %v1778 = vperm.slane %v1770, 0
        %v1779 = vperm.slane %v1771, 0
        %v1780 = vperm.slane %v1772, 0
        %v1781 = vperm.slane %v1773, 0
        %v1790 = vmul.f32 %v1774, %v1755
        %v1791 = vmul.f32 %v1775, %v1755
        %v1792 = vmul.f32 %v1776, %v1755
        %v1793 = vmul.f32 %v1777, %v1755
        %v1794 = vmul.f32 %v1778, %v1755
        %v1795 = vmul.f32 %v1779, %v1755
        %v1796 = vmul.f32 %v1780, %v1755
        %v1797 = vmul.f32 %v1781, %v1755
        %v1798 = vmul.f32 %v1790, %v1758
        %v1799 = vmul.f32 %v1791, %v1759
        %v1800 = vmul.f32 %v1792, %v1760
        %v1801 = vmul.f32 %v1793, %v1761
        %v1802 = vmul.f32 %v1794, %v1762
        %v1803 = vmul.f32 %v1795, %v1763
        %v1804 = vmul.f32 %v1796, %v1764
        %v1805 = vmul.f32 %v1797, %v1765
        %1814 = vrot.lane.b32.xlu0 %v1390, 96
        %v1815 = vpop.permute.xlu0 %1814
        %1816 = vrot.lane.b32.xlu0 %v1391, 96
        %v1817 = vpop.permute.xlu0 %1816
        %1818 = vrot.lane.b32.xlu0 %v1392, 96
        %v1819 = vpop.permute.xlu0 %1818
        %1820 = vrot.lane.b32.xlu0 %v1393, 96
        %v1821 = vpop.permute.xlu0 %1820
        %1822 = vrot.lane.b32.xlu0 %v1394, 96
        %v1823 = vpop.permute.xlu0 %1822
        %1824 = vrot.lane.b32.xlu0 %v1395, 96
        %v1825 = vpop.permute.xlu0 %1824
        %1826 = vrot.lane.b32.xlu0 %v1396, 96
        %v1827 = vpop.permute.xlu0 %1826
        %1828 = vrot.lane.b32.xlu0 %v1397, 96
        %v1829 = vpop.permute.xlu0 %1828
        %v1838 = vadd.f32 %v1798, %v1815
        %v1839 = vadd.f32 %v1799, %v1817
        %v1840 = vadd.f32 %v1800, %v1819
        %v1841 = vadd.f32 %v1801, %v1821
        %v1842 = vadd.f32 %v1802, %v1823
        %v1843 = vadd.f32 %v1803, %v1825
        %v1844 = vadd.f32 %v1804, %v1827
        %v1845 = vadd.f32 %v1805, %v1829
        %1854 = vrot.lane.b32.xlu0 %v1758, 64
        %v1855 = vpop.permute.xlu0 %1854
        %1856 = vrot.lane.b32.xlu0 %v1759, 64
        %v1857 = vpop.permute.xlu0 %1856
        %1858 = vrot.lane.b32.xlu0 %v1760, 64
        %v1859 = vpop.permute.xlu0 %1858
        %1860 = vrot.lane.b32.xlu0 %v1761, 64
        %v1861 = vpop.permute.xlu0 %1860
        %1862 = vrot.lane.b32.xlu0 %v1762, 64
        %v1863 = vpop.permute.xlu0 %1862
        %1864 = vrot.lane.b32.xlu0 %v1763, 64
        %v1865 = vpop.permute.xlu0 %1864
        %1866 = vrot.lane.b32.xlu0 %v1764, 64
        %v1867 = vpop.permute.xlu0 %1866
        %1868 = vrot.lane.b32.xlu0 %v1765, 64
        %v1869 = vpop.permute.xlu0 %1868
        %v1878 = vmul.f32 %v1444, %v1855
        %v1879 = vmul.f32 %v1459, %v1857
        %v1880 = vmul.f32 %v1474, %v1859
        %v1881 = vmul.f32 %v1489, %v1861
        %v1882 = vmul.f32 %v1504, %v1863
        %v1883 = vmul.f32 %v1519, %v1865
        %v1884 = vmul.f32 %v1534, %v1867
        %v1885 = vmul.f32 %v1549, %v1869
        %1894 = vrot.lane.b32.xlu0 %v1878, 64
        %v1895 = vpop.permute.xlu0 %1894
        %1896 = vrot.lane.b32.xlu0 %v1879, 64
        %v1897 = vpop.permute.xlu0 %1896
        %1898 = vrot.lane.b32.xlu0 %v1880, 64
        %v1899 = vpop.permute.xlu0 %1898
        %1900 = vrot.lane.b32.xlu0 %v1881, 64
        %v1901 = vpop.permute.xlu0 %1900
        %1902 = vrot.lane.b32.xlu0 %v1882, 64
        %v1903 = vpop.permute.xlu0 %1902
        %1904 = vrot.lane.b32.xlu0 %v1883, 64
        %v1905 = vpop.permute.xlu0 %1904
        %1906 = vrot.lane.b32.xlu0 %v1884, 64
        %v1907 = vpop.permute.xlu0 %1906
        %1908 = vrot.lane.b32.xlu0 %v1885, 64
        %v1909 = vpop.permute.xlu0 %1908
        %v1918 = vmul.f32 %v1838, %v1895
        %v1919 = vmul.f32 %v1839, %v1897
        %v1920 = vmul.f32 %v1840, %v1899
        %v1921 = vmul.f32 %v1841, %v1901
        %v1922 = vmul.f32 %v1842, %v1903
        %v1923 = vmul.f32 %v1843, %v1905
        %v1924 = vmul.f32 %v1844, %v1907
        %v1925 = vmul.f32 %v1845, %v1909
        %v1926 = vadd.f32 %v1918, %v1815
        %v1927 = vadd.f32 %v1919, %v1817
        %v1928 = vadd.f32 %v1920, %v1819
        %v1929 = vadd.f32 %v1921, %v1821
        %v1930 = vadd.f32 %v1922, %v1823
        %v1931 = vadd.f32 %v1923, %v1825
        %v1932 = vadd.f32 %v1924, %v1827
        %v1933 = vadd.f32 %v1925, %v1829
        %v1934 = vadd.f32 %v1590, 1.0
        %v1935 = vadd.f32 %v1591, 1.0
        %v1936 = vadd.f32 %v1592, 1.0
        %v1937 = vadd.f32 %v1593, 1.0
        %v1938 = vadd.f32 %v1594, 1.0
        %v1939 = vadd.f32 %v1595, 1.0
        %v1940 = vadd.f32 %v1596, 1.0
        %v1941 = vadd.f32 %v1597, 1.0
        %v1943 = vrot.slane %v1754, 1
        %v1944 = vrot.slane %v1754, 2
        %v1945 = vrot.slane %v1754, 3
        %v1946 = vrot.slane %v1754, 4
        %v1947 = vrot.slane %v1754, 5
        %v1948 = vrot.slane %v1754, 6
        %v1949 = vrot.slane %v1754, 7
        %v1950 = vperm.slane %v1754, 0
        %v1951 = vperm.slane %v1943, 0
        %v1952 = vperm.slane %v1944, 0
        %v1953 = vperm.slane %v1945, 0
        %v1954 = vperm.slane %v1946, 0
        %v1955 = vperm.slane %v1947, 0
        %v1956 = vperm.slane %v1948, 0
        %v1957 = vperm.slane %v1949, 0
        %v1966 = vmul.f32 %v1950, %v1753
        %v1967 = vmul.f32 %v1951, %v1753
        %v1968 = vmul.f32 %v1952, %v1753
        %v1969 = vmul.f32 %v1953, %v1753
        %v1970 = vmul.f32 %v1954, %v1753
        %v1971 = vmul.f32 %v1955, %v1753
        %v1972 = vmul.f32 %v1956, %v1753
        %v1973 = vmul.f32 %v1957, %v1753
        %v1974 = vmul.f32 %v1966, %v1934
        %v1975 = vmul.f32 %v1967, %v1935
        %v1976 = vmul.f32 %v1968, %v1936
        %v1977 = vmul.f32 %v1969, %v1937
        %v1978 = vmul.f32 %v1970, %v1938
        %v1979 = vmul.f32 %v1971, %v1939
        %v1980 = vmul.f32 %v1972, %v1940
        %v1981 = vmul.f32 %v1973, %v1941
        %1990 = vrot.lane.b32.xlu0 %v1590, 96
        %v1991 = vpop.permute.xlu0 %1990
        %1992 = vrot.lane.b32.xlu0 %v1591, 96
        %v1993 = vpop.permute.xlu0 %1992
        %1994 = vrot.lane.b32.xlu0 %v1592, 96
        %v1995 = vpop.permute.xlu0 %1994
        %1996 = vrot.lane.b32.xlu0 %v1593, 96
        %v1997 = vpop.permute.xlu0 %1996
        %1998 = vrot.lane.b32.xlu0 %v1594, 96
        %v1999 = vpop.permute.xlu0 %1998
        %2000 = vrot.lane.b32.xlu0 %v1595, 96
        %v2001 = vpop.permute.xlu0 %2000
        %2002 = vrot.lane.b32.xlu0 %v1596, 96
        %v2003 = vpop.permute.xlu0 %2002
        %2004 = vrot.lane.b32.xlu0 %v1597, 96
        %v2005 = vpop.permute.xlu0 %2004
        %v2014 = vadd.f32 %v1974, %v1991
        %v2015 = vadd.f32 %v1975, %v1993
        %v2016 = vadd.f32 %v1976, %v1995
        %v2017 = vadd.f32 %v1977, %v1997
        %v2018 = vadd.f32 %v1978, %v1999
        %v2019 = vadd.f32 %v1979, %v2001
        %v2020 = vadd.f32 %v1980, %v2003
        %v2021 = vadd.f32 %v1981, %v2005
        %2030 = vrot.lane.b32.xlu0 %v1934, 64
        %v2031 = vpop.permute.xlu0 %2030
        %2032 = vrot.lane.b32.xlu0 %v1935, 64
        %v2033 = vpop.permute.xlu0 %2032
        %2034 = vrot.lane.b32.xlu0 %v1936, 64
        %v2035 = vpop.permute.xlu0 %2034
        %2036 = vrot.lane.b32.xlu0 %v1937, 64
        %v2037 = vpop.permute.xlu0 %2036
        %2038 = vrot.lane.b32.xlu0 %v1938, 64
        %v2039 = vpop.permute.xlu0 %2038
        %2040 = vrot.lane.b32.xlu0 %v1939, 64
        %v2041 = vpop.permute.xlu0 %2040
        %2042 = vrot.lane.b32.xlu0 %v1940, 64
        %v2043 = vpop.permute.xlu0 %2042
        %2044 = vrot.lane.b32.xlu0 %v1941, 64
        %v2045 = vpop.permute.xlu0 %2044
        %v2054 = vmul.f32 %v1644, %v2031
        %v2055 = vmul.f32 %v1659, %v2033
        %v2056 = vmul.f32 %v1674, %v2035
        %v2057 = vmul.f32 %v1689, %v2037
        %v2058 = vmul.f32 %v1704, %v2039
        %v2059 = vmul.f32 %v1719, %v2041
        %v2060 = vmul.f32 %v1734, %v2043
        %v2061 = vmul.f32 %v1749, %v2045
        %2070 = vrot.lane.b32.xlu0 %v2054, 64
        %v2071 = vpop.permute.xlu0 %2070
        %2072 = vrot.lane.b32.xlu0 %v2055, 64
        %v2073 = vpop.permute.xlu0 %2072
        %2074 = vrot.lane.b32.xlu0 %v2056, 64
        %v2075 = vpop.permute.xlu0 %2074
        %2076 = vrot.lane.b32.xlu0 %v2057, 64
        %v2077 = vpop.permute.xlu0 %2076
        %2078 = vrot.lane.b32.xlu0 %v2058, 64
        %v2079 = vpop.permute.xlu0 %2078
        %2080 = vrot.lane.b32.xlu0 %v2059, 64
        %v2081 = vpop.permute.xlu0 %2080
        %2082 = vrot.lane.b32.xlu0 %v2060, 64
        %v2083 = vpop.permute.xlu0 %2082
        %2084 = vrot.lane.b32.xlu0 %v2061, 64
        %v2085 = vpop.permute.xlu0 %2084
        %v2094 = vmul.f32 %v2014, %v2071
        %v2095 = vmul.f32 %v2015, %v2073
        %v2096 = vmul.f32 %v2016, %v2075
        %v2097 = vmul.f32 %v2017, %v2077
        %v2098 = vmul.f32 %v2018, %v2079
        %v2099 = vmul.f32 %v2019, %v2081
        %v2100 = vmul.f32 %v2020, %v2083
        %v2101 = vmul.f32 %v2021, %v2085
        %v2102 = vadd.f32 %v2094, %v1991
        %v2103 = vadd.f32 %v2095, %v1993
        %v2104 = vadd.f32 %v2096, %v1995
        %v2105 = vadd.f32 %v2097, %v1997
        %v2106 = vadd.f32 %v2098, %v1999
        %v2107 = vadd.f32 %v2099, %v2001
        %v2108 = vadd.f32 %v2100, %v2003
        %v2109 = vadd.f32 %v2101, %v2005
        %vm2110 = vcmp.gt.f32.partialorder %v1019, 0.0
        %v2111 = vsel %vm2110, 1, 0
        %2112 = vset.pattern.permute.xlu0 0
        %2113 = vperm.xlu0 %2112, %v2111
        %v2114 = vpop.permute.xlu0 %2113
        %vm2115 = vcmp.eq.s32.totalorder %v2114, 1
        %v2116 = vsel %vm2115, %v1926, -1e+30
        %v2117 = vsel %vm2115, %v1927, -1e+30
        %v2118 = vsel %vm2115, %v1928, -1e+30
        %v2119 = vsel %vm2115, %v1929, -1e+30
        %v2120 = vsel %vm2115, %v1930, -1e+30
        %v2121 = vsel %vm2115, %v1931, -1e+30
        %v2122 = vsel %vm2115, %v1932, -1e+30
        %v2123 = vsel %vm2115, %v1933, -1e+30
        %vm2124 = vcmp.gt.f32.partialorder %v1053, 0.0
        %vm2125 = vcmp.gt.f32.partialorder %v1054, 0.0
        %vm2126 = vcmp.gt.f32.partialorder %v1055, 0.0
        %vm2127 = vcmp.gt.f32.partialorder %v1056, 0.0
        %vm2128 = vcmp.gt.f32.partialorder %v1057, 0.0
        %vm2129 = vcmp.gt.f32.partialorder %v1058, 0.0
        %vm2130 = vcmp.gt.f32.partialorder %v1059, 0.0
        %v2131 = vsel %vm2124, 1, 0
        %v2132 = vsel %vm2125, 1, 0
        %v2133 = vsel %vm2126, 1, 0
        %v2134 = vsel %vm2127, 1, 0
        %v2135 = vsel %vm2128, 1, 0
        %v2136 = vsel %vm2129, 1, 0
        %v2137 = vsel %vm2130, 1, 0
        %v2138 = vperm.slane %v2111, 0
        %v2139 = vperm.slane %v2131, 0
        %v2140 = vperm.slane %v2132, 0
        %v2141 = vperm.slane %v2133, 0
        %v2142 = vperm.slane %v2134, 0
        %v2143 = vperm.slane %v2135, 0
        %v2144 = vperm.slane %v2136, 0
        %v2145 = vperm.slane %v2137, 0
        %2146 = vset.pattern.permute.xlu0 0
        %2147 = vperm.xlu0 %2146, %v2138
        %v2148 = vpop.permute.xlu0 %2147
        %2149 = vset.pattern.permute.xlu0 0
        %2150 = vperm.xlu0 %2149, %v2139
        %v2151 = vpop.permute.xlu0 %2150
        %2152 = vset.pattern.permute.xlu0 0
        %2153 = vperm.xlu0 %2152, %v2140
        %v2154 = vpop.permute.xlu0 %2153
        %2155 = vset.pattern.permute.xlu0 0
        %2156 = vperm.xlu0 %2155, %v2141
        %v2157 = vpop.permute.xlu0 %2156
        %2158 = vset.pattern.permute.xlu0 0
        %2159 = vperm.xlu0 %2158, %v2142
        %v2160 = vpop.permute.xlu0 %2159
        %2161 = vset.pattern.permute.xlu0 0
        %2162 = vperm.xlu0 %2161, %v2143
        %v2163 = vpop.permute.xlu0 %2162
        %2164 = vset.pattern.permute.xlu0 0
        %2165 = vperm.xlu0 %2164, %v2144
        %v2166 = vpop.permute.xlu0 %2165
        %2167 = vset.pattern.permute.xlu0 0
        %2168 = vperm.xlu0 %2167, %v2145
        %v2169 = vpop.permute.xlu0 %2168
        %vm2170 = vcmp.eq.s32.totalorder %v2148, 1
        %vm2171 = vcmp.eq.s32.totalorder %v2151, 1
        %vm2172 = vcmp.eq.s32.totalorder %v2154, 1
        %vm2173 = vcmp.eq.s32.totalorder %v2157, 1
        %vm2174 = vcmp.eq.s32.totalorder %v2160, 1
        %vm2175 = vcmp.eq.s32.totalorder %v2163, 1
        %vm2176 = vcmp.eq.s32.totalorder %v2166, 1
        %vm2177 = vcmp.eq.s32.totalorder %v2169, 1
        %v2178 = vsel %vm2170, %v2102, -1e+30
        %v2179 = vsel %vm2171, %v2103, -1e+30
        %v2180 = vsel %vm2172, %v2104, -1e+30
        %v2181 = vsel %vm2173, %v2105, -1e+30
        %v2182 = vsel %vm2174, %v2106, -1e+30
        %v2183 = vsel %vm2175, %v2107, -1e+30
        %v2184 = vsel %vm2176, %v2108, -1e+30
        %v2185 = vsel %vm2177, %v2109, -1e+30
        %vm2186 = vcmask 261120
        %v2187 = vsel %vm2186, %v2116, -inf
        %v2188 = vrot.slane %v2187, 4
        %v2189 = vmax.f32 %v2187, %v2188
        %v2190 = vrot.slane %v2189, 2
        %v2191 = vmax.f32 %v2189, %v2190
        %v2192 = vrot.slane %v2191, 1
        %v2193 = vmax.f32 %v2191, %v2192
        %v2194 = vsel %vm2186, %v2117, -inf
        %v2195 = vrot.slane %v2194, 4
        %v2196 = vmax.f32 %v2194, %v2195
        %v2197 = vrot.slane %v2196, 2
        %v2198 = vmax.f32 %v2196, %v2197
        %v2199 = vrot.slane %v2198, 1
        %v2200 = vmax.f32 %v2198, %v2199
        %v2201 = vsel %vm2186, %v2118, -inf
        %v2202 = vrot.slane %v2201, 4
        %v2203 = vmax.f32 %v2201, %v2202
        %v2204 = vrot.slane %v2203, 2
        %v2205 = vmax.f32 %v2203, %v2204
        %v2206 = vrot.slane %v2205, 1
        %v2207 = vmax.f32 %v2205, %v2206
        %v2208 = vsel %vm2186, %v2119, -inf
        %v2209 = vrot.slane %v2208, 4
        %v2210 = vmax.f32 %v2208, %v2209
        %v2211 = vrot.slane %v2210, 2
        %v2212 = vmax.f32 %v2210, %v2211
        %v2213 = vrot.slane %v2212, 1
        %v2214 = vmax.f32 %v2212, %v2213
        %v2215 = vsel %vm2186, %v2120, -inf
        %v2216 = vrot.slane %v2215, 4
        %v2217 = vmax.f32 %v2215, %v2216
        %v2218 = vrot.slane %v2217, 2
        %v2219 = vmax.f32 %v2217, %v2218
        %v2220 = vrot.slane %v2219, 1
        %v2221 = vmax.f32 %v2219, %v2220
        %v2222 = vsel %vm2186, %v2121, -inf
        %v2223 = vrot.slane %v2222, 4
        %v2224 = vmax.f32 %v2222, %v2223
        %v2225 = vrot.slane %v2224, 2
        %v2226 = vmax.f32 %v2224, %v2225
        %v2227 = vrot.slane %v2226, 1
        %v2228 = vmax.f32 %v2226, %v2227
        %v2229 = vsel %vm2186, %v2122, -inf
        %v2230 = vrot.slane %v2229, 4
        %v2231 = vmax.f32 %v2229, %v2230
        %v2232 = vrot.slane %v2231, 2
        %v2233 = vmax.f32 %v2231, %v2232
        %v2234 = vrot.slane %v2233, 1
        %v2235 = vmax.f32 %v2233, %v2234
        %v2236 = vsel %vm2186, %v2123, -inf
        %v2237 = vrot.slane %v2236, 4
        %v2238 = vmax.f32 %v2236, %v2237
        %v2239 = vrot.slane %v2238, 2
        %v2240 = vmax.f32 %v2238, %v2239
        %v2241 = vrot.slane %v2240, 1
        %v2242 = vmax.f32 %v2240, %v2241
        %v2243 = vsel %vm2186, %v2178, -inf
        %v2244 = vsel %vm2186, %v2179, -inf
        %v2245 = vsel %vm2186, %v2180, -inf
        %v2246 = vsel %vm2186, %v2181, -inf
        %v2247 = vsel %vm2186, %v2182, -inf
        %v2248 = vmax.f32 %v2243, %v2247
        %v2249 = vsel %vm2186, %v2183, -inf
        %v2250 = vmax.f32 %v2244, %v2249
        %v2251 = vsel %vm2186, %v2184, -inf
        %v2252 = vmax.f32 %v2245, %v2251
        %v2253 = vsel %vm2186, %v2185, -inf
        %v2254 = vmax.f32 %v2246, %v2253
        %v2255 = vmax.f32 %v2248, %v2250
        %v2256 = vmax.f32 %v2252, %v2254
        %v2257 = vmax.f32 %v2255, %v2256
        %v2259 = vrot.slane %v2257, 1
        %v2260 = vrot.slane %v2257, 2
        %v2261 = vrot.slane %v2257, 3
        %v2262 = vrot.slane %v2257, 4
        %v2263 = vrot.slane %v2257, 5
        %v2264 = vrot.slane %v2257, 6
        %v2265 = vrot.slane %v2257, 7
        %v2274 = vmax.f32 %v2193, %v2257
        %v2275 = vmax.f32 %v2200, %v2259
        %v2276 = vmax.f32 %v2207, %v2260
        %v2277 = vmax.f32 %v2214, %v2261
        %v2278 = vmax.f32 %v2221, %v2262
        %v2279 = vmax.f32 %v2228, %v2263
        %v2280 = vmax.f32 %v2235, %v2264
        %v2281 = vmax.f32 %v2242, %v2265
        %v2282 = vperm.slane %v2274, 0
        %v2283 = vperm.slane %v2275, 0
        %v2284 = vperm.slane %v2276, 0
        %v2285 = vperm.slane %v2277, 0
        %v2286 = vperm.slane %v2278, 0
        %v2287 = vperm.slane %v2279, 0
        %v2288 = vperm.slane %v2280, 0
        %v2289 = vperm.slane %v2281, 0
        %v2290 = vsub.f32 %v2116, %v2282
        %v2291 = vsub.f32 %v2117, %v2283
        %v2292 = vsub.f32 %v2118, %v2284
        %v2293 = vsub.f32 %v2119, %v2285
        %v2294 = vsub.f32 %v2120, %v2286
        %v2295 = vsub.f32 %v2121, %v2287
        %v2296 = vsub.f32 %v2122, %v2288
        %v2297 = vsub.f32 %v2123, %v2289
        %v2298 = vmul.f32 %v2290, 1.442695
        %v2299 = vpow.pop %v2298
        %v2300 = vmul.f32 %v2291, 1.442695
        %v2301 = vpow.pop %v2300
        %v2302 = vmul.f32 %v2292, 1.442695
        %v2303 = vpow.pop %v2302
        %v2304 = vmul.f32 %v2293, 1.442695
        %v2305 = vpow.pop %v2304
        %v2306 = vmul.f32 %v2294, 1.442695
        %v2307 = vpow.pop %v2306
        %v2308 = vmul.f32 %v2295, 1.442695
        %v2309 = vpow.pop %v2308
        %v2310 = vmul.f32 %v2296, 1.442695
        %v2311 = vpow.pop %v2310
        %v2312 = vmul.f32 %v2297, 1.442695
        %v2313 = vpow.pop %v2312
        %v2322 = vrot.slane %v2275, 7
        %vm2323 = vcmask 1041409
        %v2324 = vsel %vm2323, %v2322, %v2274
        %v2325 = vrot.slane %v2276, 6
        %vm2326 = vcmask 1042434
        %v2327 = vsel %vm2326, %v2325, %v2324
        %v2328 = vrot.slane %v2277, 5
        %vm2329 = vcmask 1043459
        %v2330 = vsel %vm2329, %v2328, %v2327
        %v2331 = vrot.slane %v2278, 4
        %vm2332 = vcmask 1044484
        %v2333 = vsel %vm2332, %v2331, %v2330
        %v2334 = vrot.slane %v2279, 3
        %vm2335 = vcmask 1045509
        %v2336 = vsel %vm2335, %v2334, %v2333
        %v2337 = vrot.slane %v2280, 2
        %vm2338 = vcmask 1046534
        %v2339 = vsel %vm2338, %v2337, %v2336
        %v2340 = vrot.slane %v2281, 1
        %vm2341 = vcmask 1047559
        %v2342 = vsel %vm2341, %v2340, %v2339
        %v2344 = vsub.f32 %v2178, %v2342
        %v2345 = vsub.f32 %v2179, %v2342
        %v2346 = vsub.f32 %v2180, %v2342
        %v2347 = vsub.f32 %v2181, %v2342
        %v2348 = vsub.f32 %v2182, %v2342
        %v2349 = vsub.f32 %v2183, %v2342
        %v2350 = vsub.f32 %v2184, %v2342
        %v2351 = vsub.f32 %v2185, %v2342
        %v2352 = vmul.f32 %v2344, 1.442695
        %v2353 = vpow.pop %v2352
        %v2354 = vmul.f32 %v2345, 1.442695
        %v2355 = vpow.pop %v2354
        %v2356 = vmul.f32 %v2346, 1.442695
        %v2357 = vpow.pop %v2356
        %v2358 = vmul.f32 %v2347, 1.442695
        %v2359 = vpow.pop %v2358
        %v2360 = vmul.f32 %v2348, 1.442695
        %v2361 = vpow.pop %v2360
        %v2362 = vmul.f32 %v2349, 1.442695
        %v2363 = vpow.pop %v2362
        %v2364 = vmul.f32 %v2350, 1.442695
        %v2365 = vpow.pop %v2364
        %v2366 = vmul.f32 %v2351, 1.442695
        %v2367 = vpow.pop %v2366
        %v2368 = vsel %vm2186, %v2299, 0.0
        %v2369 = vrot.slane %v2368, 4
        %v2370 = vadd.f32 %v2368, %v2369
        %v2371 = vrot.slane %v2370, 2
        %v2372 = vadd.f32 %v2370, %v2371
        %v2373 = vrot.slane %v2372, 1
        %v2374 = vadd.f32 %v2372, %v2373
        %v2375 = vsel %vm2186, %v2301, 0.0
        %v2376 = vrot.slane %v2375, 4
        %v2377 = vadd.f32 %v2375, %v2376
        %v2378 = vrot.slane %v2377, 2
        %v2379 = vadd.f32 %v2377, %v2378
        %v2380 = vrot.slane %v2379, 1
        %v2381 = vadd.f32 %v2379, %v2380
        %v2382 = vsel %vm2186, %v2303, 0.0
        %v2383 = vrot.slane %v2382, 4
        %v2384 = vadd.f32 %v2382, %v2383
        %v2385 = vrot.slane %v2384, 2
        %v2386 = vadd.f32 %v2384, %v2385
        %v2387 = vrot.slane %v2386, 1
        %v2388 = vadd.f32 %v2386, %v2387
        %v2389 = vsel %vm2186, %v2305, 0.0
        %v2390 = vrot.slane %v2389, 4
        %v2391 = vadd.f32 %v2389, %v2390
        %v2392 = vrot.slane %v2391, 2
        %v2393 = vadd.f32 %v2391, %v2392
        %v2394 = vrot.slane %v2393, 1
        %v2395 = vadd.f32 %v2393, %v2394
        %v2396 = vsel %vm2186, %v2307, 0.0
        %v2397 = vrot.slane %v2396, 4
        %v2398 = vadd.f32 %v2396, %v2397
        %v2399 = vrot.slane %v2398, 2
        %v2400 = vadd.f32 %v2398, %v2399
        %v2401 = vrot.slane %v2400, 1
        %v2402 = vadd.f32 %v2400, %v2401
        %v2403 = vsel %vm2186, %v2309, 0.0
        %v2404 = vrot.slane %v2403, 4
        %v2405 = vadd.f32 %v2403, %v2404
        %v2406 = vrot.slane %v2405, 2
        %v2407 = vadd.f32 %v2405, %v2406
        %v2408 = vrot.slane %v2407, 1
        %v2409 = vadd.f32 %v2407, %v2408
        %v2410 = vsel %vm2186, %v2311, 0.0
        %v2411 = vrot.slane %v2410, 4
        %v2412 = vadd.f32 %v2410, %v2411
        %v2413 = vrot.slane %v2412, 2
        %v2414 = vadd.f32 %v2412, %v2413
        %v2415 = vrot.slane %v2414, 1
        %v2416 = vadd.f32 %v2414, %v2415
        %v2417 = vsel %vm2186, %v2313, 0.0
        %v2418 = vrot.slane %v2417, 4
        %v2419 = vadd.f32 %v2417, %v2418
        %v2420 = vrot.slane %v2419, 2
        %v2421 = vadd.f32 %v2419, %v2420
        %v2422 = vrot.slane %v2421, 1
        %v2423 = vadd.f32 %v2421, %v2422
        %v2424 = vsel %vm2186, %v2353, 0.0
        %v2425 = vsel %vm2186, %v2355, 0.0
        %v2426 = vadd.f32 %v2424, %v2425
        %v2427 = vsel %vm2186, %v2357, 0.0
        %v2428 = vadd.f32 %v2426, %v2427
        %v2429 = vsel %vm2186, %v2359, 0.0
        %v2430 = vadd.f32 %v2428, %v2429
        %v2431 = vsel %vm2186, %v2361, 0.0
        %v2432 = vadd.f32 %v2430, %v2431
        %v2433 = vsel %vm2186, %v2363, 0.0
        %v2434 = vadd.f32 %v2432, %v2433
        %v2435 = vsel %vm2186, %v2365, 0.0
        %v2436 = vadd.f32 %v2434, %v2435
        %v2437 = vsel %vm2186, %v2367, 0.0
        %v2438 = vadd.f32 %v2436, %v2437
        %v2440 = vrot.slane %v2438, 1
        %v2441 = vrot.slane %v2438, 2
        %v2442 = vrot.slane %v2438, 3
        %v2443 = vrot.slane %v2438, 4
        %v2444 = vrot.slane %v2438, 5
        %v2445 = vrot.slane %v2438, 6
        %v2446 = vrot.slane %v2438, 7
        %v2455 = vadd.f32 %v2374, %v2438
        %v2456 = vadd.f32 %v2381, %v2440
        %v2457 = vadd.f32 %v2388, %v2441
        %v2458 = vadd.f32 %v2395, %v2442
        %v2459 = vadd.f32 %v2402, %v2443
        %v2460 = vadd.f32 %v2409, %v2444
        %v2461 = vadd.f32 %v2416, %v2445
        %v2462 = vadd.f32 %v2423, %v2446
        %v2463 = vmul.f32 %v2299, %v1757
        %v2464 = vmul.f32 %v2301, %v1757
        %v2465 = vmul.f32 %v2303, %v1757
        %v2466 = vmul.f32 %v2305, %v1757
        %v2467 = vmul.f32 %v2307, %v1757
        %v2468 = vmul.f32 %v2309, %v1757
        %v2469 = vmul.f32 %v2311, %v1757
        %v2470 = vmul.f32 %v2313, %v1757
        %v2471 = vsel %vm2186, %v2463, 0.0
        %v2472 = vrot.slane %v2471, 4
        %v2473 = vadd.f32 %v2471, %v2472
        %v2474 = vrot.slane %v2473, 2
        %v2475 = vadd.f32 %v2473, %v2474
        %v2476 = vrot.slane %v2475, 1
        %v2477 = vadd.f32 %v2475, %v2476
        %v2478 = vsel %vm2186, %v2464, 0.0
        %v2479 = vrot.slane %v2478, 4
        %v2480 = vadd.f32 %v2478, %v2479
        %v2481 = vrot.slane %v2480, 2
        %v2482 = vadd.f32 %v2480, %v2481
        %v2483 = vrot.slane %v2482, 1
        %v2484 = vadd.f32 %v2482, %v2483
        %v2485 = vsel %vm2186, %v2465, 0.0
        %v2486 = vrot.slane %v2485, 4
        %v2487 = vadd.f32 %v2485, %v2486
        %v2488 = vrot.slane %v2487, 2
        %v2489 = vadd.f32 %v2487, %v2488
        %v2490 = vrot.slane %v2489, 1
        %v2491 = vadd.f32 %v2489, %v2490
        %v2492 = vsel %vm2186, %v2466, 0.0
        %v2493 = vrot.slane %v2492, 4
        %v2494 = vadd.f32 %v2492, %v2493
        %v2495 = vrot.slane %v2494, 2
        %v2496 = vadd.f32 %v2494, %v2495
        %v2497 = vrot.slane %v2496, 1
        %v2498 = vadd.f32 %v2496, %v2497
        %v2499 = vsel %vm2186, %v2467, 0.0
        %v2500 = vrot.slane %v2499, 4
        %v2501 = vadd.f32 %v2499, %v2500
        %v2502 = vrot.slane %v2501, 2
        %v2503 = vadd.f32 %v2501, %v2502
        %v2504 = vrot.slane %v2503, 1
        %v2505 = vadd.f32 %v2503, %v2504
        %v2506 = vsel %vm2186, %v2468, 0.0
        %v2507 = vrot.slane %v2506, 4
        %v2508 = vadd.f32 %v2506, %v2507
        %v2509 = vrot.slane %v2508, 2
        %v2510 = vadd.f32 %v2508, %v2509
        %v2511 = vrot.slane %v2510, 1
        %v2512 = vadd.f32 %v2510, %v2511
        %v2513 = vsel %vm2186, %v2469, 0.0
        %v2514 = vrot.slane %v2513, 4
        %v2515 = vadd.f32 %v2513, %v2514
        %v2516 = vrot.slane %v2515, 2
        %v2517 = vadd.f32 %v2515, %v2516
        %v2518 = vrot.slane %v2517, 1
        %v2519 = vadd.f32 %v2517, %v2518
        %v2520 = vsel %vm2186, %v2470, 0.0
        %v2521 = vrot.slane %v2520, 4
        %v2522 = vadd.f32 %v2520, %v2521
        %v2523 = vrot.slane %v2522, 2
        %v2524 = vadd.f32 %v2522, %v2523
        %v2525 = vrot.slane %v2524, 1
        %v2526 = vadd.f32 %v2524, %v2525
        %v2528 = vrot.slane %v1756, 1
        %v2529 = vrot.slane %v1756, 2
        %v2530 = vrot.slane %v1756, 3
        %v2531 = vrot.slane %v1756, 4
        %v2532 = vrot.slane %v1756, 5
        %v2533 = vrot.slane %v1756, 6
        %v2534 = vrot.slane %v1756, 7
        %v2535 = vperm.slane %v1756, 0
        %v2536 = vperm.slane %v2528, 0
        %v2537 = vperm.slane %v2529, 0
        %v2538 = vperm.slane %v2530, 0
        %v2539 = vperm.slane %v2531, 0
        %v2540 = vperm.slane %v2532, 0
        %v2541 = vperm.slane %v2533, 0
        %v2542 = vperm.slane %v2534, 0
        %v2551 = vmul.f32 %v2353, %v2535
        %v2552 = vmul.f32 %v2355, %v2536
        %v2553 = vmul.f32 %v2357, %v2537
        %v2554 = vmul.f32 %v2359, %v2538
        %v2555 = vmul.f32 %v2361, %v2539
        %v2556 = vmul.f32 %v2363, %v2540
        %v2557 = vmul.f32 %v2365, %v2541
        %v2558 = vmul.f32 %v2367, %v2542
        %v2559 = vsel %vm2186, %v2551, 0.0
        %v2560 = vsel %vm2186, %v2552, 0.0
        %v2561 = vadd.f32 %v2559, %v2560
        %v2562 = vsel %vm2186, %v2553, 0.0
        %v2563 = vadd.f32 %v2561, %v2562
        %v2564 = vsel %vm2186, %v2554, 0.0
        %v2565 = vadd.f32 %v2563, %v2564
        %v2566 = vsel %vm2186, %v2555, 0.0
        %v2567 = vadd.f32 %v2565, %v2566
        %v2568 = vsel %vm2186, %v2556, 0.0
        %v2569 = vadd.f32 %v2567, %v2568
        %v2570 = vsel %vm2186, %v2557, 0.0
        %v2571 = vadd.f32 %v2569, %v2570
        %v2572 = vsel %vm2186, %v2558, 0.0
        %v2573 = vadd.f32 %v2571, %v2572
        %v2575 = vrot.slane %v2573, 1
        %v2576 = vrot.slane %v2573, 2
        %v2577 = vrot.slane %v2573, 3
        %v2578 = vrot.slane %v2573, 4
        %v2579 = vrot.slane %v2573, 5
        %v2580 = vrot.slane %v2573, 6
        %v2581 = vrot.slane %v2573, 7
        %v2590 = vadd.f32 %v2477, %v2573
        %v2591 = vadd.f32 %v2484, %v2575
        %v2592 = vadd.f32 %v2491, %v2576
        %v2593 = vadd.f32 %v2498, %v2577
        %v2594 = vadd.f32 %v2505, %v2578
        %v2595 = vadd.f32 %v2512, %v2579
        %v2596 = vadd.f32 %v2519, %v2580
        %v2597 = vadd.f32 %v2526, %v2581
        %vm2598 = vcmp.gt.f32.partialorder %v2455, 0.0
        %vm2599 = vcmp.gt.f32.partialorder %v2456, 0.0
        %vm2600 = vcmp.gt.f32.partialorder %v2457, 0.0
        %vm2601 = vcmp.gt.f32.partialorder %v2458, 0.0
        %vm2602 = vcmp.gt.f32.partialorder %v2459, 0.0
        %vm2603 = vcmp.gt.f32.partialorder %v2460, 0.0
        %vm2604 = vcmp.gt.f32.partialorder %v2461, 0.0
        %vm2605 = vcmp.gt.f32.partialorder %v2462, 0.0
        %v2606 = vrcp.pop %v2455
        %v2607 = vmul.f32 %v2455, %v2606
        %v2608 = vsub.f32 1.0, %v2607
        %v2609 = vmul.f32 %v2606, %v2608
        %v2610 = vadd.f32 %v2606, %v2609
        %vm2611 = vweird.f32 %v2455
        %vm2612 = vweird.f32 %v2606
        %vm2613 = vmor %vm2611, %vm2612
        %v2614 = vsel %vm2613, %v2606, %v2610
        %v2615 = vand.u32 2147483647, %v2455
        %vm2616 = vcmp.eq.f32.partialorder %v2615, 8.507059e+37
        %v2617 = vand.u32 %v2455, 2147483648
        %v2618 = vor.u32 1.1754944e-38, %v2617
        %v2619 = vsel %vm2616, %v2618, %v2614
        %v2620 = vmul.f32 %v2590, %v2619
        %v2621 = vrcp.pop %v2456
        %v2622 = vmul.f32 %v2456, %v2621
        %v2623 = vsub.f32 1.0, %v2622
        %v2624 = vmul.f32 %v2621, %v2623
        %v2625 = vadd.f32 %v2621, %v2624
        %vm2626 = vweird.f32 %v2456
        %vm2627 = vweird.f32 %v2621
        %vm2628 = vmor %vm2626, %vm2627
        %v2629 = vsel %vm2628, %v2621, %v2625
        %v2630 = vand.u32 2147483647, %v2456
        %vm2631 = vcmp.eq.f32.partialorder %v2630, 8.507059e+37
        %v2632 = vand.u32 %v2456, 2147483648
        %v2633 = vor.u32 1.1754944e-38, %v2632
        %v2634 = vsel %vm2631, %v2633, %v2629
        %v2635 = vmul.f32 %v2591, %v2634
        %v2636 = vrcp.pop %v2457
        %v2637 = vmul.f32 %v2457, %v2636
        %v2638 = vsub.f32 1.0, %v2637
        %v2639 = vmul.f32 %v2636, %v2638
        %v2640 = vadd.f32 %v2636, %v2639
        %vm2641 = vweird.f32 %v2457
        %vm2642 = vweird.f32 %v2636
        %vm2643 = vmor %vm2641, %vm2642
        %v2644 = vsel %vm2643, %v2636, %v2640
        %v2645 = vand.u32 2147483647, %v2457
        %vm2646 = vcmp.eq.f32.partialorder %v2645, 8.507059e+37
        %v2647 = vand.u32 %v2457, 2147483648
        %v2648 = vor.u32 1.1754944e-38, %v2647
        %v2649 = vsel %vm2646, %v2648, %v2644
        %v2650 = vmul.f32 %v2592, %v2649
        %v2651 = vrcp.pop %v2458
        %v2652 = vmul.f32 %v2458, %v2651
        %v2653 = vsub.f32 1.0, %v2652
        %v2654 = vmul.f32 %v2651, %v2653
        %v2655 = vadd.f32 %v2651, %v2654
        %vm2656 = vweird.f32 %v2458
        %vm2657 = vweird.f32 %v2651
        %vm2658 = vmor %vm2656, %vm2657
        %v2659 = vsel %vm2658, %v2651, %v2655
        %v2660 = vand.u32 2147483647, %v2458
        %vm2661 = vcmp.eq.f32.partialorder %v2660, 8.507059e+37
        %v2662 = vand.u32 %v2458, 2147483648
        %v2663 = vor.u32 1.1754944e-38, %v2662
        %v2664 = vsel %vm2661, %v2663, %v2659
        %v2665 = vmul.f32 %v2593, %v2664
        %v2666 = vrcp.pop %v2459
        %v2667 = vmul.f32 %v2459, %v2666
        %v2668 = vsub.f32 1.0, %v2667
        %v2669 = vmul.f32 %v2666, %v2668
        %v2670 = vadd.f32 %v2666, %v2669
        %vm2671 = vweird.f32 %v2459
        %vm2672 = vweird.f32 %v2666
        %vm2673 = vmor %vm2671, %vm2672
        %v2674 = vsel %vm2673, %v2666, %v2670
        %v2675 = vand.u32 2147483647, %v2459
        %vm2676 = vcmp.eq.f32.partialorder %v2675, 8.507059e+37
        %v2677 = vand.u32 %v2459, 2147483648
        %v2678 = vor.u32 1.1754944e-38, %v2677
        %v2679 = vsel %vm2676, %v2678, %v2674
        %v2680 = vmul.f32 %v2594, %v2679
        %v2681 = vrcp.pop %v2460
        %v2682 = vmul.f32 %v2460, %v2681
        %v2683 = vsub.f32 1.0, %v2682
        %v2684 = vmul.f32 %v2681, %v2683
        %v2685 = vadd.f32 %v2681, %v2684
        %vm2686 = vweird.f32 %v2460
        %vm2687 = vweird.f32 %v2681
        %vm2688 = vmor %vm2686, %vm2687
        %v2689 = vsel %vm2688, %v2681, %v2685
        %v2690 = vand.u32 2147483647, %v2460
        %vm2691 = vcmp.eq.f32.partialorder %v2690, 8.507059e+37
        %v2692 = vand.u32 %v2460, 2147483648
        %v2693 = vor.u32 1.1754944e-38, %v2692
        %v2694 = vsel %vm2691, %v2693, %v2689
        %v2695 = vmul.f32 %v2595, %v2694
        %v2696 = vrcp.pop %v2461
        %v2697 = vmul.f32 %v2461, %v2696
        %v2698 = vsub.f32 1.0, %v2697
        %v2699 = vmul.f32 %v2696, %v2698
        %v2700 = vadd.f32 %v2696, %v2699
        %vm2701 = vweird.f32 %v2461
        %vm2702 = vweird.f32 %v2696
        %vm2703 = vmor %vm2701, %vm2702
        %v2704 = vsel %vm2703, %v2696, %v2700
        %v2705 = vand.u32 2147483647, %v2461
        %vm2706 = vcmp.eq.f32.partialorder %v2705, 8.507059e+37
        %v2707 = vand.u32 %v2461, 2147483648
        %v2708 = vor.u32 1.1754944e-38, %v2707
        %v2709 = vsel %vm2706, %v2708, %v2704
        %v2710 = vmul.f32 %v2596, %v2709
        %v2711 = vrcp.pop %v2462
        %v2712 = vmul.f32 %v2462, %v2711
        %v2713 = vsub.f32 1.0, %v2712
        %v2714 = vmul.f32 %v2711, %v2713
        %v2715 = vadd.f32 %v2711, %v2714
        %vm2716 = vweird.f32 %v2462
        %vm2717 = vweird.f32 %v2711
        %vm2718 = vmor %vm2716, %vm2717
        %v2719 = vsel %vm2718, %v2711, %v2715
        %v2720 = vand.u32 2147483647, %v2462
        %vm2721 = vcmp.eq.f32.partialorder %v2720, 8.507059e+37
        %v2722 = vand.u32 %v2462, 2147483648
        %v2723 = vor.u32 1.1754944e-38, %v2722
        %v2724 = vsel %vm2721, %v2723, %v2719
        %v2725 = vmul.f32 %v2597, %v2724
        %v2726 = vsel %vm2598, %v2620, 0.0
        %v2727 = vsel %vm2599, %v2635, 0.0
        %v2728 = vsel %vm2600, %v2650, 0.0
        %v2729 = vsel %vm2601, %v2665, 0.0
        %v2730 = vsel %vm2602, %v2680, 0.0
        %v2731 = vsel %vm2603, %v2695, 0.0
        %v2732 = vsel %vm2604, %v2710, 0.0
        %v2733 = vsel %vm2605, %v2725, 0.0
        %v2742 = vrot.slane %v2727, 7
        %v2743 = vsel %vm2323, %v2742, %v2726
        %v2744 = vrot.slane %v2728, 6
        %v2745 = vsel %vm2326, %v2744, %v2743
        %v2746 = vrot.slane %v2729, 5
        %v2747 = vsel %vm2329, %v2746, %v2745
        %v2748 = vrot.slane %v2730, 4
        %v2749 = vsel %vm2332, %v2748, %v2747
        %v2750 = vrot.slane %v2731, 3
        %v2751 = vsel %vm2335, %v2750, %v2749
        %v2752 = vrot.slane %v2732, 2
        %v2753 = vsel %vm2338, %v2752, %v2751
        %v2754 = vrot.slane %v2733, 1
        %v2755 = vsel %vm2341, %v2754, %v2753
        %2757 = vst.msk [vmem:[%s1010] sm:$0xff] %vm2186, %v2755
        %v2758 = vld [vmem:[%s1002] sm:$0x1]
        %v2759 = vadd.f32 %v2758, 1.0
        %v2761 = vperm.slane %v2759, 0
        %2771 = vrot.lane.b32.xlu0 %v1926, 32
        %v2772 = vpop.permute.xlu0 %2771
        %2773 = vrot.lane.b32.xlu0 %v1927, 32
        %v2774 = vpop.permute.xlu0 %2773
        %2775 = vrot.lane.b32.xlu0 %v1928, 32
        %v2776 = vpop.permute.xlu0 %2775
        %2777 = vrot.lane.b32.xlu0 %v1929, 32
        %v2778 = vpop.permute.xlu0 %2777
        %2779 = vrot.lane.b32.xlu0 %v1930, 32
        %v2780 = vpop.permute.xlu0 %2779
        %2781 = vrot.lane.b32.xlu0 %v1931, 32
        %v2782 = vpop.permute.xlu0 %2781
        %2783 = vrot.lane.b32.xlu0 %v1932, 32
        %v2784 = vpop.permute.xlu0 %2783
        %2785 = vrot.lane.b32.xlu0 %v1933, 32
        %v2786 = vpop.permute.xlu0 %2785
        %v2795 = vmul.f32 %v2761, %v2772
        %v2796 = vmul.f32 %v2761, %v2774
        %v2797 = vmul.f32 %v2761, %v2776
        %v2798 = vmul.f32 %v2761, %v2778
        %v2799 = vmul.f32 %v2761, %v2780
        %v2800 = vmul.f32 %v2761, %v2782
        %v2801 = vmul.f32 %v2761, %v2784
        %v2802 = vmul.f32 %v2761, %v2786
        %v2804 = vperm.slane %v2758, 0
        %2814 = vrot.lane.b32.xlu0 %v2795, 96
        %v2815 = vpop.permute.xlu0 %2814
        %2816 = vrot.lane.b32.xlu0 %v2796, 96
        %v2817 = vpop.permute.xlu0 %2816
        %2818 = vrot.lane.b32.xlu0 %v2797, 96
        %v2819 = vpop.permute.xlu0 %2818
        %2820 = vrot.lane.b32.xlu0 %v2798, 96
        %v2821 = vpop.permute.xlu0 %2820
        %2822 = vrot.lane.b32.xlu0 %v2799, 96
        %v2823 = vpop.permute.xlu0 %2822
        %2824 = vrot.lane.b32.xlu0 %v2800, 96
        %v2825 = vpop.permute.xlu0 %2824
        %2826 = vrot.lane.b32.xlu0 %v2801, 96
        %v2827 = vpop.permute.xlu0 %2826
        %2828 = vrot.lane.b32.xlu0 %v2802, 96
        %v2829 = vpop.permute.xlu0 %2828
        %v2838 = vadd.f32 %v2804, %v2815
        %v2839 = vadd.f32 %v2804, %v2817
        %v2840 = vadd.f32 %v2804, %v2819
        %v2841 = vadd.f32 %v2804, %v2821
        %v2842 = vadd.f32 %v2804, %v2823
        %v2843 = vadd.f32 %v2804, %v2825
        %v2844 = vadd.f32 %v2804, %v2827
        %v2845 = vadd.f32 %v2804, %v2829
        %v2846 = vld [vmem:[%s15] sm:$0xff]
        %v2847 = vld [vmem:[%s15 + $0x8] sm:$0xff]
        %v2848 = vld [vmem:[%s15 + $0x10] sm:$0xff]
        %v2849 = vld [vmem:[%s15 + $0x18] sm:$0xff]
        %v2850 = vld [vmem:[%s16] sm:$0x1]
        %v2852 = vperm.slane %v2850, 0
        %v2855 = vsel %vm2186, %v2838, 0
        %v2858 = vsel %vm2186, %v2839, 0
        %v2861 = vsel %vm2186, %v2840, 0
        %v2864 = vsel %vm2186, %v2841, 0
        %v2867 = vsel %vm2186, %v2842, 0
        %v2870 = vsel %vm2186, %v2843, 0
        %v2873 = vsel %vm2186, %v2844, 0
        %v2876 = vsel %vm2186, %v2845, 0
        %2878 = vmatpush.msra.mxu0 0.0
        %2879 = vmatpush.msra.mxu0 0.0
        %2880 = vmatpush.msra.mxu0 0.0
        %2881 = vmatpush.msra.mxu0 0.0
        %2882 = vmatpush.msra.mxu0 0.0
        %2883 = vmatpush.msra.mxu0 0.0
        %2884 = vmatpush.msra.mxu0 0.0
        %2885 = vmatpush.msra.mxu0 0.0
        %2886 = vmatpush.msra.mxu0 0.0
        %2887 = vmatpush.msra.mxu0 0.0
        %2888 = vmatpush.msra.mxu0 0.0
        %2889 = vmatpush.msra.mxu0 0.0
        %2890 = vmatpush.msra.mxu0 %v2849
        %2891 = vmatpush.msra.mxu0 %v2848
        %2892 = vmatpush.msra.mxu0 %v2847
        %2893 = vmatpush.msra.mxu0 %v2846
        %2894 = vmatmul.f32.gmra.mxu0 %v2855
        %v2895 = vpop.f32.mrf.mxu0
        %v2896 = vadd.f32 %v2852, %v2895
        %2897 = vmatmul.f32.gmra.mxu0 %v2858
        %v2898 = vpop.f32.mrf.mxu0
        %v2899 = vadd.f32 %v2852, %v2898
        %2900 = vmatmul.f32.gmra.mxu0 %v2861
        %v2901 = vpop.f32.mrf.mxu0
        %v2902 = vadd.f32 %v2852, %v2901
        %2903 = vmatmul.f32.gmra.mxu0 %v2864
        %v2904 = vpop.f32.mrf.mxu0
        %v2905 = vadd.f32 %v2852, %v2904
        %2906 = vmatmul.f32.gmra.mxu0 %v2867
        %v2907 = vpop.f32.mrf.mxu0
        %v2908 = vadd.f32 %v2852, %v2907
        %2909 = vmatmul.f32.gmra.mxu0 %v2870
        %v2910 = vpop.f32.mrf.mxu0
        %v2911 = vadd.f32 %v2852, %v2910
        %2912 = vmatmul.f32.gmra.mxu0 %v2873
        %v2913 = vpop.f32.mrf.mxu0
        %v2914 = vadd.f32 %v2852, %v2913
        %2915 = vmatmul.f32.gmra.mxu0 %v2876
        %v2916 = vpop.f32.mrf.mxu0
        %v2917 = vadd.f32 %v2852, %v2916
        %2918 = vdwg.mxu0
        %v2919 = vmul.f32 %v2896, %v1353
        %v2920 = vmul.f32 %v2899, %v1358
        %v2921 = vmul.f32 %v2902, %v1363
        %v2922 = vmul.f32 %v2905, %v1368
        %v2923 = vmul.f32 %v2908, %v1373
        %v2924 = vmul.f32 %v2911, %v1378
        %v2925 = vmul.f32 %v2914, %v1383
        %v2926 = vmul.f32 %v2917, %v1388
        %v2927 = vadd.f32 %v1091, %v2919
        %v2928 = vadd.f32 %v1092, %v2920
        %v2929 = vadd.f32 %v1093, %v2921
        %v2930 = vadd.f32 %v1094, %v2922
        %v2931 = vadd.f32 %v1095, %v2923
        %v2932 = vadd.f32 %v1096, %v2924
        %v2933 = vadd.f32 %v1097, %v2925
        %v2934 = vadd.f32 %v1098, %v2926
        %v2935 = vmul.f32 %v2927, %v1353
        %v2936 = vmul.f32 %v2928, %v1358
        %v2937 = vmul.f32 %v2929, %v1363
        %v2938 = vmul.f32 %v2930, %v1368
        %v2939 = vmul.f32 %v2931, %v1373
        %v2940 = vmul.f32 %v2932, %v1378
        %v2941 = vmul.f32 %v2933, %v1383
        %v2942 = vmul.f32 %v2934, %v1388
        %v2943 = vld [vmem:[%s17] sm:$0x1]
        %v2944 = vld [vmem:[%s17 + $0x1] sm:$0x1]
        %v2945 = vld [vmem:[%s17 + $0x2] sm:$0x1]
        %v2946 = vld [vmem:[%s17 + $0x3] sm:$0x1]
        %v2947 = vadd.f32 %v1091, %v2935
        %v2948 = vadd.f32 %v1092, %v2936
        %v2949 = vadd.f32 %v1093, %v2937
        %v2950 = vadd.f32 %v1094, %v2938
        %v2951 = vadd.f32 %v1095, %v2939
        %v2952 = vadd.f32 %v1096, %v2940
        %v2953 = vadd.f32 %v1097, %v2941
        %v2954 = vadd.f32 %v1098, %v2942
        %v2955 = vsel %vm1107, %v2947, 0.0
        %2956 = vadd.xlane.f32.xlu0 %v2955
        %v2957 = vpop.xlane.xlu0 %2956
        %v2958 = vsel %vm1107, %v2948, 0.0
        %2959 = vadd.xlane.f32.xlu0 %v2958
        %v2960 = vpop.xlane.xlu0 %2959
        %v2961 = vsel %vm1107, %v2949, 0.0
        %2962 = vadd.xlane.f32.xlu0 %v2961
        %v2963 = vpop.xlane.xlu0 %2962
        %v2964 = vsel %vm1107, %v2950, 0.0
        %2965 = vadd.xlane.f32.xlu0 %v2964
        %v2966 = vpop.xlane.xlu0 %2965
        %v2967 = vsel %vm1107, %v2951, 0.0
        %2968 = vadd.xlane.f32.xlu0 %v2967
        %v2969 = vpop.xlane.xlu0 %2968
        %v2970 = vsel %vm1107, %v2952, 0.0
        %2971 = vadd.xlane.f32.xlu0 %v2970
        %v2972 = vpop.xlane.xlu0 %2971
        %v2973 = vsel %vm1107, %v2953, 0.0
        %2974 = vadd.xlane.f32.xlu0 %v2973
        %v2975 = vpop.xlane.xlu0 %2974
        %v2976 = vsel %vm1107, %v2954, 0.0
        %2977 = vadd.xlane.f32.xlu0 %v2976
        %v2978 = vpop.xlane.xlu0 %2977
        %v2979 = vrcp.pop 16.0
        %v2980 = vmul.f32 16.0, %v2979
        %v2981 = vsub.f32 1.0, %v2980
        %v2982 = vmul.f32 %v2979, %v2981
        %v2983 = vadd.f32 %v2979, %v2982
        %vm2984 = vweird.f32 %v2979
        %v2985 = vsel %vm2984, %v2979, %v2983
        %v2986 = vmul.f32 %v2957, %v2985
        %v2987 = vmul.f32 %v2960, %v2985
        %v2988 = vmul.f32 %v2963, %v2985
        %v2989 = vmul.f32 %v2966, %v2985
        %v2990 = vmul.f32 %v2969, %v2985
        %v2991 = vmul.f32 %v2972, %v2985
        %v2992 = vmul.f32 %v2975, %v2985
        %v2993 = vmul.f32 %v2978, %v2985
        %v2994 = vsub.f32 %v2947, %v2986
        %v2995 = vsub.f32 %v2948, %v2987
        %v2996 = vsub.f32 %v2949, %v2988
        %v2997 = vsub.f32 %v2950, %v2989
        %v2998 = vsub.f32 %v2951, %v2990
        %v2999 = vsub.f32 %v2952, %v2991
        %v3000 = vsub.f32 %v2953, %v2992
        %v3001 = vsub.f32 %v2954, %v2993
        %v3002 = vmul.f32 %v2994, %v2994
        %v3003 = vmul.f32 %v2995, %v2995
        %v3004 = vmul.f32 %v2996, %v2996
        %v3005 = vmul.f32 %v2997, %v2997
        %v3006 = vmul.f32 %v2998, %v2998
        %v3007 = vmul.f32 %v2999, %v2999
        %v3008 = vmul.f32 %v3000, %v3000
        %v3009 = vmul.f32 %v3001, %v3001
        %v3010 = vsel %vm1107, %v3002, 0.0
        %3011 = vadd.xlane.f32.xlu0 %v3010
        %v3012 = vpop.xlane.xlu0 %3011
        %v3013 = vsel %vm1107, %v3003, 0.0
        %3014 = vadd.xlane.f32.xlu0 %v3013
        %v3015 = vpop.xlane.xlu0 %3014
        %v3016 = vsel %vm1107, %v3004, 0.0
        %3017 = vadd.xlane.f32.xlu0 %v3016
        %v3018 = vpop.xlane.xlu0 %3017
        %v3019 = vsel %vm1107, %v3005, 0.0
        %3020 = vadd.xlane.f32.xlu0 %v3019
        %v3021 = vpop.xlane.xlu0 %3020
        %v3022 = vsel %vm1107, %v3006, 0.0
        %3023 = vadd.xlane.f32.xlu0 %v3022
        %v3024 = vpop.xlane.xlu0 %3023
        %v3025 = vsel %vm1107, %v3007, 0.0
        %3026 = vadd.xlane.f32.xlu0 %v3025
        %v3027 = vpop.xlane.xlu0 %3026
        %v3028 = vsel %vm1107, %v3008, 0.0
        %3029 = vadd.xlane.f32.xlu0 %v3028
        %v3030 = vpop.xlane.xlu0 %3029
        %v3031 = vsel %vm1107, %v3009, 0.0
        %3032 = vadd.xlane.f32.xlu0 %v3031
        %v3033 = vpop.xlane.xlu0 %3032
        %v3034 = vmul.f32 %v3012, %v2985
        %v3035 = vmul.f32 %v3015, %v2985
        %v3036 = vmul.f32 %v3018, %v2985
        %v3037 = vmul.f32 %v3021, %v2985
        %v3038 = vmul.f32 %v3024, %v2985
        %v3039 = vmul.f32 %v3027, %v2985
        %v3040 = vmul.f32 %v3030, %v2985
        %v3041 = vmul.f32 %v3033, %v2985
        %v3042 = vadd.f32 %v3034, 1e-05
        %v3043 = vadd.f32 %v3035, 1e-05
        %v3044 = vadd.f32 %v3036, 1e-05
        %v3045 = vadd.f32 %v3037, 1e-05
        %v3046 = vadd.f32 %v3038, 1e-05
        %v3047 = vadd.f32 %v3039, 1e-05
        %v3048 = vadd.f32 %v3040, 1e-05
        %v3049 = vadd.f32 %v3041, 1e-05
        %v3050 = vrsqrt.pop %v3042
        %v3051 = vmul.f32 %v3050, %v3042
        %v3052 = vmul.f32 %v3051, %v3050
        %v3053 = vmul.f32 0.5, %v3052
        %v3054 = vsub.f32 1.5, %v3053
        %v3055 = vmul.f32 %v3050, %v3054
        %vm3056 = vweird.f32 %v3042
        %vm3057 = vweird.f32 %v3050
        %vm3058 = vmor %vm3056, %vm3057
        %v3059 = vsel %vm3058, %v3050, %v3055
        %v3060 = vrsqrt.pop %v3043
        %v3061 = vmul.f32 %v3060, %v3043
        %v3062 = vmul.f32 %v3061, %v3060
        %v3063 = vmul.f32 0.5, %v3062
        %v3064 = vsub.f32 1.5, %v3063
        %v3065 = vmul.f32 %v3060, %v3064
        %vm3066 = vweird.f32 %v3043
        %vm3067 = vweird.f32 %v3060
        %vm3068 = vmor %vm3066, %vm3067
        %v3069 = vsel %vm3068, %v3060, %v3065
        %v3070 = vrsqrt.pop %v3044
        %v3071 = vmul.f32 %v3070, %v3044
        %v3072 = vmul.f32 %v3071, %v3070
        %v3073 = vmul.f32 0.5, %v3072
        %v3074 = vsub.f32 1.5, %v3073
        %v3075 = vmul.f32 %v3070, %v3074
        %vm3076 = vweird.f32 %v3044
        %vm3077 = vweird.f32 %v3070
        %vm3078 = vmor %vm3076, %vm3077
        %v3079 = vsel %vm3078, %v3070, %v3075
        %v3080 = vrsqrt.pop %v3045
        %v3081 = vmul.f32 %v3080, %v3045
        %v3082 = vmul.f32 %v3081, %v3080
        %v3083 = vmul.f32 0.5, %v3082
        %v3084 = vsub.f32 1.5, %v3083
        %v3085 = vmul.f32 %v3080, %v3084
        %vm3086 = vweird.f32 %v3045
        %vm3087 = vweird.f32 %v3080
        %vm3088 = vmor %vm3086, %vm3087
        %v3089 = vsel %vm3088, %v3080, %v3085
        %v3090 = vrsqrt.pop %v3046
        %v3091 = vmul.f32 %v3090, %v3046
        %v3092 = vmul.f32 %v3091, %v3090
        %v3093 = vmul.f32 0.5, %v3092
        %v3094 = vsub.f32 1.5, %v3093
        %v3095 = vmul.f32 %v3090, %v3094
        %vm3096 = vweird.f32 %v3046
        %vm3097 = vweird.f32 %v3090
        %vm3098 = vmor %vm3096, %vm3097
        %v3099 = vsel %vm3098, %v3090, %v3095
        %v3100 = vrsqrt.pop %v3047
        %v3101 = vmul.f32 %v3100, %v3047
        %v3102 = vmul.f32 %v3101, %v3100
        %v3103 = vmul.f32 0.5, %v3102
        %v3104 = vsub.f32 1.5, %v3103
        %v3105 = vmul.f32 %v3100, %v3104
        %vm3106 = vweird.f32 %v3047
        %vm3107 = vweird.f32 %v3100
        %vm3108 = vmor %vm3106, %vm3107
        %v3109 = vsel %vm3108, %v3100, %v3105
        %v3110 = vrsqrt.pop %v3048
        %v3111 = vmul.f32 %v3110, %v3048
        %v3112 = vmul.f32 %v3111, %v3110
        %v3113 = vmul.f32 0.5, %v3112
        %v3114 = vsub.f32 1.5, %v3113
        %v3115 = vmul.f32 %v3110, %v3114
        %vm3116 = vweird.f32 %v3048
        %vm3117 = vweird.f32 %v3110
        %vm3118 = vmor %vm3116, %vm3117
        %v3119 = vsel %vm3118, %v3110, %v3115
        %v3120 = vrsqrt.pop %v3049
        %v3121 = vmul.f32 %v3120, %v3049
        %v3122 = vmul.f32 %v3121, %v3120
        %v3123 = vmul.f32 0.5, %v3122
        %v3124 = vsub.f32 1.5, %v3123
        %v3125 = vmul.f32 %v3120, %v3124
        %vm3126 = vweird.f32 %v3049
        %vm3127 = vweird.f32 %v3120
        %vm3128 = vmor %vm3126, %vm3127
        %v3129 = vsel %vm3128, %v3120, %v3125
        %v3130 = vmul.f32 %v2994, %v3059
        %v3131 = vmul.f32 %v2995, %v3069
        %v3132 = vmul.f32 %v2996, %v3079
        %v3133 = vmul.f32 %v2997, %v3089
        %v3134 = vmul.f32 %v2998, %v3099
        %v3135 = vmul.f32 %v2999, %v3109
        %v3136 = vmul.f32 %v3000, %v3119
        %v3137 = vmul.f32 %v3001, %v3129
        %v3138 = vperm.slane %v2943, 0
        %v3139 = vmul.f32 %v3130, %v3138
        %v3140 = vmul.f32 %v3131, %v3138
        %v3141 = vmul.f32 %v3132, %v3138
        %v3142 = vmul.f32 %v3133, %v3138
        %v3143 = vmul.f32 %v3134, %v3138
        %v3144 = vmul.f32 %v3135, %v3138
        %v3145 = vmul.f32 %v3136, %v3138
        %v3146 = vmul.f32 %v3137, %v3138
        %v3147 = vperm.slane %v2944, 0
        %v3148 = vadd.f32 %v3139, %v3147
        %v3149 = vadd.f32 %v3140, %v3147
        %v3150 = vadd.f32 %v3141, %v3147
        %v3151 = vadd.f32 %v3142, %v3147
        %v3152 = vadd.f32 %v3143, %v3147
        %v3153 = vadd.f32 %v3144, %v3147
        %v3154 = vadd.f32 %v3145, %v3147
        %v3155 = vadd.f32 %v3146, %v3147
        %v3156 = vld [vmem:[%s18] sm:$0xff]
        %v3157 = vld [vmem:[%s18 + $0x8] sm:$0xff]
        %v3158 = vld [vmem:[%s19] sm:$0x1]
        %v3160 = vperm.slane %v3158, 0
        %v3163 = vsel %vm1107, %v3148, 0
        %v3166 = vsel %vm1107, %v3149, 0
        %v3169 = vsel %vm1107, %v3150, 0
        %v3172 = vsel %vm1107, %v3151, 0
        %v3175 = vsel %vm1107, %v3152, 0
        %v3178 = vsel %vm1107, %v3153, 0
        %v3181 = vsel %vm1107, %v3154, 0
        %v3184 = vsel %vm1107, %v3155, 0
        %3186 = vmatpush.msra.mxu0 0.0
        %3187 = vmatpush.msra.mxu0 0.0
        %3188 = vmatpush.msra.mxu0 0.0
        %3189 = vmatpush.msra.mxu0 0.0
        %3190 = vmatpush.msra.mxu0 0.0
        %3191 = vmatpush.msra.mxu0 0.0
        %3192 = vmatpush.msra.mxu0 0.0
        %3193 = vmatpush.msra.mxu0 0.0
        %3194 = vmatpush.msra.mxu0 0.0
        %3195 = vmatpush.msra.mxu0 0.0
        %3196 = vmatpush.msra.mxu0 0.0
        %3197 = vmatpush.msra.mxu0 0.0
        %3198 = vmatpush.msra.mxu0 0.0
        %3199 = vmatpush.msra.mxu0 0.0
        %3200 = vmatpush.msra.mxu0 %v3157
        %3201 = vmatpush.msra.mxu0 %v3156
        %3202 = vmatmul.f32.gmra.mxu0 %v3163
        %v3203 = vpop.f32.mrf.mxu0
        %v3204 = vadd.f32 %v3160, %v3203
        %3205 = vmatmul.f32.gmra.mxu0 %v3166
        %v3206 = vpop.f32.mrf.mxu0
        %v3207 = vadd.f32 %v3160, %v3206
        %3208 = vmatmul.f32.gmra.mxu0 %v3169
        %v3209 = vpop.f32.mrf.mxu0
        %v3210 = vadd.f32 %v3160, %v3209
        %3211 = vmatmul.f32.gmra.mxu0 %v3172
        %v3212 = vpop.f32.mrf.mxu0
        %v3213 = vadd.f32 %v3160, %v3212
        %3214 = vmatmul.f32.gmra.mxu0 %v3175
        %v3215 = vpop.f32.mrf.mxu0
        %v3216 = vadd.f32 %v3160, %v3215
        %3217 = vmatmul.f32.gmra.mxu0 %v3178
        %v3218 = vpop.f32.mrf.mxu0
        %v3219 = vadd.f32 %v3160, %v3218
        %3220 = vmatmul.f32.gmra.mxu0 %v3181
        %v3221 = vpop.f32.mrf.mxu0
        %v3222 = vadd.f32 %v3160, %v3221
        %3223 = vmatmul.f32.gmra.mxu0 %v3184
        %v3224 = vpop.f32.mrf.mxu0
        %v3225 = vadd.f32 %v3160, %v3224
        %3226 = vdwg.mxu0
        %v3227 = vmax.f32 %v3204, 0.0
        %v3228 = vmax.f32 %v3207, 0.0
        %v3229 = vmax.f32 %v3210, 0.0
        %v3230 = vmax.f32 %v3213, 0.0
        %v3231 = vmax.f32 %v3216, 0.0
        %v3232 = vmax.f32 %v3219, 0.0
        %v3233 = vmax.f32 %v3222, 0.0
        %v3234 = vmax.f32 %v3225, 0.0
        %v3235 = vld [vmem:[%s20] sm:$0xff]
        %v3236 = vld [vmem:[%s20 + $0x8] sm:$0xff]
        %v3237 = vld [vmem:[%s20 + $0x10] sm:$0xff]
        %v3238 = vld [vmem:[%s20 + $0x18] sm:$0xff]
        %v3239 = vld [vmem:[%s21] sm:$0x1]
        %v3241 = vperm.slane %v3239, 0
        %v3244 = vsel %vm2186, %v3227, 0
        %v3247 = vsel %vm2186, %v3228, 0
        %v3250 = vsel %vm2186, %v3229, 0
        %v3253 = vsel %vm2186, %v3230, 0
        %v3256 = vsel %vm2186, %v3231, 0
        %v3259 = vsel %vm2186, %v3232, 0
        %v3262 = vsel %vm2186, %v3233, 0
        %v3265 = vsel %vm2186, %v3234, 0
        %3267 = vmatpush.msra.mxu0 0.0
        %3268 = vmatpush.msra.mxu0 0.0
        %3269 = vmatpush.msra.mxu0 0.0
        %3270 = vmatpush.msra.mxu0 0.0
        %3271 = vmatpush.msra.mxu0 0.0
        %3272 = vmatpush.msra.mxu0 0.0
        %3273 = vmatpush.msra.mxu0 0.0
        %3274 = vmatpush.msra.mxu0 0.0
        %3275 = vmatpush.msra.mxu0 0.0
        %3276 = vmatpush.msra.mxu0 0.0
        %3277 = vmatpush.msra.mxu0 0.0
        %3278 = vmatpush.msra.mxu0 0.0
        %3279 = vmatpush.msra.mxu0 %v3238
        %3280 = vmatpush.msra.mxu0 %v3237
        %3281 = vmatpush.msra.mxu0 %v3236
        %3282 = vmatpush.msra.mxu0 %v3235
        %3283 = vmatmul.f32.gmra.mxu0 %v3244
        %v3284 = vpop.f32.mrf.mxu0
        %v3285 = vadd.f32 %v3241, %v3284
        %3286 = vmatmul.f32.gmra.mxu0 %v3247
        %v3287 = vpop.f32.mrf.mxu0
        %v3288 = vadd.f32 %v3241, %v3287
        %3289 = vmatmul.f32.gmra.mxu0 %v3250
        %v3290 = vpop.f32.mrf.mxu0
        %v3291 = vadd.f32 %v3241, %v3290
        %3292 = vmatmul.f32.gmra.mxu0 %v3253
        %v3293 = vpop.f32.mrf.mxu0
        %v3294 = vadd.f32 %v3241, %v3293
        %3295 = vmatmul.f32.gmra.mxu0 %v3256
        %v3296 = vpop.f32.mrf.mxu0
        %v3297 = vadd.f32 %v3241, %v3296
        %3298 = vmatmul.f32.gmra.mxu0 %v3259
        %v3299 = vpop.f32.mrf.mxu0
        %v3300 = vadd.f32 %v3241, %v3299
        %3301 = vmatmul.f32.gmra.mxu0 %v3262
        %v3302 = vpop.f32.mrf.mxu0
        %v3303 = vadd.f32 %v3241, %v3302
        %3304 = vmatmul.f32.gmra.mxu0 %v3265
        %v3305 = vpop.f32.mrf.mxu0
        %v3306 = vadd.f32 %v3241, %v3305
        %3307 = vdwg.mxu0
        %v3308 = vadd.f32 %v3148, %v3285
        %v3309 = vadd.f32 %v3149, %v3288
        %v3310 = vadd.f32 %v3150, %v3291
        %v3311 = vadd.f32 %v3151, %v3294
        %v3312 = vadd.f32 %v3152, %v3297
        %v3313 = vadd.f32 %v3153, %v3300
        %v3314 = vadd.f32 %v3154, %v3303
        %v3315 = vadd.f32 %v3155, %v3306
        %v3316 = vsel %vm1107, %v3308, 0.0
        %3317 = vadd.xlane.f32.xlu0 %v3316
        %v3318 = vpop.xlane.xlu0 %3317
        %v3319 = vsel %vm1107, %v3309, 0.0
        %3320 = vadd.xlane.f32.xlu0 %v3319
        %v3321 = vpop.xlane.xlu0 %3320
        %v3322 = vsel %vm1107, %v3310, 0.0
        %3323 = vadd.xlane.f32.xlu0 %v3322
        %v3324 = vpop.xlane.xlu0 %3323
        %v3325 = vsel %vm1107, %v3311, 0.0
        %3326 = vadd.xlane.f32.xlu0 %v3325
        %v3327 = vpop.xlane.xlu0 %3326
        %v3328 = vsel %vm1107, %v3312, 0.0
        %3329 = vadd.xlane.f32.xlu0 %v3328
        %v3330 = vpop.xlane.xlu0 %3329
        %v3331 = vsel %vm1107, %v3313, 0.0
        %3332 = vadd.xlane.f32.xlu0 %v3331
        %v3333 = vpop.xlane.xlu0 %3332
        %v3334 = vsel %vm1107, %v3314, 0.0
        %3335 = vadd.xlane.f32.xlu0 %v3334
        %v3336 = vpop.xlane.xlu0 %3335
        %v3337 = vsel %vm1107, %v3315, 0.0
        %3338 = vadd.xlane.f32.xlu0 %v3337
        %v3339 = vpop.xlane.xlu0 %3338
        %v3340 = vmul.f32 %v3318, %v2985
        %v3341 = vmul.f32 %v3321, %v2985
        %v3342 = vmul.f32 %v3324, %v2985
        %v3343 = vmul.f32 %v3327, %v2985
        %v3344 = vmul.f32 %v3330, %v2985
        %v3345 = vmul.f32 %v3333, %v2985
        %v3346 = vmul.f32 %v3336, %v2985
        %v3347 = vmul.f32 %v3339, %v2985
        %v3348 = vsub.f32 %v3308, %v3340
        %v3349 = vsub.f32 %v3309, %v3341
        %v3350 = vsub.f32 %v3310, %v3342
        %v3351 = vsub.f32 %v3311, %v3343
        %v3352 = vsub.f32 %v3312, %v3344
        %v3353 = vsub.f32 %v3313, %v3345
        %v3354 = vsub.f32 %v3314, %v3346
        %v3355 = vsub.f32 %v3315, %v3347
        %v3356 = vmul.f32 %v3348, %v3348
        %v3357 = vmul.f32 %v3349, %v3349
        %v3358 = vmul.f32 %v3350, %v3350
        %v3359 = vmul.f32 %v3351, %v3351
        %v3360 = vmul.f32 %v3352, %v3352
        %v3361 = vmul.f32 %v3353, %v3353
        %v3362 = vmul.f32 %v3354, %v3354
        %v3363 = vmul.f32 %v3355, %v3355
        %v3364 = vsel %vm1107, %v3356, 0.0
        %3365 = vadd.xlane.f32.xlu0 %v3364
        %v3366 = vpop.xlane.xlu0 %3365
        %v3367 = vsel %vm1107, %v3357, 0.0
        %3368 = vadd.xlane.f32.xlu0 %v3367
        %v3369 = vpop.xlane.xlu0 %3368
        %v3370 = vsel %vm1107, %v3358, 0.0
        %3371 = vadd.xlane.f32.xlu0 %v3370
        %v3372 = vpop.xlane.xlu0 %3371
        %v3373 = vsel %vm1107, %v3359, 0.0
        %3374 = vadd.xlane.f32.xlu0 %v3373
        %v3375 = vpop.xlane.xlu0 %3374
        %v3376 = vsel %vm1107, %v3360, 0.0
        %3377 = vadd.xlane.f32.xlu0 %v3376
        %v3378 = vpop.xlane.xlu0 %3377
        %v3379 = vsel %vm1107, %v3361, 0.0
        %3380 = vadd.xlane.f32.xlu0 %v3379
        %v3381 = vpop.xlane.xlu0 %3380
        %v3382 = vsel %vm1107, %v3362, 0.0
        %3383 = vadd.xlane.f32.xlu0 %v3382
        %v3384 = vpop.xlane.xlu0 %3383
        %v3385 = vsel %vm1107, %v3363, 0.0
        %3386 = vadd.xlane.f32.xlu0 %v3385
        %v3387 = vpop.xlane.xlu0 %3386
        %v3388 = vmul.f32 %v3366, %v2985
        %v3389 = vmul.f32 %v3369, %v2985
        %v3390 = vmul.f32 %v3372, %v2985
        %v3391 = vmul.f32 %v3375, %v2985
        %v3392 = vmul.f32 %v3378, %v2985
        %v3393 = vmul.f32 %v3381, %v2985
        %v3394 = vmul.f32 %v3384, %v2985
        %v3395 = vmul.f32 %v3387, %v2985
        %v3396 = vadd.f32 %v3388, 1e-05
        %v3397 = vadd.f32 %v3389, 1e-05
        %v3398 = vadd.f32 %v3390, 1e-05
        %v3399 = vadd.f32 %v3391, 1e-05
        %v3400 = vadd.f32 %v3392, 1e-05
        %v3401 = vadd.f32 %v3393, 1e-05
        %v3402 = vadd.f32 %v3394, 1e-05
        %v3403 = vadd.f32 %v3395, 1e-05
        %v3404 = vrsqrt.pop %v3396
        %v3405 = vmul.f32 %v3404, %v3396
        %v3406 = vmul.f32 %v3405, %v3404
        %v3407 = vmul.f32 0.5, %v3406
        %v3408 = vsub.f32 1.5, %v3407
        %v3409 = vmul.f32 %v3404, %v3408
        %vm3410 = vweird.f32 %v3396
        %vm3411 = vweird.f32 %v3404
        %vm3412 = vmor %vm3410, %vm3411
        %v3413 = vsel %vm3412, %v3404, %v3409
        %v3414 = vrsqrt.pop %v3397
        %v3415 = vmul.f32 %v3414, %v3397
        %v3416 = vmul.f32 %v3415, %v3414
        %v3417 = vmul.f32 0.5, %v3416
        %v3418 = vsub.f32 1.5, %v3417
        %v3419 = vmul.f32 %v3414, %v3418
        %vm3420 = vweird.f32 %v3397
        %vm3421 = vweird.f32 %v3414
        %vm3422 = vmor %vm3420, %vm3421
        %v3423 = vsel %vm3422, %v3414, %v3419
        %v3424 = vrsqrt.pop %v3398
        %v3425 = vmul.f32 %v3424, %v3398
        %v3426 = vmul.f32 %v3425, %v3424
        %v3427 = vmul.f32 0.5, %v3426
        %v3428 = vsub.f32 1.5, %v3427
        %v3429 = vmul.f32 %v3424, %v3428
        %vm3430 = vweird.f32 %v3398
        %vm3431 = vweird.f32 %v3424
        %vm3432 = vmor %vm3430, %vm3431
        %v3433 = vsel %vm3432, %v3424, %v3429
        %v3434 = vrsqrt.pop %v3399
        %v3435 = vmul.f32 %v3434, %v3399
        %v3436 = vmul.f32 %v3435, %v3434
        %v3437 = vmul.f32 0.5, %v3436
        %v3438 = vsub.f32 1.5, %v3437
        %v3439 = vmul.f32 %v3434, %v3438
        %vm3440 = vweird.f32 %v3399
        %vm3441 = vweird.f32 %v3434
        %vm3442 = vmor %vm3440, %vm3441
        %v3443 = vsel %vm3442, %v3434, %v3439
        %v3444 = vrsqrt.pop %v3400
        %v3445 = vmul.f32 %v3444, %v3400
        %v3446 = vmul.f32 %v3445, %v3444
        %v3447 = vmul.f32 0.5, %v3446
        %v3448 = vsub.f32 1.5, %v3447
        %v3449 = vmul.f32 %v3444, %v3448
        %vm3450 = vweird.f32 %v3400
        %vm3451 = vweird.f32 %v3444
        %vm3452 = vmor %vm3450, %vm3451
        %v3453 = vsel %vm3452, %v3444, %v3449
        %v3454 = vrsqrt.pop %v3401
        %v3455 = vmul.f32 %v3454, %v3401
        %v3456 = vmul.f32 %v3455, %v3454
        %v3457 = vmul.f32 0.5, %v3456
        %v3458 = vsub.f32 1.5, %v3457
        %v3459 = vmul.f32 %v3454, %v3458
        %vm3460 = vweird.f32 %v3401
        %vm3461 = vweird.f32 %v3454
        %vm3462 = vmor %vm3460, %vm3461
        %v3463 = vsel %vm3462, %v3454, %v3459
        %v3464 = vrsqrt.pop %v3402
        %v3465 = vmul.f32 %v3464, %v3402
        %v3466 = vmul.f32 %v3465, %v3464
        %v3467 = vmul.f32 0.5, %v3466
        %v3468 = vsub.f32 1.5, %v3467
        %v3469 = vmul.f32 %v3464, %v3468
        %vm3470 = vweird.f32 %v3402
        %vm3471 = vweird.f32 %v3464
        %vm3472 = vmor %vm3470, %vm3471
        %v3473 = vsel %vm3472, %v3464, %v3469
        %v3474 = vrsqrt.pop %v3403
        %v3475 = vmul.f32 %v3474, %v3403
        %v3476 = vmul.f32 %v3475, %v3474
        %v3477 = vmul.f32 0.5, %v3476
        %v3478 = vsub.f32 1.5, %v3477
        %v3479 = vmul.f32 %v3474, %v3478
        %vm3480 = vweird.f32 %v3403
        %vm3481 = vweird.f32 %v3474
        %vm3482 = vmor %vm3480, %vm3481
        %v3483 = vsel %vm3482, %v3474, %v3479
        %v3484 = vmul.f32 %v3348, %v3413
        %v3485 = vmul.f32 %v3349, %v3423
        %v3486 = vmul.f32 %v3350, %v3433
        %v3487 = vmul.f32 %v3351, %v3443
        %v3488 = vmul.f32 %v3352, %v3453
        %v3489 = vmul.f32 %v3353, %v3463
        %v3490 = vmul.f32 %v3354, %v3473
        %v3491 = vmul.f32 %v3355, %v3483
        %v3492 = vperm.slane %v2945, 0
        %v3493 = vmul.f32 %v3484, %v3492
        %v3494 = vmul.f32 %v3485, %v3492
        %v3495 = vmul.f32 %v3486, %v3492
        %v3496 = vmul.f32 %v3487, %v3492
        %v3497 = vmul.f32 %v3488, %v3492
        %v3498 = vmul.f32 %v3489, %v3492
        %v3499 = vmul.f32 %v3490, %v3492
        %v3500 = vmul.f32 %v3491, %v3492
        %v3501 = vperm.slane %v2946, 0
        %v3502 = vadd.f32 %v3493, %v3501
        %v3503 = vadd.f32 %v3494, %v3501
        %v3504 = vadd.f32 %v3495, %v3501
        %v3505 = vadd.f32 %v3496, %v3501
        %v3506 = vadd.f32 %v3497, %v3501
        %v3507 = vadd.f32 %v3498, %v3501
        %v3508 = vadd.f32 %v3499, %v3501
        %v3509 = vadd.f32 %v3500, %v3501
        %3510 = vst.msk [vmem:[%s922] sm:$0xff] %vm1107, %v3502
        %3511 = vst.msk [vmem:[%s922 + $0x8] sm:$0xff] %vm1107, %v3503
        %3512 = vst.msk [vmem:[%s922 + $0x10] sm:$0xff] %vm1107, %v3504
        %3513 = vst.msk [vmem:[%s922 + $0x18] sm:$0xff] %vm1107, %v3505
        %3514 = vst.msk [vmem:[%s922 + $0x20] sm:$0xff] %vm1107, %v3506
        %3515 = vst.msk [vmem:[%s922 + $0x28] sm:$0xff] %vm1107, %v3507
        %3516 = vst.msk [vmem:[%s922 + $0x30] sm:$0xff] %vm1107, %v3508
        %3517 = vst.msk [vmem:[%s922 + $0x38] sm:$0xff] %vm1107, %v3509
        %s3518 = sand.u32 %s588, 1
        %s3519 = scalar_lea.sflag [#allocation3], %s3518
        %s3520 = sand.u32 %s588, 1
        %s3521 = smul.addr %s3520, 64
        %s3522 = scalar_lea.vmem [#allocation2], %s3521
        %p3523 = scmp.lt.s32.totalorder %s43, 1
        %s3524 = scalar_select %p3523, %s43, 1
        %p3525 = scmp.lt.s32.totalorder %s44, 0
        %s3526 = scalar_select %p3525, %s44, 0
        %s3527 = sadd.s32 %s3526, %s3524
        %s3528 = smul.addr %s3527, 8
        %s3529 = scalar_lea.vmem %s23, %s3528
        %p3530 = scmp.lt.s32.totalorder %s43, 1
        %s3531 = scalar_select %p3530, %s43, 1
        %p3532 = scmp.lt.s32.totalorder %s44, 0
        %s3533 = scalar_select %p3532, %s44, 0
        %s3534 = sadd.s32 %s3533, %s3531
        %s3535 = smul.addr %s3534, 4
        %s3536 = scalar_lea.vmem %s24, %s3535
        // Predicated region
        $region109: #{xey_transformer_layer.7} parent=107 // pred_check
          %p3537 = pneg %p598
        $region110: #{xey_transformer_layer.7} parent=107 // pred_check_branch
          %3539 = sbr.rel (%p3537) target = $region112
        $region111: #{xey_transformer_layer.7} parent=107 // pred_region
          %s3540 = smul.u32 8, %s44
          %3542 = vsyncadd %s3519, 0
          %s3543 = smul.addr %s43, 8
          %s3544 = sadd.s32 %s3540, %s3543
          %s3545 = smul.addr %s3544, 8
          %s3546 = scalar_lea.hbm %s22, %s3545
          %s3547 = sshll.u32 %s3522, 4
          %s3548 = int_to_ptr.vmem [resolvable:$true] %s3547
          %s3549 = sshll.u32 %s3546, 4
          %s3550 = int_to_ptr.hbm [resolvable:$true] %s3549
          %3555 = dma.vmem_to_hbm [thread:$0]  %s3548, 1024, %s3550, %s3519, 128, 128, 8
        $region112: #{xey_transformer_layer.7} parent=107 // pred_fallthru
          _
        // Predicated region
        $region113: #{xey_transformer_layer.7} parent=107 // pred_check
          %p3556 = pneg %p626
        $region114: #{xey_transformer_layer.7} parent=107 // pred_check_branch
          %3558 = sbr.rel (%p3556) target = $region116
        $region115: #{xey_transformer_layer.7} parent=107 // pred_region
          _
        $region116: #{xey_transformer_layer.7} parent=107 // pred_fallthru
          _
        // Predicated region
        $region117: #{xey_transformer_layer.7} parent=107 // pred_check
          %p3559 = pneg %p654
        $region118: #{xey_transformer_layer.7} parent=107 // pred_check_branch
          %3561 = sbr.rel (%p3559) target = $region120
        $region119: #{xey_transformer_layer.7} parent=107 // pred_region
          _
        $region120: #{xey_transformer_layer.7} parent=107 // pred_fallthru
          _
      $region108: #{xey_transformer_layer.7} parent=5 // pred_fallthru
        _
      %p3562 = scmp.le.s32.totalorder 2, %s34
      // Predicated region
      $region121: #{xey_transformer_layer.7} parent=5 // pred_check
        %p3563 = pneg %p3562
      $region122: #{xey_transformer_layer.7} parent=5 // pred_check_branch
        %3565 = sbr.rel (%p3563) target = $region124
      $region123: #{xey_transformer_layer.7} parent=5 // pred_region
        %s3566 = ssub.s32 %s34, 2
        // Predicated region
        $region125: #{xey_transformer_layer.7} parent=123 // pred_check
          %p3567 = pneg %p604
        $region126: #{xey_transformer_layer.7} parent=123 // pred_check_branch
          %3569 = sbr.rel (%p3567) target = $region128
        $region127: #{xey_transformer_layer.7} parent=123 // pred_region
          %s3570 = sand.u32 %s589, 1
          %s3571 = scalar_lea.sflag [#allocation3], %s3570
          %s3572 = sand.u32 %s589, 1
          %s3573 = smul.addr %s3572, 64
          %s3574 = scalar_lea.vmem [#allocation2], %s3573
          %3576 = dma.done %s3571, 1024
        $region128: #{xey_transformer_layer.7} parent=123 // pred_fallthru
          _
        // Predicated region
        $region129: #{xey_transformer_layer.7} parent=123 // pred_check
          %p3577 = pneg %p632
        $region130: #{xey_transformer_layer.7} parent=123 // pred_check_branch
          %3579 = sbr.rel (%p3577) target = $region132
        $region131: #{xey_transformer_layer.7} parent=123 // pred_region
          %p3580 = scmp.lt.s32.totalorder %s45, 1
          %s3581 = scalar_select %p3580, %s45, 1
          %p3582 = scmp.lt.s32.totalorder %s46, 0
          %s3583 = scalar_select %p3582, %s46, 0
          %s3584 = sadd.s32 %s3583, %s3581
          %s3585 = smul.addr %s3584, 8
          %s3586 = scalar_lea.vmem %s23, %s3585
        $region132: #{xey_transformer_layer.7} parent=123 // pred_fallthru
          _
        // Predicated region
        $region133: #{xey_transformer_layer.7} parent=123 // pred_check
          %p3587 = pneg %p660
        $region134: #{xey_transformer_layer.7} parent=123 // pred_check_branch
          %3589 = sbr.rel (%p3587) target = $region136
        $region135: #{xey_transformer_layer.7} parent=123 // pred_region
          %p3590 = scmp.lt.s32.totalorder %s45, 1
          %s3591 = scalar_select %p3590, %s45, 1
          %p3592 = scmp.lt.s32.totalorder %s46, 0
          %s3593 = scalar_select %p3592, %s46, 0
          %s3594 = sadd.s32 %s3593, %s3591
          %s3595 = smul.addr %s3594, 4
          %s3596 = scalar_lea.vmem %s24, %s3595
        $region136: #{xey_transformer_layer.7} parent=123 // pred_fallthru
          _
      $region124: #{xey_transformer_layer.7} parent=5 // pred_fallthru
        _
    $region6: #{xey_transformer_layer.7} parent=1 // loop_footer
      %s38 = sadd.s32 1, %s34
    $region7: #{xey_transformer_layer.7} parent=1 // loop_footer_branch
      %33 = sbr.rel target = $region3
    $region8: #{xey_transformer_layer.7} parent=1 // loop_exit
      _
    %3597 = vsyncpa [#allocation3], 1
    %s3598 = scalar_lea.sflag [#allocation3], 1
    %3599 = vsyncpa %s3598, 1

</llo_original>
